<compile_context>
chip_gen: v7x
topology: tpu7x:2x2x1
jax: 0.10.0
libtpu: 0.0.40
codegen_flags: <defaults>
</compile_context>

<pallas_src>
import functools

import jax
import jax.numpy as jnp
import numpy as np
from jax.experimental import pallas as pl
from jax.experimental.pallas import tpu as pltpu


def _round_up(x, m):
    return (x + m - 1) // m * m


# ==========================================================================
# Kernel 1: fused Linear + BatchNorm1d(train) + ReLU
# ==========================================================================
def _fc_bn_relu_kernel(x_ref, w_ref, bias_ref, gamma_ref, beta_ref, o_ref, *,
                       m_true, eps):
    y = jnp.dot(x_ref[...], w_ref[...], preferred_element_type=jnp.float32)
    y = y + bias_ref[...]
    # Batch stats over the true batch rows only.  Pad rows had zero inputs, so
    # there y == bias, which would bias the mean/var -> mask them out.
    rows = jax.lax.broadcasted_iota(jnp.int32, y.shape, 0)
    valid = rows < m_true
    inv_m = 1.0 / float(m_true)
    yv = jnp.where(valid, y, 0.0)
    mean = jnp.sum(yv, axis=0, keepdims=True) * inv_m
    d = jnp.where(valid, y - mean, 0.0)
    var = jnp.sum(d * d, axis=0, keepdims=True) * inv_m          # biased var
    o = (y - mean) * jax.lax.rsqrt(var + eps) * gamma_ref[...] + beta_ref[...]
    o_ref[...] = jnp.maximum(o, 0.0)


def pallas_fc_bn_relu(x, w, bias, gamma, beta, *, tn=None, use_bf16=False,
                      eps=1e-5):
    """relu(batchnorm(x @ w + bias)) for x:(M,K), w:(K,N).  M = batch (tiny)."""
    m, k = x.shape
    n = w.shape[1]
    if tn is None:
        tn = n
    assert n % tn == 0 and tn % 128 == 0
    mp = _round_up(m, 8)
    kp = _round_up(k, 128)
    cdt = jnp.bfloat16 if use_bf16 else jnp.float32
    x_p = jnp.pad(x.astype(jnp.float32), ((0, mp - m), (0, kp - k))).astype(cdt)
    w_p = jnp.pad(w.astype(jnp.float32), ((0, kp - k), (0, 0))).astype(cdt)
    b2 = bias.astype(jnp.float32).reshape(1, n)
    g2 = gamma.astype(jnp.float32).reshape(1, n)
    be2 = beta.astype(jnp.float32).reshape(1, n)

    out = pl.pallas_call(
        functools.partial(_fc_bn_relu_kernel, m_true=m, eps=eps),
        out_shape=jax.ShapeDtypeStruct((mp, n), jnp.float32),
        grid_spec=pltpu.PrefetchScalarGridSpec(
            num_scalar_prefetch=0,
            grid=(n // tn,),
            in_specs=[
                pl.BlockSpec((mp, kp), lambda j: (0, 0)),
                pl.BlockSpec((kp, tn), lambda j: (0, j)),
                pl.BlockSpec((1, tn), lambda j: (0, j)),
                pl.BlockSpec((1, tn), lambda j: (0, j)),
                pl.BlockSpec((1, tn), lambda j: (0, j)),
            ],
            out_specs=pl.BlockSpec((mp, tn), lambda j: (0, j)),
        ),
        compiler_params=pltpu.CompilerParams(
            dimension_semantics=("parallel",)),
    )(x_p, w_p, b2, g2, be2)
    return out[:m, :]


# ==========================================================================
# Kernel 2: batched-over-phase matmul + bias (deconv3 hot path)
# ==========================================================================
def _phase_mm_kernel(a_ref, w_ref, b_ref, o_ref):
    o_ref[...] = (jnp.dot(a_ref[...], w_ref[...],
                          preferred_element_type=jnp.float32) + b_ref[...])


def pallas_phase_matmul(patches, wmat, bias):
    """patches:(P,Mp,K) @ wmat:(P,K,C) + bias:(C,) -> (P,Mp,C)."""
    p, mp, k = patches.shape
    c = wmat.shape[2]
    return pl.pallas_call(
        _phase_mm_kernel,
        out_shape=jax.ShapeDtypeStruct((p, mp, c), jnp.float32),
        grid_spec=pltpu.PrefetchScalarGridSpec(
            num_scalar_prefetch=0,
            grid=(p,),
            in_specs=[
                pl.BlockSpec((None, mp, k), lambda i: (i, 0, 0)),
                pl.BlockSpec((None, k, c), lambda i: (i, 0, 0)),
                pl.BlockSpec((1, c), lambda i: (0, 0)),
            ],
            out_specs=pl.BlockSpec((None, mp, c), lambda i: (i, 0, 0)),
        ),
        compiler_params=pltpu.CompilerParams(
            dimension_semantics=("parallel",)),
    )(patches.astype(jnp.float32), wmat.astype(jnp.float32),
      bias.astype(jnp.float32).reshape(1, c))


# ==========================================================================
# Kernel 3: batched-over-phase matvec (Cout=1) + sigmoid (deconv4)
#           lane-reduce instead of a 1-column MXU matmul; output stays
#           (Mp, 1) instead of being padded to 128 lanes.
# ==========================================================================
def _phase_matvec_sigmoid_kernel(a_ref, w_ref, b_ref, o_ref):
    y = jnp.sum(a_ref[...] * w_ref[...], axis=-1, keepdims=True) + b_ref[...]
    o_ref[...] = jax.nn.sigmoid(y)


def pallas_phase_matvec_sigmoid(patches, wvec, bias):
    """sigmoid(patches:(P,Mp,K) . wvec:(P,1,K) + bias) -> (P,Mp,1)."""
    p, mp, k = patches.shape
    return pl.pallas_call(
        _phase_matvec_sigmoid_kernel,
        out_shape=jax.ShapeDtypeStruct((p, mp, 1), jnp.float32),
        grid_spec=pltpu.PrefetchScalarGridSpec(
            num_scalar_prefetch=0,
            grid=(p,),
            in_specs=[
                pl.BlockSpec((None, mp, k), lambda i: (i, 0, 0)),
                pl.BlockSpec((None, 1, k), lambda i: (i, 0, 0)),
                pl.BlockSpec((1, 1), lambda i: (0, 0)),
            ],
            out_specs=pl.BlockSpec((None, mp, 1), lambda i: (i, 0, 0)),
        ),
        compiler_params=pltpu.CompilerParams(
            dimension_semantics=("parallel",)),
    )(patches.astype(jnp.float32), wvec.astype(jnp.float32),
      bias.astype(jnp.float32).reshape(1, 1))


# ==========================================================================
# Kernel 4: BatchNorm (train stats over rows) + ReLU, single full-width block
# ==========================================================================
def _bn_relu_kernel(x_ref, g_ref, b_ref, o_ref, *, eps):
    x = x_ref[...]
    mean = jnp.mean(x, axis=0, keepdims=True)
    var = jnp.mean(jnp.square(x - mean), axis=0, keepdims=True)   # biased var
    o_ref[...] = jnp.maximum(
        (x - mean) * jax.lax.rsqrt(var + eps) * g_ref[...] + b_ref[...], 0.0)


def pallas_bn_relu(x, gamma, beta, eps=1e-5):
    m, c = x.shape
    return pl.pallas_call(
        functools.partial(_bn_relu_kernel, eps=eps),
        out_shape=jax.ShapeDtypeStruct((m, c), jnp.float32),
    )(x.astype(jnp.float32),
      gamma.astype(jnp.float32).reshape(1, c),
      beta.astype(jnp.float32).reshape(1, c))


# ==========================================================================
# ConvTranspose2d(k=4, s=2, p=1) via 4-phase (sub-pixel) decomposition.
#
# Output pixel (2*qy+ry, 2*qx+rx) only touches a 2x2 window of the 1-padded
# input and a fixed 2x2 subset of the 4x4 kernel:
#     ry=0: padded rows (qy,   qy+1) with kernel taps ky = (3, 1)
#     ry=1: padded rows (qy+1, qy+2) with kernel taps ky = (2, 0)
# (same along x).  Each phase is then a dense (N*H*W, 4*Cin) @ (4*Cin, Cout)
# matmul -- no zero-inserted upsample, no 75%-zero patch rows.
# ==========================================================================
_OFFS = ((0, 1), (1, 2))   # padded-input offsets per phase bit
_TAPS = ((3, 1), (2, 0))   # kernel tap index per phase bit

# TODO(synk): the tap gather below is thin plain-JAX glue; it could be folded
# into the deconv kernels with pl.ds gathers to avoid materializing the (<4 MB)
# patch tensors in HBM.


def phase_patches(x_nhwc, m_pad):
    """(N,H,W,C) -> (4, m_pad, 4*C); row = n*H*W + qy*W + qx, K = (tap, c)."""
    n, h, w, c = x_nhwc.shape
    xp = jnp.pad(x_nhwc, ((0, 0), (1, 1), (1, 1), (0, 0)))
    phases = []
    for ry in range(2):
        for rx in range(2):
            taps = [xp[:, dy:dy + h, dx:dx + w, :]
                    for dy in _OFFS[ry] for dx in _OFFS[rx]]
            pt = jnp.stack(taps, axis=3)                  # (N,H,W,4,C)
            phases.append(pt.reshape(n * h * w, 4 * c))
    pat = jnp.stack(phases, axis=0)                       # (4, N*H*W, 4*C)
    if m_pad > n * h * w:
        pat = jnp.pad(pat, ((0, 0), (0, m_pad - n * h * w), (0, 0)))
    return pat


def phase_weight(w):
    """PyTorch ConvTranspose2d weight (Cin,Cout,4,4) -> (4, 4*Cin, Cout)."""
    cin, cout = w.shape[:2]
    mats = []
    for ry in range(2):
        for rx in range(2):
            taps = [w[:, :, ky, kx]
                    for ky in _TAPS[ry] for kx in _TAPS[rx]]   # 4 x (Cin,Cout)
            mats.append(jnp.stack(taps, axis=0).reshape(4 * cin, cout))
    return jnp.stack(mats, axis=0)                        # (4, 4*Cin, Cout)


def phase_unshuffle(y, n, h, w, c):
    """(4, >=N*H*W, C) phase outputs -> (N, 2H, 2W, C)."""
    y = y[:, :n * h * w, :].reshape(2, 2, n, h, w, c)     # (ry,rx,n,qy,qx,c)
    return y.transpose(2, 3, 0, 4, 1, 5).reshape(n, 2 * h, 2 * w, c)


# ==========================================================================
# Parameters (deterministic kaiming-style init; fc weights stored (in, out))
# ==========================================================================
def init_params(key, latent_dim):
    ks = jax.random.split(key, 4)
    in1 = latent_dim + 10
    return {
        "fc1_w": jax.random.normal(ks[0], (in1, 1024), jnp.float32) * np.sqrt(2.0 / in1),
        "fc1_b": jnp.zeros((1024,), jnp.float32),
        "bn1_g": jnp.ones((1024,), jnp.float32),
        "bn1_b": jnp.zeros((1024,), jnp.float32),
        "fc2_w": jax.random.normal(ks[1], (1024, 128 * 7 * 7), jnp.float32) * np.sqrt(2.0 / 1024),
        "fc2_b": jnp.zeros((128 * 7 * 7,), jnp.float32),
        "bn2_g": jnp.ones((128 * 7 * 7,), jnp.float32),
        "bn2_b": jnp.zeros((128 * 7 * 7,), jnp.float32),
        # ConvTranspose2d weights in PyTorch layout (Cin, Cout, K, K)
        "dc3_w": jax.random.normal(ks[2], (128, 64, 4, 4), jnp.float32) * np.sqrt(2.0 / (64 * 16)),
        "dc3_b": jnp.zeros((64,), jnp.float32),
        "bn3_g": jnp.ones((64,), jnp.float32),
        "bn3_b": jnp.zeros((64,), jnp.float32),
        "dc4_w": jax.random.normal(ks[3], (64, 1, 4, 4), jnp.float32) * np.sqrt(2.0 / (1 * 16)),
        "dc4_b": jnp.zeros((1,), jnp.float32),
    }


# ==========================================================================
# Forward pass (Pallas) and pure-JAX reference
# ==========================================================================
def bernoulli_decoder_forward(z, params):
    n = z.shape[0]
    # fc1 + bn1 + relu (single fused kernel, one grid step)
    h = pallas_fc_bn_relu(z, params["fc1_w"], params["fc1_b"],
                          params["bn1_g"], params["bn1_b"], tn=1024)
    # fc2 + bn2 + relu (fused; 7 parallel 896-wide steps; bf16 weight stream)
    h = pallas_fc_bn_relu(h, params["fc2_w"], params["fc2_b"],
                          params["bn2_g"], params["bn2_b"], tn=896,
                          use_bf16=True)
    # view(-1, 128, 7, 7) [NCHW] -> NHWC
    x = h.reshape(n, 128, 7, 7).transpose(0, 2, 3, 1)
    # deconv3 (4-phase) -> bn3 -> relu
    m3 = n * 7 * 7
    pat = phase_patches(x, _round_up(m3, 8))                     # (4, 200, 512)
    y = pallas_phase_matmul(pat, phase_weight(params["dc3_w"]),
                            params["dc3_b"])                      # (4, 200, 64)
    y = y[:, :m3, :]
    y = pallas_bn_relu(y.reshape(4 * m3, 64),
                       params["bn3_g"], params["bn3_b"]).reshape(4, m3, 64)
    x = phase_unshuffle(y, n, 7, 7, 64)                           # (N,14,14,64)
    # deconv4 (4-phase, Cout=1) -> sigmoid
    m4 = n * 14 * 14
    pat = phase_patches(x, _round_up(m4, 8))                      # (4, 784, 256)
    o = pallas_phase_matvec_sigmoid(
        pat, phase_weight(params["dc4_w"]).transpose(0, 2, 1),    # (4, 1, 256)
        params["dc4_b"])                                          # (4, 784, 1)
    o = phase_unshuffle(o, n, 14, 14, 1)                          # (N, 28, 28, 1)
    return (o.transpose(0, 3, 1, 2),)                             # NCHW


def _ref_bn(x, g, b, axes, eps=1e-5):
    m = x.mean(axes, keepdims=True)
    v = jnp.square(x - m).mean(axes, keepdims=True)
    return (x - m) * jax.lax.rsqrt(v + eps) * g + b


def _ref_conv_transpose(x_nchw, w, b):
    # ConvTranspose2d(k=4,s=2,p=1) == cross-correlation of the 2x-dilated,
    # 2-padded input with the spatially flipped kernel.
    rhs = jnp.flip(w, (2, 3)).transpose(1, 0, 2, 3)          # (Cout, Cin, 4, 4)
    y = jax.lax.conv_general_dilated(
        x_nchw, rhs, window_strides=(1, 1), padding=((2, 2), (2, 2)),
        lhs_dilation=(2, 2), dimension_numbers=("NCHW", "OIHW", "NCHW"),
        precision=jax.lax.Precision.HIGHEST)
    return y + b.reshape(1, -1, 1, 1)


def reference_forward(z, params):
    n = z.shape[0]
    h = jnp.dot(z, params["fc1_w"],
                precision=jax.lax.Precision.HIGHEST) + params["fc1_b"]
    h = jnp.maximum(_ref_bn(h, params["bn1_g"], params["bn1_b"], 0), 0.0)
    h = jnp.dot(h, params["fc2_w"],
                precision=jax.lax.Precision.HIGHEST) + params["fc2_b"]
    h = jnp.maximum(_ref_bn(h, params["bn2_g"], params["bn2_b"], 0), 0.0)
    x = h.reshape(n, 128, 7, 7)
    y = _ref_conv_transpose(x, params["dc3_w"], params["dc3_b"])
    y = jnp.maximum(_ref_bn(y, params["bn3_g"].reshape(1, -1, 1, 1),
                            params["bn3_b"].reshape(1, -1, 1, 1), (0, 2, 3)), 0.0)
    y = _ref_conv_transpose(y, params["dc4_w"], params["dc4_b"])
    return (jax.nn.sigmoid(y),)


# ==========================================================================
if __name__ == "__main__":
    latent_dim = 20
    batch = 4  # BatchNorm in training mode needs batch > 1

    key = jax.random.PRNGKey(0)
    k_param, k_z, k_lbl = jax.random.split(key, 3)
    params = init_params(k_param, latent_dim)

    # z = [latent sample | one-hot label], shape (batch, latent_dim + 10)
    latent = jax.random.normal(k_z, (batch, latent_dim), jnp.float32)
    labels = jax.random.randint(k_lbl, (batch,), 0, 10)
    onehot = jax.nn.one_hot(labels, 10, dtype=jnp.float32)
    z = jnp.concatenate([latent, onehot], axis=1)

    fwd = jax.jit(bernoulli_decoder_forward)
    (out,) = fwd(z, params)
    out = jax.block_until_ready(out)

    assert out.shape == (batch, 1, 28, 28), out.shape
    assert bool(jnp.all(jnp.isfinite(out)))
    assert bool(jnp.all((out >= 0.0) & (out <= 1.0)))

    # fc2 streams bf16 operands (f32 accumulation), so compare against the
    # f32 reference with a loose absolute tolerance on the sigmoid outputs.
    (ref,) = jax.jit(reference_forward)(z, params)
    np.testing.assert_allclose(np.asarray(out), np.asarray(ref),
                               atol=2e-2, rtol=0)

    print("KERNEL_OK")
</pallas_src>

<mosaic_0001>
module attributes {stable_mosaic.version = 11 : i64} {
  func.func @_fc_bn_relu_kernel(%arg0: i32, %arg1: memref<8x128xf32, #tpu.memory_space<vmem>>, %arg2: memref<128x1024xf32, #tpu.memory_space<vmem>>, %arg3: memref<1x1024xf32, #tpu.memory_space<vmem>>, %arg4: memref<1x1024xf32, #tpu.memory_space<vmem>>, %arg5: memref<1x1024xf32, #tpu.memory_space<vmem>>, %arg6: memref<8x1024xf32, #tpu.memory_space<vmem>>) attributes {dimension_semantics = [#tpu.dimension_semantics<parallel>], iteration_bounds = array<i64: 1>, scalar_prefetch = 0 : i64, scratch_operands = 0 : i64, tpu.core_type = #tpu.core_type<tc>, window_params = [{pipeline_mode = #tpu.pipeline_mode<synchronous>, transform_indices = @transform_0, window_bounds = array<i64: 8, 128>}, {transform_indices = @transform_1, window_bounds = array<i64: 128, 1024>}, {transform_indices = @transform_2, window_bounds = array<i64: 1, 1024>}, {transform_indices = @transform_3, window_bounds = array<i64: 1, 1024>}, {transform_indices = @transform_4, window_bounds = array<i64: 1, 1024>}, {transform_indices = @transform_5, window_bounds = array<i64: 8, 1024>}]} {
    %c0 = arith.constant 0 : index
    %c0_0 = arith.constant 0 : index
    %0 = vector.load %arg1[%c0, %c0_0] : memref<8x128xf32, #tpu.memory_space<vmem>>, vector<8x128xf32>
    %c0_1 = arith.constant 0 : index
    %c0_2 = arith.constant 0 : index
    %1 = vector.load %arg2[%c0_1, %c0_2] : memref<128x1024xf32, #tpu.memory_space<vmem>>, vector<128x1024xf32>
    %cst = arith.constant dense<0.000000e+00> : vector<8x1024xf32>
    %2 = tpu.matmul %0, %1, %cst {dimension_numbers = #tpu.dot_dimension_numbers<[1], [0], [0], [1], [0, 0, 1, 1], [], []>} : vector<8x128xf32>, vector<128x1024xf32>, vector<8x1024xf32> -> vector<8x1024xf32>
    %c0_3 = arith.constant 0 : index
    %c0_4 = arith.constant 0 : index
    %3 = vector.load %arg3[%c0_3, %c0_4] : memref<1x1024xf32, #tpu.memory_space<vmem>>, vector<1x1024xf32>
    %4 = vector.broadcast %3 : vector<1x1024xf32> to vector<8x1024xf32>
    %5 = arith.addf %2, %4 : vector<8x1024xf32>
    %6 = tpu.iota {dimensions = array<i32: 0>} : vector<8x1024xi32>
    %c4_i32 = arith.constant 4 : i32
    %7 = vector.broadcast %c4_i32 : i32 to vector<8x1024xi32>
    %8 = arith.cmpi slt, %6, %7 : vector<8x1024xi32>
    %cst_5 = arith.constant 0.000000e+00 : f32
    %9 = vector.broadcast %cst_5 : f32 to vector<8x1024xf32>
    %10 = arith.select %8, %5, %9 : vector<8x1024xi1>, vector<8x1024xf32>
    %cst_6 = arith.constant dense<0.000000e+00> : vector<1024xf32>
    %11 = vector.multi_reduction <add>, %10, %cst_6 [0] : vector<8x1024xf32> to vector<1024xf32>
    %12 = vector.shape_cast %11 : vector<1024xf32> to vector<1x1024xf32>
    %cst_7 = arith.constant 2.500000e-01 : f32
    %13 = vector.broadcast %cst_7 : f32 to vector<1x1024xf32>
    %14 = arith.mulf %12, %13 : vector<1x1024xf32>
    %15 = vector.broadcast %14 : vector<1x1024xf32> to vector<8x1024xf32>
    %16 = arith.subf %5, %15 : vector<8x1024xf32>
    %cst_8 = arith.constant 0.000000e+00 : f32
    %17 = vector.broadcast %cst_8 : f32 to vector<8x1024xf32>
    %18 = arith.select %8, %16, %17 : vector<8x1024xi1>, vector<8x1024xf32>
    %19 = arith.mulf %18, %18 : vector<8x1024xf32>
    %cst_9 = arith.constant dense<0.000000e+00> : vector<1024xf32>
    %20 = vector.multi_reduction <add>, %19, %cst_9 [0] : vector<8x1024xf32> to vector<1024xf32>
    %21 = vector.shape_cast %20 : vector<1024xf32> to vector<1x1024xf32>
    %cst_10 = arith.constant 2.500000e-01 : f32
    %22 = vector.broadcast %cst_10 : f32 to vector<1x1024xf32>
    %23 = arith.mulf %21, %22 : vector<1x1024xf32>
    %24 = vector.broadcast %14 : vector<1x1024xf32> to vector<8x1024xf32>
    %25 = arith.subf %5, %24 : vector<8x1024xf32>
    %cst_11 = arith.constant 9.99999974E-6 : f32
    %26 = vector.broadcast %cst_11 : f32 to vector<1x1024xf32>
    %27 = arith.addf %23, %26 : vector<1x1024xf32>
    %28 = math.rsqrt %27 : vector<1x1024xf32>
    %29 = vector.broadcast %28 : vector<1x1024xf32> to vector<8x1024xf32>
    %30 = arith.mulf %25, %29 : vector<8x1024xf32>
    %c0_12 = arith.constant 0 : index
    %c0_13 = arith.constant 0 : index
    %31 = vector.load %arg4[%c0_12, %c0_13] : memref<1x1024xf32, #tpu.memory_space<vmem>>, vector<1x1024xf32>
    %32 = vector.broadcast %31 : vector<1x1024xf32> to vector<8x1024xf32>
    %33 = arith.mulf %30, %32 : vector<8x1024xf32>
    %c0_14 = arith.constant 0 : index
    %c0_15 = arith.constant 0 : index
    %34 = vector.load %arg5[%c0_14, %c0_15] : memref<1x1024xf32, #tpu.memory_space<vmem>>, vector<1x1024xf32>
    %35 = vector.broadcast %34 : vector<1x1024xf32> to vector<8x1024xf32>
    %36 = arith.addf %33, %35 : vector<8x1024xf32>
    %cst_16 = arith.constant 0.000000e+00 : f32
    %37 = vector.broadcast %cst_16 : f32 to vector<8x1024xf32>
    %38 = arith.maximumf %36, %37 : vector<8x1024xf32>
    %c0_17 = arith.constant 0 : index
    %c0_18 = arith.constant 0 : index
    %39 = vector.load %arg6[%c0_17, %c0_18] : memref<8x1024xf32, #tpu.memory_space<vmem>>, vector<8x1024xf32>
    tpu.vector_store %arg6[%c0_17, %c0_18], %38 {strides = array<i32>} : memref<8x1024xf32, #tpu.memory_space<vmem>>, vector<8x1024xf32>,
    return
  }
  func.func @transform_0(%arg0: i32) -> (i32, i32) {
    %c0_i32 = arith.constant 0 : i32
    %c0_i32_0 = arith.constant 0 : i32
    %c0_i32_1 = arith.constant 0 : i32
    return %c0_i32, %c0_i32_0 : i32, i32
  }
  func.func @transform_1(%arg0: i32) -> (i32, i32) {
    %c0_i32 = arith.constant 0 : i32
    %c0_i32_0 = arith.constant 0 : i32
    return %c0_i32, %arg0 : i32, i32
  }
  func.func @transform_2(%arg0: i32) -> (i32, i32) {
    %c0_i32 = arith.constant 0 : i32
    %c0_i32_0 = arith.constant 0 : i32
    return %c0_i32, %arg0 : i32, i32
  }
  func.func @transform_3(%arg0: i32) -> (i32, i32) {
    %c0_i32 = arith.constant 0 : i32
    %c0_i32_0 = arith.constant 0 : i32
    return %c0_i32, %arg0 : i32, i32
  }
  func.func @transform_4(%arg0: i32) -> (i32, i32) {
    %c0_i32 = arith.constant 0 : i32
    %c0_i32_0 = arith.constant 0 : i32
    return %c0_i32, %arg0 : i32, i32
  }
  func.func @transform_5(%arg0: i32) -> (i32, i32) {
    %c0_i32 = arith.constant 0 : i32
    %c0_i32_0 = arith.constant 0 : i32
    return %c0_i32, %arg0 : i32, i32
  }
}

module attributes {stable_mosaic.version = 11 : i64} {
  func.func @_fc_bn_relu_kernel(%arg0: i32, %arg1: memref<8x1024xbf16, #tpu.memory_space<vmem>>, %arg2: memref<1024x896xbf16, #tpu.memory_space<vmem>>, %arg3: memref<1x896xf32, #tpu.memory_space<vmem>>, %arg4: memref<1x896xf32, #tpu.memory_space<vmem>>, %arg5: memref<1x896xf32, #tpu.memory_space<vmem>>, %arg6: memref<8x896xf32, #tpu.memory_space<vmem>>) attributes {dimension_semantics = [#tpu.dimension_semantics<parallel>], iteration_bounds = array<i64: 7>, scalar_prefetch = 0 : i64, scratch_operands = 0 : i64, tpu.core_type = #tpu.core_type<tc>, window_params = [{pipeline_mode = #tpu.pipeline_mode<synchronous>, transform_indices = @transform_0, window_bounds = array<i64: 8, 1024>}, {transform_indices = @transform_1, window_bounds = array<i64: 1024, 896>}, {transform_indices = @transform_2, window_bounds = array<i64: 1, 896>}, {transform_indices = @transform_3, window_bounds = array<i64: 1, 896>}, {transform_indices = @transform_4, window_bounds = array<i64: 1, 896>}, {transform_indices = @transform_5, window_bounds = array<i64: 8, 896>}]} {
    %c0 = arith.constant 0 : index
    %c0_0 = arith.constant 0 : index
    %0 = vector.load %arg1[%c0, %c0_0] : memref<8x1024xbf16, #tpu.memory_space<vmem>>, vector<8x1024xbf16>
    %c0_1 = arith.constant 0 : index
    %c0_2 = arith.constant 0 : index
    %1 = vector.load %arg2[%c0_1, %c0_2] : memref<1024x896xbf16, #tpu.memory_space<vmem>>, vector<1024x896xbf16>
    %cst = arith.constant dense<0.000000e+00> : vector<8x896xf32>
    %2 = tpu.matmul %0, %1, %cst {dimension_numbers = #tpu.dot_dimension_numbers<[1], [0], [0], [1], [0, 0, 1, 1], [], []>} : vector<8x1024xbf16>, vector<1024x896xbf16>, vector<8x896xf32> -> vector<8x896xf32>
    %c0_3 = arith.constant 0 : index
    %c0_4 = arith.constant 0 : index
    %3 = vector.load %arg3[%c0_3, %c0_4] : memref<1x896xf32, #tpu.memory_space<vmem>>, vector<1x896xf32>
    %4 = vector.broadcast %3 : vector<1x896xf32> to vector<8x896xf32>
    %5 = arith.addf %2, %4 : vector<8x896xf32>
    %6 = tpu.iota {dimensions = array<i32: 0>} : vector<8x896xi32>
    %c4_i32 = arith.constant 4 : i32
    %7 = vector.broadcast %c4_i32 : i32 to vector<8x896xi32>
    %8 = arith.cmpi slt, %6, %7 : vector<8x896xi32>
    %cst_5 = arith.constant 0.000000e+00 : f32
    %9 = vector.broadcast %cst_5 : f32 to vector<8x896xf32>
    %10 = arith.select %8, %5, %9 : vector<8x896xi1>, vector<8x896xf32>
    %cst_6 = arith.constant dense<0.000000e+00> : vector<896xf32>
    %11 = vector.multi_reduction <add>, %10, %cst_6 [0] : vector<8x896xf32> to vector<896xf32>
    %12 = vector.shape_cast %11 : vector<896xf32> to vector<1x896xf32>
    %cst_7 = arith.constant 2.500000e-01 : f32
    %13 = vector.broadcast %cst_7 : f32 to vector<1x896xf32>
    %14 = arith.mulf %12, %13 : vector<1x896xf32>
    %15 = vector.broadcast %14 : vector<1x896xf32> to vector<8x896xf32>
    %16 = arith.subf %5, %15 : vector<8x896xf32>
    %cst_8 = arith.constant 0.000000e+00 : f32
    %17 = vector.broadcast %cst_8 : f32 to vector<8x896xf32>
    %18 = arith.select %8, %16, %17 : vector<8x896xi1>, vector<8x896xf32>
    %19 = arith.mulf %18, %18 : vector<8x896xf32>
    %cst_9 = arith.constant dense<0.000000e+00> : vector<896xf32>
    %20 = vector.multi_reduction <add>, %19, %cst_9 [0] : vector<8x896xf32> to vector<896xf32>
    %21 = vector.shape_cast %20 : vector<896xf32> to vector<1x896xf32>
    %cst_10 = arith.constant 2.500000e-01 : f32
    %22 = vector.broadcast %cst_10 : f32 to vector<1x896xf32>
    %23 = arith.mulf %21, %22 : vector<1x896xf32>
    %24 = vector.broadcast %14 : vector<1x896xf32> to vector<8x896xf32>
    %25 = arith.subf %5, %24 : vector<8x896xf32>
    %cst_11 = arith.constant 9.99999974E-6 : f32
    %26 = vector.broadcast %cst_11 : f32 to vector<1x896xf32>
    %27 = arith.addf %23, %26 : vector<1x896xf32>
    %28 = math.rsqrt %27 : vector<1x896xf32>
    %29 = vector.broadcast %28 : vector<1x896xf32> to vector<8x896xf32>
    %30 = arith.mulf %25, %29 : vector<8x896xf32>
    %c0_12 = arith.constant 0 : index
    %c0_13 = arith.constant 0 : index
    %31 = vector.load %arg4[%c0_12, %c0_13] : memref<1x896xf32, #tpu.memory_space<vmem>>, vector<1x896xf32>
    %32 = vector.broadcast %31 : vector<1x896xf32> to vector<8x896xf32>
    %33 = arith.mulf %30, %32 : vector<8x896xf32>
    %c0_14 = arith.constant 0 : index
    %c0_15 = arith.constant 0 : index
    %34 = vector.load %arg5[%c0_14, %c0_15] : memref<1x896xf32, #tpu.memory_space<vmem>>, vector<1x896xf32>
    %35 = vector.broadcast %34 : vector<1x896xf32> to vector<8x896xf32>
    %36 = arith.addf %33, %35 : vector<8x896xf32>
    %cst_16 = arith.constant 0.000000e+00 : f32
    %37 = vector.broadcast %cst_16 : f32 to vector<8x896xf32>
    %38 = arith.maximumf %36, %37 : vector<8x896xf32>
    %c0_17 = arith.constant 0 : index
    %c0_18 = arith.constant 0 : index
    %39 = vector.load %arg6[%c0_17, %c0_18] : memref<8x896xf32, #tpu.memory_space<vmem>>, vector<8x896xf32>
    tpu.vector_store %arg6[%c0_17, %c0_18], %38 {strides = array<i32>} : memref<8x896xf32, #tpu.memory_space<vmem>>, vector<8x896xf32>,
    return
  }
  func.func @transform_0(%arg0: i32) -> (i32, i32) {
    %c0_i32 = arith.constant 0 : i32
    %c0_i32_0 = arith.constant 0 : i32
    %c0_i32_1 = arith.constant 0 : i32
    return %c0_i32, %c0_i32_0 : i32, i32
  }
  func.func @transform_1(%arg0: i32) -> (i32, i32) {
    %c0_i32 = arith.constant 0 : i32
    %c0_i32_0 = arith.constant 0 : i32
    return %c0_i32, %arg0 : i32, i32
  }
  func.func @transform_2(%arg0: i32) -> (i32, i32) {
    %c0_i32 = arith.constant 0 : i32
    %c0_i32_0 = arith.constant 0 : i32
    return %c0_i32, %arg0 : i32, i32
  }
  func.func @transform_3(%arg0: i32) -> (i32, i32) {
    %c0_i32 = arith.constant 0 : i32
    %c0_i32_0 = arith.constant 0 : i32
    return %c0_i32, %arg0 : i32, i32
  }
  func.func @transform_4(%arg0: i32) -> (i32, i32) {
    %c0_i32 = arith.constant 0 : i32
    %c0_i32_0 = arith.constant 0 : i32
    return %c0_i32, %arg0 : i32, i32
  }
  func.func @transform_5(%arg0: i32) -> (i32, i32) {
    %c0_i32 = arith.constant 0 : i32
    %c0_i32_0 = arith.constant 0 : i32
    return %c0_i32, %arg0 : i32, i32
  }
}

module attributes {stable_mosaic.version = 11 : i64} {
  func.func @_phase_mm_kernel(%arg0: i32, %arg1: memref<1x200x512xf32, #tpu.memory_space<vmem>>, %arg2: memref<1x512x64xf32, #tpu.memory_space<vmem>>, %arg3: memref<1x64xf32, #tpu.memory_space<vmem>>, %arg4: memref<1x200x64xf32, #tpu.memory_space<vmem>>) attributes {dimension_semantics = [#tpu.dimension_semantics<parallel>], iteration_bounds = array<i64: 4>, scalar_prefetch = 0 : i64, scratch_operands = 0 : i64, tpu.core_type = #tpu.core_type<tc>, window_params = [{transform_indices = @transform_0, window_bounds = array<i64: 1, 200, 512>}, {transform_indices = @transform_1, window_bounds = array<i64: 1, 512, 64>}, {pipeline_mode = #tpu.pipeline_mode<synchronous>, transform_indices = @transform_2, window_bounds = array<i64: 1, 64>}, {transform_indices = @transform_3, window_bounds = array<i64: 1, 200, 64>}]} {
    %c0 = arith.constant 0 : index
    %c0_0 = arith.constant 0 : index
    %c0_1 = arith.constant 0 : index
    %0 = vector.load %arg1[%c0, %c0_0, %c0_1] : memref<1x200x512xf32, #tpu.memory_space<vmem>>, vector<1x200x512xf32>
    %1 = vector.shape_cast %0 : vector<1x200x512xf32> to vector<200x512xf32>
    %c0_2 = arith.constant 0 : index
    %c0_3 = arith.constant 0 : index
    %c0_4 = arith.constant 0 : index
    %2 = vector.load %arg2[%c0_2, %c0_3, %c0_4] : memref<1x512x64xf32, #tpu.memory_space<vmem>>, vector<1x512x64xf32>
    %3 = vector.shape_cast %2 : vector<1x512x64xf32> to vector<512x64xf32>
    %cst = arith.constant dense<0.000000e+00> : vector<200x64xf32>
    %4 = tpu.matmul %1, %3, %cst {dimension_numbers = #tpu.dot_dimension_numbers<[1], [0], [0], [1], [0, 0, 1, 1], [], []>} : vector<200x512xf32>, vector<512x64xf32>, vector<200x64xf32> -> vector<200x64xf32>
    %c0_5 = arith.constant 0 : index
    %c0_6 = arith.constant 0 : index
    %5 = vector.load %arg3[%c0_5, %c0_6] : memref<1x64xf32, #tpu.memory_space<vmem>>, vector<1x64xf32>
    %6 = vector.broadcast %5 : vector<1x64xf32> to vector<200x64xf32>
    %7 = arith.addf %4, %6 : vector<200x64xf32>
    %c0_7 = arith.constant 0 : index
    %c0_8 = arith.constant 0 : index
    %c0_9 = arith.constant 0 : index
    %8 = vector.load %arg4[%c0_7, %c0_8, %c0_9] : memref<1x200x64xf32, #tpu.memory_space<vmem>>, vector<1x200x64xf32>
    %9 = vector.shape_cast %8 : vector<1x200x64xf32> to vector<200x64xf32>
    %10 = vector.shape_cast %7 : vector<200x64xf32> to vector<1x200x64xf32>
    tpu.vector_store %arg4[%c0_7, %c0_8, %c0_9], %10 {strides = array<i32>} : memref<1x200x64xf32, #tpu.memory_space<vmem>>, vector<1x200x64xf32>,
    return
  }
  func.func @transform_0(%arg0: i32) -> (i32, i32, i32) {
    %c0_i32 = arith.constant 0 : i32
    %c0_i32_0 = arith.constant 0 : i32
    %c0_i32_1 = arith.constant 0 : i32
    return %arg0, %c0_i32, %c0_i32_0 : i32, i32, i32
  }
  func.func @transform_1(%arg0: i32) -> (i32, i32, i32) {
    %c0_i32 = arith.constant 0 : i32
    %c0_i32_0 = arith.constant 0 : i32
    %c0_i32_1 = arith.constant 0 : i32
    return %arg0, %c0_i32, %c0_i32_0 : i32, i32, i32
  }
  func.func @transform_2(%arg0: i32) -> (i32, i32) {
    %c0_i32 = arith.constant 0 : i32
    %c0_i32_0 = arith.constant 0 : i32
    %c0_i32_1 = arith.constant 0 : i32
    return %c0_i32, %c0_i32_0 : i32, i32
  }
  func.func @transform_3(%arg0: i32) -> (i32, i32, i32) {
    %c0_i32 = arith.constant 0 : i32
    %c0_i32_0 = arith.constant 0 : i32
    %c0_i32_1 = arith.constant 0 : i32
    return %arg0, %c0_i32, %c0_i32_0 : i32, i32, i32
  }
}

module attributes {stable_mosaic.version = 11 : i64} {
  func.func @_bn_relu_kernel(%arg0: memref<784x64xf32, #tpu.memory_space<vmem>>, %arg1: memref<1x64xf32, #tpu.memory_space<vmem>>, %arg2: memref<1x64xf32, #tpu.memory_space<vmem>>, %arg3: memref<784x64xf32, #tpu.memory_space<vmem>>) attributes {dimension_semantics = [], scalar_prefetch = 0 : i64, scratch_operands = 0 : i64, tpu.core_type = #tpu.core_type<tc>} {
    %c0 = arith.constant 0 : index
    %c0_0 = arith.constant 0 : index
    %0 = vector.load %arg0[%c0, %c0_0] : memref<784x64xf32, #tpu.memory_space<vmem>>, vector<784x64xf32>
    %cst = arith.constant dense<0.000000e+00> : vector<64xf32>
    %1 = vector.multi_reduction <add>, %0, %cst [0] : vector<784x64xf32> to vector<64xf32>
    %2 = vector.shape_cast %1 : vector<64xf32> to vector<1x64xf32>
    %cst_1 = arith.constant 7.840000e+02 : f32
    %3 = vector.broadcast %cst_1 : f32 to vector<1x64xf32>
    %4 = arith.divf %2, %3 : vector<1x64xf32>
    %5 = vector.broadcast %4 : vector<1x64xf32> to vector<784x64xf32>
    %6 = arith.subf %0, %5 : vector<784x64xf32>
    %7 = arith.mulf %6, %6 : vector<784x64xf32>
    %cst_2 = arith.constant dense<0.000000e+00> : vector<64xf32>
    %8 = vector.multi_reduction <add>, %7, %cst_2 [0] : vector<784x64xf32> to vector<64xf32>
    %9 = vector.shape_cast %8 : vector<64xf32> to vector<1x64xf32>
    %cst_3 = arith.constant 7.840000e+02 : f32
    %10 = vector.broadcast %cst_3 : f32 to vector<1x64xf32>
    %11 = arith.divf %9, %10 : vector<1x64xf32>
    %12 = vector.broadcast %4 : vector<1x64xf32> to vector<784x64xf32>
    %13 = arith.subf %0, %12 : vector<784x64xf32>
    %cst_4 = arith.constant 9.99999974E-6 : f32
    %14 = vector.broadcast %cst_4 : f32 to vector<1x64xf32>
    %15 = arith.addf %11, %14 : vector<1x64xf32>
    %16 = math.rsqrt %15 : vector<1x64xf32>
    %17 = vector.broadcast %16 : vector<1x64xf32> to vector<784x64xf32>
    %18 = arith.mulf %13, %17 : vector<784x64xf32>
    %c0_5 = arith.constant 0 : index
    %c0_6 = arith.constant 0 : index
    %19 = vector.load %arg1[%c0_5, %c0_6] : memref<1x64xf32, #tpu.memory_space<vmem>>, vector<1x64xf32>
    %20 = vector.broadcast %19 : vector<1x64xf32> to vector<784x64xf32>
    %21 = arith.mulf %18, %20 : vector<784x64xf32>
    %c0_7 = arith.constant 0 : index
    %c0_8 = arith.constant 0 : index
    %22 = vector.load %arg2[%c0_7, %c0_8] : memref<1x64xf32, #tpu.memory_space<vmem>>, vector<1x64xf32>
    %23 = vector.broadcast %22 : vector<1x64xf32> to vector<784x64xf32>
    %24 = arith.addf %21, %23 : vector<784x64xf32>
    %cst_9 = arith.constant 0.000000e+00 : f32
    %25 = vector.broadcast %cst_9 : f32 to vector<784x64xf32>
    %26 = arith.maximumf %24, %25 : vector<784x64xf32>
    %c0_10 = arith.constant 0 : index
    %c0_11 = arith.constant 0 : index
    %27 = vector.load %arg3[%c0_10, %c0_11] : memref<784x64xf32, #tpu.memory_space<vmem>>, vector<784x64xf32>
    tpu.vector_store %arg3[%c0_10, %c0_11], %26 {strides = array<i32>} : memref<784x64xf32, #tpu.memory_space<vmem>>, vector<784x64xf32>,
    return
  }
}

module attributes {stable_mosaic.version = 11 : i64} {
  func.func @_phase_matvec_sigmoid_kernel(%arg0: i32, %arg1: memref<1x784x256xf32, #tpu.memory_space<vmem>>, %arg2: memref<1x1x256xf32, #tpu.memory_space<vmem>>, %arg3: memref<1x1xf32, #tpu.memory_space<vmem>>, %arg4: memref<1x784x1xf32, #tpu.memory_space<vmem>>) attributes {dimension_semantics = [#tpu.dimension_semantics<parallel>], iteration_bounds = array<i64: 4>, scalar_prefetch = 0 : i64, scratch_operands = 0 : i64, tpu.core_type = #tpu.core_type<tc>, window_params = [{transform_indices = @transform_0, window_bounds = array<i64: 1, 784, 256>}, {transform_indices = @transform_1, window_bounds = array<i64: 1, 1, 256>}, {pipeline_mode = #tpu.pipeline_mode<synchronous>, transform_indices = @transform_2, window_bounds = array<i64: 1, 1>}, {transform_indices = @transform_3, window_bounds = array<i64: 1, 784, 1>}]} {
    %c0 = arith.constant 0 : index
    %c0_0 = arith.constant 0 : index
    %c0_1 = arith.constant 0 : index
    %0 = vector.load %arg1[%c0, %c0_0, %c0_1] : memref<1x784x256xf32, #tpu.memory_space<vmem>>, vector<1x784x256xf32>
    %1 = vector.shape_cast %0 : vector<1x784x256xf32> to vector<784x256xf32>
    %c0_2 = arith.constant 0 : index
    %c0_3 = arith.constant 0 : index
    %c0_4 = arith.constant 0 : index
    %2 = vector.load %arg2[%c0_2, %c0_3, %c0_4] : memref<1x1x256xf32, #tpu.memory_space<vmem>>, vector<1x1x256xf32>
    %3 = vector.shape_cast %2 : vector<1x1x256xf32> to vector<1x256xf32>
    %4 = vector.broadcast %3 : vector<1x256xf32> to vector<784x256xf32>
    %5 = arith.mulf %1, %4 : vector<784x256xf32>
    %cst = arith.constant dense<0.000000e+00> : vector<784xf32>
    %6 = vector.multi_reduction <add>, %5, %cst [1] : vector<784x256xf32> to vector<784xf32>
    %7 = vector.shape_cast %6 : vector<784xf32> to vector<784x1xf32>
    %c0_5 = arith.constant 0 : index
    %c0_6 = arith.constant 0 : index
    %8 = vector.load %arg3[%c0_5, %c0_6] : memref<1x1xf32, #tpu.memory_space<vmem>>, vector<1x1xf32>
    %9 = vector.broadcast %8 : vector<1x1xf32> to vector<784x1xf32>
    %10 = arith.addf %7, %9 : vector<784x1xf32>
    %11 = arith.negf %10 : vector<784x1xf32>
    %12 = math.exp %11 : vector<784x1xf32>
    %cst_7 = arith.constant 1.000000e+00 : f32
    %13 = vector.broadcast %cst_7 : f32 to vector<784x1xf32>
    %14 = arith.addf %13, %12 : vector<784x1xf32>
    %15 = arith.divf %13, %14 : vector<784x1xf32>
    %c0_8 = arith.constant 0 : index
    %c0_9 = arith.constant 0 : index
    %c0_10 = arith.constant 0 : index
    %16 = vector.load %arg4[%c0_8, %c0_9, %c0_10] : memref<1x784x1xf32, #tpu.memory_space<vmem>>, vector<1x784x1xf32>
    %17 = vector.shape_cast %16 : vector<1x784x1xf32> to vector<784x1xf32>
    %18 = vector.shape_cast %15 : vector<784x1xf32> to vector<1x784x1xf32>
    tpu.vector_store %arg4[%c0_8, %c0_9, %c0_10], %18 {strides = array<i32>} : memref<1x784x1xf32, #tpu.memory_space<vmem>>, vector<1x784x1xf32>,
    return
  }
  func.func @transform_0(%arg0: i32) -> (i32, i32, i32) {
    %c0_i32 = arith.constant 0 : i32
    %c0_i32_0 = arith.constant 0 : i32
    %c0_i32_1 = arith.constant 0 : i32
    return %arg0, %c0_i32, %c0_i32_0 : i32, i32, i32
  }
  func.func @transform_1(%arg0: i32) -> (i32, i32, i32) {
    %c0_i32 = arith.constant 0 : i32
    %c0_i32_0 = arith.constant 0 : i32
    %c0_i32_1 = arith.constant 0 : i32
    return %arg0, %c0_i32, %c0_i32_0 : i32, i32, i32
  }
  func.func @transform_2(%arg0: i32) -> (i32, i32) {
    %c0_i32 = arith.constant 0 : i32
    %c0_i32_0 = arith.constant 0 : i32
    %c0_i32_1 = arith.constant 0 : i32
    return %c0_i32, %c0_i32_0 : i32, i32
  }
  func.func @transform_3(%arg0: i32) -> (i32, i32, i32) {
    %c0_i32 = arith.constant 0 : i32
    %c0_i32_0 = arith.constant 0 : i32
    %c0_i32_1 = arith.constant 0 : i32
    return %arg0, %c0_i32, %c0_i32_0 : i32, i32, i32
  }
}

</mosaic_0001>

<llo_original>
// kernel: bernoulli_decoder_forward.5
$region0: #{bernoulli_decoder_forward.5}
  #allocation0 [shape = 'u32[]', space=smem, size = 0x4, offset = 0x4, fixed_abs, tag = 'smem constant byte address 0x4 - core index']
  #allocation1 [shape = 'u32[144,128]{1,0:T(1,128)}', space=vmem, size = 0x12000, scoped, tag = 'internal scratch']
  %s0 = inlined_call_operand.vmem [shape: f32[8,128], index: 0, kind: input, shape index: {}]
  %s1 = inlined_call_operand.vmem [shape: f32[128,1024], index: 1, kind: input, shape index: {}]
  %s2 = inlined_call_operand.vmem [shape: f32[1,1024], index: 2, kind: input, shape index: {}]
  %s3 = inlined_call_operand.vmem [shape: f32[1,1024], index: 3, kind: input, shape index: {}]
  %s4 = inlined_call_operand.vmem [shape: f32[1,1024], index: 4, kind: input, shape index: {}]
  %s5 = inlined_call_operand.vmem [shape: f32[8,1024], index: 5, kind: output, shape index: {}]
  %s6 = sld [smem:[#allocation0]]
  $region30: #{bernoulli_decoder_forward.5} parent=0
    _
  %s8 = ssub.s32 1, %s6
  %s9 = scalar_select 0, %s8, %s6
  // Predicated region
  $region2: #{bernoulli_decoder_forward.5} parent=0 // pred_check
    _
  $region3: #{bernoulli_decoder_forward.5} parent=0 // pred_check_branch
    %11 = sbr.rel (0) target = $region5
  $region4: #{bernoulli_decoder_forward.5} parent=0 // pred_region
    _
  $region5: #{bernoulli_decoder_forward.5} parent=0 // pred_fallthru
    _
  // Predicated region
  $region6: #{bernoulli_decoder_forward.5} parent=0 // pred_check
    _
  $region7: #{bernoulli_decoder_forward.5} parent=0 // pred_check_branch
    %13 = sbr.rel (0) target = $region9
  $region8: #{bernoulli_decoder_forward.5} parent=0 // pred_region
    _
  $region9: #{bernoulli_decoder_forward.5} parent=0 // pred_fallthru
    _
  // Predicated region
  $region10: #{bernoulli_decoder_forward.5} parent=0 // pred_check
    _
  $region11: #{bernoulli_decoder_forward.5} parent=0 // pred_check_branch
    %15 = sbr.rel (0) target = $region13
  $region12: #{bernoulli_decoder_forward.5} parent=0 // pred_region
    _
  $region13: #{bernoulli_decoder_forward.5} parent=0 // pred_fallthru
    _
  // Predicated region
  $region14: #{bernoulli_decoder_forward.5} parent=0 // pred_check
    _
  $region15: #{bernoulli_decoder_forward.5} parent=0 // pred_check_branch
    %17 = sbr.rel (0) target = $region17
  $region16: #{bernoulli_decoder_forward.5} parent=0 // pred_region
    _
  $region17: #{bernoulli_decoder_forward.5} parent=0 // pred_fallthru
    _
  // Predicated region
  $region18: #{bernoulli_decoder_forward.5} parent=0 // pred_check
    _
  $region19: #{bernoulli_decoder_forward.5} parent=0 // pred_check_branch
    %19 = sbr.rel (0) target = $region21
  $region20: #{bernoulli_decoder_forward.5} parent=0 // pred_region
    _
  $region21: #{bernoulli_decoder_forward.5} parent=0 // pred_fallthru
    _
  %v20 = vld [vmem:[%s0] sm:$0xff]
  %v21 = vld [vmem:[%s1] sm:$0xff]
  %v22 = vld [vmem:[%s1 + $0x8] sm:$0xff]
  %v23 = vld [vmem:[%s1 + $0x10] sm:$0xff]
  %v24 = vld [vmem:[%s1 + $0x18] sm:$0xff]
  %v25 = vld [vmem:[%s1 + $0x20] sm:$0xff]
  %v26 = vld [vmem:[%s1 + $0x28] sm:$0xff]
  %v27 = vld [vmem:[%s1 + $0x30] sm:$0xff]
  %v28 = vld [vmem:[%s1 + $0x38] sm:$0xff]
  %v29 = vld [vmem:[%s1 + $0x40] sm:$0xff]
  %v30 = vld [vmem:[%s1 + $0x48] sm:$0xff]
  %v31 = vld [vmem:[%s1 + $0x50] sm:$0xff]
  %v32 = vld [vmem:[%s1 + $0x58] sm:$0xff]
  %v33 = vld [vmem:[%s1 + $0x60] sm:$0xff]
  %v34 = vld [vmem:[%s1 + $0x68] sm:$0xff]
  %v35 = vld [vmem:[%s1 + $0x70] sm:$0xff]
  %v36 = vld [vmem:[%s1 + $0x78] sm:$0xff]
  %v37 = vld [vmem:[%s1 + $0x80] sm:$0xff]
  %v38 = vld [vmem:[%s1 + $0x88] sm:$0xff]
  %v39 = vld [vmem:[%s1 + $0x90] sm:$0xff]
  %v40 = vld [vmem:[%s1 + $0x98] sm:$0xff]
  %v41 = vld [vmem:[%s1 + $0xa0] sm:$0xff]
  %v42 = vld [vmem:[%s1 + $0xa8] sm:$0xff]
  %v43 = vld [vmem:[%s1 + $0xb0] sm:$0xff]
  %v44 = vld [vmem:[%s1 + $0xb8] sm:$0xff]
  %v45 = vld [vmem:[%s1 + $0xc0] sm:$0xff]
  %v46 = vld [vmem:[%s1 + $0xc8] sm:$0xff]
  %v47 = vld [vmem:[%s1 + $0xd0] sm:$0xff]
  %v48 = vld [vmem:[%s1 + $0xd8] sm:$0xff]
  %v49 = vld [vmem:[%s1 + $0xe0] sm:$0xff]
  %v50 = vld [vmem:[%s1 + $0xe8] sm:$0xff]
  %v51 = vld [vmem:[%s1 + $0xf0] sm:$0xff]
  %v52 = vld [vmem:[%s1 + $0xf8] sm:$0xff]
  %v53 = vld [vmem:[%s1 + $0x100] sm:$0xff]
  %v54 = vld [vmem:[%s1 + $0x108] sm:$0xff]
  %v55 = vld [vmem:[%s1 + $0x110] sm:$0xff]
  %v56 = vld [vmem:[%s1 + $0x118] sm:$0xff]
  %v57 = vld [vmem:[%s1 + $0x120] sm:$0xff]
  %v58 = vld [vmem:[%s1 + $0x128] sm:$0xff]
  %v59 = vld [vmem:[%s1 + $0x130] sm:$0xff]
  %v60 = vld [vmem:[%s1 + $0x138] sm:$0xff]
  %v61 = vld [vmem:[%s1 + $0x140] sm:$0xff]
  %v62 = vld [vmem:[%s1 + $0x148] sm:$0xff]
  %v63 = vld [vmem:[%s1 + $0x150] sm:$0xff]
  %v64 = vld [vmem:[%s1 + $0x158] sm:$0xff]
  %v65 = vld [vmem:[%s1 + $0x160] sm:$0xff]
  %v66 = vld [vmem:[%s1 + $0x168] sm:$0xff]
  %v67 = vld [vmem:[%s1 + $0x170] sm:$0xff]
  %v68 = vld [vmem:[%s1 + $0x178] sm:$0xff]
  %v69 = vld [vmem:[%s1 + $0x180] sm:$0xff]
  %v70 = vld [vmem:[%s1 + $0x188] sm:$0xff]
  %v71 = vld [vmem:[%s1 + $0x190] sm:$0xff]
  %v72 = vld [vmem:[%s1 + $0x198] sm:$0xff]
  %v73 = vld [vmem:[%s1 + $0x1a0] sm:$0xff]
  %v74 = vld [vmem:[%s1 + $0x1a8] sm:$0xff]
  %v75 = vld [vmem:[%s1 + $0x1b0] sm:$0xff]
  %v76 = vld [vmem:[%s1 + $0x1b8] sm:$0xff]
  %v77 = vld [vmem:[%s1 + $0x1c0] sm:$0xff]
  %v78 = vld [vmem:[%s1 + $0x1c8] sm:$0xff]
  %v79 = vld [vmem:[%s1 + $0x1d0] sm:$0xff]
  %v80 = vld [vmem:[%s1 + $0x1d8] sm:$0xff]
  %v81 = vld [vmem:[%s1 + $0x1e0] sm:$0xff]
  %v82 = vld [vmem:[%s1 + $0x1e8] sm:$0xff]
  %v83 = vld [vmem:[%s1 + $0x1f0] sm:$0xff]
  %v84 = vld [vmem:[%s1 + $0x1f8] sm:$0xff]
  %v85 = vld [vmem:[%s1 + $0x200] sm:$0xff]
  %v86 = vld [vmem:[%s1 + $0x208] sm:$0xff]
  %v87 = vld [vmem:[%s1 + $0x210] sm:$0xff]
  %v88 = vld [vmem:[%s1 + $0x218] sm:$0xff]
  %v89 = vld [vmem:[%s1 + $0x220] sm:$0xff]
  %v90 = vld [vmem:[%s1 + $0x228] sm:$0xff]
  %v91 = vld [vmem:[%s1 + $0x230] sm:$0xff]
  %v92 = vld [vmem:[%s1 + $0x238] sm:$0xff]
  %v93 = vld [vmem:[%s1 + $0x240] sm:$0xff]
  %v94 = vld [vmem:[%s1 + $0x248] sm:$0xff]
  %v95 = vld [vmem:[%s1 + $0x250] sm:$0xff]
  %v96 = vld [vmem:[%s1 + $0x258] sm:$0xff]
  %v97 = vld [vmem:[%s1 + $0x260] sm:$0xff]
  %v98 = vld [vmem:[%s1 + $0x268] sm:$0xff]
  %v99 = vld [vmem:[%s1 + $0x270] sm:$0xff]
  %v100 = vld [vmem:[%s1 + $0x278] sm:$0xff]
  %v101 = vld [vmem:[%s1 + $0x280] sm:$0xff]
  %v102 = vld [vmem:[%s1 + $0x288] sm:$0xff]
  %v103 = vld [vmem:[%s1 + $0x290] sm:$0xff]
  %v104 = vld [vmem:[%s1 + $0x298] sm:$0xff]
  %v105 = vld [vmem:[%s1 + $0x2a0] sm:$0xff]
  %v106 = vld [vmem:[%s1 + $0x2a8] sm:$0xff]
  %v107 = vld [vmem:[%s1 + $0x2b0] sm:$0xff]
  %v108 = vld [vmem:[%s1 + $0x2b8] sm:$0xff]
  %v109 = vld [vmem:[%s1 + $0x2c0] sm:$0xff]
  %v110 = vld [vmem:[%s1 + $0x2c8] sm:$0xff]
  %v111 = vld [vmem:[%s1 + $0x2d0] sm:$0xff]
  %v112 = vld [vmem:[%s1 + $0x2d8] sm:$0xff]
  %v113 = vld [vmem:[%s1 + $0x2e0] sm:$0xff]
  %v114 = vld [vmem:[%s1 + $0x2e8] sm:$0xff]
  %v115 = vld [vmem:[%s1 + $0x2f0] sm:$0xff]
  %v116 = vld [vmem:[%s1 + $0x2f8] sm:$0xff]
  %v117 = vld [vmem:[%s1 + $0x300] sm:$0xff]
  %v118 = vld [vmem:[%s1 + $0x308] sm:$0xff]
  %v119 = vld [vmem:[%s1 + $0x310] sm:$0xff]
  %v120 = vld [vmem:[%s1 + $0x318] sm:$0xff]
  %v121 = vld [vmem:[%s1 + $0x320] sm:$0xff]
  %v122 = vld [vmem:[%s1 + $0x328] sm:$0xff]
  %v123 = vld [vmem:[%s1 + $0x330] sm:$0xff]
  %v124 = vld [vmem:[%s1 + $0x338] sm:$0xff]
  %v125 = vld [vmem:[%s1 + $0x340] sm:$0xff]
  %v126 = vld [vmem:[%s1 + $0x348] sm:$0xff]
  %v127 = vld [vmem:[%s1 + $0x350] sm:$0xff]
  %v128 = vld [vmem:[%s1 + $0x358] sm:$0xff]
  %v129 = vld [vmem:[%s1 + $0x360] sm:$0xff]
  %v130 = vld [vmem:[%s1 + $0x368] sm:$0xff]
  %v131 = vld [vmem:[%s1 + $0x370] sm:$0xff]
  %v132 = vld [vmem:[%s1 + $0x378] sm:$0xff]
  %v133 = vld [vmem:[%s1 + $0x380] sm:$0xff]
  %v134 = vld [vmem:[%s1 + $0x388] sm:$0xff]
  %v135 = vld [vmem:[%s1 + $0x390] sm:$0xff]
  %v136 = vld [vmem:[%s1 + $0x398] sm:$0xff]
  %v137 = vld [vmem:[%s1 + $0x3a0] sm:$0xff]
  %v138 = vld [vmem:[%s1 + $0x3a8] sm:$0xff]
  %v139 = vld [vmem:[%s1 + $0x3b0] sm:$0xff]
  %v140 = vld [vmem:[%s1 + $0x3b8] sm:$0xff]
  %v141 = vld [vmem:[%s1 + $0x3c0] sm:$0xff]
  %v142 = vld [vmem:[%s1 + $0x3c8] sm:$0xff]
  %v143 = vld [vmem:[%s1 + $0x3d0] sm:$0xff]
  %v144 = vld [vmem:[%s1 + $0x3d8] sm:$0xff]
  %v145 = vld [vmem:[%s1 + $0x3e0] sm:$0xff]
  %v146 = vld [vmem:[%s1 + $0x3e8] sm:$0xff]
  %v147 = vld [vmem:[%s1 + $0x3f0] sm:$0xff]
  %v148 = vld [vmem:[%s1 + $0x3f8] sm:$0xff]
  %v149 = vld [vmem:[%s2] sm:$0xff]
  %v151 = vlaneseq
  %v152 = vshrl.u32 %v151, 7
  %v153 = vsub.s32 0, %v152
  %v154 = vrot.slane %v149, %v153
  %v155 = vlaneseq
  %v156 = vshrl.u32 %v155, 7
  %v157 = vsub.s32 1, %v156
  %v158 = vrot.slane %v149, %v157
  %v159 = vlaneseq
  %v160 = vshrl.u32 %v159, 7
  %v161 = vsub.s32 2, %v160
  %v162 = vrot.slane %v149, %v161
  %v163 = vlaneseq
  %v164 = vshrl.u32 %v163, 7
  %v165 = vsub.s32 3, %v164
  %v166 = vrot.slane %v149, %v165
  %v167 = vlaneseq
  %v168 = vshrl.u32 %v167, 7
  %v169 = vsub.s32 4, %v168
  %v170 = vrot.slane %v149, %v169
  %v171 = vlaneseq
  %v172 = vshrl.u32 %v171, 7
  %v173 = vsub.s32 5, %v172
  %v174 = vrot.slane %v149, %v173
  %v175 = vlaneseq
  %v176 = vshrl.u32 %v175, 7
  %v177 = vsub.s32 6, %v176
  %v178 = vrot.slane %v149, %v177
  %v179 = vlaneseq
  %v180 = vshrl.u32 %v179, 7
  %v181 = vsub.s32 7, %v180
  %v182 = vrot.slane %v149, %v181
  %191 = vmatprep.subr.mxu0 %v22
  %192 = vmatpush1.msra.mxu0 %v21
  %193 = vmatprep.subr.mxu0 %v30
  %194 = vmatpush1.msra.mxu0 %v29
  %195 = vmatprep.subr.mxu0 %v38
  %196 = vmatpush1.msra.mxu0 %v37
  %197 = vmatprep.subr.mxu0 %v46
  %198 = vmatpush1.msra.mxu0 %v45
  %199 = vmatprep.subr.mxu0 %v54
  %200 = vmatpush1.msra.mxu0 %v53
  %201 = vmatprep.subr.mxu0 %v62
  %202 = vmatpush1.msra.mxu0 %v61
  %203 = vmatprep.subr.mxu0 %v70
  %204 = vmatpush1.msra.mxu0 %v69
  %205 = vmatprep.subr.mxu0 %v78
  %206 = vmatpush1.msra.mxu0 %v77
  %207 = vmatprep.subr.mxu0 %v86
  %208 = vmatpush1.msra.mxu0 %v85
  %209 = vmatprep.subr.mxu0 %v94
  %210 = vmatpush1.msra.mxu0 %v93
  %211 = vmatprep.subr.mxu0 %v102
  %212 = vmatpush1.msra.mxu0 %v101
  %213 = vmatprep.subr.mxu0 %v110
  %214 = vmatpush1.msra.mxu0 %v109
  %215 = vmatprep.subr.mxu0 %v118
  %216 = vmatpush1.msra.mxu0 %v117
  %217 = vmatprep.subr.mxu0 %v126
  %218 = vmatpush1.msra.mxu0 %v125
  %219 = vmatprep.subr.mxu0 %v134
  %220 = vmatpush1.msra.mxu0 %v133
  %221 = vmatprep.subr.mxu0 %v142
  %222 = vmatpush1.msra.mxu0 %v141
  %223 = vmatprep.subr.mxu0 0.0
  %224 = vmatpush1.msra.mxu0 0.0
  %225 = vmatprep.subr.mxu0 0.0
  %226 = vmatpush1.msra.mxu0 0.0
  %227 = vmatprep.subr.mxu0 0.0
  %228 = vmatpush1.msra.mxu0 0.0
  %229 = vmatprep.subr.mxu0 0.0
  %230 = vmatpush1.msra.mxu0 0.0
  %231 = vmatprep.subr.mxu0 0.0
  %232 = vmatpush1.msra.mxu0 0.0
  %233 = vmatprep.subr.mxu0 0.0
  %234 = vmatpush1.msra.mxu0 0.0
  %235 = vmatprep.subr.mxu0 0.0
  %236 = vmatpush1.msra.mxu0 0.0
  %237 = vmatprep.subr.mxu0 0.0
  %238 = vmatpush1.msra.mxu0 0.0
  %239 = vmatprep.subr.mxu0 0.0
  %240 = vmatpush1.msra.mxu0 0.0
  %241 = vmatprep.subr.mxu0 0.0
  %242 = vmatpush1.msra.mxu0 0.0
  %243 = vmatprep.subr.mxu0 0.0
  %244 = vmatpush1.msra.mxu0 0.0
  %245 = vmatprep.subr.mxu0 0.0
  %246 = vmatpush1.msra.mxu0 0.0
  %247 = vmatprep.subr.mxu0 0.0
  %248 = vmatpush1.msra.mxu0 0.0
  %249 = vmatprep.subr.mxu0 0.0
  %250 = vmatpush1.msra.mxu0 0.0
  %251 = vmatprep.subr.mxu0 0.0
  %252 = vmatpush1.msra.mxu0 0.0
  %253 = vmatprep.subr.mxu0 0.0
  %254 = vmatpush1.msra.mxu0 0.0
  %255 = vmatprep.mubr.f32.mxu0 0.0
  %256 = vmatmul.mubr.f32.gmra.mrb[0].mxu0 %v20
  %v257 = vpop.f32.mrb[0].mxu0
  %v258 = vadd.f32 %v154, %v257
  %v259 = vpop.f32.mrb[0].mxu0
  %v260 = vadd.f32 %v158, %v259
  %261 = vdwg.mxu0
  %262 = vmatprep.subr.mxu0 %v24
  %263 = vmatpush1.msra.mxu0 %v23
  %264 = vmatprep.subr.mxu0 %v32
  %265 = vmatpush1.msra.mxu0 %v31
  %266 = vmatprep.subr.mxu0 %v40
  %267 = vmatpush1.msra.mxu0 %v39
  %268 = vmatprep.subr.mxu0 %v48
  %269 = vmatpush1.msra.mxu0 %v47
  %270 = vmatprep.subr.mxu0 %v56
  %271 = vmatpush1.msra.mxu0 %v55
  %272 = vmatprep.subr.mxu0 %v64
  %273 = vmatpush1.msra.mxu0 %v63
  %274 = vmatprep.subr.mxu0 %v72
  %275 = vmatpush1.msra.mxu0 %v71
  %276 = vmatprep.subr.mxu0 %v80
  %277 = vmatpush1.msra.mxu0 %v79
  %278 = vmatprep.subr.mxu0 %v88
  %279 = vmatpush1.msra.mxu0 %v87
  %280 = vmatprep.subr.mxu0 %v96
  %281 = vmatpush1.msra.mxu0 %v95
  %282 = vmatprep.subr.mxu0 %v104
  %283 = vmatpush1.msra.mxu0 %v103
  %284 = vmatprep.subr.mxu0 %v112
  %285 = vmatpush1.msra.mxu0 %v111
  %286 = vmatprep.subr.mxu0 %v120
  %287 = vmatpush1.msra.mxu0 %v119
  %288 = vmatprep.subr.mxu0 %v128
  %289 = vmatpush1.msra.mxu0 %v127
  %290 = vmatprep.subr.mxu0 %v136
  %291 = vmatpush1.msra.mxu0 %v135
  %292 = vmatprep.subr.mxu0 %v144
  %293 = vmatpush1.msra.mxu0 %v143
  %294 = vmatprep.subr.mxu0 0.0
  %295 = vmatpush1.msra.mxu0 0.0
  %296 = vmatprep.subr.mxu0 0.0
  %297 = vmatpush1.msra.mxu0 0.0
  %298 = vmatprep.subr.mxu0 0.0
  %299 = vmatpush1.msra.mxu0 0.0
  %300 = vmatprep.subr.mxu0 0.0
  %301 = vmatpush1.msra.mxu0 0.0
  %302 = vmatprep.subr.mxu0 0.0
  %303 = vmatpush1.msra.mxu0 0.0
  %304 = vmatprep.subr.mxu0 0.0
  %305 = vmatpush1.msra.mxu0 0.0
  %306 = vmatprep.subr.mxu0 0.0
  %307 = vmatpush1.msra.mxu0 0.0
  %308 = vmatprep.subr.mxu0 0.0
  %309 = vmatpush1.msra.mxu0 0.0
  %310 = vmatprep.subr.mxu0 0.0
  %311 = vmatpush1.msra.mxu0 0.0
  %312 = vmatprep.subr.mxu0 0.0
  %313 = vmatpush1.msra.mxu0 0.0
  %314 = vmatprep.subr.mxu0 0.0
  %315 = vmatpush1.msra.mxu0 0.0
  %316 = vmatprep.subr.mxu0 0.0
  %317 = vmatpush1.msra.mxu0 0.0
  %318 = vmatprep.subr.mxu0 0.0
  %319 = vmatpush1.msra.mxu0 0.0
  %320 = vmatprep.subr.mxu0 0.0
  %321 = vmatpush1.msra.mxu0 0.0
  %322 = vmatprep.subr.mxu0 0.0
  %323 = vmatpush1.msra.mxu0 0.0
  %324 = vmatprep.subr.mxu0 0.0
  %325 = vmatpush1.msra.mxu0 0.0
  %326 = vmatprep.mubr.f32.mxu0 0.0
  %327 = vmatmul.mubr.f32.gmra.mrb[0].mxu0 %v20
  %v328 = vpop.f32.mrb[0].mxu0
  %v329 = vadd.f32 %v162, %v328
  %v330 = vpop.f32.mrb[0].mxu0
  %v331 = vadd.f32 %v166, %v330
  %332 = vdwg.mxu0
  %333 = vmatprep.subr.mxu0 %v26
  %334 = vmatpush1.msra.mxu0 %v25
  %335 = vmatprep.subr.mxu0 %v34
  %336 = vmatpush1.msra.mxu0 %v33
  %337 = vmatprep.subr.mxu0 %v42
  %338 = vmatpush1.msra.mxu0 %v41
  %339 = vmatprep.subr.mxu0 %v50
  %340 = vmatpush1.msra.mxu0 %v49
  %341 = vmatprep.subr.mxu0 %v58
  %342 = vmatpush1.msra.mxu0 %v57
  %343 = vmatprep.subr.mxu0 %v66
  %344 = vmatpush1.msra.mxu0 %v65
  %345 = vmatprep.subr.mxu0 %v74
  %346 = vmatpush1.msra.mxu0 %v73
  %347 = vmatprep.subr.mxu0 %v82
  %348 = vmatpush1.msra.mxu0 %v81
  %349 = vmatprep.subr.mxu0 %v90
  %350 = vmatpush1.msra.mxu0 %v89
  %351 = vmatprep.subr.mxu0 %v98
  %352 = vmatpush1.msra.mxu0 %v97
  %353 = vmatprep.subr.mxu0 %v106
  %354 = vmatpush1.msra.mxu0 %v105
  %355 = vmatprep.subr.mxu0 %v114
  %356 = vmatpush1.msra.mxu0 %v113
  %357 = vmatprep.subr.mxu0 %v122
  %358 = vmatpush1.msra.mxu0 %v121
  %359 = vmatprep.subr.mxu0 %v130
  %360 = vmatpush1.msra.mxu0 %v129
  %361 = vmatprep.subr.mxu0 %v138
  %362 = vmatpush1.msra.mxu0 %v137
  %363 = vmatprep.subr.mxu0 %v146
  %364 = vmatpush1.msra.mxu0 %v145
  %365 = vmatprep.subr.mxu0 0.0
  %366 = vmatpush1.msra.mxu0 0.0
  %367 = vmatprep.subr.mxu0 0.0
  %368 = vmatpush1.msra.mxu0 0.0
  %369 = vmatprep.subr.mxu0 0.0
  %370 = vmatpush1.msra.mxu0 0.0
  %371 = vmatprep.subr.mxu0 0.0
  %372 = vmatpush1.msra.mxu0 0.0
  %373 = vmatprep.subr.mxu0 0.0
  %374 = vmatpush1.msra.mxu0 0.0
  %375 = vmatprep.subr.mxu0 0.0
  %376 = vmatpush1.msra.mxu0 0.0
  %377 = vmatprep.subr.mxu0 0.0
  %378 = vmatpush1.msra.mxu0 0.0
  %379 = vmatprep.subr.mxu0 0.0
  %380 = vmatpush1.msra.mxu0 0.0
  %381 = vmatprep.subr.mxu0 0.0
  %382 = vmatpush1.msra.mxu0 0.0
  %383 = vmatprep.subr.mxu0 0.0
  %384 = vmatpush1.msra.mxu0 0.0
  %385 = vmatprep.subr.mxu0 0.0
  %386 = vmatpush1.msra.mxu0 0.0
  %387 = vmatprep.subr.mxu0 0.0
  %388 = vmatpush1.msra.mxu0 0.0
  %389 = vmatprep.subr.mxu0 0.0
  %390 = vmatpush1.msra.mxu0 0.0
  %391 = vmatprep.subr.mxu0 0.0
  %392 = vmatpush1.msra.mxu0 0.0
  %393 = vmatprep.subr.mxu0 0.0
  %394 = vmatpush1.msra.mxu0 0.0
  %395 = vmatprep.subr.mxu0 0.0
  %396 = vmatpush1.msra.mxu0 0.0
  %397 = vmatprep.mubr.f32.mxu0 0.0
  %398 = vmatmul.mubr.f32.gmra.mrb[0].mxu0 %v20
  %v399 = vpop.f32.mrb[0].mxu0
  %v400 = vadd.f32 %v170, %v399
  %v401 = vpop.f32.mrb[0].mxu0
  %v402 = vadd.f32 %v174, %v401
  %403 = vdwg.mxu0
  %404 = vmatprep.subr.mxu0 %v28
  %405 = vmatpush1.msra.mxu0 %v27
  %406 = vmatprep.subr.mxu0 %v36
  %407 = vmatpush1.msra.mxu0 %v35
  %408 = vmatprep.subr.mxu0 %v44
  %409 = vmatpush1.msra.mxu0 %v43
  %410 = vmatprep.subr.mxu0 %v52
  %411 = vmatpush1.msra.mxu0 %v51
  %412 = vmatprep.subr.mxu0 %v60
  %413 = vmatpush1.msra.mxu0 %v59
  %414 = vmatprep.subr.mxu0 %v68
  %415 = vmatpush1.msra.mxu0 %v67
  %416 = vmatprep.subr.mxu0 %v76
  %417 = vmatpush1.msra.mxu0 %v75
  %418 = vmatprep.subr.mxu0 %v84
  %419 = vmatpush1.msra.mxu0 %v83
  %420 = vmatprep.subr.mxu0 %v92
  %421 = vmatpush1.msra.mxu0 %v91
  %422 = vmatprep.subr.mxu0 %v100
  %423 = vmatpush1.msra.mxu0 %v99
  %424 = vmatprep.subr.mxu0 %v108
  %425 = vmatpush1.msra.mxu0 %v107
  %426 = vmatprep.subr.mxu0 %v116
  %427 = vmatpush1.msra.mxu0 %v115
  %428 = vmatprep.subr.mxu0 %v124
  %429 = vmatpush1.msra.mxu0 %v123
  %430 = vmatprep.subr.mxu0 %v132
  %431 = vmatpush1.msra.mxu0 %v131
  %432 = vmatprep.subr.mxu0 %v140
  %433 = vmatpush1.msra.mxu0 %v139
  %434 = vmatprep.subr.mxu0 %v148
  %435 = vmatpush1.msra.mxu0 %v147
  %436 = vmatprep.subr.mxu0 0.0
  %437 = vmatpush1.msra.mxu0 0.0
  %438 = vmatprep.subr.mxu0 0.0
  %439 = vmatpush1.msra.mxu0 0.0
  %440 = vmatprep.subr.mxu0 0.0
  %441 = vmatpush1.msra.mxu0 0.0
  %442 = vmatprep.subr.mxu0 0.0
  %443 = vmatpush1.msra.mxu0 0.0
  %444 = vmatprep.subr.mxu0 0.0
  %445 = vmatpush1.msra.mxu0 0.0
  %446 = vmatprep.subr.mxu0 0.0
  %447 = vmatpush1.msra.mxu0 0.0
  %448 = vmatprep.subr.mxu0 0.0
  %449 = vmatpush1.msra.mxu0 0.0
  %450 = vmatprep.subr.mxu0 0.0
  %451 = vmatpush1.msra.mxu0 0.0
  %452 = vmatprep.subr.mxu0 0.0
  %453 = vmatpush1.msra.mxu0 0.0
  %454 = vmatprep.subr.mxu0 0.0
  %455 = vmatpush1.msra.mxu0 0.0
  %456 = vmatprep.subr.mxu0 0.0
  %457 = vmatpush1.msra.mxu0 0.0
  %458 = vmatprep.subr.mxu0 0.0
  %459 = vmatpush1.msra.mxu0 0.0
  %460 = vmatprep.subr.mxu0 0.0
  %461 = vmatpush1.msra.mxu0 0.0
  %462 = vmatprep.subr.mxu0 0.0
  %463 = vmatpush1.msra.mxu0 0.0
  %464 = vmatprep.subr.mxu0 0.0
  %465 = vmatpush1.msra.mxu0 0.0
  %466 = vmatprep.subr.mxu0 0.0
  %467 = vmatpush1.msra.mxu0 0.0
  %468 = vmatprep.mubr.f32.mxu0 0.0
  %469 = vmatmul.mubr.f32.gmra.mrb[0].mxu0 %v20
  %v470 = vpop.f32.mrb[0].mxu0
  %v471 = vadd.f32 %v178, %v470
  %v472 = vpop.f32.mrb[0].mxu0
  %v473 = vadd.f32 %v182, %v472
  %474 = vdwg.mxu0
  %v475 = vlaneseq
  %v476 = vshrl.u32 %v475, 7
  %vm477 = vcmp.lt.s32.totalorder %v476, 4
  %v478 = vsel %vm477, %v258, 0.0
  %v479 = vsel %vm477, %v260, 0.0
  %v480 = vsel %vm477, %v329, 0.0
  %v481 = vsel %vm477, %v331, 0.0
  %v482 = vsel %vm477, %v400, 0.0
  %v483 = vsel %vm477, %v402, 0.0
  %v484 = vsel %vm477, %v471, 0.0
  %v485 = vsel %vm477, %v473, 0.0
  %v486 = vrot.slane %v478, 4
  %v487 = vadd.f32 %v478, %v486
  %v488 = vrot.slane %v487, 2
  %v489 = vadd.f32 %v487, %v488
  %v490 = vrot.slane %v489, 1
  %v491 = vadd.f32 %v489, %v490
  %v492 = vrot.slane %v479, 4
  %v493 = vadd.f32 %v479, %v492
  %v494 = vrot.slane %v493, 2
  %v495 = vadd.f32 %v493, %v494
  %v496 = vrot.slane %v495, 1
  %v497 = vadd.f32 %v495, %v496
  %v498 = vrot.slane %v480, 4
  %v499 = vadd.f32 %v480, %v498
  %v500 = vrot.slane %v499, 2
  %v501 = vadd.f32 %v499, %v500
  %v502 = vrot.slane %v501, 1
  %v503 = vadd.f32 %v501, %v502
  %v504 = vrot.slane %v481, 4
  %v505 = vadd.f32 %v481, %v504
  %v506 = vrot.slane %v505, 2
  %v507 = vadd.f32 %v505, %v506
  %v508 = vrot.slane %v507, 1
  %v509 = vadd.f32 %v507, %v508
  %v510 = vrot.slane %v482, 4
  %v511 = vadd.f32 %v482, %v510
  %v512 = vrot.slane %v511, 2
  %v513 = vadd.f32 %v511, %v512
  %v514 = vrot.slane %v513, 1
  %v515 = vadd.f32 %v513, %v514
  %v516 = vrot.slane %v483, 4
  %v517 = vadd.f32 %v483, %v516
  %v518 = vrot.slane %v517, 2
  %v519 = vadd.f32 %v517, %v518
  %v520 = vrot.slane %v519, 1
  %v521 = vadd.f32 %v519, %v520
  %v522 = vrot.slane %v484, 4
  %v523 = vadd.f32 %v484, %v522
  %v524 = vrot.slane %v523, 2
  %v525 = vadd.f32 %v523, %v524
  %v526 = vrot.slane %v525, 1
  %v527 = vadd.f32 %v525, %v526
  %v528 = vrot.slane %v485, 4
  %v529 = vadd.f32 %v485, %v528
  %v530 = vrot.slane %v529, 2
  %v531 = vadd.f32 %v529, %v530
  %v532 = vrot.slane %v531, 1
  %v533 = vadd.f32 %v531, %v532
  %v534 = vmul.f32 %v491, 0.25
  %v535 = vmul.f32 %v497, 0.25
  %v536 = vmul.f32 %v503, 0.25
  %v537 = vmul.f32 %v509, 0.25
  %v538 = vmul.f32 %v515, 0.25
  %v539 = vmul.f32 %v521, 0.25
  %v540 = vmul.f32 %v527, 0.25
  %v541 = vmul.f32 %v533, 0.25
  %v542 = vsub.f32 %v258, %v534
  %v543 = vsub.f32 %v260, %v535
  %v544 = vsub.f32 %v329, %v536
  %v545 = vsub.f32 %v331, %v537
  %v546 = vsub.f32 %v400, %v538
  %v547 = vsub.f32 %v402, %v539
  %v548 = vsub.f32 %v471, %v540
  %v549 = vsub.f32 %v473, %v541
  %v550 = vsel %vm477, %v542, 0.0
  %v551 = vsel %vm477, %v543, 0.0
  %v552 = vsel %vm477, %v544, 0.0
  %v553 = vsel %vm477, %v545, 0.0
  %v554 = vsel %vm477, %v546, 0.0
  %v555 = vsel %vm477, %v547, 0.0
  %v556 = vsel %vm477, %v548, 0.0
  %v557 = vsel %vm477, %v549, 0.0
  %v558 = vmul.f32 %v550, %v550
  %v559 = vmul.f32 %v551, %v551
  %v560 = vmul.f32 %v552, %v552
  %v561 = vmul.f32 %v553, %v553
  %v562 = vmul.f32 %v554, %v554
  %v563 = vmul.f32 %v555, %v555
  %v564 = vmul.f32 %v556, %v556
  %v565 = vmul.f32 %v557, %v557
  %v566 = vrot.slane %v558, 4
  %v567 = vadd.f32 %v558, %v566
  %v568 = vrot.slane %v567, 2
  %v569 = vadd.f32 %v567, %v568
  %v570 = vrot.slane %v569, 1
  %v571 = vadd.f32 %v569, %v570
  %v572 = vrot.slane %v559, 4
  %v573 = vadd.f32 %v559, %v572
  %v574 = vrot.slane %v573, 2
  %v575 = vadd.f32 %v573, %v574
  %v576 = vrot.slane %v575, 1
  %v577 = vadd.f32 %v575, %v576
  %v578 = vrot.slane %v560, 4
  %v579 = vadd.f32 %v560, %v578
  %v580 = vrot.slane %v579, 2
  %v581 = vadd.f32 %v579, %v580
  %v582 = vrot.slane %v581, 1
  %v583 = vadd.f32 %v581, %v582
  %v584 = vrot.slane %v561, 4
  %v585 = vadd.f32 %v561, %v584
  %v586 = vrot.slane %v585, 2
  %v587 = vadd.f32 %v585, %v586
  %v588 = vrot.slane %v587, 1
  %v589 = vadd.f32 %v587, %v588
  %v590 = vrot.slane %v562, 4
  %v591 = vadd.f32 %v562, %v590
  %v592 = vrot.slane %v591, 2
  %v593 = vadd.f32 %v591, %v592
  %v594 = vrot.slane %v593, 1
  %v595 = vadd.f32 %v593, %v594
  %v596 = vrot.slane %v563, 4
  %v597 = vadd.f32 %v563, %v596
  %v598 = vrot.slane %v597, 2
  %v599 = vadd.f32 %v597, %v598
  %v600 = vrot.slane %v599, 1
  %v601 = vadd.f32 %v599, %v600
  %v602 = vrot.slane %v564, 4
  %v603 = vadd.f32 %v564, %v602
  %v604 = vrot.slane %v603, 2
  %v605 = vadd.f32 %v603, %v604
  %v606 = vrot.slane %v605, 1
  %v607 = vadd.f32 %v605, %v606
  %v608 = vrot.slane %v565, 4
  %v609 = vadd.f32 %v565, %v608
  %v610 = vrot.slane %v609, 2
  %v611 = vadd.f32 %v609, %v610
  %v612 = vrot.slane %v611, 1
  %v613 = vadd.f32 %v611, %v612
  %v614 = vmul.f32 %v571, 0.25
  %v615 = vmul.f32 %v577, 0.25
  %v616 = vmul.f32 %v583, 0.25
  %v617 = vmul.f32 %v589, 0.25
  %v618 = vmul.f32 %v595, 0.25
  %v619 = vmul.f32 %v601, 0.25
  %v620 = vmul.f32 %v607, 0.25
  %v621 = vmul.f32 %v613, 0.25
  %v622 = vadd.f32 %v614, 1e-05
  %v623 = vadd.f32 %v615, 1e-05
  %v624 = vadd.f32 %v616, 1e-05
  %v625 = vadd.f32 %v617, 1e-05
  %v626 = vadd.f32 %v618, 1e-05
  %v627 = vadd.f32 %v619, 1e-05
  %v628 = vadd.f32 %v620, 1e-05
  %v629 = vadd.f32 %v621, 1e-05
  %v630 = vrsqrt.pop %v622
  %v631 = vrsqrt.pop %v623
  %v632 = vrsqrt.pop %v624
  %v633 = vrsqrt.pop %v625
  %v634 = vrsqrt.pop %v626
  %v635 = vrsqrt.pop %v627
  %v636 = vrsqrt.pop %v628
  %v637 = vrsqrt.pop %v629
  %v638 = vmul.f32 %v542, %v630
  %v639 = vmul.f32 %v543, %v631
  %v640 = vmul.f32 %v544, %v632
  %v641 = vmul.f32 %v545, %v633
  %v642 = vmul.f32 %v546, %v634
  %v643 = vmul.f32 %v547, %v635
  %v644 = vmul.f32 %v548, %v636
  %v645 = vmul.f32 %v549, %v637
  %v646 = vld [vmem:[%s3] sm:$0xff]
  %v648 = vlaneseq
  %v649 = vshrl.u32 %v648, 7
  %v650 = vsub.s32 0, %v649
  %v651 = vrot.slane %v646, %v650
  %v652 = vlaneseq
  %v653 = vshrl.u32 %v652, 7
  %v654 = vsub.s32 1, %v653
  %v655 = vrot.slane %v646, %v654
  %v656 = vlaneseq
  %v657 = vshrl.u32 %v656, 7
  %v658 = vsub.s32 2, %v657
  %v659 = vrot.slane %v646, %v658
  %v660 = vlaneseq
  %v661 = vshrl.u32 %v660, 7
  %v662 = vsub.s32 3, %v661
  %v663 = vrot.slane %v646, %v662
  %v664 = vlaneseq
  %v665 = vshrl.u32 %v664, 7
  %v666 = vsub.s32 4, %v665
  %v667 = vrot.slane %v646, %v666
  %v668 = vlaneseq
  %v669 = vshrl.u32 %v668, 7
  %v670 = vsub.s32 5, %v669
  %v671 = vrot.slane %v646, %v670
  %v672 = vlaneseq
  %v673 = vshrl.u32 %v672, 7
  %v674 = vsub.s32 6, %v673
  %v675 = vrot.slane %v646, %v674
  %v676 = vlaneseq
  %v677 = vshrl.u32 %v676, 7
  %v678 = vsub.s32 7, %v677
  %v679 = vrot.slane %v646, %v678
  %v688 = vmul.f32 %v638, %v651
  %v689 = vmul.f32 %v639, %v655
  %v690 = vmul.f32 %v640, %v659
  %v691 = vmul.f32 %v641, %v663
  %v692 = vmul.f32 %v642, %v667
  %v693 = vmul.f32 %v643, %v671
  %v694 = vmul.f32 %v644, %v675
  %v695 = vmul.f32 %v645, %v679
  %v696 = vld [vmem:[%s4] sm:$0xff]
  %v698 = vlaneseq
  %v699 = vshrl.u32 %v698, 7
  %v700 = vsub.s32 0, %v699
  %v701 = vrot.slane %v696, %v700
  %v702 = vlaneseq
  %v703 = vshrl.u32 %v702, 7
  %v704 = vsub.s32 1, %v703
  %v705 = vrot.slane %v696, %v704
  %v706 = vlaneseq
  %v707 = vshrl.u32 %v706, 7
  %v708 = vsub.s32 2, %v707
  %v709 = vrot.slane %v696, %v708
  %v710 = vlaneseq
  %v711 = vshrl.u32 %v710, 7
  %v712 = vsub.s32 3, %v711
  %v713 = vrot.slane %v696, %v712
  %v714 = vlaneseq
  %v715 = vshrl.u32 %v714, 7
  %v716 = vsub.s32 4, %v715
  %v717 = vrot.slane %v696, %v716
  %v718 = vlaneseq
  %v719 = vshrl.u32 %v718, 7
  %v720 = vsub.s32 5, %v719
  %v721 = vrot.slane %v696, %v720
  %v722 = vlaneseq
  %v723 = vshrl.u32 %v722, 7
  %v724 = vsub.s32 6, %v723
  %v725 = vrot.slane %v696, %v724
  %v726 = vlaneseq
  %v727 = vshrl.u32 %v726, 7
  %v728 = vsub.s32 7, %v727
  %v729 = vrot.slane %v696, %v728
  %v738 = vadd.f32 %v688, %v701
  %v739 = vadd.f32 %v689, %v705
  %v740 = vadd.f32 %v690, %v709
  %v741 = vadd.f32 %v691, %v713
  %v742 = vadd.f32 %v692, %v717
  %v743 = vadd.f32 %v693, %v721
  %v744 = vadd.f32 %v694, %v725
  %v745 = vadd.f32 %v695, %v729
  %v746 = vmax.f32 %v738, 0.0
  %v747 = vmax.f32 %v739, 0.0
  %v748 = vmax.f32 %v740, 0.0
  %v749 = vmax.f32 %v741, 0.0
  %v750 = vmax.f32 %v742, 0.0
  %v751 = vmax.f32 %v743, 0.0
  %v752 = vmax.f32 %v744, 0.0
  %v753 = vmax.f32 %v745, 0.0
  %754 = vst [vmem:[%s5] sm:$0xff] %v746
  %755 = vst [vmem:[%s5 + $0x8] sm:$0xff] %v747
  %756 = vst [vmem:[%s5 + $0x10] sm:$0xff] %v748
  %757 = vst [vmem:[%s5 + $0x18] sm:$0xff] %v749
  %758 = vst [vmem:[%s5 + $0x20] sm:$0xff] %v750
  %759 = vst [vmem:[%s5 + $0x28] sm:$0xff] %v751
  %760 = vst [vmem:[%s5 + $0x30] sm:$0xff] %v752
  %761 = vst [vmem:[%s5 + $0x38] sm:$0xff] %v753
  // Predicated region
  $region22: #{bernoulli_decoder_forward.5} parent=0 // pred_check
    _
  $region23: #{bernoulli_decoder_forward.5} parent=0 // pred_check_branch
    %763 = sbr.rel (0) target = $region25
  $region24: #{bernoulli_decoder_forward.5} parent=0 // pred_region
    _
  $region25: #{bernoulli_decoder_forward.5} parent=0 // pred_fallthru
    _
  // Predicated region
  $region26: #{bernoulli_decoder_forward.5} parent=0 // pred_check
    _
  $region27: #{bernoulli_decoder_forward.5} parent=0 // pred_check_branch
    %765 = sbr.rel (0) target = $region29
  $region28: #{bernoulli_decoder_forward.5} parent=0 // pred_region
    _
  $region29: #{bernoulli_decoder_forward.5} parent=0 // pred_fallthru
    _

// kernel: bernoulli_decoder_forward.6
$region0: #{bernoulli_decoder_forward.6}
  #allocation0 [shape = 'u32[]', space=smem, size = 0x4, offset = 0x4, fixed_abs, tag = 'smem constant byte address 0x4 - core index']
  #allocation1 [shape = 'u32[144,128]{1,0:T(1,128)}', space=vmem, size = 0x12000, scoped, tag = 'internal scratch']
  %s0 = inlined_call_operand.vmem [shape: bf16[8,1024], index: 0, kind: input, shape index: {}]
  %s1 = inlined_call_operand.vmem [shape: bf16[1024,6272], index: 1, kind: input, shape index: {}]
  %s2 = inlined_call_operand.vmem [shape: f32[1,6272], index: 2, kind: input, shape index: {}]
  %s3 = inlined_call_operand.vmem [shape: f32[1,6272], index: 3, kind: input, shape index: {}]
  %s4 = inlined_call_operand.vmem [shape: f32[1,6272], index: 4, kind: input, shape index: {}]
  %s5 = inlined_call_operand.vmem [shape: f32[8,6272], index: 5, kind: output, shape index: {}]
  %s6 = sld [smem:[#allocation0]]
  $region79: #{bernoulli_decoder_forward.6} parent=0
    _
  %s8 = ssub.s32 1, %s6
  %s9 = scalar_select 0, %s8, %s6
  $region1: #{bernoulli_decoder_forward.6} parent=0
    #allocation2 [shape = 'u8[3670016]{0}', space=vmem, size = 0x380000, scoped, tag = 'input window, operand 1']
    loop: start=0, step=1, limit=9
    $region2: #{bernoulli_decoder_forward.6} parent=1 // loop_pre_header
      _
    $region3: #{bernoulli_decoder_forward.6} parent=1 // loop_header
      %s11 = sphi 0, %s15
      %p12 = scmp.ge.s32.totalorder %s11, 9
      %s19 = sphi 0, %s19
      %s21 = sphi 0, %s19
      %s22 = sphi 0, %s21
      %s36 = sphi 0, %s22
      %s42 = sphi 0, %s44
      %s45 = sphi 0, %s42
      %s46 = sphi 0, %s45
      %s62 = sphi 0, %s46
      %s68 = sphi 0, %s70
      %s71 = sphi 0, %s68
      %s72 = sphi 0, %s71
      %s88 = sphi 0, %s72
      %s94 = sphi 0, %s96
      %s97 = sphi 0, %s94
      %s98 = sphi 0, %s97
      %s114 = sphi 0, %s98
      %s120 = sphi 0, %s122
      %s123 = sphi 0, %s120
      %s124 = sphi 0, %s123
      %s140 = sphi 0, %s124
      %s146 = sphi 0, %s148
      %s149 = sphi 0, %s146
      %s150 = sphi 0, %s149
      %s166 = sphi 0, %s150
    $region4: #{bernoulli_decoder_forward.6} parent=1 // loop_header_branch
      %14 = sbr.rel (%p12) target = $region8
    $region5: #{bernoulli_decoder_forward.6} parent=1 // loop_body
      %s16 = ssub.s32 %s11, 1
      %s17 = ssub.s32 %s11, 2
      %s18 = sadd.s32 %s11, 1
      %s20 = sadd.s32 %s19, 1
      %p23 = scmp.eq.s32.totalorder %s11, 6
      %p24 = scmp.ne.s32.totalorder %s19, %s21
      %p25 = scmp.eq.s32.totalorder %s11, 0
      %p26 = por %p24, %p25
      %p27 = scmp.ne.s32.totalorder %s19, %s21
      %p28 = scmp.eq.s32.totalorder %s16, 6
      %p29 = por %p27, %p28
      %p30 = scmp.ne.s32.totalorder %s21, %s22
      %p31 = scmp.eq.s32.totalorder %s16, 0
      %p32 = por %p30, %p31
      %p33 = scmp.ne.s32.totalorder %s21, %s22
      %p34 = scmp.eq.s32.totalorder %s17, 6
      %p35 = por %p33, %p34
      %p37 = scmp.ne.s32.totalorder %s22, %s36
      %p38 = scmp.eq.s32.totalorder %s17, 0
      %p39 = por %p37, %p38
      %s40 = ssub.s32 %s11, %s18
      %p41 = scmp.eq.s32.totalorder %s40, 0
      %s43 = sadd.s32 %s42, 1
      %s44 = scalar_select %p41, %s42, %s43
      %p47 = pneg %p41
      %p48 = scmp.eq.s32.totalorder %s11, 6
      %p49 = por %p47, %p48
      %p50 = scmp.ne.s32.totalorder %s42, %s45
      %p51 = scmp.eq.s32.totalorder %s11, 0
      %p52 = por %p50, %p51
      %p53 = scmp.ne.s32.totalorder %s42, %s45
      %p54 = scmp.eq.s32.totalorder %s16, 6
      %p55 = por %p53, %p54
      %p56 = scmp.ne.s32.totalorder %s45, %s46
      %p57 = scmp.eq.s32.totalorder %s16, 0
      %p58 = por %p56, %p57
      %p59 = scmp.ne.s32.totalorder %s45, %s46
      %p60 = scmp.eq.s32.totalorder %s17, 6
      %p61 = por %p59, %p60
      %p63 = scmp.ne.s32.totalorder %s46, %s62
      %p64 = scmp.eq.s32.totalorder %s17, 0
      %p65 = por %p63, %p64
      %s66 = ssub.s32 %s11, %s18
      %p67 = scmp.eq.s32.totalorder %s66, 0
      %s69 = sadd.s32 %s68, 1
      %s70 = scalar_select %p67, %s68, %s69
      %p73 = pneg %p67
      %p74 = scmp.eq.s32.totalorder %s11, 6
      %p75 = por %p73, %p74
      %p76 = scmp.ne.s32.totalorder %s68, %s71
      %p77 = scmp.eq.s32.totalorder %s11, 0
      %p78 = por %p76, %p77
      %p79 = scmp.ne.s32.totalorder %s68, %s71
      %p80 = scmp.eq.s32.totalorder %s16, 6
      %p81 = por %p79, %p80
      %p82 = scmp.ne.s32.totalorder %s71, %s72
      %p83 = scmp.eq.s32.totalorder %s16, 0
      %p84 = por %p82, %p83
      %p85 = scmp.ne.s32.totalorder %s71, %s72
      %p86 = scmp.eq.s32.totalorder %s17, 6
      %p87 = por %p85, %p86
      %p89 = scmp.ne.s32.totalorder %s72, %s88
      %p90 = scmp.eq.s32.totalorder %s17, 0
      %p91 = por %p89, %p90
      %s92 = ssub.s32 %s11, %s18
      %p93 = scmp.eq.s32.totalorder %s92, 0
      %s95 = sadd.s32 %s94, 1
      %s96 = scalar_select %p93, %s94, %s95
      %p99 = pneg %p93
      %p100 = scmp.eq.s32.totalorder %s11, 6
      %p101 = por %p99, %p100
      %p102 = scmp.ne.s32.totalorder %s94, %s97
      %p103 = scmp.eq.s32.totalorder %s11, 0
      %p104 = por %p102, %p103
      %p105 = scmp.ne.s32.totalorder %s94, %s97
      %p106 = scmp.eq.s32.totalorder %s16, 6
      %p107 = por %p105, %p106
      %p108 = scmp.ne.s32.totalorder %s97, %s98
      %p109 = scmp.eq.s32.totalorder %s16, 0
      %p110 = por %p108, %p109
      %p111 = scmp.ne.s32.totalorder %s97, %s98
      %p112 = scmp.eq.s32.totalorder %s17, 6
      %p113 = por %p111, %p112
      %p115 = scmp.ne.s32.totalorder %s98, %s114
      %p116 = scmp.eq.s32.totalorder %s17, 0
      %p117 = por %p115, %p116
      %s118 = ssub.s32 %s11, %s18
      %p119 = scmp.eq.s32.totalorder %s118, 0
      %s121 = sadd.s32 %s120, 1
      %s122 = scalar_select %p119, %s120, %s121
      %p125 = pneg %p119
      %p126 = scmp.eq.s32.totalorder %s11, 6
      %p127 = por %p125, %p126
      %p128 = scmp.ne.s32.totalorder %s120, %s123
      %p129 = scmp.eq.s32.totalorder %s11, 0
      %p130 = por %p128, %p129
      %p131 = scmp.ne.s32.totalorder %s120, %s123
      %p132 = scmp.eq.s32.totalorder %s16, 6
      %p133 = por %p131, %p132
      %p134 = scmp.ne.s32.totalorder %s123, %s124
      %p135 = scmp.eq.s32.totalorder %s16, 0
      %p136 = por %p134, %p135
      %p137 = scmp.ne.s32.totalorder %s123, %s124
      %p138 = scmp.eq.s32.totalorder %s17, 6
      %p139 = por %p137, %p138
      %p141 = scmp.ne.s32.totalorder %s124, %s140
      %p142 = scmp.eq.s32.totalorder %s17, 0
      %p143 = por %p141, %p142
      %s144 = ssub.s32 %s11, %s18
      %p145 = scmp.eq.s32.totalorder %s144, 0
      %s147 = sadd.s32 %s146, 1
      %s148 = scalar_select %p145, %s146, %s147
      %p151 = pneg %p145
      %p152 = scmp.eq.s32.totalorder %s11, 6
      %p153 = por %p151, %p152
      %p154 = scmp.ne.s32.totalorder %s146, %s149
      %p155 = scmp.eq.s32.totalorder %s11, 0
      %p156 = por %p154, %p155
      %p157 = scmp.ne.s32.totalorder %s146, %s149
      %p158 = scmp.eq.s32.totalorder %s16, 6
      %p159 = por %p157, %p158
      %p160 = scmp.ne.s32.totalorder %s149, %s150
      %p161 = scmp.eq.s32.totalorder %s16, 0
      %p162 = por %p160, %p161
      %p163 = scmp.ne.s32.totalorder %s149, %s150
      %p164 = scmp.eq.s32.totalorder %s17, 6
      %p165 = por %p163, %p164
      %p167 = scmp.ne.s32.totalorder %s150, %s166
      %p168 = scmp.eq.s32.totalorder %s17, 0
      %p169 = por %p167, %p168
      %p170 = scmp.le.s32.totalorder 1, %s11
      %p171 = scmp.lt.s32.totalorder %s11, 8
      %p172 = pnand %p170, %p171
      %p173 = pneg %p172
      // Predicated region
      $region9: #{bernoulli_decoder_forward.6} parent=5 // pred_check
        _
      $region10: #{bernoulli_decoder_forward.6} parent=5 // pred_check_branch
        %175 = sbr.rel (%p172) target = $region12
      $region11: #{bernoulli_decoder_forward.6} parent=5 // pred_region
        %s176 = ssub.s32 %s11, 1
        // Predicated region
        $region13: #{bernoulli_decoder_forward.6} parent=11 // pred_check
          %p177 = pneg %p32
        $region14: #{bernoulli_decoder_forward.6} parent=11 // pred_check_branch
          %179 = sbr.rel (%p177) target = $region16
        $region15: #{bernoulli_decoder_forward.6} parent=11 // pred_region
          _
        $region16: #{bernoulli_decoder_forward.6} parent=11 // pred_fallthru
          _
      $region12: #{bernoulli_decoder_forward.6} parent=5 // pred_fallthru
        _
      %p180 = scmp.lt.s32.totalorder %s11, 7
      // Predicated region
      $region17: #{bernoulli_decoder_forward.6} parent=5 // pred_check
        %p181 = pneg %p180
      $region18: #{bernoulli_decoder_forward.6} parent=5 // pred_check_branch
        %183 = sbr.rel (%p181) target = $region20
      $region19: #{bernoulli_decoder_forward.6} parent=5 // pred_region
        // Predicated region
        $region21: #{bernoulli_decoder_forward.6} parent=19 // pred_check
          %p184 = pneg %p52
        $region22: #{bernoulli_decoder_forward.6} parent=19 // pred_check_branch
          %186 = sbr.rel (%p184) target = $region24
        $region23: #{bernoulli_decoder_forward.6} parent=19 // pred_region
          %s187 = sand.u32 %s42, 1
          %s188 = sand.u32 %s42, 1
          %s189 = smul.addr %s188, 3584
          %s190 = scalar_lea.vmem [#allocation2], %s189
          %s191 = smul.u32 7, %s11
          %s192 = smul.addr %s191, 4
          %s193 = scalar_lea.vmem %s1, %s192
          // Predicated region
          $region25: #{bernoulli_decoder_forward.6} parent=23 // pred_check
            _
          $region26: #{bernoulli_decoder_forward.6} parent=23 // pred_check_branch
            %195 = sbr.rel (0) target = $region28
          $region27: #{bernoulli_decoder_forward.6} parent=23 // pred_region
            // Predicated region
            $region29: #{bernoulli_decoder_forward.6} parent=27 // pred_check
              _
            $region30: #{bernoulli_decoder_forward.6} parent=27 // pred_check_branch
              %197 = sbr.rel (0) target = $region32
            $region31: #{bernoulli_decoder_forward.6} parent=27 // pred_region
              %s198 = scalar_lea.vmem %s193, 24
              %s199 = scalar_lea.vmem %s190, 24 [#allocation2]
              loop: start=0, step=1, limit=1
              $region33: #{bernoulli_decoder_forward.6} parent=31 // loop_pre_header
                _
              $region34: #{bernoulli_decoder_forward.6} parent=31 // loop_header
                %s201 = sphi 0, %s205
                %p202 = scmp.ge.s32.totalorder %s201, 1
                %s206 = sphi %s193, %s193
                %s207 = sphi %s190, %s190
              $region35: #{bernoulli_decoder_forward.6} parent=31 // loop_header_branch
                %204 = sbr.rel (%p202) target = $region39
              $region36: #{bernoulli_decoder_forward.6} parent=31 // loop_body
                %v208 = vld [vmem:[%s206] sm:$0xff]
                %209 = vst [vmem:[%s207] sm:$0xff] %v208
                %v210 = vld [vmem:[%s206 + $0x8] sm:$0xff]
                %211 = vst [vmem:[%s207 + $0x8] sm:$0xff] %v210
                %v212 = vld [vmem:[%s206 + $0x10] sm:$0xff]
                %213 = vst [vmem:[%s207 + $0x10] sm:$0xff] %v212
                %v214 = vld [vmem:[%s206 + $0xc4] sm:$0xff]
                %215 = vst [vmem:[%s207 + $0x1c] sm:$0xff] %v214
                %v216 = vld [vmem:[%s206 + $0xcc] sm:$0xff]
                %217 = vst [vmem:[%s207 + $0x24] sm:$0xff] %v216
                %v218 = vld [vmem:[%s206 + $0xd4] sm:$0xff]
                %219 = vst [vmem:[%s207 + $0x2c] sm:$0xff] %v218
                %v220 = vld [vmem:[%s206 + $0x188] sm:$0xff]
                %221 = vst [vmem:[%s207 + $0x38] sm:$0xff] %v220
                %v222 = vld [vmem:[%s206 + $0x190] sm:$0xff]
                %223 = vst [vmem:[%s207 + $0x40] sm:$0xff] %v222
                %v224 = vld [vmem:[%s206 + $0x198] sm:$0xff]
                %225 = vst [vmem:[%s207 + $0x48] sm:$0xff] %v224
                %v226 = vld [vmem:[%s206 + $0x24c] sm:$0xff]
                %227 = vst [vmem:[%s207 + $0x54] sm:$0xff] %v226
                %v228 = vld [vmem:[%s206 + $0x254] sm:$0xff]
                %229 = vst [vmem:[%s207 + $0x5c] sm:$0xff] %v228
                %v230 = vld [vmem:[%s206 + $0x25c] sm:$0xff]
                %231 = vst [vmem:[%s207 + $0x64] sm:$0xff] %v230
                %v232 = vld [vmem:[%s206 + $0x310] sm:$0xff]
                %233 = vst [vmem:[%s207 + $0x70] sm:$0xff] %v232
                %v234 = vld [vmem:[%s206 + $0x318] sm:$0xff]
                %235 = vst [vmem:[%s207 + $0x78] sm:$0xff] %v234
                %v236 = vld [vmem:[%s206 + $0x320] sm:$0xff]
                %237 = vst [vmem:[%s207 + $0x80] sm:$0xff] %v236
                %v238 = vld [vmem:[%s206 + $0x3d4] sm:$0xff]
                %239 = vst [vmem:[%s207 + $0x8c] sm:$0xff] %v238
                %v240 = vld [vmem:[%s206 + $0x3dc] sm:$0xff]
                %241 = vst [vmem:[%s207 + $0x94] sm:$0xff] %v240
                %v242 = vld [vmem:[%s206 + $0x3e4] sm:$0xff]
                %243 = vst [vmem:[%s207 + $0x9c] sm:$0xff] %v242
                %v244 = vld [vmem:[%s206 + $0x498] sm:$0xff]
                %245 = vst [vmem:[%s207 + $0xa8] sm:$0xff] %v244
                %v246 = vld [vmem:[%s206 + $0x4a0] sm:$0xff]
                %247 = vst [vmem:[%s207 + $0xb0] sm:$0xff] %v246
                %v248 = vld [vmem:[%s206 + $0x4a8] sm:$0xff]
                %249 = vst [vmem:[%s207 + $0xb8] sm:$0xff] %v248
                %v250 = vld [vmem:[%s206 + $0x55c] sm:$0xff]
                %251 = vst [vmem:[%s207 + $0xc4] sm:$0xff] %v250
                %v252 = vld [vmem:[%s206 + $0x564] sm:$0xff]
                %253 = vst [vmem:[%s207 + $0xcc] sm:$0xff] %v252
                %v254 = vld [vmem:[%s206 + $0x56c] sm:$0xff]
                %255 = vst [vmem:[%s207 + $0xd4] sm:$0xff] %v254
                %v256 = vld [vmem:[%s206 + $0x620] sm:$0xff]
                %257 = vst [vmem:[%s207 + $0xe0] sm:$0xff] %v256
                %v258 = vld [vmem:[%s206 + $0x628] sm:$0xff]
                %259 = vst [vmem:[%s207 + $0xe8] sm:$0xff] %v258
                %v260 = vld [vmem:[%s206 + $0x630] sm:$0xff]
                %261 = vst [vmem:[%s207 + $0xf0] sm:$0xff] %v260
                %v262 = vld [vmem:[%s206 + $0x6e4] sm:$0xff]
                %263 = vst [vmem:[%s207 + $0xfc] sm:$0xff] %v262
                %v264 = vld [vmem:[%s206 + $0x6ec] sm:$0xff]
                %265 = vst [vmem:[%s207 + $0x104] sm:$0xff] %v264
                %v266 = vld [vmem:[%s206 + $0x6f4] sm:$0xff]
                %267 = vst [vmem:[%s207 + $0x10c] sm:$0xff] %v266
                %v268 = vld [vmem:[%s206 + $0x7a8] sm:$0xff]
                %269 = vst [vmem:[%s207 + $0x118] sm:$0xff] %v268
                %v270 = vld [vmem:[%s206 + $0x7b0] sm:$0xff]
                %271 = vst [vmem:[%s207 + $0x120] sm:$0xff] %v270
                %v272 = vld [vmem:[%s206 + $0x7b8] sm:$0xff]
                %273 = vst [vmem:[%s207 + $0x128] sm:$0xff] %v272
                %v274 = vld [vmem:[%s206 + $0x86c] sm:$0xff]
                %275 = vst [vmem:[%s207 + $0x134] sm:$0xff] %v274
                %v276 = vld [vmem:[%s206 + $0x874] sm:$0xff]
                %277 = vst [vmem:[%s207 + $0x13c] sm:$0xff] %v276
                %v278 = vld [vmem:[%s206 + $0x87c] sm:$0xff]
                %279 = vst [vmem:[%s207 + $0x144] sm:$0xff] %v278
                %v280 = vld [vmem:[%s206 + $0x930] sm:$0xff]
                %281 = vst [vmem:[%s207 + $0x150] sm:$0xff] %v280
                %v282 = vld [vmem:[%s206 + $0x938] sm:$0xff]
                %283 = vst [vmem:[%s207 + $0x158] sm:$0xff] %v282
                %v284 = vld [vmem:[%s206 + $0x940] sm:$0xff]
                %285 = vst [vmem:[%s207 + $0x160] sm:$0xff] %v284
                %v286 = vld [vmem:[%s206 + $0x9f4] sm:$0xff]
                %287 = vst [vmem:[%s207 + $0x16c] sm:$0xff] %v286
                %v288 = vld [vmem:[%s206 + $0x9fc] sm:$0xff]
                %289 = vst [vmem:[%s207 + $0x174] sm:$0xff] %v288
                %v290 = vld [vmem:[%s206 + $0xa04] sm:$0xff]
                %291 = vst [vmem:[%s207 + $0x17c] sm:$0xff] %v290
                %v292 = vld [vmem:[%s206 + $0xab8] sm:$0xff]
                %293 = vst [vmem:[%s207 + $0x188] sm:$0xff] %v292
                %v294 = vld [vmem:[%s206 + $0xac0] sm:$0xff]
                %295 = vst [vmem:[%s207 + $0x190] sm:$0xff] %v294
                %v296 = vld [vmem:[%s206 + $0xac8] sm:$0xff]
                %297 = vst [vmem:[%s207 + $0x198] sm:$0xff] %v296
                %v298 = vld [vmem:[%s206 + $0xb7c] sm:$0xff]
                %299 = vst [vmem:[%s207 + $0x1a4] sm:$0xff] %v298
                %v300 = vld [vmem:[%s206 + $0xb84] sm:$0xff]
                %301 = vst [vmem:[%s207 + $0x1ac] sm:$0xff] %v300
                %v302 = vld [vmem:[%s206 + $0xb8c] sm:$0xff]
                %303 = vst [vmem:[%s207 + $0x1b4] sm:$0xff] %v302
                %v304 = vld [vmem:[%s206 + $0xc40] sm:$0xff]
                %305 = vst [vmem:[%s207 + $0x1c0] sm:$0xff] %v304
                %v306 = vld [vmem:[%s206 + $0xc48] sm:$0xff]
                %307 = vst [vmem:[%s207 + $0x1c8] sm:$0xff] %v306
                %v308 = vld [vmem:[%s206 + $0xc50] sm:$0xff]
                %309 = vst [vmem:[%s207 + $0x1d0] sm:$0xff] %v308
                %v310 = vld [vmem:[%s206 + $0xd04] sm:$0xff]
                %311 = vst [vmem:[%s207 + $0x1dc] sm:$0xff] %v310
                %v312 = vld [vmem:[%s206 + $0xd0c] sm:$0xff]
                %313 = vst [vmem:[%s207 + $0x1e4] sm:$0xff] %v312
                %v314 = vld [vmem:[%s206 + $0xd14] sm:$0xff]
                %315 = vst [vmem:[%s207 + $0x1ec] sm:$0xff] %v314
                %v316 = vld [vmem:[%s206 + $0xdc8] sm:$0xff]
                %317 = vst [vmem:[%s207 + $0x1f8] sm:$0xff] %v316
                %v318 = vld [vmem:[%s206 + $0xdd0] sm:$0xff]
                %319 = vst [vmem:[%s207 + $0x200] sm:$0xff] %v318
                %v320 = vld [vmem:[%s206 + $0xdd8] sm:$0xff]
                %321 = vst [vmem:[%s207 + $0x208] sm:$0xff] %v320
                %v322 = vld [vmem:[%s206 + $0xe8c] sm:$0xff]
                %323 = vst [vmem:[%s207 + $0x214] sm:$0xff] %v322
                %v324 = vld [vmem:[%s206 + $0xe94] sm:$0xff]
                %325 = vst [vmem:[%s207 + $0x21c] sm:$0xff] %v324
                %v326 = vld [vmem:[%s206 + $0xe9c] sm:$0xff]
                %327 = vst [vmem:[%s207 + $0x224] sm:$0xff] %v326
                %v328 = vld [vmem:[%s206 + $0xf50] sm:$0xff]
                %329 = vst [vmem:[%s207 + $0x230] sm:$0xff] %v328
                %v330 = vld [vmem:[%s206 + $0xf58] sm:$0xff]
                %331 = vst [vmem:[%s207 + $0x238] sm:$0xff] %v330
                %v332 = vld [vmem:[%s206 + $0xf60] sm:$0xff]
                %333 = vst [vmem:[%s207 + $0x240] sm:$0xff] %v332
                %v334 = vld [vmem:[%s206 + $0x1014] sm:$0xff]
                %335 = vst [vmem:[%s207 + $0x24c] sm:$0xff] %v334
                %v336 = vld [vmem:[%s206 + $0x101c] sm:$0xff]
                %337 = vst [vmem:[%s207 + $0x254] sm:$0xff] %v336
                %v338 = vld [vmem:[%s206 + $0x1024] sm:$0xff]
                %339 = vst [vmem:[%s207 + $0x25c] sm:$0xff] %v338
                %v340 = vld [vmem:[%s206 + $0x10d8] sm:$0xff]
                %341 = vst [vmem:[%s207 + $0x268] sm:$0xff] %v340
                %v342 = vld [vmem:[%s206 + $0x10e0] sm:$0xff]
                %343 = vst [vmem:[%s207 + $0x270] sm:$0xff] %v342
                %v344 = vld [vmem:[%s206 + $0x10e8] sm:$0xff]
                %345 = vst [vmem:[%s207 + $0x278] sm:$0xff] %v344
                %v346 = vld [vmem:[%s206 + $0x119c] sm:$0xff]
                %347 = vst [vmem:[%s207 + $0x284] sm:$0xff] %v346
                %v348 = vld [vmem:[%s206 + $0x11a4] sm:$0xff]
                %349 = vst [vmem:[%s207 + $0x28c] sm:$0xff] %v348
                %v350 = vld [vmem:[%s206 + $0x11ac] sm:$0xff]
                %351 = vst [vmem:[%s207 + $0x294] sm:$0xff] %v350
                %v352 = vld [vmem:[%s206 + $0x1260] sm:$0xff]
                %353 = vst [vmem:[%s207 + $0x2a0] sm:$0xff] %v352
                %v354 = vld [vmem:[%s206 + $0x1268] sm:$0xff]
                %355 = vst [vmem:[%s207 + $0x2a8] sm:$0xff] %v354
                %v356 = vld [vmem:[%s206 + $0x1270] sm:$0xff]
                %357 = vst [vmem:[%s207 + $0x2b0] sm:$0xff] %v356
                %v358 = vld [vmem:[%s206 + $0x1324] sm:$0xff]
                %359 = vst [vmem:[%s207 + $0x2bc] sm:$0xff] %v358
                %v360 = vld [vmem:[%s206 + $0x132c] sm:$0xff]
                %361 = vst [vmem:[%s207 + $0x2c4] sm:$0xff] %v360
                %v362 = vld [vmem:[%s206 + $0x1334] sm:$0xff]
                %363 = vst [vmem:[%s207 + $0x2cc] sm:$0xff] %v362
                %v364 = vld [vmem:[%s206 + $0x13e8] sm:$0xff]
                %365 = vst [vmem:[%s207 + $0x2d8] sm:$0xff] %v364
                %v366 = vld [vmem:[%s206 + $0x13f0] sm:$0xff]
                %367 = vst [vmem:[%s207 + $0x2e0] sm:$0xff] %v366
                %v368 = vld [vmem:[%s206 + $0x13f8] sm:$0xff]
                %369 = vst [vmem:[%s207 + $0x2e8] sm:$0xff] %v368
                %v370 = vld [vmem:[%s206 + $0x14ac] sm:$0xff]
                %371 = vst [vmem:[%s207 + $0x2f4] sm:$0xff] %v370
                %v372 = vld [vmem:[%s206 + $0x14b4] sm:$0xff]
                %373 = vst [vmem:[%s207 + $0x2fc] sm:$0xff] %v372
                %v374 = vld [vmem:[%s206 + $0x14bc] sm:$0xff]
                %375 = vst [vmem:[%s207 + $0x304] sm:$0xff] %v374
                %v376 = vld [vmem:[%s206 + $0x1570] sm:$0xff]
                %377 = vst [vmem:[%s207 + $0x310] sm:$0xff] %v376
                %v378 = vld [vmem:[%s206 + $0x1578] sm:$0xff]
                %379 = vst [vmem:[%s207 + $0x318] sm:$0xff] %v378
                %v380 = vld [vmem:[%s206 + $0x1580] sm:$0xff]
                %381 = vst [vmem:[%s207 + $0x320] sm:$0xff] %v380
                %v382 = vld [vmem:[%s206 + $0x1634] sm:$0xff]
                %383 = vst [vmem:[%s207 + $0x32c] sm:$0xff] %v382
                %v384 = vld [vmem:[%s206 + $0x163c] sm:$0xff]
                %385 = vst [vmem:[%s207 + $0x334] sm:$0xff] %v384
                %v386 = vld [vmem:[%s206 + $0x1644] sm:$0xff]
                %387 = vst [vmem:[%s207 + $0x33c] sm:$0xff] %v386
                %v388 = vld [vmem:[%s206 + $0x16f8] sm:$0xff]
                %389 = vst [vmem:[%s207 + $0x348] sm:$0xff] %v388
                %v390 = vld [vmem:[%s206 + $0x1700] sm:$0xff]
                %391 = vst [vmem:[%s207 + $0x350] sm:$0xff] %v390
                %v392 = vld [vmem:[%s206 + $0x1708] sm:$0xff]
                %393 = vst [vmem:[%s207 + $0x358] sm:$0xff] %v392
                %v394 = vld [vmem:[%s206 + $0x17bc] sm:$0xff]
                %395 = vst [vmem:[%s207 + $0x364] sm:$0xff] %v394
                %v396 = vld [vmem:[%s206 + $0x17c4] sm:$0xff]
                %397 = vst [vmem:[%s207 + $0x36c] sm:$0xff] %v396
                %v398 = vld [vmem:[%s206 + $0x17cc] sm:$0xff]
                %399 = vst [vmem:[%s207 + $0x374] sm:$0xff] %v398
                %v400 = vld [vmem:[%s206 + $0x1880] sm:$0xff]
                %401 = vst [vmem:[%s207 + $0x380] sm:$0xff] %v400
                %v402 = vld [vmem:[%s206 + $0x1888] sm:$0xff]
                %403 = vst [vmem:[%s207 + $0x388] sm:$0xff] %v402
                %v404 = vld [vmem:[%s206 + $0x1890] sm:$0xff]
                %405 = vst [vmem:[%s207 + $0x390] sm:$0xff] %v404
                %v406 = vld [vmem:[%s206 + $0x1944] sm:$0xff]
                %407 = vst [vmem:[%s207 + $0x39c] sm:$0xff] %v406
                %v408 = vld [vmem:[%s206 + $0x194c] sm:$0xff]
                %409 = vst [vmem:[%s207 + $0x3a4] sm:$0xff] %v408
                %v410 = vld [vmem:[%s206 + $0x1954] sm:$0xff]
                %411 = vst [vmem:[%s207 + $0x3ac] sm:$0xff] %v410
                %v412 = vld [vmem:[%s206 + $0x1a08] sm:$0xff]
                %413 = vst [vmem:[%s207 + $0x3b8] sm:$0xff] %v412
                %v414 = vld [vmem:[%s206 + $0x1a10] sm:$0xff]
                %415 = vst [vmem:[%s207 + $0x3c0] sm:$0xff] %v414
                %v416 = vld [vmem:[%s206 + $0x1a18] sm:$0xff]
                %417 = vst [vmem:[%s207 + $0x3c8] sm:$0xff] %v416
                %v418 = vld [vmem:[%s206 + $0x1acc] sm:$0xff]
                %419 = vst [vmem:[%s207 + $0x3d4] sm:$0xff] %v418
                %v420 = vld [vmem:[%s206 + $0x1ad4] sm:$0xff]
                %421 = vst [vmem:[%s207 + $0x3dc] sm:$0xff] %v420
                %v422 = vld [vmem:[%s206 + $0x1adc] sm:$0xff]
                %423 = vst [vmem:[%s207 + $0x3e4] sm:$0xff] %v422
                %v424 = vld [vmem:[%s206 + $0x1b90] sm:$0xff]
                %425 = vst [vmem:[%s207 + $0x3f0] sm:$0xff] %v424
                %v426 = vld [vmem:[%s206 + $0x1b98] sm:$0xff]
                %427 = vst [vmem:[%s207 + $0x3f8] sm:$0xff] %v426
                %v428 = vld [vmem:[%s206 + $0x1ba0] sm:$0xff]
                %429 = vst [vmem:[%s207 + $0x400] sm:$0xff] %v428
                %v430 = vld [vmem:[%s206 + $0x1c54] sm:$0xff]
                %431 = vst [vmem:[%s207 + $0x40c] sm:$0xff] %v430
                %v432 = vld [vmem:[%s206 + $0x1c5c] sm:$0xff]
                %433 = vst [vmem:[%s207 + $0x414] sm:$0xff] %v432
                %v434 = vld [vmem:[%s206 + $0x1c64] sm:$0xff]
                %435 = vst [vmem:[%s207 + $0x41c] sm:$0xff] %v434
                %v436 = vld [vmem:[%s206 + $0x1d18] sm:$0xff]
                %437 = vst [vmem:[%s207 + $0x428] sm:$0xff] %v436
                %v438 = vld [vmem:[%s206 + $0x1d20] sm:$0xff]
                %439 = vst [vmem:[%s207 + $0x430] sm:$0xff] %v438
                %v440 = vld [vmem:[%s206 + $0x1d28] sm:$0xff]
                %441 = vst [vmem:[%s207 + $0x438] sm:$0xff] %v440
                %v442 = vld [vmem:[%s206 + $0x1ddc] sm:$0xff]
                %443 = vst [vmem:[%s207 + $0x444] sm:$0xff] %v442
                %v444 = vld [vmem:[%s206 + $0x1de4] sm:$0xff]
                %445 = vst [vmem:[%s207 + $0x44c] sm:$0xff] %v444
                %v446 = vld [vmem:[%s206 + $0x1dec] sm:$0xff]
                %447 = vst [vmem:[%s207 + $0x454] sm:$0xff] %v446
                %v448 = vld [vmem:[%s206 + $0x1ea0] sm:$0xff]
                %449 = vst [vmem:[%s207 + $0x460] sm:$0xff] %v448
                %v450 = vld [vmem:[%s206 + $0x1ea8] sm:$0xff]
                %451 = vst [vmem:[%s207 + $0x468] sm:$0xff] %v450
                %v452 = vld [vmem:[%s206 + $0x1eb0] sm:$0xff]
                %453 = vst [vmem:[%s207 + $0x470] sm:$0xff] %v452
                %v454 = vld [vmem:[%s206 + $0x1f64] sm:$0xff]
                %455 = vst [vmem:[%s207 + $0x47c] sm:$0xff] %v454
                %v456 = vld [vmem:[%s206 + $0x1f6c] sm:$0xff]
                %457 = vst [vmem:[%s207 + $0x484] sm:$0xff] %v456
                %v458 = vld [vmem:[%s206 + $0x1f74] sm:$0xff]
                %459 = vst [vmem:[%s207 + $0x48c] sm:$0xff] %v458
                %v460 = vld [vmem:[%s206 + $0x2028] sm:$0xff]
                %461 = vst [vmem:[%s207 + $0x498] sm:$0xff] %v460
                %v462 = vld [vmem:[%s206 + $0x2030] sm:$0xff]
                %463 = vst [vmem:[%s207 + $0x4a0] sm:$0xff] %v462
                %v464 = vld [vmem:[%s206 + $0x2038] sm:$0xff]
                %465 = vst [vmem:[%s207 + $0x4a8] sm:$0xff] %v464
                %v466 = vld [vmem:[%s206 + $0x20ec] sm:$0xff]
                %467 = vst [vmem:[%s207 + $0x4b4] sm:$0xff] %v466
                %v468 = vld [vmem:[%s206 + $0x20f4] sm:$0xff]
                %469 = vst [vmem:[%s207 + $0x4bc] sm:$0xff] %v468
                %v470 = vld [vmem:[%s206 + $0x20fc] sm:$0xff]
                %471 = vst [vmem:[%s207 + $0x4c4] sm:$0xff] %v470
                %v472 = vld [vmem:[%s206 + $0x21b0] sm:$0xff]
                %473 = vst [vmem:[%s207 + $0x4d0] sm:$0xff] %v472
                %v474 = vld [vmem:[%s206 + $0x21b8] sm:$0xff]
                %475 = vst [vmem:[%s207 + $0x4d8] sm:$0xff] %v474
                %v476 = vld [vmem:[%s206 + $0x21c0] sm:$0xff]
                %477 = vst [vmem:[%s207 + $0x4e0] sm:$0xff] %v476
                %v478 = vld [vmem:[%s206 + $0x2274] sm:$0xff]
                %479 = vst [vmem:[%s207 + $0x4ec] sm:$0xff] %v478
                %v480 = vld [vmem:[%s206 + $0x227c] sm:$0xff]
                %481 = vst [vmem:[%s207 + $0x4f4] sm:$0xff] %v480
                %v482 = vld [vmem:[%s206 + $0x2284] sm:$0xff]
                %483 = vst [vmem:[%s207 + $0x4fc] sm:$0xff] %v482
                %v484 = vld [vmem:[%s206 + $0x2338] sm:$0xff]
                %485 = vst [vmem:[%s207 + $0x508] sm:$0xff] %v484
                %v486 = vld [vmem:[%s206 + $0x2340] sm:$0xff]
                %487 = vst [vmem:[%s207 + $0x510] sm:$0xff] %v486
                %v488 = vld [vmem:[%s206 + $0x2348] sm:$0xff]
                %489 = vst [vmem:[%s207 + $0x518] sm:$0xff] %v488
                %v490 = vld [vmem:[%s206 + $0x23fc] sm:$0xff]
                %491 = vst [vmem:[%s207 + $0x524] sm:$0xff] %v490
                %v492 = vld [vmem:[%s206 + $0x2404] sm:$0xff]
                %493 = vst [vmem:[%s207 + $0x52c] sm:$0xff] %v492
                %v494 = vld [vmem:[%s206 + $0x240c] sm:$0xff]
                %495 = vst [vmem:[%s207 + $0x534] sm:$0xff] %v494
                %v496 = vld [vmem:[%s206 + $0x24c0] sm:$0xff]
                %497 = vst [vmem:[%s207 + $0x540] sm:$0xff] %v496
                %v498 = vld [vmem:[%s206 + $0x24c8] sm:$0xff]
                %499 = vst [vmem:[%s207 + $0x548] sm:$0xff] %v498
                %v500 = vld [vmem:[%s206 + $0x24d0] sm:$0xff]
                %501 = vst [vmem:[%s207 + $0x550] sm:$0xff] %v500
                %v502 = vld [vmem:[%s206 + $0x2584] sm:$0xff]
                %503 = vst [vmem:[%s207 + $0x55c] sm:$0xff] %v502
                %v504 = vld [vmem:[%s206 + $0x258c] sm:$0xff]
                %505 = vst [vmem:[%s207 + $0x564] sm:$0xff] %v504
                %v506 = vld [vmem:[%s206 + $0x2594] sm:$0xff]
                %507 = vst [vmem:[%s207 + $0x56c] sm:$0xff] %v506
                %v508 = vld [vmem:[%s206 + $0x2648] sm:$0xff]
                %509 = vst [vmem:[%s207 + $0x578] sm:$0xff] %v508
                %v510 = vld [vmem:[%s206 + $0x2650] sm:$0xff]
                %511 = vst [vmem:[%s207 + $0x580] sm:$0xff] %v510
                %v512 = vld [vmem:[%s206 + $0x2658] sm:$0xff]
                %513 = vst [vmem:[%s207 + $0x588] sm:$0xff] %v512
                %v514 = vld [vmem:[%s206 + $0x270c] sm:$0xff]
                %515 = vst [vmem:[%s207 + $0x594] sm:$0xff] %v514
                %v516 = vld [vmem:[%s206 + $0x2714] sm:$0xff]
                %517 = vst [vmem:[%s207 + $0x59c] sm:$0xff] %v516
                %v518 = vld [vmem:[%s206 + $0x271c] sm:$0xff]
                %519 = vst [vmem:[%s207 + $0x5a4] sm:$0xff] %v518
                %v520 = vld [vmem:[%s206 + $0x27d0] sm:$0xff]
                %521 = vst [vmem:[%s207 + $0x5b0] sm:$0xff] %v520
                %v522 = vld [vmem:[%s206 + $0x27d8] sm:$0xff]
                %523 = vst [vmem:[%s207 + $0x5b8] sm:$0xff] %v522
                %v524 = vld [vmem:[%s206 + $0x27e0] sm:$0xff]
                %525 = vst [vmem:[%s207 + $0x5c0] sm:$0xff] %v524
                %v526 = vld [vmem:[%s206 + $0x2894] sm:$0xff]
                %527 = vst [vmem:[%s207 + $0x5cc] sm:$0xff] %v526
                %v528 = vld [vmem:[%s206 + $0x289c] sm:$0xff]
                %529 = vst [vmem:[%s207 + $0x5d4] sm:$0xff] %v528
                %v530 = vld [vmem:[%s206 + $0x28a4] sm:$0xff]
                %531 = vst [vmem:[%s207 + $0x5dc] sm:$0xff] %v530
                %v532 = vld [vmem:[%s206 + $0x2958] sm:$0xff]
                %533 = vst [vmem:[%s207 + $0x5e8] sm:$0xff] %v532
                %v534 = vld [vmem:[%s206 + $0x2960] sm:$0xff]
                %535 = vst [vmem:[%s207 + $0x5f0] sm:$0xff] %v534
                %v536 = vld [vmem:[%s206 + $0x2968] sm:$0xff]
                %537 = vst [vmem:[%s207 + $0x5f8] sm:$0xff] %v536
                %v538 = vld [vmem:[%s206 + $0x2a1c] sm:$0xff]
                %539 = vst [vmem:[%s207 + $0x604] sm:$0xff] %v538
                %v540 = vld [vmem:[%s206 + $0x2a24] sm:$0xff]
                %541 = vst [vmem:[%s207 + $0x60c] sm:$0xff] %v540
                %v542 = vld [vmem:[%s206 + $0x2a2c] sm:$0xff]
                %543 = vst [vmem:[%s207 + $0x614] sm:$0xff] %v542
                %v544 = vld [vmem:[%s206 + $0x2ae0] sm:$0xff]
                %545 = vst [vmem:[%s207 + $0x620] sm:$0xff] %v544
                %v546 = vld [vmem:[%s206 + $0x2ae8] sm:$0xff]
                %547 = vst [vmem:[%s207 + $0x628] sm:$0xff] %v546
                %v548 = vld [vmem:[%s206 + $0x2af0] sm:$0xff]
                %549 = vst [vmem:[%s207 + $0x630] sm:$0xff] %v548
                %v550 = vld [vmem:[%s206 + $0x2ba4] sm:$0xff]
                %551 = vst [vmem:[%s207 + $0x63c] sm:$0xff] %v550
                %v552 = vld [vmem:[%s206 + $0x2bac] sm:$0xff]
                %553 = vst [vmem:[%s207 + $0x644] sm:$0xff] %v552
                %v554 = vld [vmem:[%s206 + $0x2bb4] sm:$0xff]
                %555 = vst [vmem:[%s207 + $0x64c] sm:$0xff] %v554
                %v556 = vld [vmem:[%s206 + $0x2c68] sm:$0xff]
                %557 = vst [vmem:[%s207 + $0x658] sm:$0xff] %v556
                %v558 = vld [vmem:[%s206 + $0x2c70] sm:$0xff]
                %559 = vst [vmem:[%s207 + $0x660] sm:$0xff] %v558
                %v560 = vld [vmem:[%s206 + $0x2c78] sm:$0xff]
                %561 = vst [vmem:[%s207 + $0x668] sm:$0xff] %v560
                %v562 = vld [vmem:[%s206 + $0x2d2c] sm:$0xff]
                %563 = vst [vmem:[%s207 + $0x674] sm:$0xff] %v562
                %v564 = vld [vmem:[%s206 + $0x2d34] sm:$0xff]
                %565 = vst [vmem:[%s207 + $0x67c] sm:$0xff] %v564
                %v566 = vld [vmem:[%s206 + $0x2d3c] sm:$0xff]
                %567 = vst [vmem:[%s207 + $0x684] sm:$0xff] %v566
                %v568 = vld [vmem:[%s206 + $0x2df0] sm:$0xff]
                %569 = vst [vmem:[%s207 + $0x690] sm:$0xff] %v568
                %v570 = vld [vmem:[%s206 + $0x2df8] sm:$0xff]
                %571 = vst [vmem:[%s207 + $0x698] sm:$0xff] %v570
                %v572 = vld [vmem:[%s206 + $0x2e00] sm:$0xff]
                %573 = vst [vmem:[%s207 + $0x6a0] sm:$0xff] %v572
                %v574 = vld [vmem:[%s206 + $0x2eb4] sm:$0xff]
                %575 = vst [vmem:[%s207 + $0x6ac] sm:$0xff] %v574
                %v576 = vld [vmem:[%s206 + $0x2ebc] sm:$0xff]
                %577 = vst [vmem:[%s207 + $0x6b4] sm:$0xff] %v576
                %v578 = vld [vmem:[%s206 + $0x2ec4] sm:$0xff]
                %579 = vst [vmem:[%s207 + $0x6bc] sm:$0xff] %v578
                %v580 = vld [vmem:[%s206 + $0x2f78] sm:$0xff]
                %581 = vst [vmem:[%s207 + $0x6c8] sm:$0xff] %v580
                %v582 = vld [vmem:[%s206 + $0x2f80] sm:$0xff]
                %583 = vst [vmem:[%s207 + $0x6d0] sm:$0xff] %v582
                %v584 = vld [vmem:[%s206 + $0x2f88] sm:$0xff]
                %585 = vst [vmem:[%s207 + $0x6d8] sm:$0xff] %v584
                %v586 = vld [vmem:[%s206 + $0x303c] sm:$0xff]
                %587 = vst [vmem:[%s207 + $0x6e4] sm:$0xff] %v586
                %v588 = vld [vmem:[%s206 + $0x3044] sm:$0xff]
                %589 = vst [vmem:[%s207 + $0x6ec] sm:$0xff] %v588
                %v590 = vld [vmem:[%s206 + $0x304c] sm:$0xff]
                %591 = vst [vmem:[%s207 + $0x6f4] sm:$0xff] %v590
                %v592 = vld [vmem:[%s206 + $0x3100] sm:$0xff]
                %593 = vst [vmem:[%s207 + $0x700] sm:$0xff] %v592
                %v594 = vld [vmem:[%s206 + $0x3108] sm:$0xff]
                %595 = vst [vmem:[%s207 + $0x708] sm:$0xff] %v594
                %v596 = vld [vmem:[%s206 + $0x3110] sm:$0xff]
                %597 = vst [vmem:[%s207 + $0x710] sm:$0xff] %v596
                %v598 = vld [vmem:[%s206 + $0x31c4] sm:$0xff]
                %599 = vst [vmem:[%s207 + $0x71c] sm:$0xff] %v598
                %v600 = vld [vmem:[%s206 + $0x31cc] sm:$0xff]
                %601 = vst [vmem:[%s207 + $0x724] sm:$0xff] %v600
                %v602 = vld [vmem:[%s206 + $0x31d4] sm:$0xff]
                %603 = vst [vmem:[%s207 + $0x72c] sm:$0xff] %v602
                %v604 = vld [vmem:[%s206 + $0x3288] sm:$0xff]
                %605 = vst [vmem:[%s207 + $0x738] sm:$0xff] %v604
                %v606 = vld [vmem:[%s206 + $0x3290] sm:$0xff]
                %607 = vst [vmem:[%s207 + $0x740] sm:$0xff] %v606
                %v608 = vld [vmem:[%s206 + $0x3298] sm:$0xff]
                %609 = vst [vmem:[%s207 + $0x748] sm:$0xff] %v608
                %v610 = vld [vmem:[%s206 + $0x334c] sm:$0xff]
                %611 = vst [vmem:[%s207 + $0x754] sm:$0xff] %v610
                %v612 = vld [vmem:[%s206 + $0x3354] sm:$0xff]
                %613 = vst [vmem:[%s207 + $0x75c] sm:$0xff] %v612
                %v614 = vld [vmem:[%s206 + $0x335c] sm:$0xff]
                %615 = vst [vmem:[%s207 + $0x764] sm:$0xff] %v614
                %v616 = vld [vmem:[%s206 + $0x3410] sm:$0xff]
                %617 = vst [vmem:[%s207 + $0x770] sm:$0xff] %v616
                %v618 = vld [vmem:[%s206 + $0x3418] sm:$0xff]
                %619 = vst [vmem:[%s207 + $0x778] sm:$0xff] %v618
                %v620 = vld [vmem:[%s206 + $0x3420] sm:$0xff]
                %621 = vst [vmem:[%s207 + $0x780] sm:$0xff] %v620
                %v622 = vld [vmem:[%s206 + $0x34d4] sm:$0xff]
                %623 = vst [vmem:[%s207 + $0x78c] sm:$0xff] %v622
                %v624 = vld [vmem:[%s206 + $0x34dc] sm:$0xff]
                %625 = vst [vmem:[%s207 + $0x794] sm:$0xff] %v624
                %v626 = vld [vmem:[%s206 + $0x34e4] sm:$0xff]
                %627 = vst [vmem:[%s207 + $0x79c] sm:$0xff] %v626
                %v628 = vld [vmem:[%s206 + $0x3598] sm:$0xff]
                %629 = vst [vmem:[%s207 + $0x7a8] sm:$0xff] %v628
                %v630 = vld [vmem:[%s206 + $0x35a0] sm:$0xff]
                %631 = vst [vmem:[%s207 + $0x7b0] sm:$0xff] %v630
                %v632 = vld [vmem:[%s206 + $0x35a8] sm:$0xff]
                %633 = vst [vmem:[%s207 + $0x7b8] sm:$0xff] %v632
                %v634 = vld [vmem:[%s206 + $0x365c] sm:$0xff]
                %635 = vst [vmem:[%s207 + $0x7c4] sm:$0xff] %v634
                %v636 = vld [vmem:[%s206 + $0x3664] sm:$0xff]
                %637 = vst [vmem:[%s207 + $0x7cc] sm:$0xff] %v636
                %v638 = vld [vmem:[%s206 + $0x366c] sm:$0xff]
                %639 = vst [vmem:[%s207 + $0x7d4] sm:$0xff] %v638
                %v640 = vld [vmem:[%s206 + $0x3720] sm:$0xff]
                %641 = vst [vmem:[%s207 + $0x7e0] sm:$0xff] %v640
                %v642 = vld [vmem:[%s206 + $0x3728] sm:$0xff]
                %643 = vst [vmem:[%s207 + $0x7e8] sm:$0xff] %v642
                %v644 = vld [vmem:[%s206 + $0x3730] sm:$0xff]
                %645 = vst [vmem:[%s207 + $0x7f0] sm:$0xff] %v644
                %v646 = vld [vmem:[%s206 + $0x37e4] sm:$0xff]
                %647 = vst [vmem:[%s207 + $0x7fc] sm:$0xff] %v646
                %v648 = vld [vmem:[%s206 + $0x37ec] sm:$0xff]
                %649 = vst [vmem:[%s207 + $0x804] sm:$0xff] %v648
                %v650 = vld [vmem:[%s206 + $0x37f4] sm:$0xff]
                %651 = vst [vmem:[%s207 + $0x80c] sm:$0xff] %v650
                %v652 = vld [vmem:[%s206 + $0x38a8] sm:$0xff]
                %653 = vst [vmem:[%s207 + $0x818] sm:$0xff] %v652
                %v654 = vld [vmem:[%s206 + $0x38b0] sm:$0xff]
                %655 = vst [vmem:[%s207 + $0x820] sm:$0xff] %v654
                %v656 = vld [vmem:[%s206 + $0x38b8] sm:$0xff]
                %657 = vst [vmem:[%s207 + $0x828] sm:$0xff] %v656
                %v658 = vld [vmem:[%s206 + $0x396c] sm:$0xff]
                %659 = vst [vmem:[%s207 + $0x834] sm:$0xff] %v658
                %v660 = vld [vmem:[%s206 + $0x3974] sm:$0xff]
                %661 = vst [vmem:[%s207 + $0x83c] sm:$0xff] %v660
                %v662 = vld [vmem:[%s206 + $0x397c] sm:$0xff]
                %663 = vst [vmem:[%s207 + $0x844] sm:$0xff] %v662
                %v664 = vld [vmem:[%s206 + $0x3a30] sm:$0xff]
                %665 = vst [vmem:[%s207 + $0x850] sm:$0xff] %v664
                %v666 = vld [vmem:[%s206 + $0x3a38] sm:$0xff]
                %667 = vst [vmem:[%s207 + $0x858] sm:$0xff] %v666
                %v668 = vld [vmem:[%s206 + $0x3a40] sm:$0xff]
                %669 = vst [vmem:[%s207 + $0x860] sm:$0xff] %v668
                %v670 = vld [vmem:[%s206 + $0x3af4] sm:$0xff]
                %671 = vst [vmem:[%s207 + $0x86c] sm:$0xff] %v670
                %v672 = vld [vmem:[%s206 + $0x3afc] sm:$0xff]
                %673 = vst [vmem:[%s207 + $0x874] sm:$0xff] %v672
                %v674 = vld [vmem:[%s206 + $0x3b04] sm:$0xff]
                %675 = vst [vmem:[%s207 + $0x87c] sm:$0xff] %v674
                %v676 = vld [vmem:[%s206 + $0x3bb8] sm:$0xff]
                %677 = vst [vmem:[%s207 + $0x888] sm:$0xff] %v676
                %v678 = vld [vmem:[%s206 + $0x3bc0] sm:$0xff]
                %679 = vst [vmem:[%s207 + $0x890] sm:$0xff] %v678
                %v680 = vld [vmem:[%s206 + $0x3bc8] sm:$0xff]
                %681 = vst [vmem:[%s207 + $0x898] sm:$0xff] %v680
                %v682 = vld [vmem:[%s206 + $0x3c7c] sm:$0xff]
                %683 = vst [vmem:[%s207 + $0x8a4] sm:$0xff] %v682
                %v684 = vld [vmem:[%s206 + $0x3c84] sm:$0xff]
                %685 = vst [vmem:[%s207 + $0x8ac] sm:$0xff] %v684
                %v686 = vld [vmem:[%s206 + $0x3c8c] sm:$0xff]
                %687 = vst [vmem:[%s207 + $0x8b4] sm:$0xff] %v686
                %v688 = vld [vmem:[%s206 + $0x3d40] sm:$0xff]
                %689 = vst [vmem:[%s207 + $0x8c0] sm:$0xff] %v688
                %v690 = vld [vmem:[%s206 + $0x3d48] sm:$0xff]
                %691 = vst [vmem:[%s207 + $0x8c8] sm:$0xff] %v690
                %v692 = vld [vmem:[%s206 + $0x3d50] sm:$0xff]
                %693 = vst [vmem:[%s207 + $0x8d0] sm:$0xff] %v692
                %v694 = vld [vmem:[%s206 + $0x3e04] sm:$0xff]
                %695 = vst [vmem:[%s207 + $0x8dc] sm:$0xff] %v694
                %v696 = vld [vmem:[%s206 + $0x3e0c] sm:$0xff]
                %697 = vst [vmem:[%s207 + $0x8e4] sm:$0xff] %v696
                %v698 = vld [vmem:[%s206 + $0x3e14] sm:$0xff]
                %699 = vst [vmem:[%s207 + $0x8ec] sm:$0xff] %v698
                %v700 = vld [vmem:[%s206 + $0x3ec8] sm:$0xff]
                %701 = vst [vmem:[%s207 + $0x8f8] sm:$0xff] %v700
                %v702 = vld [vmem:[%s206 + $0x3ed0] sm:$0xff]
                %703 = vst [vmem:[%s207 + $0x900] sm:$0xff] %v702
                %v704 = vld [vmem:[%s206 + $0x3ed8] sm:$0xff]
                %705 = vst [vmem:[%s207 + $0x908] sm:$0xff] %v704
                %v706 = vld [vmem:[%s206 + $0x3f8c] sm:$0xff]
                %707 = vst [vmem:[%s207 + $0x914] sm:$0xff] %v706
                %v708 = vld [vmem:[%s206 + $0x3f94] sm:$0xff]
                %709 = vst [vmem:[%s207 + $0x91c] sm:$0xff] %v708
                %v710 = vld [vmem:[%s206 + $0x3f9c] sm:$0xff]
                %711 = vst [vmem:[%s207 + $0x924] sm:$0xff] %v710
                %v712 = vld [vmem:[%s206 + $0x4050] sm:$0xff]
                %713 = vst [vmem:[%s207 + $0x930] sm:$0xff] %v712
                %v714 = vld [vmem:[%s206 + $0x4058] sm:$0xff]
                %715 = vst [vmem:[%s207 + $0x938] sm:$0xff] %v714
                %v716 = vld [vmem:[%s206 + $0x4060] sm:$0xff]
                %717 = vst [vmem:[%s207 + $0x940] sm:$0xff] %v716
                %v718 = vld [vmem:[%s206 + $0x4114] sm:$0xff]
                %719 = vst [vmem:[%s207 + $0x94c] sm:$0xff] %v718
                %v720 = vld [vmem:[%s206 + $0x411c] sm:$0xff]
                %721 = vst [vmem:[%s207 + $0x954] sm:$0xff] %v720
                %v722 = vld [vmem:[%s206 + $0x4124] sm:$0xff]
                %723 = vst [vmem:[%s207 + $0x95c] sm:$0xff] %v722
                %v724 = vld [vmem:[%s206 + $0x41d8] sm:$0xff]
                %725 = vst [vmem:[%s207 + $0x968] sm:$0xff] %v724
                %v726 = vld [vmem:[%s206 + $0x41e0] sm:$0xff]
                %727 = vst [vmem:[%s207 + $0x970] sm:$0xff] %v726
                %v728 = vld [vmem:[%s206 + $0x41e8] sm:$0xff]
                %729 = vst [vmem:[%s207 + $0x978] sm:$0xff] %v728
                %v730 = vld [vmem:[%s206 + $0x429c] sm:$0xff]
                %731 = vst [vmem:[%s207 + $0x984] sm:$0xff] %v730
                %v732 = vld [vmem:[%s206 + $0x42a4] sm:$0xff]
                %733 = vst [vmem:[%s207 + $0x98c] sm:$0xff] %v732
                %v734 = vld [vmem:[%s206 + $0x42ac] sm:$0xff]
                %735 = vst [vmem:[%s207 + $0x994] sm:$0xff] %v734
                %v736 = vld [vmem:[%s206 + $0x4360] sm:$0xff]
                %737 = vst [vmem:[%s207 + $0x9a0] sm:$0xff] %v736
                %v738 = vld [vmem:[%s206 + $0x4368] sm:$0xff]
                %739 = vst [vmem:[%s207 + $0x9a8] sm:$0xff] %v738
                %v740 = vld [vmem:[%s206 + $0x4370] sm:$0xff]
                %741 = vst [vmem:[%s207 + $0x9b0] sm:$0xff] %v740
                %v742 = vld [vmem:[%s206 + $0x4424] sm:$0xff]
                %743 = vst [vmem:[%s207 + $0x9bc] sm:$0xff] %v742
                %v744 = vld [vmem:[%s206 + $0x442c] sm:$0xff]
                %745 = vst [vmem:[%s207 + $0x9c4] sm:$0xff] %v744
                %v746 = vld [vmem:[%s206 + $0x4434] sm:$0xff]
                %747 = vst [vmem:[%s207 + $0x9cc] sm:$0xff] %v746
                %v748 = vld [vmem:[%s206 + $0x44e8] sm:$0xff]
                %749 = vst [vmem:[%s207 + $0x9d8] sm:$0xff] %v748
                %v750 = vld [vmem:[%s206 + $0x44f0] sm:$0xff]
                %751 = vst [vmem:[%s207 + $0x9e0] sm:$0xff] %v750
                %v752 = vld [vmem:[%s206 + $0x44f8] sm:$0xff]
                %753 = vst [vmem:[%s207 + $0x9e8] sm:$0xff] %v752
                %v754 = vld [vmem:[%s206 + $0x45ac] sm:$0xff]
                %755 = vst [vmem:[%s207 + $0x9f4] sm:$0xff] %v754
                %v756 = vld [vmem:[%s206 + $0x45b4] sm:$0xff]
                %757 = vst [vmem:[%s207 + $0x9fc] sm:$0xff] %v756
                %v758 = vld [vmem:[%s206 + $0x45bc] sm:$0xff]
                %759 = vst [vmem:[%s207 + $0xa04] sm:$0xff] %v758
                %v760 = vld [vmem:[%s206 + $0x4670] sm:$0xff]
                %761 = vst [vmem:[%s207 + $0xa10] sm:$0xff] %v760
                %v762 = vld [vmem:[%s206 + $0x4678] sm:$0xff]
                %763 = vst [vmem:[%s207 + $0xa18] sm:$0xff] %v762
                %v764 = vld [vmem:[%s206 + $0x4680] sm:$0xff]
                %765 = vst [vmem:[%s207 + $0xa20] sm:$0xff] %v764
                %v766 = vld [vmem:[%s206 + $0x4734] sm:$0xff]
                %767 = vst [vmem:[%s207 + $0xa2c] sm:$0xff] %v766
                %v768 = vld [vmem:[%s206 + $0x473c] sm:$0xff]
                %769 = vst [vmem:[%s207 + $0xa34] sm:$0xff] %v768
                %v770 = vld [vmem:[%s206 + $0x4744] sm:$0xff]
                %771 = vst [vmem:[%s207 + $0xa3c] sm:$0xff] %v770
                %v772 = vld [vmem:[%s206 + $0x47f8] sm:$0xff]
                %773 = vst [vmem:[%s207 + $0xa48] sm:$0xff] %v772
                %v774 = vld [vmem:[%s206 + $0x4800] sm:$0xff]
                %775 = vst [vmem:[%s207 + $0xa50] sm:$0xff] %v774
                %v776 = vld [vmem:[%s206 + $0x4808] sm:$0xff]
                %777 = vst [vmem:[%s207 + $0xa58] sm:$0xff] %v776
                %v778 = vld [vmem:[%s206 + $0x48bc] sm:$0xff]
                %779 = vst [vmem:[%s207 + $0xa64] sm:$0xff] %v778
                %v780 = vld [vmem:[%s206 + $0x48c4] sm:$0xff]
                %781 = vst [vmem:[%s207 + $0xa6c] sm:$0xff] %v780
                %v782 = vld [vmem:[%s206 + $0x48cc] sm:$0xff]
                %783 = vst [vmem:[%s207 + $0xa74] sm:$0xff] %v782
                %v784 = vld [vmem:[%s206 + $0x4980] sm:$0xff]
                %785 = vst [vmem:[%s207 + $0xa80] sm:$0xff] %v784
                %v786 = vld [vmem:[%s206 + $0x4988] sm:$0xff]
                %787 = vst [vmem:[%s207 + $0xa88] sm:$0xff] %v786
                %v788 = vld [vmem:[%s206 + $0x4990] sm:$0xff]
                %789 = vst [vmem:[%s207 + $0xa90] sm:$0xff] %v788
                %v790 = vld [vmem:[%s206 + $0x4a44] sm:$0xff]
                %791 = vst [vmem:[%s207 + $0xa9c] sm:$0xff] %v790
                %v792 = vld [vmem:[%s206 + $0x4a4c] sm:$0xff]
                %793 = vst [vmem:[%s207 + $0xaa4] sm:$0xff] %v792
                %v794 = vld [vmem:[%s206 + $0x4a54] sm:$0xff]
                %795 = vst [vmem:[%s207 + $0xaac] sm:$0xff] %v794
                %v796 = vld [vmem:[%s206 + $0x4b08] sm:$0xff]
                %797 = vst [vmem:[%s207 + $0xab8] sm:$0xff] %v796
                %v798 = vld [vmem:[%s206 + $0x4b10] sm:$0xff]
                %799 = vst [vmem:[%s207 + $0xac0] sm:$0xff] %v798
                %v800 = vld [vmem:[%s206 + $0x4b18] sm:$0xff]
                %801 = vst [vmem:[%s207 + $0xac8] sm:$0xff] %v800
                %v802 = vld [vmem:[%s206 + $0x4bcc] sm:$0xff]
                %803 = vst [vmem:[%s207 + $0xad4] sm:$0xff] %v802
                %v804 = vld [vmem:[%s206 + $0x4bd4] sm:$0xff]
                %805 = vst [vmem:[%s207 + $0xadc] sm:$0xff] %v804
                %v806 = vld [vmem:[%s206 + $0x4bdc] sm:$0xff]
                %807 = vst [vmem:[%s207 + $0xae4] sm:$0xff] %v806
                %v808 = vld [vmem:[%s206 + $0x4c90] sm:$0xff]
                %809 = vst [vmem:[%s207 + $0xaf0] sm:$0xff] %v808
                %v810 = vld [vmem:[%s206 + $0x4c98] sm:$0xff]
                %811 = vst [vmem:[%s207 + $0xaf8] sm:$0xff] %v810
                %v812 = vld [vmem:[%s206 + $0x4ca0] sm:$0xff]
                %813 = vst [vmem:[%s207 + $0xb00] sm:$0xff] %v812
                %v814 = vld [vmem:[%s206 + $0x4d54] sm:$0xff]
                %815 = vst [vmem:[%s207 + $0xb0c] sm:$0xff] %v814
                %v816 = vld [vmem:[%s206 + $0x4d5c] sm:$0xff]
                %817 = vst [vmem:[%s207 + $0xb14] sm:$0xff] %v816
                %v818 = vld [vmem:[%s206 + $0x4d64] sm:$0xff]
                %819 = vst [vmem:[%s207 + $0xb1c] sm:$0xff] %v818
                %v820 = vld [vmem:[%s206 + $0x4e18] sm:$0xff]
                %821 = vst [vmem:[%s207 + $0xb28] sm:$0xff] %v820
                %v822 = vld [vmem:[%s206 + $0x4e20] sm:$0xff]
                %823 = vst [vmem:[%s207 + $0xb30] sm:$0xff] %v822
                %v824 = vld [vmem:[%s206 + $0x4e28] sm:$0xff]
                %825 = vst [vmem:[%s207 + $0xb38] sm:$0xff] %v824
                %v826 = vld [vmem:[%s206 + $0x4edc] sm:$0xff]
                %827 = vst [vmem:[%s207 + $0xb44] sm:$0xff] %v826
                %v828 = vld [vmem:[%s206 + $0x4ee4] sm:$0xff]
                %829 = vst [vmem:[%s207 + $0xb4c] sm:$0xff] %v828
                %v830 = vld [vmem:[%s206 + $0x4eec] sm:$0xff]
                %831 = vst [vmem:[%s207 + $0xb54] sm:$0xff] %v830
                %v832 = vld [vmem:[%s206 + $0x4fa0] sm:$0xff]
                %833 = vst [vmem:[%s207 + $0xb60] sm:$0xff] %v832
                %v834 = vld [vmem:[%s206 + $0x4fa8] sm:$0xff]
                %835 = vst [vmem:[%s207 + $0xb68] sm:$0xff] %v834
                %v836 = vld [vmem:[%s206 + $0x4fb0] sm:$0xff]
                %837 = vst [vmem:[%s207 + $0xb70] sm:$0xff] %v836
                %v838 = vld [vmem:[%s206 + $0x5064] sm:$0xff]
                %839 = vst [vmem:[%s207 + $0xb7c] sm:$0xff] %v838
                %v840 = vld [vmem:[%s206 + $0x506c] sm:$0xff]
                %841 = vst [vmem:[%s207 + $0xb84] sm:$0xff] %v840
                %v842 = vld [vmem:[%s206 + $0x5074] sm:$0xff]
                %843 = vst [vmem:[%s207 + $0xb8c] sm:$0xff] %v842
                %v844 = vld [vmem:[%s206 + $0x5128] sm:$0xff]
                %845 = vst [vmem:[%s207 + $0xb98] sm:$0xff] %v844
                %v846 = vld [vmem:[%s206 + $0x5130] sm:$0xff]
                %847 = vst [vmem:[%s207 + $0xba0] sm:$0xff] %v846
                %v848 = vld [vmem:[%s206 + $0x5138] sm:$0xff]
                %849 = vst [vmem:[%s207 + $0xba8] sm:$0xff] %v848
                %v850 = vld [vmem:[%s206 + $0x51ec] sm:$0xff]
                %851 = vst [vmem:[%s207 + $0xbb4] sm:$0xff] %v850
                %v852 = vld [vmem:[%s206 + $0x51f4] sm:$0xff]
                %853 = vst [vmem:[%s207 + $0xbbc] sm:$0xff] %v852
                %v854 = vld [vmem:[%s206 + $0x51fc] sm:$0xff]
                %855 = vst [vmem:[%s207 + $0xbc4] sm:$0xff] %v854
                %v856 = vld [vmem:[%s206 + $0x52b0] sm:$0xff]
                %857 = vst [vmem:[%s207 + $0xbd0] sm:$0xff] %v856
                %v858 = vld [vmem:[%s206 + $0x52b8] sm:$0xff]
                %859 = vst [vmem:[%s207 + $0xbd8] sm:$0xff] %v858
                %v860 = vld [vmem:[%s206 + $0x52c0] sm:$0xff]
                %861 = vst [vmem:[%s207 + $0xbe0] sm:$0xff] %v860
                %v862 = vld [vmem:[%s206 + $0x5374] sm:$0xff]
                %863 = vst [vmem:[%s207 + $0xbec] sm:$0xff] %v862
                %v864 = vld [vmem:[%s206 + $0x537c] sm:$0xff]
                %865 = vst [vmem:[%s207 + $0xbf4] sm:$0xff] %v864
                %v866 = vld [vmem:[%s206 + $0x5384] sm:$0xff]
                %867 = vst [vmem:[%s207 + $0xbfc] sm:$0xff] %v866
                %v868 = vld [vmem:[%s206 + $0x5438] sm:$0xff]
                %869 = vst [vmem:[%s207 + $0xc08] sm:$0xff] %v868
                %v870 = vld [vmem:[%s206 + $0x5440] sm:$0xff]
                %871 = vst [vmem:[%s207 + $0xc10] sm:$0xff] %v870
                %v872 = vld [vmem:[%s206 + $0x5448] sm:$0xff]
                %873 = vst [vmem:[%s207 + $0xc18] sm:$0xff] %v872
                %v874 = vld [vmem:[%s206 + $0x54fc] sm:$0xff]
                %875 = vst [vmem:[%s207 + $0xc24] sm:$0xff] %v874
                %v876 = vld [vmem:[%s206 + $0x5504] sm:$0xff]
                %877 = vst [vmem:[%s207 + $0xc2c] sm:$0xff] %v876
                %v878 = vld [vmem:[%s206 + $0x550c] sm:$0xff]
                %879 = vst [vmem:[%s207 + $0xc34] sm:$0xff] %v878
                %v880 = vld [vmem:[%s206 + $0x55c0] sm:$0xff]
                %881 = vst [vmem:[%s207 + $0xc40] sm:$0xff] %v880
                %v882 = vld [vmem:[%s206 + $0x55c8] sm:$0xff]
                %883 = vst [vmem:[%s207 + $0xc48] sm:$0xff] %v882
                %v884 = vld [vmem:[%s206 + $0x55d0] sm:$0xff]
                %885 = vst [vmem:[%s207 + $0xc50] sm:$0xff] %v884
                %v886 = vld [vmem:[%s206 + $0x5684] sm:$0xff]
                %887 = vst [vmem:[%s207 + $0xc5c] sm:$0xff] %v886
                %v888 = vld [vmem:[%s206 + $0x568c] sm:$0xff]
                %889 = vst [vmem:[%s207 + $0xc64] sm:$0xff] %v888
                %v890 = vld [vmem:[%s206 + $0x5694] sm:$0xff]
                %891 = vst [vmem:[%s207 + $0xc6c] sm:$0xff] %v890
                %v892 = vld [vmem:[%s206 + $0x5748] sm:$0xff]
                %893 = vst [vmem:[%s207 + $0xc78] sm:$0xff] %v892
                %v894 = vld [vmem:[%s206 + $0x5750] sm:$0xff]
                %895 = vst [vmem:[%s207 + $0xc80] sm:$0xff] %v894
                %v896 = vld [vmem:[%s206 + $0x5758] sm:$0xff]
                %897 = vst [vmem:[%s207 + $0xc88] sm:$0xff] %v896
                %v898 = vld [vmem:[%s206 + $0x580c] sm:$0xff]
                %899 = vst [vmem:[%s207 + $0xc94] sm:$0xff] %v898
                %v900 = vld [vmem:[%s206 + $0x5814] sm:$0xff]
                %901 = vst [vmem:[%s207 + $0xc9c] sm:$0xff] %v900
                %v902 = vld [vmem:[%s206 + $0x581c] sm:$0xff]
                %903 = vst [vmem:[%s207 + $0xca4] sm:$0xff] %v902
                %v904 = vld [vmem:[%s206 + $0x58d0] sm:$0xff]
                %905 = vst [vmem:[%s207 + $0xcb0] sm:$0xff] %v904
                %v906 = vld [vmem:[%s206 + $0x58d8] sm:$0xff]
                %907 = vst [vmem:[%s207 + $0xcb8] sm:$0xff] %v906
                %v908 = vld [vmem:[%s206 + $0x58e0] sm:$0xff]
                %909 = vst [vmem:[%s207 + $0xcc0] sm:$0xff] %v908
                %v910 = vld [vmem:[%s206 + $0x5994] sm:$0xff]
                %911 = vst [vmem:[%s207 + $0xccc] sm:$0xff] %v910
                %v912 = vld [vmem:[%s206 + $0x599c] sm:$0xff]
                %913 = vst [vmem:[%s207 + $0xcd4] sm:$0xff] %v912
                %v914 = vld [vmem:[%s206 + $0x59a4] sm:$0xff]
                %915 = vst [vmem:[%s207 + $0xcdc] sm:$0xff] %v914
                %v916 = vld [vmem:[%s206 + $0x5a58] sm:$0xff]
                %917 = vst [vmem:[%s207 + $0xce8] sm:$0xff] %v916
                %v918 = vld [vmem:[%s206 + $0x5a60] sm:$0xff]
                %919 = vst [vmem:[%s207 + $0xcf0] sm:$0xff] %v918
                %v920 = vld [vmem:[%s206 + $0x5a68] sm:$0xff]
                %921 = vst [vmem:[%s207 + $0xcf8] sm:$0xff] %v920
                %v922 = vld [vmem:[%s206 + $0x5b1c] sm:$0xff]
                %923 = vst [vmem:[%s207 + $0xd04] sm:$0xff] %v922
                %v924 = vld [vmem:[%s206 + $0x5b24] sm:$0xff]
                %925 = vst [vmem:[%s207 + $0xd0c] sm:$0xff] %v924
                %v926 = vld [vmem:[%s206 + $0x5b2c] sm:$0xff]
                %927 = vst [vmem:[%s207 + $0xd14] sm:$0xff] %v926
                %v928 = vld [vmem:[%s206 + $0x5be0] sm:$0xff]
                %929 = vst [vmem:[%s207 + $0xd20] sm:$0xff] %v928
                %v930 = vld [vmem:[%s206 + $0x5be8] sm:$0xff]
                %931 = vst [vmem:[%s207 + $0xd28] sm:$0xff] %v930
                %v932 = vld [vmem:[%s206 + $0x5bf0] sm:$0xff]
                %933 = vst [vmem:[%s207 + $0xd30] sm:$0xff] %v932
                %v934 = vld [vmem:[%s206 + $0x5ca4] sm:$0xff]
                %935 = vst [vmem:[%s207 + $0xd3c] sm:$0xff] %v934
                %v936 = vld [vmem:[%s206 + $0x5cac] sm:$0xff]
                %937 = vst [vmem:[%s207 + $0xd44] sm:$0xff] %v936
                %v938 = vld [vmem:[%s206 + $0x5cb4] sm:$0xff]
                %939 = vst [vmem:[%s207 + $0xd4c] sm:$0xff] %v938
                %v940 = vld [vmem:[%s206 + $0x5d68] sm:$0xff]
                %941 = vst [vmem:[%s207 + $0xd58] sm:$0xff] %v940
                %v942 = vld [vmem:[%s206 + $0x5d70] sm:$0xff]
                %943 = vst [vmem:[%s207 + $0xd60] sm:$0xff] %v942
                %v944 = vld [vmem:[%s206 + $0x5d78] sm:$0xff]
                %945 = vst [vmem:[%s207 + $0xd68] sm:$0xff] %v944
                %v946 = vld [vmem:[%s206 + $0x5e2c] sm:$0xff]
                %947 = vst [vmem:[%s207 + $0xd74] sm:$0xff] %v946
                %v948 = vld [vmem:[%s206 + $0x5e34] sm:$0xff]
                %949 = vst [vmem:[%s207 + $0xd7c] sm:$0xff] %v948
                %v950 = vld [vmem:[%s206 + $0x5e3c] sm:$0xff]
                %951 = vst [vmem:[%s207 + $0xd84] sm:$0xff] %v950
                %v952 = vld [vmem:[%s206 + $0x5ef0] sm:$0xff]
                %953 = vst [vmem:[%s207 + $0xd90] sm:$0xff] %v952
                %v954 = vld [vmem:[%s206 + $0x5ef8] sm:$0xff]
                %955 = vst [vmem:[%s207 + $0xd98] sm:$0xff] %v954
                %v956 = vld [vmem:[%s206 + $0x5f00] sm:$0xff]
                %957 = vst [vmem:[%s207 + $0xda0] sm:$0xff] %v956
                %v958 = vld [vmem:[%s206 + $0x5fb4] sm:$0xff]
                %959 = vst [vmem:[%s207 + $0xdac] sm:$0xff] %v958
                %v960 = vld [vmem:[%s206 + $0x5fbc] sm:$0xff]
                %961 = vst [vmem:[%s207 + $0xdb4] sm:$0xff] %v960
                %v962 = vld [vmem:[%s206 + $0x5fc4] sm:$0xff]
                %963 = vst [vmem:[%s207 + $0xdbc] sm:$0xff] %v962
                %v964 = vld [vmem:[%s206 + $0x6078] sm:$0xff]
                %965 = vst [vmem:[%s207 + $0xdc8] sm:$0xff] %v964
                %v966 = vld [vmem:[%s206 + $0x6080] sm:$0xff]
                %967 = vst [vmem:[%s207 + $0xdd0] sm:$0xff] %v966
                %v968 = vld [vmem:[%s206 + $0x6088] sm:$0xff]
                %969 = vst [vmem:[%s207 + $0xdd8] sm:$0xff] %v968
                %v970 = vld [vmem:[%s206 + $0x613c] sm:$0xff]
                %971 = vst [vmem:[%s207 + $0xde4] sm:$0xff] %v970
                %v972 = vld [vmem:[%s206 + $0x6144] sm:$0xff]
                %973 = vst [vmem:[%s207 + $0xdec] sm:$0xff] %v972
                %v974 = vld [vmem:[%s206 + $0x614c] sm:$0xff]
                %975 = vst [vmem:[%s207 + $0xdf4] sm:$0xff] %v974
              $region37: #{bernoulli_decoder_forward.6} parent=31 // loop_footer
                %s205 = sadd.s32 1, %s201
              $region38: #{bernoulli_decoder_forward.6} parent=31 // loop_footer_branch
                %200 = sbr.rel target = $region34
              $region39: #{bernoulli_decoder_forward.6} parent=31 // loop_exit
                _
              loop: start=0, step=1, limit=1
              $region40: #{bernoulli_decoder_forward.6} parent=31 // loop_pre_header
                _
              $region41: #{bernoulli_decoder_forward.6} parent=31 // loop_header
                %s978 = sphi 0, %s982
                %p979 = scmp.ge.s32.totalorder %s978, 1
                %s983 = sphi %s198, %s198
                %s984 = sphi %s199, %s199
              $region42: #{bernoulli_decoder_forward.6} parent=31 // loop_header_branch
                %981 = sbr.rel (%p979) target = $region46
              $region43: #{bernoulli_decoder_forward.6} parent=31 // loop_body
                %v985 = vld [vmem:[%s983] sm:$0xf]
                %986 = vst [vmem:[%s984] sm:$0xf] %v985
                %v987 = vld [vmem:[%s983 + $0xc4] sm:$0xf]
                %988 = vst [vmem:[%s984 + $0x1c] sm:$0xf] %v987
                %v989 = vld [vmem:[%s983 + $0x188] sm:$0xf]
                %990 = vst [vmem:[%s984 + $0x38] sm:$0xf] %v989
                %v991 = vld [vmem:[%s983 + $0x24c] sm:$0xf]
                %992 = vst [vmem:[%s984 + $0x54] sm:$0xf] %v991
                %v993 = vld [vmem:[%s983 + $0x310] sm:$0xf]
                %994 = vst [vmem:[%s984 + $0x70] sm:$0xf] %v993
                %v995 = vld [vmem:[%s983 + $0x3d4] sm:$0xf]
                %996 = vst [vmem:[%s984 + $0x8c] sm:$0xf] %v995
                %v997 = vld [vmem:[%s983 + $0x498] sm:$0xf]
                %998 = vst [vmem:[%s984 + $0xa8] sm:$0xf] %v997
                %v999 = vld [vmem:[%s983 + $0x55c] sm:$0xf]
                %1000 = vst [vmem:[%s984 + $0xc4] sm:$0xf] %v999
                %v1001 = vld [vmem:[%s983 + $0x620] sm:$0xf]
                %1002 = vst [vmem:[%s984 + $0xe0] sm:$0xf] %v1001
                %v1003 = vld [vmem:[%s983 + $0x6e4] sm:$0xf]
                %1004 = vst [vmem:[%s984 + $0xfc] sm:$0xf] %v1003
                %v1005 = vld [vmem:[%s983 + $0x7a8] sm:$0xf]
                %1006 = vst [vmem:[%s984 + $0x118] sm:$0xf] %v1005
                %v1007 = vld [vmem:[%s983 + $0x86c] sm:$0xf]
                %1008 = vst [vmem:[%s984 + $0x134] sm:$0xf] %v1007
                %v1009 = vld [vmem:[%s983 + $0x930] sm:$0xf]
                %1010 = vst [vmem:[%s984 + $0x150] sm:$0xf] %v1009
                %v1011 = vld [vmem:[%s983 + $0x9f4] sm:$0xf]
                %1012 = vst [vmem:[%s984 + $0x16c] sm:$0xf] %v1011
                %v1013 = vld [vmem:[%s983 + $0xab8] sm:$0xf]
                %1014 = vst [vmem:[%s984 + $0x188] sm:$0xf] %v1013
                %v1015 = vld [vmem:[%s983 + $0xb7c] sm:$0xf]
                %1016 = vst [vmem:[%s984 + $0x1a4] sm:$0xf] %v1015
                %v1017 = vld [vmem:[%s983 + $0xc40] sm:$0xf]
                %1018 = vst [vmem:[%s984 + $0x1c0] sm:$0xf] %v1017
                %v1019 = vld [vmem:[%s983 + $0xd04] sm:$0xf]
                %1020 = vst [vmem:[%s984 + $0x1dc] sm:$0xf] %v1019
                %v1021 = vld [vmem:[%s983 + $0xdc8] sm:$0xf]
                %1022 = vst [vmem:[%s984 + $0x1f8] sm:$0xf] %v1021
                %v1023 = vld [vmem:[%s983 + $0xe8c] sm:$0xf]
                %1024 = vst [vmem:[%s984 + $0x214] sm:$0xf] %v1023
                %v1025 = vld [vmem:[%s983 + $0xf50] sm:$0xf]
                %1026 = vst [vmem:[%s984 + $0x230] sm:$0xf] %v1025
                %v1027 = vld [vmem:[%s983 + $0x1014] sm:$0xf]
                %1028 = vst [vmem:[%s984 + $0x24c] sm:$0xf] %v1027
                %v1029 = vld [vmem:[%s983 + $0x10d8] sm:$0xf]
                %1030 = vst [vmem:[%s984 + $0x268] sm:$0xf] %v1029
                %v1031 = vld [vmem:[%s983 + $0x119c] sm:$0xf]
                %1032 = vst [vmem:[%s984 + $0x284] sm:$0xf] %v1031
                %v1033 = vld [vmem:[%s983 + $0x1260] sm:$0xf]
                %1034 = vst [vmem:[%s984 + $0x2a0] sm:$0xf] %v1033
                %v1035 = vld [vmem:[%s983 + $0x1324] sm:$0xf]
                %1036 = vst [vmem:[%s984 + $0x2bc] sm:$0xf] %v1035
                %v1037 = vld [vmem:[%s983 + $0x13e8] sm:$0xf]
                %1038 = vst [vmem:[%s984 + $0x2d8] sm:$0xf] %v1037
                %v1039 = vld [vmem:[%s983 + $0x14ac] sm:$0xf]
                %1040 = vst [vmem:[%s984 + $0x2f4] sm:$0xf] %v1039
                %v1041 = vld [vmem:[%s983 + $0x1570] sm:$0xf]
                %1042 = vst [vmem:[%s984 + $0x310] sm:$0xf] %v1041
                %v1043 = vld [vmem:[%s983 + $0x1634] sm:$0xf]
                %1044 = vst [vmem:[%s984 + $0x32c] sm:$0xf] %v1043
                %v1045 = vld [vmem:[%s983 + $0x16f8] sm:$0xf]
                %1046 = vst [vmem:[%s984 + $0x348] sm:$0xf] %v1045
                %v1047 = vld [vmem:[%s983 + $0x17bc] sm:$0xf]
                %1048 = vst [vmem:[%s984 + $0x364] sm:$0xf] %v1047
                %v1049 = vld [vmem:[%s983 + $0x1880] sm:$0xf]
                %1050 = vst [vmem:[%s984 + $0x380] sm:$0xf] %v1049
                %v1051 = vld [vmem:[%s983 + $0x1944] sm:$0xf]
                %1052 = vst [vmem:[%s984 + $0x39c] sm:$0xf] %v1051
                %v1053 = vld [vmem:[%s983 + $0x1a08] sm:$0xf]
                %1054 = vst [vmem:[%s984 + $0x3b8] sm:$0xf] %v1053
                %v1055 = vld [vmem:[%s983 + $0x1acc] sm:$0xf]
                %1056 = vst [vmem:[%s984 + $0x3d4] sm:$0xf] %v1055
                %v1057 = vld [vmem:[%s983 + $0x1b90] sm:$0xf]
                %1058 = vst [vmem:[%s984 + $0x3f0] sm:$0xf] %v1057
                %v1059 = vld [vmem:[%s983 + $0x1c54] sm:$0xf]
                %1060 = vst [vmem:[%s984 + $0x40c] sm:$0xf] %v1059
                %v1061 = vld [vmem:[%s983 + $0x1d18] sm:$0xf]
                %1062 = vst [vmem:[%s984 + $0x428] sm:$0xf] %v1061
                %v1063 = vld [vmem:[%s983 + $0x1ddc] sm:$0xf]
                %1064 = vst [vmem:[%s984 + $0x444] sm:$0xf] %v1063
                %v1065 = vld [vmem:[%s983 + $0x1ea0] sm:$0xf]
                %1066 = vst [vmem:[%s984 + $0x460] sm:$0xf] %v1065
                %v1067 = vld [vmem:[%s983 + $0x1f64] sm:$0xf]
                %1068 = vst [vmem:[%s984 + $0x47c] sm:$0xf] %v1067
                %v1069 = vld [vmem:[%s983 + $0x2028] sm:$0xf]
                %1070 = vst [vmem:[%s984 + $0x498] sm:$0xf] %v1069
                %v1071 = vld [vmem:[%s983 + $0x20ec] sm:$0xf]
                %1072 = vst [vmem:[%s984 + $0x4b4] sm:$0xf] %v1071
                %v1073 = vld [vmem:[%s983 + $0x21b0] sm:$0xf]
                %1074 = vst [vmem:[%s984 + $0x4d0] sm:$0xf] %v1073
                %v1075 = vld [vmem:[%s983 + $0x2274] sm:$0xf]
                %1076 = vst [vmem:[%s984 + $0x4ec] sm:$0xf] %v1075
                %v1077 = vld [vmem:[%s983 + $0x2338] sm:$0xf]
                %1078 = vst [vmem:[%s984 + $0x508] sm:$0xf] %v1077
                %v1079 = vld [vmem:[%s983 + $0x23fc] sm:$0xf]
                %1080 = vst [vmem:[%s984 + $0x524] sm:$0xf] %v1079
                %v1081 = vld [vmem:[%s983 + $0x24c0] sm:$0xf]
                %1082 = vst [vmem:[%s984 + $0x540] sm:$0xf] %v1081
                %v1083 = vld [vmem:[%s983 + $0x2584] sm:$0xf]
                %1084 = vst [vmem:[%s984 + $0x55c] sm:$0xf] %v1083
                %v1085 = vld [vmem:[%s983 + $0x2648] sm:$0xf]
                %1086 = vst [vmem:[%s984 + $0x578] sm:$0xf] %v1085
                %v1087 = vld [vmem:[%s983 + $0x270c] sm:$0xf]
                %1088 = vst [vmem:[%s984 + $0x594] sm:$0xf] %v1087
                %v1089 = vld [vmem:[%s983 + $0x27d0] sm:$0xf]
                %1090 = vst [vmem:[%s984 + $0x5b0] sm:$0xf] %v1089
                %v1091 = vld [vmem:[%s983 + $0x2894] sm:$0xf]
                %1092 = vst [vmem:[%s984 + $0x5cc] sm:$0xf] %v1091
                %v1093 = vld [vmem:[%s983 + $0x2958] sm:$0xf]
                %1094 = vst [vmem:[%s984 + $0x5e8] sm:$0xf] %v1093
                %v1095 = vld [vmem:[%s983 + $0x2a1c] sm:$0xf]
                %1096 = vst [vmem:[%s984 + $0x604] sm:$0xf] %v1095
                %v1097 = vld [vmem:[%s983 + $0x2ae0] sm:$0xf]
                %1098 = vst [vmem:[%s984 + $0x620] sm:$0xf] %v1097
                %v1099 = vld [vmem:[%s983 + $0x2ba4] sm:$0xf]
                %1100 = vst [vmem:[%s984 + $0x63c] sm:$0xf] %v1099
                %v1101 = vld [vmem:[%s983 + $0x2c68] sm:$0xf]
                %1102 = vst [vmem:[%s984 + $0x658] sm:$0xf] %v1101
                %v1103 = vld [vmem:[%s983 + $0x2d2c] sm:$0xf]
                %1104 = vst [vmem:[%s984 + $0x674] sm:$0xf] %v1103
                %v1105 = vld [vmem:[%s983 + $0x2df0] sm:$0xf]
                %1106 = vst [vmem:[%s984 + $0x690] sm:$0xf] %v1105
                %v1107 = vld [vmem:[%s983 + $0x2eb4] sm:$0xf]
                %1108 = vst [vmem:[%s984 + $0x6ac] sm:$0xf] %v1107
                %v1109 = vld [vmem:[%s983 + $0x2f78] sm:$0xf]
                %1110 = vst [vmem:[%s984 + $0x6c8] sm:$0xf] %v1109
                %v1111 = vld [vmem:[%s983 + $0x303c] sm:$0xf]
                %1112 = vst [vmem:[%s984 + $0x6e4] sm:$0xf] %v1111
                %v1113 = vld [vmem:[%s983 + $0x3100] sm:$0xf]
                %1114 = vst [vmem:[%s984 + $0x700] sm:$0xf] %v1113
                %v1115 = vld [vmem:[%s983 + $0x31c4] sm:$0xf]
                %1116 = vst [vmem:[%s984 + $0x71c] sm:$0xf] %v1115
                %v1117 = vld [vmem:[%s983 + $0x3288] sm:$0xf]
                %1118 = vst [vmem:[%s984 + $0x738] sm:$0xf] %v1117
                %v1119 = vld [vmem:[%s983 + $0x334c] sm:$0xf]
                %1120 = vst [vmem:[%s984 + $0x754] sm:$0xf] %v1119
                %v1121 = vld [vmem:[%s983 + $0x3410] sm:$0xf]
                %1122 = vst [vmem:[%s984 + $0x770] sm:$0xf] %v1121
                %v1123 = vld [vmem:[%s983 + $0x34d4] sm:$0xf]
                %1124 = vst [vmem:[%s984 + $0x78c] sm:$0xf] %v1123
                %v1125 = vld [vmem:[%s983 + $0x3598] sm:$0xf]
                %1126 = vst [vmem:[%s984 + $0x7a8] sm:$0xf] %v1125
                %v1127 = vld [vmem:[%s983 + $0x365c] sm:$0xf]
                %1128 = vst [vmem:[%s984 + $0x7c4] sm:$0xf] %v1127
                %v1129 = vld [vmem:[%s983 + $0x3720] sm:$0xf]
                %1130 = vst [vmem:[%s984 + $0x7e0] sm:$0xf] %v1129
                %v1131 = vld [vmem:[%s983 + $0x37e4] sm:$0xf]
                %1132 = vst [vmem:[%s984 + $0x7fc] sm:$0xf] %v1131
                %v1133 = vld [vmem:[%s983 + $0x38a8] sm:$0xf]
                %1134 = vst [vmem:[%s984 + $0x818] sm:$0xf] %v1133
                %v1135 = vld [vmem:[%s983 + $0x396c] sm:$0xf]
                %1136 = vst [vmem:[%s984 + $0x834] sm:$0xf] %v1135
                %v1137 = vld [vmem:[%s983 + $0x3a30] sm:$0xf]
                %1138 = vst [vmem:[%s984 + $0x850] sm:$0xf] %v1137
                %v1139 = vld [vmem:[%s983 + $0x3af4] sm:$0xf]
                %1140 = vst [vmem:[%s984 + $0x86c] sm:$0xf] %v1139
                %v1141 = vld [vmem:[%s983 + $0x3bb8] sm:$0xf]
                %1142 = vst [vmem:[%s984 + $0x888] sm:$0xf] %v1141
                %v1143 = vld [vmem:[%s983 + $0x3c7c] sm:$0xf]
                %1144 = vst [vmem:[%s984 + $0x8a4] sm:$0xf] %v1143
                %v1145 = vld [vmem:[%s983 + $0x3d40] sm:$0xf]
                %1146 = vst [vmem:[%s984 + $0x8c0] sm:$0xf] %v1145
                %v1147 = vld [vmem:[%s983 + $0x3e04] sm:$0xf]
                %1148 = vst [vmem:[%s984 + $0x8dc] sm:$0xf] %v1147
                %v1149 = vld [vmem:[%s983 + $0x3ec8] sm:$0xf]
                %1150 = vst [vmem:[%s984 + $0x8f8] sm:$0xf] %v1149
                %v1151 = vld [vmem:[%s983 + $0x3f8c] sm:$0xf]
                %1152 = vst [vmem:[%s984 + $0x914] sm:$0xf] %v1151
                %v1153 = vld [vmem:[%s983 + $0x4050] sm:$0xf]
                %1154 = vst [vmem:[%s984 + $0x930] sm:$0xf] %v1153
                %v1155 = vld [vmem:[%s983 + $0x4114] sm:$0xf]
                %1156 = vst [vmem:[%s984 + $0x94c] sm:$0xf] %v1155
                %v1157 = vld [vmem:[%s983 + $0x41d8] sm:$0xf]
                %1158 = vst [vmem:[%s984 + $0x968] sm:$0xf] %v1157
                %v1159 = vld [vmem:[%s983 + $0x429c] sm:$0xf]
                %1160 = vst [vmem:[%s984 + $0x984] sm:$0xf] %v1159
                %v1161 = vld [vmem:[%s983 + $0x4360] sm:$0xf]
                %1162 = vst [vmem:[%s984 + $0x9a0] sm:$0xf] %v1161
                %v1163 = vld [vmem:[%s983 + $0x4424] sm:$0xf]
                %1164 = vst [vmem:[%s984 + $0x9bc] sm:$0xf] %v1163
                %v1165 = vld [vmem:[%s983 + $0x44e8] sm:$0xf]
                %1166 = vst [vmem:[%s984 + $0x9d8] sm:$0xf] %v1165
                %v1167 = vld [vmem:[%s983 + $0x45ac] sm:$0xf]
                %1168 = vst [vmem:[%s984 + $0x9f4] sm:$0xf] %v1167
                %v1169 = vld [vmem:[%s983 + $0x4670] sm:$0xf]
                %1170 = vst [vmem:[%s984 + $0xa10] sm:$0xf] %v1169
                %v1171 = vld [vmem:[%s983 + $0x4734] sm:$0xf]
                %1172 = vst [vmem:[%s984 + $0xa2c] sm:$0xf] %v1171
                %v1173 = vld [vmem:[%s983 + $0x47f8] sm:$0xf]
                %1174 = vst [vmem:[%s984 + $0xa48] sm:$0xf] %v1173
                %v1175 = vld [vmem:[%s983 + $0x48bc] sm:$0xf]
                %1176 = vst [vmem:[%s984 + $0xa64] sm:$0xf] %v1175
                %v1177 = vld [vmem:[%s983 + $0x4980] sm:$0xf]
                %1178 = vst [vmem:[%s984 + $0xa80] sm:$0xf] %v1177
                %v1179 = vld [vmem:[%s983 + $0x4a44] sm:$0xf]
                %1180 = vst [vmem:[%s984 + $0xa9c] sm:$0xf] %v1179
                %v1181 = vld [vmem:[%s983 + $0x4b08] sm:$0xf]
                %1182 = vst [vmem:[%s984 + $0xab8] sm:$0xf] %v1181
                %v1183 = vld [vmem:[%s983 + $0x4bcc] sm:$0xf]
                %1184 = vst [vmem:[%s984 + $0xad4] sm:$0xf] %v1183
                %v1185 = vld [vmem:[%s983 + $0x4c90] sm:$0xf]
                %1186 = vst [vmem:[%s984 + $0xaf0] sm:$0xf] %v1185
                %v1187 = vld [vmem:[%s983 + $0x4d54] sm:$0xf]
                %1188 = vst [vmem:[%s984 + $0xb0c] sm:$0xf] %v1187
                %v1189 = vld [vmem:[%s983 + $0x4e18] sm:$0xf]
                %1190 = vst [vmem:[%s984 + $0xb28] sm:$0xf] %v1189
                %v1191 = vld [vmem:[%s983 + $0x4edc] sm:$0xf]
                %1192 = vst [vmem:[%s984 + $0xb44] sm:$0xf] %v1191
                %v1193 = vld [vmem:[%s983 + $0x4fa0] sm:$0xf]
                %1194 = vst [vmem:[%s984 + $0xb60] sm:$0xf] %v1193
                %v1195 = vld [vmem:[%s983 + $0x5064] sm:$0xf]
                %1196 = vst [vmem:[%s984 + $0xb7c] sm:$0xf] %v1195
                %v1197 = vld [vmem:[%s983 + $0x5128] sm:$0xf]
                %1198 = vst [vmem:[%s984 + $0xb98] sm:$0xf] %v1197
                %v1199 = vld [vmem:[%s983 + $0x51ec] sm:$0xf]
                %1200 = vst [vmem:[%s984 + $0xbb4] sm:$0xf] %v1199
                %v1201 = vld [vmem:[%s983 + $0x52b0] sm:$0xf]
                %1202 = vst [vmem:[%s984 + $0xbd0] sm:$0xf] %v1201
                %v1203 = vld [vmem:[%s983 + $0x5374] sm:$0xf]
                %1204 = vst [vmem:[%s984 + $0xbec] sm:$0xf] %v1203
                %v1205 = vld [vmem:[%s983 + $0x5438] sm:$0xf]
                %1206 = vst [vmem:[%s984 + $0xc08] sm:$0xf] %v1205
                %v1207 = vld [vmem:[%s983 + $0x54fc] sm:$0xf]
                %1208 = vst [vmem:[%s984 + $0xc24] sm:$0xf] %v1207
                %v1209 = vld [vmem:[%s983 + $0x55c0] sm:$0xf]
                %1210 = vst [vmem:[%s984 + $0xc40] sm:$0xf] %v1209
                %v1211 = vld [vmem:[%s983 + $0x5684] sm:$0xf]
                %1212 = vst [vmem:[%s984 + $0xc5c] sm:$0xf] %v1211
                %v1213 = vld [vmem:[%s983 + $0x5748] sm:$0xf]
                %1214 = vst [vmem:[%s984 + $0xc78] sm:$0xf] %v1213
                %v1215 = vld [vmem:[%s983 + $0x580c] sm:$0xf]
                %1216 = vst [vmem:[%s984 + $0xc94] sm:$0xf] %v1215
                %v1217 = vld [vmem:[%s983 + $0x58d0] sm:$0xf]
                %1218 = vst [vmem:[%s984 + $0xcb0] sm:$0xf] %v1217
                %v1219 = vld [vmem:[%s983 + $0x5994] sm:$0xf]
                %1220 = vst [vmem:[%s984 + $0xccc] sm:$0xf] %v1219
                %v1221 = vld [vmem:[%s983 + $0x5a58] sm:$0xf]
                %1222 = vst [vmem:[%s984 + $0xce8] sm:$0xf] %v1221
                %v1223 = vld [vmem:[%s983 + $0x5b1c] sm:$0xf]
                %1224 = vst [vmem:[%s984 + $0xd04] sm:$0xf] %v1223
                %v1225 = vld [vmem:[%s983 + $0x5be0] sm:$0xf]
                %1226 = vst [vmem:[%s984 + $0xd20] sm:$0xf] %v1225
                %v1227 = vld [vmem:[%s983 + $0x5ca4] sm:$0xf]
                %1228 = vst [vmem:[%s984 + $0xd3c] sm:$0xf] %v1227
                %v1229 = vld [vmem:[%s983 + $0x5d68] sm:$0xf]
                %1230 = vst [vmem:[%s984 + $0xd58] sm:$0xf] %v1229
                %v1231 = vld [vmem:[%s983 + $0x5e2c] sm:$0xf]
                %1232 = vst [vmem:[%s984 + $0xd74] sm:$0xf] %v1231
                %v1233 = vld [vmem:[%s983 + $0x5ef0] sm:$0xf]
                %1234 = vst [vmem:[%s984 + $0xd90] sm:$0xf] %v1233
                %v1235 = vld [vmem:[%s983 + $0x5fb4] sm:$0xf]
                %1236 = vst [vmem:[%s984 + $0xdac] sm:$0xf] %v1235
                %v1237 = vld [vmem:[%s983 + $0x6078] sm:$0xf]
                %1238 = vst [vmem:[%s984 + $0xdc8] sm:$0xf] %v1237
                %v1239 = vld [vmem:[%s983 + $0x613c] sm:$0xf]
                %1240 = vst [vmem:[%s984 + $0xde4] sm:$0xf] %v1239
              $region44: #{bernoulli_decoder_forward.6} parent=31 // loop_footer
                %s982 = sadd.s32 1, %s978
              $region45: #{bernoulli_decoder_forward.6} parent=31 // loop_footer_branch
                %977 = sbr.rel target = $region41
              $region46: #{bernoulli_decoder_forward.6} parent=31 // loop_exit
                _
            $region32: #{bernoulli_decoder_forward.6} parent=27 // pred_fallthru
              _
          $region28: #{bernoulli_decoder_forward.6} parent=23 // pred_fallthru
            _
          %1241 = vnop
        $region24: #{bernoulli_decoder_forward.6} parent=19 // pred_fallthru
          _
        // Predicated region
        $region47: #{bernoulli_decoder_forward.6} parent=19 // pred_check
          %p1242 = pneg %p78
        $region48: #{bernoulli_decoder_forward.6} parent=19 // pred_check_branch
          %1244 = sbr.rel (%p1242) target = $region50
        $region49: #{bernoulli_decoder_forward.6} parent=19 // pred_region
          %s1245 = smul.u32 7, %s11
          %p1246 = scmp.lt.s32.totalorder %s1245, 48
          %s1247 = scalar_select %p1246, %s1245, 48
          %s1248 = scalar_lea.vmem %s2, %s1247
          %s1249 = smul.u32 7, %s11
        $region50: #{bernoulli_decoder_forward.6} parent=19 // pred_fallthru
          _
        // Predicated region
        $region51: #{bernoulli_decoder_forward.6} parent=19 // pred_check
          %p1250 = pneg %p104
        $region52: #{bernoulli_decoder_forward.6} parent=19 // pred_check_branch
          %1252 = sbr.rel (%p1250) target = $region54
        $region53: #{bernoulli_decoder_forward.6} parent=19 // pred_region
          %s1253 = smul.u32 7, %s11
          %p1254 = scmp.lt.s32.totalorder %s1253, 48
          %s1255 = scalar_select %p1254, %s1253, 48
          %s1256 = scalar_lea.vmem %s3, %s1255
          %s1257 = smul.u32 7, %s11
        $region54: #{bernoulli_decoder_forward.6} parent=19 // pred_fallthru
          _
        // Predicated region
        $region55: #{bernoulli_decoder_forward.6} parent=19 // pred_check
          %p1258 = pneg %p130
        $region56: #{bernoulli_decoder_forward.6} parent=19 // pred_check_branch
          %1260 = sbr.rel (%p1258) target = $region58
        $region57: #{bernoulli_decoder_forward.6} parent=19 // pred_region
          %s1261 = smul.u32 7, %s11
          %p1262 = scmp.lt.s32.totalorder %s1261, 48
          %s1263 = scalar_select %p1262, %s1261, 48
          %s1264 = scalar_lea.vmem %s4, %s1263
          %s1265 = smul.u32 7, %s11
        $region58: #{bernoulli_decoder_forward.6} parent=19 // pred_fallthru
          _
      $region20: #{bernoulli_decoder_forward.6} parent=5 // pred_fallthru
        _
      %p1266 = scmp.le.s32.totalorder 1, %s11
      %p1267 = scmp.lt.s32.totalorder %s11, 8
      %p1268 = pnand %p1266, %p1267
      %p1269 = pneg %p1268
      // Predicated region
      $region59: #{bernoulli_decoder_forward.6} parent=5 // pred_check
        _
      $region60: #{bernoulli_decoder_forward.6} parent=5 // pred_check_branch
        %1271 = sbr.rel (%p1268) target = $region62
      $region61: #{bernoulli_decoder_forward.6} parent=5 // pred_region
        %s1272 = ssub.s32 %s11, 1
        %s1273 = sand.u32 %s45, 1
        %s1274 = sand.u32 %s45, 1
        %s1275 = smul.addr %s1274, 3584
        %s1276 = scalar_lea.vmem [#allocation2], %s1275
        // Predicated region
        $region63: #{bernoulli_decoder_forward.6} parent=61 // pred_check
          %p1277 = pneg %p58
        $region64: #{bernoulli_decoder_forward.6} parent=61 // pred_check_branch
          %1279 = sbr.rel (%p1277) target = $region66
        $region65: #{bernoulli_decoder_forward.6} parent=61 // pred_region
          _
        $region66: #{bernoulli_decoder_forward.6} parent=61 // pred_fallthru
          _
        %p1280 = pneg %p32
        %p1281 = pneg %p29
        %s1282 = sand.u32 %s45, 1
        %s1283 = sand.u32 %s45, 1
        %s1284 = smul.addr %s1283, 3584
        %s1285 = scalar_lea.vmem [#allocation2], %s1284
        %p1286 = pneg %p58
        %p1287 = pneg %p55
        %s1288 = smul.u32 7, %s16
        %p1289 = scmp.lt.s32.totalorder %s1288, 48
        %s1290 = scalar_select %p1289, %s1288, 48
        %s1291 = scalar_lea.vmem %s2, %s1290
        %p1292 = pneg %p84
        %p1293 = pneg %p81
        %s1294 = smul.u32 7, %s16
        %p1295 = scmp.lt.s32.totalorder %s1294, 48
        %s1296 = scalar_select %p1295, %s1294, 48
        %s1297 = scalar_lea.vmem %s3, %s1296
        %p1298 = pneg %p110
        %p1299 = pneg %p107
        %s1300 = smul.u32 7, %s16
        %p1301 = scmp.lt.s32.totalorder %s1300, 48
        %s1302 = scalar_select %p1301, %s1300, 48
        %s1303 = scalar_lea.vmem %s4, %s1302
        %p1304 = pneg %p136
        %p1305 = pneg %p133
        %p1306 = pneg %p162
        %p1307 = pneg %p159
        %s1308 = smul.u32 7, %s16
        %p1309 = scmp.lt.s32.totalorder %s1308, 48
        %s1310 = scalar_select %p1309, %s1308, 48
        %s1311 = smul.addr %s1310, 8
        %s1312 = scalar_lea.vmem %s5, %s1311
        %s1313 = smul.u32 7, %s16
        %s1314 = smul.u32 7, %s16
        %p1315 = scmp.lt.s32.totalorder %s1314, 48
        %s1316 = scalar_select %p1315, %s1314, 48
        %s1317 = scalar_lea.vmem %s2, %s1316
        %s1318 = smul.u32 7, %s16
        %s1319 = smul.u32 7, %s16
        %p1320 = scmp.lt.s32.totalorder %s1319, 48
        %s1321 = scalar_select %p1320, %s1319, 48
        %s1322 = scalar_lea.vmem %s3, %s1321
        %s1323 = smul.u32 7, %s16
        %s1324 = smul.u32 7, %s16
        %p1325 = scmp.lt.s32.totalorder %s1324, 48
        %s1326 = scalar_select %p1325, %s1324, 48
        %s1327 = scalar_lea.vmem %s4, %s1326
        %s1328 = smul.u32 7, %s16
        %s1329 = smul.u32 7, %s16
        %p1330 = scmp.lt.s32.totalorder %s1329, 48
        %s1331 = scalar_select %p1330, %s1329, 48
        %s1332 = smul.addr %s1331, 8
        %s1333 = scalar_lea.vmem %s5, %s1332
        %s1334 = smul.u32 7, %s16
        %v1336 = vld [vmem:[%s0] sm:$0xff]
        %v1337 = vld [vmem:[%s0 + $0x8] sm:$0xff]
        %v1338 = vld [vmem:[%s0 + $0x10] sm:$0xff]
        %v1339 = vld [vmem:[%s0 + $0x18] sm:$0xff]
        %v1340 = vld [vmem:[%s1276] sm:$0xff]
        %v1341 = vld [vmem:[%s1276 + $0x8] sm:$0xff]
        %v1342 = vld [vmem:[%s1276 + $0x10] sm:$0xff]
        %v1343 = vld [vmem:[%s1276 + $0x18] sm:$0xf]
        %v1344 = vld [vmem:[%s1276 + $0x1c] sm:$0xff]
        %v1345 = vld [vmem:[%s1276 + $0x24] sm:$0xff]
        %v1346 = vld [vmem:[%s1276 + $0x2c] sm:$0xff]
        %v1347 = vld [vmem:[%s1276 + $0x34] sm:$0xf]
        %v1348 = vld [vmem:[%s1276 + $0x38] sm:$0xff]
        %v1349 = vld [vmem:[%s1276 + $0x40] sm:$0xff]
        %v1350 = vld [vmem:[%s1276 + $0x48] sm:$0xff]
        %v1351 = vld [vmem:[%s1276 + $0x50] sm:$0xf]
        %v1352 = vld [vmem:[%s1276 + $0x54] sm:$0xff]
        %v1353 = vld [vmem:[%s1276 + $0x5c] sm:$0xff]
        %v1354 = vld [vmem:[%s1276 + $0x64] sm:$0xff]
        %v1355 = vld [vmem:[%s1276 + $0x6c] sm:$0xf]
        %v1356 = vld [vmem:[%s1276 + $0x70] sm:$0xff]
        %v1357 = vld [vmem:[%s1276 + $0x78] sm:$0xff]
        %v1358 = vld [vmem:[%s1276 + $0x80] sm:$0xff]
        %v1359 = vld [vmem:[%s1276 + $0x88] sm:$0xf]
        %v1360 = vld [vmem:[%s1276 + $0x8c] sm:$0xff]
        %v1361 = vld [vmem:[%s1276 + $0x94] sm:$0xff]
        %v1362 = vld [vmem:[%s1276 + $0x9c] sm:$0xff]
        %v1363 = vld [vmem:[%s1276 + $0xa4] sm:$0xf]
        %v1364 = vld [vmem:[%s1276 + $0xa8] sm:$0xff]
        %v1365 = vld [vmem:[%s1276 + $0xb0] sm:$0xff]
        %v1366 = vld [vmem:[%s1276 + $0xb8] sm:$0xff]
        %v1367 = vld [vmem:[%s1276 + $0xc0] sm:$0xf]
        %v1368 = vld [vmem:[%s1276 + $0xc4] sm:$0xff]
        %v1369 = vld [vmem:[%s1276 + $0xcc] sm:$0xff]
        %v1370 = vld [vmem:[%s1276 + $0xd4] sm:$0xff]
        %v1371 = vld [vmem:[%s1276 + $0xdc] sm:$0xf]
        %v1372 = vld [vmem:[%s1276 + $0xe0] sm:$0xff]
        %v1373 = vld [vmem:[%s1276 + $0xe8] sm:$0xff]
        %v1374 = vld [vmem:[%s1276 + $0xf0] sm:$0xff]
        %v1375 = vld [vmem:[%s1276 + $0xf8] sm:$0xf]
        %v1376 = vld [vmem:[%s1276 + $0xfc] sm:$0xff]
        %v1377 = vld [vmem:[%s1276 + $0x104] sm:$0xff]
        %v1378 = vld [vmem:[%s1276 + $0x10c] sm:$0xff]
        %v1379 = vld [vmem:[%s1276 + $0x114] sm:$0xf]
        %v1380 = vld [vmem:[%s1276 + $0x118] sm:$0xff]
        %v1381 = vld [vmem:[%s1276 + $0x120] sm:$0xff]
        %v1382 = vld [vmem:[%s1276 + $0x128] sm:$0xff]
        %v1383 = vld [vmem:[%s1276 + $0x130] sm:$0xf]
        %v1384 = vld [vmem:[%s1276 + $0x134] sm:$0xff]
        %v1385 = vld [vmem:[%s1276 + $0x13c] sm:$0xff]
        %v1386 = vld [vmem:[%s1276 + $0x144] sm:$0xff]
        %v1387 = vld [vmem:[%s1276 + $0x14c] sm:$0xf]
        %v1388 = vld [vmem:[%s1276 + $0x150] sm:$0xff]
        %v1389 = vld [vmem:[%s1276 + $0x158] sm:$0xff]
        %v1390 = vld [vmem:[%s1276 + $0x160] sm:$0xff]
        %v1391 = vld [vmem:[%s1276 + $0x168] sm:$0xf]
        %v1392 = vld [vmem:[%s1276 + $0x16c] sm:$0xff]
        %v1393 = vld [vmem:[%s1276 + $0x174] sm:$0xff]
        %v1394 = vld [vmem:[%s1276 + $0x17c] sm:$0xff]
        %v1395 = vld [vmem:[%s1276 + $0x184] sm:$0xf]
        %v1396 = vld [vmem:[%s1276 + $0x188] sm:$0xff]
        %v1397 = vld [vmem:[%s1276 + $0x190] sm:$0xff]
        %v1398 = vld [vmem:[%s1276 + $0x198] sm:$0xff]
        %v1399 = vld [vmem:[%s1276 + $0x1a0] sm:$0xf]
        %v1400 = vld [vmem:[%s1276 + $0x1a4] sm:$0xff]
        %v1401 = vld [vmem:[%s1276 + $0x1ac] sm:$0xff]
        %v1402 = vld [vmem:[%s1276 + $0x1b4] sm:$0xff]
        %v1403 = vld [vmem:[%s1276 + $0x1bc] sm:$0xf]
        %v1404 = vld [vmem:[%s1276 + $0x1c0] sm:$0xff]
        %v1405 = vld [vmem:[%s1276 + $0x1c8] sm:$0xff]
        %v1406 = vld [vmem:[%s1276 + $0x1d0] sm:$0xff]
        %v1407 = vld [vmem:[%s1276 + $0x1d8] sm:$0xf]
        %v1408 = vld [vmem:[%s1276 + $0x1dc] sm:$0xff]
        %v1409 = vld [vmem:[%s1276 + $0x1e4] sm:$0xff]
        %v1410 = vld [vmem:[%s1276 + $0x1ec] sm:$0xff]
        %v1411 = vld [vmem:[%s1276 + $0x1f4] sm:$0xf]
        %v1412 = vld [vmem:[%s1276 + $0x1f8] sm:$0xff]
        %v1413 = vld [vmem:[%s1276 + $0x200] sm:$0xff]
        %v1414 = vld [vmem:[%s1276 + $0x208] sm:$0xff]
        %v1415 = vld [vmem:[%s1276 + $0x210] sm:$0xf]
        %v1416 = vld [vmem:[%s1276 + $0x214] sm:$0xff]
        %v1417 = vld [vmem:[%s1276 + $0x21c] sm:$0xff]
        %v1418 = vld [vmem:[%s1276 + $0x224] sm:$0xff]
        %v1419 = vld [vmem:[%s1276 + $0x22c] sm:$0xf]
        %v1420 = vld [vmem:[%s1276 + $0x230] sm:$0xff]
        %v1421 = vld [vmem:[%s1276 + $0x238] sm:$0xff]
        %v1422 = vld [vmem:[%s1276 + $0x240] sm:$0xff]
        %v1423 = vld [vmem:[%s1276 + $0x248] sm:$0xf]
        %v1424 = vld [vmem:[%s1276 + $0x24c] sm:$0xff]
        %v1425 = vld [vmem:[%s1276 + $0x254] sm:$0xff]
        %v1426 = vld [vmem:[%s1276 + $0x25c] sm:$0xff]
        %v1427 = vld [vmem:[%s1276 + $0x264] sm:$0xf]
        %v1428 = vld [vmem:[%s1276 + $0x268] sm:$0xff]
        %v1429 = vld [vmem:[%s1276 + $0x270] sm:$0xff]
        %v1430 = vld [vmem:[%s1276 + $0x278] sm:$0xff]
        %v1431 = vld [vmem:[%s1276 + $0x280] sm:$0xf]
        %v1432 = vld [vmem:[%s1276 + $0x284] sm:$0xff]
        %v1433 = vld [vmem:[%s1276 + $0x28c] sm:$0xff]
        %v1434 = vld [vmem:[%s1276 + $0x294] sm:$0xff]
        %v1435 = vld [vmem:[%s1276 + $0x29c] sm:$0xf]
        %v1436 = vld [vmem:[%s1276 + $0x2a0] sm:$0xff]
        %v1437 = vld [vmem:[%s1276 + $0x2a8] sm:$0xff]
        %v1438 = vld [vmem:[%s1276 + $0x2b0] sm:$0xff]
        %v1439 = vld [vmem:[%s1276 + $0x2b8] sm:$0xf]
        %v1440 = vld [vmem:[%s1276 + $0x2bc] sm:$0xff]
        %v1441 = vld [vmem:[%s1276 + $0x2c4] sm:$0xff]
        %v1442 = vld [vmem:[%s1276 + $0x2cc] sm:$0xff]
        %v1443 = vld [vmem:[%s1276 + $0x2d4] sm:$0xf]
        %v1444 = vld [vmem:[%s1276 + $0x2d8] sm:$0xff]
        %v1445 = vld [vmem:[%s1276 + $0x2e0] sm:$0xff]
        %v1446 = vld [vmem:[%s1276 + $0x2e8] sm:$0xff]
        %v1447 = vld [vmem:[%s1276 + $0x2f0] sm:$0xf]
        %v1448 = vld [vmem:[%s1276 + $0x2f4] sm:$0xff]
        %v1449 = vld [vmem:[%s1276 + $0x2fc] sm:$0xff]
        %v1450 = vld [vmem:[%s1276 + $0x304] sm:$0xff]
        %v1451 = vld [vmem:[%s1276 + $0x30c] sm:$0xf]
        %v1452 = vld [vmem:[%s1276 + $0x310] sm:$0xff]
        %v1453 = vld [vmem:[%s1276 + $0x318] sm:$0xff]
        %v1454 = vld [vmem:[%s1276 + $0x320] sm:$0xff]
        %v1455 = vld [vmem:[%s1276 + $0x328] sm:$0xf]
        %v1456 = vld [vmem:[%s1276 + $0x32c] sm:$0xff]
        %v1457 = vld [vmem:[%s1276 + $0x334] sm:$0xff]
        %v1458 = vld [vmem:[%s1276 + $0x33c] sm:$0xff]
        %v1459 = vld [vmem:[%s1276 + $0x344] sm:$0xf]
        %v1460 = vld [vmem:[%s1276 + $0x348] sm:$0xff]
        %v1461 = vld [vmem:[%s1276 + $0x350] sm:$0xff]
        %v1462 = vld [vmem:[%s1276 + $0x358] sm:$0xff]
        %v1463 = vld [vmem:[%s1276 + $0x360] sm:$0xf]
        %v1464 = vld [vmem:[%s1276 + $0x364] sm:$0xff]
        %v1465 = vld [vmem:[%s1276 + $0x36c] sm:$0xff]
        %v1466 = vld [vmem:[%s1276 + $0x374] sm:$0xff]
        %v1467 = vld [vmem:[%s1276 + $0x37c] sm:$0xf]
        %v1468 = vld [vmem:[%s1276 + $0x380] sm:$0xff]
        %v1469 = vld [vmem:[%s1276 + $0x388] sm:$0xff]
        %v1470 = vld [vmem:[%s1276 + $0x390] sm:$0xff]
        %v1471 = vld [vmem:[%s1276 + $0x398] sm:$0xf]
        %v1472 = vld [vmem:[%s1276 + $0x39c] sm:$0xff]
        %v1473 = vld [vmem:[%s1276 + $0x3a4] sm:$0xff]
        %v1474 = vld [vmem:[%s1276 + $0x3ac] sm:$0xff]
        %v1475 = vld [vmem:[%s1276 + $0x3b4] sm:$0xf]
        %v1476 = vld [vmem:[%s1276 + $0x3b8] sm:$0xff]
        %v1477 = vld [vmem:[%s1276 + $0x3c0] sm:$0xff]
        %v1478 = vld [vmem:[%s1276 + $0x3c8] sm:$0xff]
        %v1479 = vld [vmem:[%s1276 + $0x3d0] sm:$0xf]
        %v1480 = vld [vmem:[%s1276 + $0x3d4] sm:$0xff]
        %v1481 = vld [vmem:[%s1276 + $0x3dc] sm:$0xff]
        %v1482 = vld [vmem:[%s1276 + $0x3e4] sm:$0xff]
        %v1483 = vld [vmem:[%s1276 + $0x3ec] sm:$0xf]
        %v1484 = vld [vmem:[%s1276 + $0x3f0] sm:$0xff]
        %v1485 = vld [vmem:[%s1276 + $0x3f8] sm:$0xff]
        %v1486 = vld [vmem:[%s1276 + $0x400] sm:$0xff]
        %v1487 = vld [vmem:[%s1276 + $0x408] sm:$0xf]
        %v1488 = vld [vmem:[%s1276 + $0x40c] sm:$0xff]
        %v1489 = vld [vmem:[%s1276 + $0x414] sm:$0xff]
        %v1490 = vld [vmem:[%s1276 + $0x41c] sm:$0xff]
        %v1491 = vld [vmem:[%s1276 + $0x424] sm:$0xf]
        %v1492 = vld [vmem:[%s1276 + $0x428] sm:$0xff]
        %v1493 = vld [vmem:[%s1276 + $0x430] sm:$0xff]
        %v1494 = vld [vmem:[%s1276 + $0x438] sm:$0xff]
        %v1495 = vld [vmem:[%s1276 + $0x440] sm:$0xf]
        %v1496 = vld [vmem:[%s1276 + $0x444] sm:$0xff]
        %v1497 = vld [vmem:[%s1276 + $0x44c] sm:$0xff]
        %v1498 = vld [vmem:[%s1276 + $0x454] sm:$0xff]
        %v1499 = vld [vmem:[%s1276 + $0x45c] sm:$0xf]
        %v1500 = vld [vmem:[%s1276 + $0x460] sm:$0xff]
        %v1501 = vld [vmem:[%s1276 + $0x468] sm:$0xff]
        %v1502 = vld [vmem:[%s1276 + $0x470] sm:$0xff]
        %v1503 = vld [vmem:[%s1276 + $0x478] sm:$0xf]
        %v1504 = vld [vmem:[%s1276 + $0x47c] sm:$0xff]
        %v1505 = vld [vmem:[%s1276 + $0x484] sm:$0xff]
        %v1506 = vld [vmem:[%s1276 + $0x48c] sm:$0xff]
        %v1507 = vld [vmem:[%s1276 + $0x494] sm:$0xf]
        %v1508 = vld [vmem:[%s1276 + $0x498] sm:$0xff]
        %v1509 = vld [vmem:[%s1276 + $0x4a0] sm:$0xff]
        %v1510 = vld [vmem:[%s1276 + $0x4a8] sm:$0xff]
        %v1511 = vld [vmem:[%s1276 + $0x4b0] sm:$0xf]
        %v1512 = vld [vmem:[%s1276 + $0x4b4] sm:$0xff]
        %v1513 = vld [vmem:[%s1276 + $0x4bc] sm:$0xff]
        %v1514 = vld [vmem:[%s1276 + $0x4c4] sm:$0xff]
        %v1515 = vld [vmem:[%s1276 + $0x4cc] sm:$0xf]
        %v1516 = vld [vmem:[%s1276 + $0x4d0] sm:$0xff]
        %v1517 = vld [vmem:[%s1276 + $0x4d8] sm:$0xff]
        %v1518 = vld [vmem:[%s1276 + $0x4e0] sm:$0xff]
        %v1519 = vld [vmem:[%s1276 + $0x4e8] sm:$0xf]
        %v1520 = vld [vmem:[%s1276 + $0x4ec] sm:$0xff]
        %v1521 = vld [vmem:[%s1276 + $0x4f4] sm:$0xff]
        %v1522 = vld [vmem:[%s1276 + $0x4fc] sm:$0xff]
        %v1523 = vld [vmem:[%s1276 + $0x504] sm:$0xf]
        %v1524 = vld [vmem:[%s1276 + $0x508] sm:$0xff]
        %v1525 = vld [vmem:[%s1276 + $0x510] sm:$0xff]
        %v1526 = vld [vmem:[%s1276 + $0x518] sm:$0xff]
        %v1527 = vld [vmem:[%s1276 + $0x520] sm:$0xf]
        %v1528 = vld [vmem:[%s1276 + $0x524] sm:$0xff]
        %v1529 = vld [vmem:[%s1276 + $0x52c] sm:$0xff]
        %v1530 = vld [vmem:[%s1276 + $0x534] sm:$0xff]
        %v1531 = vld [vmem:[%s1276 + $0x53c] sm:$0xf]
        %v1532 = vld [vmem:[%s1276 + $0x540] sm:$0xff]
        %v1533 = vld [vmem:[%s1276 + $0x548] sm:$0xff]
        %v1534 = vld [vmem:[%s1276 + $0x550] sm:$0xff]
        %v1535 = vld [vmem:[%s1276 + $0x558] sm:$0xf]
        %v1536 = vld [vmem:[%s1276 + $0x55c] sm:$0xff]
        %v1537 = vld [vmem:[%s1276 + $0x564] sm:$0xff]
        %v1538 = vld [vmem:[%s1276 + $0x56c] sm:$0xff]
        %v1539 = vld [vmem:[%s1276 + $0x574] sm:$0xf]
        %v1540 = vld [vmem:[%s1276 + $0x578] sm:$0xff]
        %v1541 = vld [vmem:[%s1276 + $0x580] sm:$0xff]
        %v1542 = vld [vmem:[%s1276 + $0x588] sm:$0xff]
        %v1543 = vld [vmem:[%s1276 + $0x590] sm:$0xf]
        %v1544 = vld [vmem:[%s1276 + $0x594] sm:$0xff]
        %v1545 = vld [vmem:[%s1276 + $0x59c] sm:$0xff]
        %v1546 = vld [vmem:[%s1276 + $0x5a4] sm:$0xff]
        %v1547 = vld [vmem:[%s1276 + $0x5ac] sm:$0xf]
        %v1548 = vld [vmem:[%s1276 + $0x5b0] sm:$0xff]
        %v1549 = vld [vmem:[%s1276 + $0x5b8] sm:$0xff]
        %v1550 = vld [vmem:[%s1276 + $0x5c0] sm:$0xff]
        %v1551 = vld [vmem:[%s1276 + $0x5c8] sm:$0xf]
        %v1552 = vld [vmem:[%s1276 + $0x5cc] sm:$0xff]
        %v1553 = vld [vmem:[%s1276 + $0x5d4] sm:$0xff]
        %v1554 = vld [vmem:[%s1276 + $0x5dc] sm:$0xff]
        %v1555 = vld [vmem:[%s1276 + $0x5e4] sm:$0xf]
        %v1556 = vld [vmem:[%s1276 + $0x5e8] sm:$0xff]
        %v1557 = vld [vmem:[%s1276 + $0x5f0] sm:$0xff]
        %v1558 = vld [vmem:[%s1276 + $0x5f8] sm:$0xff]
        %v1559 = vld [vmem:[%s1276 + $0x600] sm:$0xf]
        %v1560 = vld [vmem:[%s1276 + $0x604] sm:$0xff]
        %v1561 = vld [vmem:[%s1276 + $0x60c] sm:$0xff]
        %v1562 = vld [vmem:[%s1276 + $0x614] sm:$0xff]
        %v1563 = vld [vmem:[%s1276 + $0x61c] sm:$0xf]
        %v1564 = vld [vmem:[%s1276 + $0x620] sm:$0xff]
        %v1565 = vld [vmem:[%s1276 + $0x628] sm:$0xff]
        %v1566 = vld [vmem:[%s1276 + $0x630] sm:$0xff]
        %v1567 = vld [vmem:[%s1276 + $0x638] sm:$0xf]
        %v1568 = vld [vmem:[%s1276 + $0x63c] sm:$0xff]
        %v1569 = vld [vmem:[%s1276 + $0x644] sm:$0xff]
        %v1570 = vld [vmem:[%s1276 + $0x64c] sm:$0xff]
        %v1571 = vld [vmem:[%s1276 + $0x654] sm:$0xf]
        %v1572 = vld [vmem:[%s1276 + $0x658] sm:$0xff]
        %v1573 = vld [vmem:[%s1276 + $0x660] sm:$0xff]
        %v1574 = vld [vmem:[%s1276 + $0x668] sm:$0xff]
        %v1575 = vld [vmem:[%s1276 + $0x670] sm:$0xf]
        %v1576 = vld [vmem:[%s1276 + $0x674] sm:$0xff]
        %v1577 = vld [vmem:[%s1276 + $0x67c] sm:$0xff]
        %v1578 = vld [vmem:[%s1276 + $0x684] sm:$0xff]
        %v1579 = vld [vmem:[%s1276 + $0x68c] sm:$0xf]
        %v1580 = vld [vmem:[%s1276 + $0x690] sm:$0xff]
        %v1581 = vld [vmem:[%s1276 + $0x698] sm:$0xff]
        %v1582 = vld [vmem:[%s1276 + $0x6a0] sm:$0xff]
        %v1583 = vld [vmem:[%s1276 + $0x6a8] sm:$0xf]
        %v1584 = vld [vmem:[%s1276 + $0x6ac] sm:$0xff]
        %v1585 = vld [vmem:[%s1276 + $0x6b4] sm:$0xff]
        %v1586 = vld [vmem:[%s1276 + $0x6bc] sm:$0xff]
        %v1587 = vld [vmem:[%s1276 + $0x6c4] sm:$0xf]
        %v1588 = vld [vmem:[%s1276 + $0x6c8] sm:$0xff]
        %v1589 = vld [vmem:[%s1276 + $0x6d0] sm:$0xff]
        %v1590 = vld [vmem:[%s1276 + $0x6d8] sm:$0xff]
        %v1591 = vld [vmem:[%s1276 + $0x6e0] sm:$0xf]
        %v1592 = vld [vmem:[%s1276 + $0x6e4] sm:$0xff]
        %v1593 = vld [vmem:[%s1276 + $0x6ec] sm:$0xff]
        %v1594 = vld [vmem:[%s1276 + $0x6f4] sm:$0xff]
        %v1595 = vld [vmem:[%s1276 + $0x6fc] sm:$0xf]
        %v1596 = vld [vmem:[%s1276 + $0x700] sm:$0xff]
        %v1597 = vld [vmem:[%s1276 + $0x708] sm:$0xff]
        %v1598 = vld [vmem:[%s1276 + $0x710] sm:$0xff]
        %v1599 = vld [vmem:[%s1276 + $0x718] sm:$0xf]
        %v1600 = vld [vmem:[%s1276 + $0x71c] sm:$0xff]
        %v1601 = vld [vmem:[%s1276 + $0x724] sm:$0xff]
        %v1602 = vld [vmem:[%s1276 + $0x72c] sm:$0xff]
        %v1603 = vld [vmem:[%s1276 + $0x734] sm:$0xf]
        %v1604 = vld [vmem:[%s1276 + $0x738] sm:$0xff]
        %v1605 = vld [vmem:[%s1276 + $0x740] sm:$0xff]
        %v1606 = vld [vmem:[%s1276 + $0x748] sm:$0xff]
        %v1607 = vld [vmem:[%s1276 + $0x750] sm:$0xf]
        %v1608 = vld [vmem:[%s1276 + $0x754] sm:$0xff]
        %v1609 = vld [vmem:[%s1276 + $0x75c] sm:$0xff]
        %v1610 = vld [vmem:[%s1276 + $0x764] sm:$0xff]
        %v1611 = vld [vmem:[%s1276 + $0x76c] sm:$0xf]
        %v1612 = vld [vmem:[%s1276 + $0x770] sm:$0xff]
        %v1613 = vld [vmem:[%s1276 + $0x778] sm:$0xff]
        %v1614 = vld [vmem:[%s1276 + $0x780] sm:$0xff]
        %v1615 = vld [vmem:[%s1276 + $0x788] sm:$0xf]
        %v1616 = vld [vmem:[%s1276 + $0x78c] sm:$0xff]
        %v1617 = vld [vmem:[%s1276 + $0x794] sm:$0xff]
        %v1618 = vld [vmem:[%s1276 + $0x79c] sm:$0xff]
        %v1619 = vld [vmem:[%s1276 + $0x7a4] sm:$0xf]
        %v1620 = vld [vmem:[%s1276 + $0x7a8] sm:$0xff]
        %v1621 = vld [vmem:[%s1276 + $0x7b0] sm:$0xff]
        %v1622 = vld [vmem:[%s1276 + $0x7b8] sm:$0xff]
        %v1623 = vld [vmem:[%s1276 + $0x7c0] sm:$0xf]
        %v1624 = vld [vmem:[%s1276 + $0x7c4] sm:$0xff]
        %v1625 = vld [vmem:[%s1276 + $0x7cc] sm:$0xff]
        %v1626 = vld [vmem:[%s1276 + $0x7d4] sm:$0xff]
        %v1627 = vld [vmem:[%s1276 + $0x7dc] sm:$0xf]
        %v1628 = vld [vmem:[%s1276 + $0x7e0] sm:$0xff]
        %v1629 = vld [vmem:[%s1276 + $0x7e8] sm:$0xff]
        %v1630 = vld [vmem:[%s1276 + $0x7f0] sm:$0xff]
        %v1631 = vld [vmem:[%s1276 + $0x7f8] sm:$0xf]
        %v1632 = vld [vmem:[%s1276 + $0x7fc] sm:$0xff]
        %v1633 = vld [vmem:[%s1276 + $0x804] sm:$0xff]
        %v1634 = vld [vmem:[%s1276 + $0x80c] sm:$0xff]
        %v1635 = vld [vmem:[%s1276 + $0x814] sm:$0xf]
        %v1636 = vld [vmem:[%s1276 + $0x818] sm:$0xff]
        %v1637 = vld [vmem:[%s1276 + $0x820] sm:$0xff]
        %v1638 = vld [vmem:[%s1276 + $0x828] sm:$0xff]
        %v1639 = vld [vmem:[%s1276 + $0x830] sm:$0xf]
        %v1640 = vld [vmem:[%s1276 + $0x834] sm:$0xff]
        %v1641 = vld [vmem:[%s1276 + $0x83c] sm:$0xff]
        %v1642 = vld [vmem:[%s1276 + $0x844] sm:$0xff]
        %v1643 = vld [vmem:[%s1276 + $0x84c] sm:$0xf]
        %v1644 = vld [vmem:[%s1276 + $0x850] sm:$0xff]
        %v1645 = vld [vmem:[%s1276 + $0x858] sm:$0xff]
        %v1646 = vld [vmem:[%s1276 + $0x860] sm:$0xff]
        %v1647 = vld [vmem:[%s1276 + $0x868] sm:$0xf]
        %v1648 = vld [vmem:[%s1276 + $0x86c] sm:$0xff]
        %v1649 = vld [vmem:[%s1276 + $0x874] sm:$0xff]
        %v1650 = vld [vmem:[%s1276 + $0x87c] sm:$0xff]
        %v1651 = vld [vmem:[%s1276 + $0x884] sm:$0xf]
        %v1652 = vld [vmem:[%s1276 + $0x888] sm:$0xff]
        %v1653 = vld [vmem:[%s1276 + $0x890] sm:$0xff]
        %v1654 = vld [vmem:[%s1276 + $0x898] sm:$0xff]
        %v1655 = vld [vmem:[%s1276 + $0x8a0] sm:$0xf]
        %v1656 = vld [vmem:[%s1276 + $0x8a4] sm:$0xff]
        %v1657 = vld [vmem:[%s1276 + $0x8ac] sm:$0xff]
        %v1658 = vld [vmem:[%s1276 + $0x8b4] sm:$0xff]
        %v1659 = vld [vmem:[%s1276 + $0x8bc] sm:$0xf]
        %v1660 = vld [vmem:[%s1276 + $0x8c0] sm:$0xff]
        %v1661 = vld [vmem:[%s1276 + $0x8c8] sm:$0xff]
        %v1662 = vld [vmem:[%s1276 + $0x8d0] sm:$0xff]
        %v1663 = vld [vmem:[%s1276 + $0x8d8] sm:$0xf]
        %v1664 = vld [vmem:[%s1276 + $0x8dc] sm:$0xff]
        %v1665 = vld [vmem:[%s1276 + $0x8e4] sm:$0xff]
        %v1666 = vld [vmem:[%s1276 + $0x8ec] sm:$0xff]
        %v1667 = vld [vmem:[%s1276 + $0x8f4] sm:$0xf]
        %v1668 = vld [vmem:[%s1276 + $0x8f8] sm:$0xff]
        %v1669 = vld [vmem:[%s1276 + $0x900] sm:$0xff]
        %v1670 = vld [vmem:[%s1276 + $0x908] sm:$0xff]
        %v1671 = vld [vmem:[%s1276 + $0x910] sm:$0xf]
        %v1672 = vld [vmem:[%s1276 + $0x914] sm:$0xff]
        %v1673 = vld [vmem:[%s1276 + $0x91c] sm:$0xff]
        %v1674 = vld [vmem:[%s1276 + $0x924] sm:$0xff]
        %v1675 = vld [vmem:[%s1276 + $0x92c] sm:$0xf]
        %v1676 = vld [vmem:[%s1276 + $0x930] sm:$0xff]
        %v1677 = vld [vmem:[%s1276 + $0x938] sm:$0xff]
        %v1678 = vld [vmem:[%s1276 + $0x940] sm:$0xff]
        %v1679 = vld [vmem:[%s1276 + $0x948] sm:$0xf]
        %v1680 = vld [vmem:[%s1276 + $0x94c] sm:$0xff]
        %v1681 = vld [vmem:[%s1276 + $0x954] sm:$0xff]
        %v1682 = vld [vmem:[%s1276 + $0x95c] sm:$0xff]
        %v1683 = vld [vmem:[%s1276 + $0x964] sm:$0xf]
        %v1684 = vld [vmem:[%s1276 + $0x968] sm:$0xff]
        %v1685 = vld [vmem:[%s1276 + $0x970] sm:$0xff]
        %v1686 = vld [vmem:[%s1276 + $0x978] sm:$0xff]
        %v1687 = vld [vmem:[%s1276 + $0x980] sm:$0xf]
        %v1688 = vld [vmem:[%s1276 + $0x984] sm:$0xff]
        %v1689 = vld [vmem:[%s1276 + $0x98c] sm:$0xff]
        %v1690 = vld [vmem:[%s1276 + $0x994] sm:$0xff]
        %v1691 = vld [vmem:[%s1276 + $0x99c] sm:$0xf]
        %v1692 = vld [vmem:[%s1276 + $0x9a0] sm:$0xff]
        %v1693 = vld [vmem:[%s1276 + $0x9a8] sm:$0xff]
        %v1694 = vld [vmem:[%s1276 + $0x9b0] sm:$0xff]
        %v1695 = vld [vmem:[%s1276 + $0x9b8] sm:$0xf]
        %v1696 = vld [vmem:[%s1276 + $0x9bc] sm:$0xff]
        %v1697 = vld [vmem:[%s1276 + $0x9c4] sm:$0xff]
        %v1698 = vld [vmem:[%s1276 + $0x9cc] sm:$0xff]
        %v1699 = vld [vmem:[%s1276 + $0x9d4] sm:$0xf]
        %v1700 = vld [vmem:[%s1276 + $0x9d8] sm:$0xff]
        %v1701 = vld [vmem:[%s1276 + $0x9e0] sm:$0xff]
        %v1702 = vld [vmem:[%s1276 + $0x9e8] sm:$0xff]
        %v1703 = vld [vmem:[%s1276 + $0x9f0] sm:$0xf]
        %v1704 = vld [vmem:[%s1276 + $0x9f4] sm:$0xff]
        %v1705 = vld [vmem:[%s1276 + $0x9fc] sm:$0xff]
        %v1706 = vld [vmem:[%s1276 + $0xa04] sm:$0xff]
        %v1707 = vld [vmem:[%s1276 + $0xa0c] sm:$0xf]
        %v1708 = vld [vmem:[%s1276 + $0xa10] sm:$0xff]
        %v1709 = vld [vmem:[%s1276 + $0xa18] sm:$0xff]
        %v1710 = vld [vmem:[%s1276 + $0xa20] sm:$0xff]
        %v1711 = vld [vmem:[%s1276 + $0xa28] sm:$0xf]
        %v1712 = vld [vmem:[%s1276 + $0xa2c] sm:$0xff]
        %v1713 = vld [vmem:[%s1276 + $0xa34] sm:$0xff]
        %v1714 = vld [vmem:[%s1276 + $0xa3c] sm:$0xff]
        %v1715 = vld [vmem:[%s1276 + $0xa44] sm:$0xf]
        %v1716 = vld [vmem:[%s1276 + $0xa48] sm:$0xff]
        %v1717 = vld [vmem:[%s1276 + $0xa50] sm:$0xff]
        %v1718 = vld [vmem:[%s1276 + $0xa58] sm:$0xff]
        %v1719 = vld [vmem:[%s1276 + $0xa60] sm:$0xf]
        %v1720 = vld [vmem:[%s1276 + $0xa64] sm:$0xff]
        %v1721 = vld [vmem:[%s1276 + $0xa6c] sm:$0xff]
        %v1722 = vld [vmem:[%s1276 + $0xa74] sm:$0xff]
        %v1723 = vld [vmem:[%s1276 + $0xa7c] sm:$0xf]
        %v1724 = vld [vmem:[%s1276 + $0xa80] sm:$0xff]
        %v1725 = vld [vmem:[%s1276 + $0xa88] sm:$0xff]
        %v1726 = vld [vmem:[%s1276 + $0xa90] sm:$0xff]
        %v1727 = vld [vmem:[%s1276 + $0xa98] sm:$0xf]
        %v1728 = vld [vmem:[%s1276 + $0xa9c] sm:$0xff]
        %v1729 = vld [vmem:[%s1276 + $0xaa4] sm:$0xff]
        %v1730 = vld [vmem:[%s1276 + $0xaac] sm:$0xff]
        %v1731 = vld [vmem:[%s1276 + $0xab4] sm:$0xf]
        %v1732 = vld [vmem:[%s1276 + $0xab8] sm:$0xff]
        %v1733 = vld [vmem:[%s1276 + $0xac0] sm:$0xff]
        %v1734 = vld [vmem:[%s1276 + $0xac8] sm:$0xff]
        %v1735 = vld [vmem:[%s1276 + $0xad0] sm:$0xf]
        %v1736 = vld [vmem:[%s1276 + $0xad4] sm:$0xff]
        %v1737 = vld [vmem:[%s1276 + $0xadc] sm:$0xff]
        %v1738 = vld [vmem:[%s1276 + $0xae4] sm:$0xff]
        %v1739 = vld [vmem:[%s1276 + $0xaec] sm:$0xf]
        %v1740 = vld [vmem:[%s1276 + $0xaf0] sm:$0xff]
        %v1741 = vld [vmem:[%s1276 + $0xaf8] sm:$0xff]
        %v1742 = vld [vmem:[%s1276 + $0xb00] sm:$0xff]
        %v1743 = vld [vmem:[%s1276 + $0xb08] sm:$0xf]
        %v1744 = vld [vmem:[%s1276 + $0xb0c] sm:$0xff]
        %v1745 = vld [vmem:[%s1276 + $0xb14] sm:$0xff]
        %v1746 = vld [vmem:[%s1276 + $0xb1c] sm:$0xff]
        %v1747 = vld [vmem:[%s1276 + $0xb24] sm:$0xf]
        %v1748 = vld [vmem:[%s1276 + $0xb28] sm:$0xff]
        %v1749 = vld [vmem:[%s1276 + $0xb30] sm:$0xff]
        %v1750 = vld [vmem:[%s1276 + $0xb38] sm:$0xff]
        %v1751 = vld [vmem:[%s1276 + $0xb40] sm:$0xf]
        %v1752 = vld [vmem:[%s1276 + $0xb44] sm:$0xff]
        %v1753 = vld [vmem:[%s1276 + $0xb4c] sm:$0xff]
        %v1754 = vld [vmem:[%s1276 + $0xb54] sm:$0xff]
        %v1755 = vld [vmem:[%s1276 + $0xb5c] sm:$0xf]
        %v1756 = vld [vmem:[%s1276 + $0xb60] sm:$0xff]
        %v1757 = vld [vmem:[%s1276 + $0xb68] sm:$0xff]
        %v1758 = vld [vmem:[%s1276 + $0xb70] sm:$0xff]
        %v1759 = vld [vmem:[%s1276 + $0xb78] sm:$0xf]
        %v1760 = vld [vmem:[%s1276 + $0xb7c] sm:$0xff]
        %v1761 = vld [vmem:[%s1276 + $0xb84] sm:$0xff]
        %v1762 = vld [vmem:[%s1276 + $0xb8c] sm:$0xff]
        %v1763 = vld [vmem:[%s1276 + $0xb94] sm:$0xf]
        %v1764 = vld [vmem:[%s1276 + $0xb98] sm:$0xff]
        %v1765 = vld [vmem:[%s1276 + $0xba0] sm:$0xff]
        %v1766 = vld [vmem:[%s1276 + $0xba8] sm:$0xff]
        %v1767 = vld [vmem:[%s1276 + $0xbb0] sm:$0xf]
        %v1768 = vld [vmem:[%s1276 + $0xbb4] sm:$0xff]
        %v1769 = vld [vmem:[%s1276 + $0xbbc] sm:$0xff]
        %v1770 = vld [vmem:[%s1276 + $0xbc4] sm:$0xff]
        %v1771 = vld [vmem:[%s1276 + $0xbcc] sm:$0xf]
        %v1772 = vld [vmem:[%s1276 + $0xbd0] sm:$0xff]
        %v1773 = vld [vmem:[%s1276 + $0xbd8] sm:$0xff]
        %v1774 = vld [vmem:[%s1276 + $0xbe0] sm:$0xff]
        %v1775 = vld [vmem:[%s1276 + $0xbe8] sm:$0xf]
        %v1776 = vld [vmem:[%s1276 + $0xbec] sm:$0xff]
        %v1777 = vld [vmem:[%s1276 + $0xbf4] sm:$0xff]
        %v1778 = vld [vmem:[%s1276 + $0xbfc] sm:$0xff]
        %v1779 = vld [vmem:[%s1276 + $0xc04] sm:$0xf]
        %v1780 = vld [vmem:[%s1276 + $0xc08] sm:$0xff]
        %v1781 = vld [vmem:[%s1276 + $0xc10] sm:$0xff]
        %v1782 = vld [vmem:[%s1276 + $0xc18] sm:$0xff]
        %v1783 = vld [vmem:[%s1276 + $0xc20] sm:$0xf]
        %v1784 = vld [vmem:[%s1276 + $0xc24] sm:$0xff]
        %v1785 = vld [vmem:[%s1276 + $0xc2c] sm:$0xff]
        %v1786 = vld [vmem:[%s1276 + $0xc34] sm:$0xff]
        %v1787 = vld [vmem:[%s1276 + $0xc3c] sm:$0xf]
        %v1788 = vld [vmem:[%s1276 + $0xc40] sm:$0xff]
        %v1789 = vld [vmem:[%s1276 + $0xc48] sm:$0xff]
        %v1790 = vld [vmem:[%s1276 + $0xc50] sm:$0xff]
        %v1791 = vld [vmem:[%s1276 + $0xc58] sm:$0xf]
        %v1792 = vld [vmem:[%s1276 + $0xc5c] sm:$0xff]
        %v1793 = vld [vmem:[%s1276 + $0xc64] sm:$0xff]
        %v1794 = vld [vmem:[%s1276 + $0xc6c] sm:$0xff]
        %v1795 = vld [vmem:[%s1276 + $0xc74] sm:$0xf]
        %v1796 = vld [vmem:[%s1276 + $0xc78] sm:$0xff]
        %v1797 = vld [vmem:[%s1276 + $0xc80] sm:$0xff]
        %v1798 = vld [vmem:[%s1276 + $0xc88] sm:$0xff]
        %v1799 = vld [vmem:[%s1276 + $0xc90] sm:$0xf]
        %v1800 = vld [vmem:[%s1276 + $0xc94] sm:$0xff]
        %v1801 = vld [vmem:[%s1276 + $0xc9c] sm:$0xff]
        %v1802 = vld [vmem:[%s1276 + $0xca4] sm:$0xff]
        %v1803 = vld [vmem:[%s1276 + $0xcac] sm:$0xf]
        %v1804 = vld [vmem:[%s1276 + $0xcb0] sm:$0xff]
        %v1805 = vld [vmem:[%s1276 + $0xcb8] sm:$0xff]
        %v1806 = vld [vmem:[%s1276 + $0xcc0] sm:$0xff]
        %v1807 = vld [vmem:[%s1276 + $0xcc8] sm:$0xf]
        %v1808 = vld [vmem:[%s1276 + $0xccc] sm:$0xff]
        %v1809 = vld [vmem:[%s1276 + $0xcd4] sm:$0xff]
        %v1810 = vld [vmem:[%s1276 + $0xcdc] sm:$0xff]
        %v1811 = vld [vmem:[%s1276 + $0xce4] sm:$0xf]
        %v1812 = vld [vmem:[%s1276 + $0xce8] sm:$0xff]
        %v1813 = vld [vmem:[%s1276 + $0xcf0] sm:$0xff]
        %v1814 = vld [vmem:[%s1276 + $0xcf8] sm:$0xff]
        %v1815 = vld [vmem:[%s1276 + $0xd00] sm:$0xf]
        %v1816 = vld [vmem:[%s1276 + $0xd04] sm:$0xff]
        %v1817 = vld [vmem:[%s1276 + $0xd0c] sm:$0xff]
        %v1818 = vld [vmem:[%s1276 + $0xd14] sm:$0xff]
        %v1819 = vld [vmem:[%s1276 + $0xd1c] sm:$0xf]
        %v1820 = vld [vmem:[%s1276 + $0xd20] sm:$0xff]
        %v1821 = vld [vmem:[%s1276 + $0xd28] sm:$0xff]
        %v1822 = vld [vmem:[%s1276 + $0xd30] sm:$0xff]
        %v1823 = vld [vmem:[%s1276 + $0xd38] sm:$0xf]
        %v1824 = vld [vmem:[%s1276 + $0xd3c] sm:$0xff]
        %v1825 = vld [vmem:[%s1276 + $0xd44] sm:$0xff]
        %v1826 = vld [vmem:[%s1276 + $0xd4c] sm:$0xff]
        %v1827 = vld [vmem:[%s1276 + $0xd54] sm:$0xf]
        %v1828 = vld [vmem:[%s1276 + $0xd58] sm:$0xff]
        %v1829 = vld [vmem:[%s1276 + $0xd60] sm:$0xff]
        %v1830 = vld [vmem:[%s1276 + $0xd68] sm:$0xff]
        %v1831 = vld [vmem:[%s1276 + $0xd70] sm:$0xf]
        %v1832 = vld [vmem:[%s1276 + $0xd74] sm:$0xff]
        %v1833 = vld [vmem:[%s1276 + $0xd7c] sm:$0xff]
        %v1834 = vld [vmem:[%s1276 + $0xd84] sm:$0xff]
        %v1835 = vld [vmem:[%s1276 + $0xd8c] sm:$0xf]
        %v1836 = vld [vmem:[%s1276 + $0xd90] sm:$0xff]
        %v1837 = vld [vmem:[%s1276 + $0xd98] sm:$0xff]
        %v1838 = vld [vmem:[%s1276 + $0xda0] sm:$0xff]
        %v1839 = vld [vmem:[%s1276 + $0xda8] sm:$0xf]
        %v1840 = vld [vmem:[%s1276 + $0xdac] sm:$0xff]
        %v1841 = vld [vmem:[%s1276 + $0xdb4] sm:$0xff]
        %v1842 = vld [vmem:[%s1276 + $0xdbc] sm:$0xff]
        %v1843 = vld [vmem:[%s1276 + $0xdc4] sm:$0xf]
        %v1844 = vld [vmem:[%s1276 + $0xdc8] sm:$0xff]
        %v1845 = vld [vmem:[%s1276 + $0xdd0] sm:$0xff]
        %v1846 = vld [vmem:[%s1276 + $0xdd8] sm:$0xff]
        %v1847 = vld [vmem:[%s1276 + $0xde0] sm:$0xf]
        %v1848 = vld [vmem:[%s1276 + $0xde4] sm:$0xff]
        %v1849 = vld [vmem:[%s1276 + $0xdec] sm:$0xff]
        %v1850 = vld [vmem:[%s1276 + $0xdf4] sm:$0xff]
        %v1851 = vld [vmem:[%s1276 + $0xdfc] sm:$0xf]
        %v1852 = vld [vmem:[%s1317] sm:$0xff]
        %v1854 = vlaneseq
        %v1855 = vshrl.u32 %v1854, 7
        %v1856 = vsub.s32 0, %v1855
        %v1857 = vrot.slane %v1852, %v1856
        %v1858 = vlaneseq
        %v1859 = vshrl.u32 %v1858, 7
        %v1860 = vsub.s32 1, %v1859
        %v1861 = vrot.slane %v1852, %v1860
        %v1862 = vlaneseq
        %v1863 = vshrl.u32 %v1862, 7
        %v1864 = vsub.s32 2, %v1863
        %v1865 = vrot.slane %v1852, %v1864
        %v1866 = vlaneseq
        %v1867 = vshrl.u32 %v1866, 7
        %v1868 = vsub.s32 3, %v1867
        %v1869 = vrot.slane %v1852, %v1868
        %v1870 = vlaneseq
        %v1871 = vshrl.u32 %v1870, 7
        %v1872 = vsub.s32 4, %v1871
        %v1873 = vrot.slane %v1852, %v1872
        %v1874 = vlaneseq
        %v1875 = vshrl.u32 %v1874, 7
        %v1876 = vsub.s32 5, %v1875
        %v1877 = vrot.slane %v1852, %v1876
        %v1878 = vlaneseq
        %v1879 = vshrl.u32 %v1878, 7
        %v1880 = vsub.s32 6, %v1879
        %v1881 = vrot.slane %v1852, %v1880
        %v1893 = vunpack.c.l.b16 %v1336
        %v1894 = vunpack.c.h.b16 %v1336
        %v1895 = vunpack.c.l.b16 %v1337
        %v1896 = vunpack.c.h.b16 %v1337
        %v1897 = vunpack.c.l.b16 %v1338
        %v1898 = vunpack.c.h.b16 %v1338
        %v1899 = vunpack.c.l.b16 %v1339
        %v1900 = vunpack.c.h.b16 %v1339
        %v1901 = vpack.c.b16 %v1893, %v1893
        %v1902 = vpack.c.b16 %v1894, %v1894
        %v1903 = vpack.c.b16 %v1895, %v1895
        %v1904 = vpack.c.b16 %v1896, %v1896
        %v1905 = vpack.c.b16 %v1897, %v1897
        %v1906 = vpack.c.b16 %v1898, %v1898
        %v1907 = vpack.c.b16 %v1899, %v1899
        %v1908 = vpack.c.b16 %v1900, %v1900
        %v2429 = vunpack.c.l.b16 %v1340
        %v2430 = vunpack.c.h.b16 %v1340
        %v2431 = vunpack.c.l.b16 %v1341
        %v2432 = vunpack.c.h.b16 %v1341
        %v2433 = vunpack.c.l.b16 %v1342
        %v2434 = vunpack.c.h.b16 %v1342
        %v2435 = vunpack.c.l.b16 %v1343
        %v2436 = vunpack.c.l.b16 %v1344
        %v2437 = vunpack.c.h.b16 %v1344
        %v2438 = vunpack.c.l.b16 %v1345
        %v2439 = vunpack.c.h.b16 %v1345
        %v2440 = vunpack.c.l.b16 %v1346
        %v2441 = vunpack.c.h.b16 %v1346
        %v2442 = vunpack.c.l.b16 %v1347
        %v2443 = vunpack.c.l.b16 %v1348
        %v2444 = vunpack.c.h.b16 %v1348
        %v2445 = vunpack.c.l.b16 %v1349
        %v2446 = vunpack.c.h.b16 %v1349
        %v2447 = vunpack.c.l.b16 %v1350
        %v2448 = vunpack.c.h.b16 %v1350
        %v2449 = vunpack.c.l.b16 %v1351
        %v2450 = vunpack.c.l.b16 %v1352
        %v2451 = vunpack.c.h.b16 %v1352
        %v2452 = vunpack.c.l.b16 %v1353
        %v2453 = vunpack.c.h.b16 %v1353
        %v2454 = vunpack.c.l.b16 %v1354
        %v2455 = vunpack.c.h.b16 %v1354
        %v2456 = vunpack.c.l.b16 %v1355
        %v2457 = vunpack.c.l.b16 %v1356
        %v2458 = vunpack.c.h.b16 %v1356
        %v2459 = vunpack.c.l.b16 %v1357
        %v2460 = vunpack.c.h.b16 %v1357
        %v2461 = vunpack.c.l.b16 %v1358
        %v2462 = vunpack.c.h.b16 %v1358
        %v2463 = vunpack.c.l.b16 %v1359
        %v2464 = vunpack.c.l.b16 %v1360
        %v2465 = vunpack.c.h.b16 %v1360
        %v2466 = vunpack.c.l.b16 %v1361
        %v2467 = vunpack.c.h.b16 %v1361
        %v2468 = vunpack.c.l.b16 %v1362
        %v2469 = vunpack.c.h.b16 %v1362
        %v2470 = vunpack.c.l.b16 %v1363
        %v2471 = vunpack.c.l.b16 %v1364
        %v2472 = vunpack.c.h.b16 %v1364
        %v2473 = vunpack.c.l.b16 %v1365
        %v2474 = vunpack.c.h.b16 %v1365
        %v2475 = vunpack.c.l.b16 %v1366
        %v2476 = vunpack.c.h.b16 %v1366
        %v2477 = vunpack.c.l.b16 %v1367
        %v2478 = vunpack.c.l.b16 %v1368
        %v2479 = vunpack.c.h.b16 %v1368
        %v2480 = vunpack.c.l.b16 %v1369
        %v2481 = vunpack.c.h.b16 %v1369
        %v2482 = vunpack.c.l.b16 %v1370
        %v2483 = vunpack.c.h.b16 %v1370
        %v2484 = vunpack.c.l.b16 %v1371
        %v2485 = vunpack.c.l.b16 %v1372
        %v2486 = vunpack.c.h.b16 %v1372
        %v2487 = vunpack.c.l.b16 %v1373
        %v2488 = vunpack.c.h.b16 %v1373
        %v2489 = vunpack.c.l.b16 %v1374
        %v2490 = vunpack.c.h.b16 %v1374
        %v2491 = vunpack.c.l.b16 %v1375
        %v2492 = vunpack.c.l.b16 %v1376
        %v2493 = vunpack.c.h.b16 %v1376
        %v2494 = vunpack.c.l.b16 %v1377
        %v2495 = vunpack.c.h.b16 %v1377
        %v2496 = vunpack.c.l.b16 %v1378
        %v2497 = vunpack.c.h.b16 %v1378
        %v2498 = vunpack.c.l.b16 %v1379
        %v2499 = vunpack.c.l.b16 %v1380
        %v2500 = vunpack.c.h.b16 %v1380
        %v2501 = vunpack.c.l.b16 %v1381
        %v2502 = vunpack.c.h.b16 %v1381
        %v2503 = vunpack.c.l.b16 %v1382
        %v2504 = vunpack.c.h.b16 %v1382
        %v2505 = vunpack.c.l.b16 %v1383
        %v2506 = vunpack.c.l.b16 %v1384
        %v2507 = vunpack.c.h.b16 %v1384
        %v2508 = vunpack.c.l.b16 %v1385
        %v2509 = vunpack.c.h.b16 %v1385
        %v2510 = vunpack.c.l.b16 %v1386
        %v2511 = vunpack.c.h.b16 %v1386
        %v2512 = vunpack.c.l.b16 %v1387
        %v2513 = vunpack.c.l.b16 %v1388
        %v2514 = vunpack.c.h.b16 %v1388
        %v2515 = vunpack.c.l.b16 %v1389
        %v2516 = vunpack.c.h.b16 %v1389
        %v2517 = vunpack.c.l.b16 %v1390
        %v2518 = vunpack.c.h.b16 %v1390
        %v2519 = vunpack.c.l.b16 %v1391
        %v2520 = vunpack.c.l.b16 %v1392
        %v2521 = vunpack.c.h.b16 %v1392
        %v2522 = vunpack.c.l.b16 %v1393
        %v2523 = vunpack.c.h.b16 %v1393
        %v2524 = vunpack.c.l.b16 %v1394
        %v2525 = vunpack.c.h.b16 %v1394
        %v2526 = vunpack.c.l.b16 %v1395
        %v2527 = vunpack.c.l.b16 %v1396
        %v2528 = vunpack.c.h.b16 %v1396
        %v2529 = vunpack.c.l.b16 %v1397
        %v2530 = vunpack.c.h.b16 %v1397
        %v2531 = vunpack.c.l.b16 %v1398
        %v2532 = vunpack.c.h.b16 %v1398
        %v2533 = vunpack.c.l.b16 %v1399
        %v2534 = vunpack.c.l.b16 %v1400
        %v2535 = vunpack.c.h.b16 %v1400
        %v2536 = vunpack.c.l.b16 %v1401
        %v2537 = vunpack.c.h.b16 %v1401
        %v2538 = vunpack.c.l.b16 %v1402
        %v2539 = vunpack.c.h.b16 %v1402
        %v2540 = vunpack.c.l.b16 %v1403
        %v2541 = vunpack.c.l.b16 %v1404
        %v2542 = vunpack.c.h.b16 %v1404
        %v2543 = vunpack.c.l.b16 %v1405
        %v2544 = vunpack.c.h.b16 %v1405
        %v2545 = vunpack.c.l.b16 %v1406
        %v2546 = vunpack.c.h.b16 %v1406
        %v2547 = vunpack.c.l.b16 %v1407
        %v2548 = vunpack.c.l.b16 %v1408
        %v2549 = vunpack.c.h.b16 %v1408
        %v2550 = vunpack.c.l.b16 %v1409
        %v2551 = vunpack.c.h.b16 %v1409
        %v2552 = vunpack.c.l.b16 %v1410
        %v2553 = vunpack.c.h.b16 %v1410
        %v2554 = vunpack.c.l.b16 %v1411
        %v2555 = vunpack.c.l.b16 %v1412
        %v2556 = vunpack.c.h.b16 %v1412
        %v2557 = vunpack.c.l.b16 %v1413
        %v2558 = vunpack.c.h.b16 %v1413
        %v2559 = vunpack.c.l.b16 %v1414
        %v2560 = vunpack.c.h.b16 %v1414
        %v2561 = vunpack.c.l.b16 %v1415
        %v2562 = vunpack.c.l.b16 %v1416
        %v2563 = vunpack.c.h.b16 %v1416
        %v2564 = vunpack.c.l.b16 %v1417
        %v2565 = vunpack.c.h.b16 %v1417
        %v2566 = vunpack.c.l.b16 %v1418
        %v2567 = vunpack.c.h.b16 %v1418
        %v2568 = vunpack.c.l.b16 %v1419
        %v2569 = vunpack.c.l.b16 %v1420
        %v2570 = vunpack.c.h.b16 %v1420
        %v2571 = vunpack.c.l.b16 %v1421
        %v2572 = vunpack.c.h.b16 %v1421
        %v2573 = vunpack.c.l.b16 %v1422
        %v2574 = vunpack.c.h.b16 %v1422
        %v2575 = vunpack.c.l.b16 %v1423
        %v2576 = vunpack.c.l.b16 %v1424
        %v2577 = vunpack.c.h.b16 %v1424
        %v2578 = vunpack.c.l.b16 %v1425
        %v2579 = vunpack.c.h.b16 %v1425
        %v2580 = vunpack.c.l.b16 %v1426
        %v2581 = vunpack.c.h.b16 %v1426
        %v2582 = vunpack.c.l.b16 %v1427
        %v2583 = vunpack.c.l.b16 %v1428
        %v2584 = vunpack.c.h.b16 %v1428
        %v2585 = vunpack.c.l.b16 %v1429
        %v2586 = vunpack.c.h.b16 %v1429
        %v2587 = vunpack.c.l.b16 %v1430
        %v2588 = vunpack.c.h.b16 %v1430
        %v2589 = vunpack.c.l.b16 %v1431
        %v2590 = vunpack.c.l.b16 %v1432
        %v2591 = vunpack.c.h.b16 %v1432
        %v2592 = vunpack.c.l.b16 %v1433
        %v2593 = vunpack.c.h.b16 %v1433
        %v2594 = vunpack.c.l.b16 %v1434
        %v2595 = vunpack.c.h.b16 %v1434
        %v2596 = vunpack.c.l.b16 %v1435
        %v2597 = vunpack.c.l.b16 %v1436
        %v2598 = vunpack.c.h.b16 %v1436
        %v2599 = vunpack.c.l.b16 %v1437
        %v2600 = vunpack.c.h.b16 %v1437
        %v2601 = vunpack.c.l.b16 %v1438
        %v2602 = vunpack.c.h.b16 %v1438
        %v2603 = vunpack.c.l.b16 %v1439
        %v2604 = vunpack.c.l.b16 %v1440
        %v2605 = vunpack.c.h.b16 %v1440
        %v2606 = vunpack.c.l.b16 %v1441
        %v2607 = vunpack.c.h.b16 %v1441
        %v2608 = vunpack.c.l.b16 %v1442
        %v2609 = vunpack.c.h.b16 %v1442
        %v2610 = vunpack.c.l.b16 %v1443
        %v2611 = vunpack.c.l.b16 %v1444
        %v2612 = vunpack.c.h.b16 %v1444
        %v2613 = vunpack.c.l.b16 %v1445
        %v2614 = vunpack.c.h.b16 %v1445
        %v2615 = vunpack.c.l.b16 %v1446
        %v2616 = vunpack.c.h.b16 %v1446
        %v2617 = vunpack.c.l.b16 %v1447
        %v2618 = vunpack.c.l.b16 %v1448
        %v2619 = vunpack.c.h.b16 %v1448
        %v2620 = vunpack.c.l.b16 %v1449
        %v2621 = vunpack.c.h.b16 %v1449
        %v2622 = vunpack.c.l.b16 %v1450
        %v2623 = vunpack.c.h.b16 %v1450
        %v2624 = vunpack.c.l.b16 %v1451
        %v2625 = vunpack.c.l.b16 %v1452
        %v2626 = vunpack.c.h.b16 %v1452
        %v2627 = vunpack.c.l.b16 %v1453
        %v2628 = vunpack.c.h.b16 %v1453
        %v2629 = vunpack.c.l.b16 %v1454
        %v2630 = vunpack.c.h.b16 %v1454
        %v2631 = vunpack.c.l.b16 %v1455
        %v2632 = vunpack.c.l.b16 %v1456
        %v2633 = vunpack.c.h.b16 %v1456
        %v2634 = vunpack.c.l.b16 %v1457
        %v2635 = vunpack.c.h.b16 %v1457
        %v2636 = vunpack.c.l.b16 %v1458
        %v2637 = vunpack.c.h.b16 %v1458
        %v2638 = vunpack.c.l.b16 %v1459
        %v2639 = vunpack.c.l.b16 %v1460
        %v2640 = vunpack.c.h.b16 %v1460
        %v2641 = vunpack.c.l.b16 %v1461
        %v2642 = vunpack.c.h.b16 %v1461
        %v2643 = vunpack.c.l.b16 %v1462
        %v2644 = vunpack.c.h.b16 %v1462
        %v2645 = vunpack.c.l.b16 %v1463
        %v2646 = vunpack.c.l.b16 %v1464
        %v2647 = vunpack.c.h.b16 %v1464
        %v2648 = vunpack.c.l.b16 %v1465
        %v2649 = vunpack.c.h.b16 %v1465
        %v2650 = vunpack.c.l.b16 %v1466
        %v2651 = vunpack.c.h.b16 %v1466
        %v2652 = vunpack.c.l.b16 %v1467
        %v2653 = vunpack.c.l.b16 %v1468
        %v2654 = vunpack.c.h.b16 %v1468
        %v2655 = vunpack.c.l.b16 %v1469
        %v2656 = vunpack.c.h.b16 %v1469
        %v2657 = vunpack.c.l.b16 %v1470
        %v2658 = vunpack.c.h.b16 %v1470
        %v2659 = vunpack.c.l.b16 %v1471
        %v2660 = vunpack.c.l.b16 %v1472
        %v2661 = vunpack.c.h.b16 %v1472
        %v2662 = vunpack.c.l.b16 %v1473
        %v2663 = vunpack.c.h.b16 %v1473
        %v2664 = vunpack.c.l.b16 %v1474
        %v2665 = vunpack.c.h.b16 %v1474
        %v2666 = vunpack.c.l.b16 %v1475
        %v2667 = vunpack.c.l.b16 %v1476
        %v2668 = vunpack.c.h.b16 %v1476
        %v2669 = vunpack.c.l.b16 %v1477
        %v2670 = vunpack.c.h.b16 %v1477
        %v2671 = vunpack.c.l.b16 %v1478
        %v2672 = vunpack.c.h.b16 %v1478
        %v2673 = vunpack.c.l.b16 %v1479
        %v2674 = vunpack.c.l.b16 %v1480
        %v2675 = vunpack.c.h.b16 %v1480
        %v2676 = vunpack.c.l.b16 %v1481
        %v2677 = vunpack.c.h.b16 %v1481
        %v2678 = vunpack.c.l.b16 %v1482
        %v2679 = vunpack.c.h.b16 %v1482
        %v2680 = vunpack.c.l.b16 %v1483
        %v2681 = vunpack.c.l.b16 %v1484
        %v2682 = vunpack.c.h.b16 %v1484
        %v2683 = vunpack.c.l.b16 %v1485
        %v2684 = vunpack.c.h.b16 %v1485
        %v2685 = vunpack.c.l.b16 %v1486
        %v2686 = vunpack.c.h.b16 %v1486
        %v2687 = vunpack.c.l.b16 %v1487
        %v2688 = vunpack.c.l.b16 %v1488
        %v2689 = vunpack.c.h.b16 %v1488
        %v2690 = vunpack.c.l.b16 %v1489
        %v2691 = vunpack.c.h.b16 %v1489
        %v2692 = vunpack.c.l.b16 %v1490
        %v2693 = vunpack.c.h.b16 %v1490
        %v2694 = vunpack.c.l.b16 %v1491
        %v2695 = vunpack.c.l.b16 %v1492
        %v2696 = vunpack.c.h.b16 %v1492
        %v2697 = vunpack.c.l.b16 %v1493
        %v2698 = vunpack.c.h.b16 %v1493
        %v2699 = vunpack.c.l.b16 %v1494
        %v2700 = vunpack.c.h.b16 %v1494
        %v2701 = vunpack.c.l.b16 %v1495
        %v2702 = vunpack.c.l.b16 %v1496
        %v2703 = vunpack.c.h.b16 %v1496
        %v2704 = vunpack.c.l.b16 %v1497
        %v2705 = vunpack.c.h.b16 %v1497
        %v2706 = vunpack.c.l.b16 %v1498
        %v2707 = vunpack.c.h.b16 %v1498
        %v2708 = vunpack.c.l.b16 %v1499
        %v2709 = vunpack.c.l.b16 %v1500
        %v2710 = vunpack.c.h.b16 %v1500
        %v2711 = vunpack.c.l.b16 %v1501
        %v2712 = vunpack.c.h.b16 %v1501
        %v2713 = vunpack.c.l.b16 %v1502
        %v2714 = vunpack.c.h.b16 %v1502
        %v2715 = vunpack.c.l.b16 %v1503
        %v2716 = vunpack.c.l.b16 %v1504
        %v2717 = vunpack.c.h.b16 %v1504
        %v2718 = vunpack.c.l.b16 %v1505
        %v2719 = vunpack.c.h.b16 %v1505
        %v2720 = vunpack.c.l.b16 %v1506
        %v2721 = vunpack.c.h.b16 %v1506
        %v2722 = vunpack.c.l.b16 %v1507
        %v2723 = vunpack.c.l.b16 %v1508
        %v2724 = vunpack.c.h.b16 %v1508
        %v2725 = vunpack.c.l.b16 %v1509
        %v2726 = vunpack.c.h.b16 %v1509
        %v2727 = vunpack.c.l.b16 %v1510
        %v2728 = vunpack.c.h.b16 %v1510
        %v2729 = vunpack.c.l.b16 %v1511
        %v2730 = vunpack.c.l.b16 %v1512
        %v2731 = vunpack.c.h.b16 %v1512
        %v2732 = vunpack.c.l.b16 %v1513
        %v2733 = vunpack.c.h.b16 %v1513
        %v2734 = vunpack.c.l.b16 %v1514
        %v2735 = vunpack.c.h.b16 %v1514
        %v2736 = vunpack.c.l.b16 %v1515
        %v2737 = vunpack.c.l.b16 %v1516
        %v2738 = vunpack.c.h.b16 %v1516
        %v2739 = vunpack.c.l.b16 %v1517
        %v2740 = vunpack.c.h.b16 %v1517
        %v2741 = vunpack.c.l.b16 %v1518
        %v2742 = vunpack.c.h.b16 %v1518
        %v2743 = vunpack.c.l.b16 %v1519
        %v2744 = vunpack.c.l.b16 %v1520
        %v2745 = vunpack.c.h.b16 %v1520
        %v2746 = vunpack.c.l.b16 %v1521
        %v2747 = vunpack.c.h.b16 %v1521
        %v2748 = vunpack.c.l.b16 %v1522
        %v2749 = vunpack.c.h.b16 %v1522
        %v2750 = vunpack.c.l.b16 %v1523
        %v2751 = vunpack.c.l.b16 %v1524
        %v2752 = vunpack.c.h.b16 %v1524
        %v2753 = vunpack.c.l.b16 %v1525
        %v2754 = vunpack.c.h.b16 %v1525
        %v2755 = vunpack.c.l.b16 %v1526
        %v2756 = vunpack.c.h.b16 %v1526
        %v2757 = vunpack.c.l.b16 %v1527
        %v2758 = vunpack.c.l.b16 %v1528
        %v2759 = vunpack.c.h.b16 %v1528
        %v2760 = vunpack.c.l.b16 %v1529
        %v2761 = vunpack.c.h.b16 %v1529
        %v2762 = vunpack.c.l.b16 %v1530
        %v2763 = vunpack.c.h.b16 %v1530
        %v2764 = vunpack.c.l.b16 %v1531
        %v2765 = vunpack.c.l.b16 %v1532
        %v2766 = vunpack.c.h.b16 %v1532
        %v2767 = vunpack.c.l.b16 %v1533
        %v2768 = vunpack.c.h.b16 %v1533
        %v2769 = vunpack.c.l.b16 %v1534
        %v2770 = vunpack.c.h.b16 %v1534
        %v2771 = vunpack.c.l.b16 %v1535
        %v2772 = vunpack.c.l.b16 %v1536
        %v2773 = vunpack.c.h.b16 %v1536
        %v2774 = vunpack.c.l.b16 %v1537
        %v2775 = vunpack.c.h.b16 %v1537
        %v2776 = vunpack.c.l.b16 %v1538
        %v2777 = vunpack.c.h.b16 %v1538
        %v2778 = vunpack.c.l.b16 %v1539
        %v2779 = vunpack.c.l.b16 %v1540
        %v2780 = vunpack.c.h.b16 %v1540
        %v2781 = vunpack.c.l.b16 %v1541
        %v2782 = vunpack.c.h.b16 %v1541
        %v2783 = vunpack.c.l.b16 %v1542
        %v2784 = vunpack.c.h.b16 %v1542
        %v2785 = vunpack.c.l.b16 %v1543
        %v2786 = vunpack.c.l.b16 %v1544
        %v2787 = vunpack.c.h.b16 %v1544
        %v2788 = vunpack.c.l.b16 %v1545
        %v2789 = vunpack.c.h.b16 %v1545
        %v2790 = vunpack.c.l.b16 %v1546
        %v2791 = vunpack.c.h.b16 %v1546
        %v2792 = vunpack.c.l.b16 %v1547
        %v2793 = vunpack.c.l.b16 %v1548
        %v2794 = vunpack.c.h.b16 %v1548
        %v2795 = vunpack.c.l.b16 %v1549
        %v2796 = vunpack.c.h.b16 %v1549
        %v2797 = vunpack.c.l.b16 %v1550
        %v2798 = vunpack.c.h.b16 %v1550
        %v2799 = vunpack.c.l.b16 %v1551
        %v2800 = vunpack.c.l.b16 %v1552
        %v2801 = vunpack.c.h.b16 %v1552
        %v2802 = vunpack.c.l.b16 %v1553
        %v2803 = vunpack.c.h.b16 %v1553
        %v2804 = vunpack.c.l.b16 %v1554
        %v2805 = vunpack.c.h.b16 %v1554
        %v2806 = vunpack.c.l.b16 %v1555
        %v2807 = vunpack.c.l.b16 %v1556
        %v2808 = vunpack.c.h.b16 %v1556
        %v2809 = vunpack.c.l.b16 %v1557
        %v2810 = vunpack.c.h.b16 %v1557
        %v2811 = vunpack.c.l.b16 %v1558
        %v2812 = vunpack.c.h.b16 %v1558
        %v2813 = vunpack.c.l.b16 %v1559
        %v2814 = vunpack.c.l.b16 %v1560
        %v2815 = vunpack.c.h.b16 %v1560
        %v2816 = vunpack.c.l.b16 %v1561
        %v2817 = vunpack.c.h.b16 %v1561
        %v2818 = vunpack.c.l.b16 %v1562
        %v2819 = vunpack.c.h.b16 %v1562
        %v2820 = vunpack.c.l.b16 %v1563
        %v2821 = vunpack.c.l.b16 %v1564
        %v2822 = vunpack.c.h.b16 %v1564
        %v2823 = vunpack.c.l.b16 %v1565
        %v2824 = vunpack.c.h.b16 %v1565
        %v2825 = vunpack.c.l.b16 %v1566
        %v2826 = vunpack.c.h.b16 %v1566
        %v2827 = vunpack.c.l.b16 %v1567
        %v2828 = vunpack.c.l.b16 %v1568
        %v2829 = vunpack.c.h.b16 %v1568
        %v2830 = vunpack.c.l.b16 %v1569
        %v2831 = vunpack.c.h.b16 %v1569
        %v2832 = vunpack.c.l.b16 %v1570
        %v2833 = vunpack.c.h.b16 %v1570
        %v2834 = vunpack.c.l.b16 %v1571
        %v2835 = vunpack.c.l.b16 %v1572
        %v2836 = vunpack.c.h.b16 %v1572
        %v2837 = vunpack.c.l.b16 %v1573
        %v2838 = vunpack.c.h.b16 %v1573
        %v2839 = vunpack.c.l.b16 %v1574
        %v2840 = vunpack.c.h.b16 %v1574
        %v2841 = vunpack.c.l.b16 %v1575
        %v2842 = vunpack.c.l.b16 %v1576
        %v2843 = vunpack.c.h.b16 %v1576
        %v2844 = vunpack.c.l.b16 %v1577
        %v2845 = vunpack.c.h.b16 %v1577
        %v2846 = vunpack.c.l.b16 %v1578
        %v2847 = vunpack.c.h.b16 %v1578
        %v2848 = vunpack.c.l.b16 %v1579
        %v2849 = vunpack.c.l.b16 %v1580
        %v2850 = vunpack.c.h.b16 %v1580
        %v2851 = vunpack.c.l.b16 %v1581
        %v2852 = vunpack.c.h.b16 %v1581
        %v2853 = vunpack.c.l.b16 %v1582
        %v2854 = vunpack.c.h.b16 %v1582
        %v2855 = vunpack.c.l.b16 %v1583
        %v2856 = vunpack.c.l.b16 %v1584
        %v2857 = vunpack.c.h.b16 %v1584
        %v2858 = vunpack.c.l.b16 %v1585
        %v2859 = vunpack.c.h.b16 %v1585
        %v2860 = vunpack.c.l.b16 %v1586
        %v2861 = vunpack.c.h.b16 %v1586
        %v2862 = vunpack.c.l.b16 %v1587
        %v2863 = vunpack.c.l.b16 %v1588
        %v2864 = vunpack.c.h.b16 %v1588
        %v2865 = vunpack.c.l.b16 %v1589
        %v2866 = vunpack.c.h.b16 %v1589
        %v2867 = vunpack.c.l.b16 %v1590
        %v2868 = vunpack.c.h.b16 %v1590
        %v2869 = vunpack.c.l.b16 %v1591
        %v2870 = vunpack.c.l.b16 %v1592
        %v2871 = vunpack.c.h.b16 %v1592
        %v2872 = vunpack.c.l.b16 %v1593
        %v2873 = vunpack.c.h.b16 %v1593
        %v2874 = vunpack.c.l.b16 %v1594
        %v2875 = vunpack.c.h.b16 %v1594
        %v2876 = vunpack.c.l.b16 %v1595
        %v2877 = vunpack.c.l.b16 %v1596
        %v2878 = vunpack.c.h.b16 %v1596
        %v2879 = vunpack.c.l.b16 %v1597
        %v2880 = vunpack.c.h.b16 %v1597
        %v2881 = vunpack.c.l.b16 %v1598
        %v2882 = vunpack.c.h.b16 %v1598
        %v2883 = vunpack.c.l.b16 %v1599
        %v2884 = vunpack.c.l.b16 %v1600
        %v2885 = vunpack.c.h.b16 %v1600
        %v2886 = vunpack.c.l.b16 %v1601
        %v2887 = vunpack.c.h.b16 %v1601
        %v2888 = vunpack.c.l.b16 %v1602
        %v2889 = vunpack.c.h.b16 %v1602
        %v2890 = vunpack.c.l.b16 %v1603
        %v2891 = vunpack.c.l.b16 %v1604
        %v2892 = vunpack.c.h.b16 %v1604
        %v2893 = vunpack.c.l.b16 %v1605
        %v2894 = vunpack.c.h.b16 %v1605
        %v2895 = vunpack.c.l.b16 %v1606
        %v2896 = vunpack.c.h.b16 %v1606
        %v2897 = vunpack.c.l.b16 %v1607
        %v2898 = vunpack.c.l.b16 %v1608
        %v2899 = vunpack.c.h.b16 %v1608
        %v2900 = vunpack.c.l.b16 %v1609
        %v2901 = vunpack.c.h.b16 %v1609
        %v2902 = vunpack.c.l.b16 %v1610
        %v2903 = vunpack.c.h.b16 %v1610
        %v2904 = vunpack.c.l.b16 %v1611
        %v2905 = vunpack.c.l.b16 %v1612
        %v2906 = vunpack.c.h.b16 %v1612
        %v2907 = vunpack.c.l.b16 %v1613
        %v2908 = vunpack.c.h.b16 %v1613
        %v2909 = vunpack.c.l.b16 %v1614
        %v2910 = vunpack.c.h.b16 %v1614
        %v2911 = vunpack.c.l.b16 %v1615
        %v2912 = vunpack.c.l.b16 %v1616
        %v2913 = vunpack.c.h.b16 %v1616
        %v2914 = vunpack.c.l.b16 %v1617
        %v2915 = vunpack.c.h.b16 %v1617
        %v2916 = vunpack.c.l.b16 %v1618
        %v2917 = vunpack.c.h.b16 %v1618
        %v2918 = vunpack.c.l.b16 %v1619
        %v2919 = vunpack.c.l.b16 %v1620
        %v2920 = vunpack.c.h.b16 %v1620
        %v2921 = vunpack.c.l.b16 %v1621
        %v2922 = vunpack.c.h.b16 %v1621
        %v2923 = vunpack.c.l.b16 %v1622
        %v2924 = vunpack.c.h.b16 %v1622
        %v2925 = vunpack.c.l.b16 %v1623
        %v2926 = vunpack.c.l.b16 %v1624
        %v2927 = vunpack.c.h.b16 %v1624
        %v2928 = vunpack.c.l.b16 %v1625
        %v2929 = vunpack.c.h.b16 %v1625
        %v2930 = vunpack.c.l.b16 %v1626
        %v2931 = vunpack.c.h.b16 %v1626
        %v2932 = vunpack.c.l.b16 %v1627
        %v2933 = vunpack.c.l.b16 %v1628
        %v2934 = vunpack.c.h.b16 %v1628
        %v2935 = vunpack.c.l.b16 %v1629
        %v2936 = vunpack.c.h.b16 %v1629
        %v2937 = vunpack.c.l.b16 %v1630
        %v2938 = vunpack.c.h.b16 %v1630
        %v2939 = vunpack.c.l.b16 %v1631
        %v2940 = vunpack.c.l.b16 %v1632
        %v2941 = vunpack.c.h.b16 %v1632
        %v2942 = vunpack.c.l.b16 %v1633
        %v2943 = vunpack.c.h.b16 %v1633
        %v2944 = vunpack.c.l.b16 %v1634
        %v2945 = vunpack.c.h.b16 %v1634
        %v2946 = vunpack.c.l.b16 %v1635
        %v2947 = vunpack.c.l.b16 %v1636
        %v2948 = vunpack.c.h.b16 %v1636
        %v2949 = vunpack.c.l.b16 %v1637
        %v2950 = vunpack.c.h.b16 %v1637
        %v2951 = vunpack.c.l.b16 %v1638
        %v2952 = vunpack.c.h.b16 %v1638
        %v2953 = vunpack.c.l.b16 %v1639
        %v2954 = vunpack.c.l.b16 %v1640
        %v2955 = vunpack.c.h.b16 %v1640
        %v2956 = vunpack.c.l.b16 %v1641
        %v2957 = vunpack.c.h.b16 %v1641
        %v2958 = vunpack.c.l.b16 %v1642
        %v2959 = vunpack.c.h.b16 %v1642
        %v2960 = vunpack.c.l.b16 %v1643
        %v2961 = vunpack.c.l.b16 %v1644
        %v2962 = vunpack.c.h.b16 %v1644
        %v2963 = vunpack.c.l.b16 %v1645
        %v2964 = vunpack.c.h.b16 %v1645
        %v2965 = vunpack.c.l.b16 %v1646
        %v2966 = vunpack.c.h.b16 %v1646
        %v2967 = vunpack.c.l.b16 %v1647
        %v2968 = vunpack.c.l.b16 %v1648
        %v2969 = vunpack.c.h.b16 %v1648
        %v2970 = vunpack.c.l.b16 %v1649
        %v2971 = vunpack.c.h.b16 %v1649
        %v2972 = vunpack.c.l.b16 %v1650
        %v2973 = vunpack.c.h.b16 %v1650
        %v2974 = vunpack.c.l.b16 %v1651
        %v2975 = vunpack.c.l.b16 %v1652
        %v2976 = vunpack.c.h.b16 %v1652
        %v2977 = vunpack.c.l.b16 %v1653
        %v2978 = vunpack.c.h.b16 %v1653
        %v2979 = vunpack.c.l.b16 %v1654
        %v2980 = vunpack.c.h.b16 %v1654
        %v2981 = vunpack.c.l.b16 %v1655
        %v2982 = vunpack.c.l.b16 %v1656
        %v2983 = vunpack.c.h.b16 %v1656
        %v2984 = vunpack.c.l.b16 %v1657
        %v2985 = vunpack.c.h.b16 %v1657
        %v2986 = vunpack.c.l.b16 %v1658
        %v2987 = vunpack.c.h.b16 %v1658
        %v2988 = vunpack.c.l.b16 %v1659
        %v2989 = vunpack.c.l.b16 %v1660
        %v2990 = vunpack.c.h.b16 %v1660
        %v2991 = vunpack.c.l.b16 %v1661
        %v2992 = vunpack.c.h.b16 %v1661
        %v2993 = vunpack.c.l.b16 %v1662
        %v2994 = vunpack.c.h.b16 %v1662
        %v2995 = vunpack.c.l.b16 %v1663
        %v2996 = vunpack.c.l.b16 %v1664
        %v2997 = vunpack.c.h.b16 %v1664
        %v2998 = vunpack.c.l.b16 %v1665
        %v2999 = vunpack.c.h.b16 %v1665
        %v3000 = vunpack.c.l.b16 %v1666
        %v3001 = vunpack.c.h.b16 %v1666
        %v3002 = vunpack.c.l.b16 %v1667
        %v3003 = vunpack.c.l.b16 %v1668
        %v3004 = vunpack.c.h.b16 %v1668
        %v3005 = vunpack.c.l.b16 %v1669
        %v3006 = vunpack.c.h.b16 %v1669
        %v3007 = vunpack.c.l.b16 %v1670
        %v3008 = vunpack.c.h.b16 %v1670
        %v3009 = vunpack.c.l.b16 %v1671
        %v3010 = vunpack.c.l.b16 %v1672
        %v3011 = vunpack.c.h.b16 %v1672
        %v3012 = vunpack.c.l.b16 %v1673
        %v3013 = vunpack.c.h.b16 %v1673
        %v3014 = vunpack.c.l.b16 %v1674
        %v3015 = vunpack.c.h.b16 %v1674
        %v3016 = vunpack.c.l.b16 %v1675
        %v3017 = vunpack.c.l.b16 %v1676
        %v3018 = vunpack.c.h.b16 %v1676
        %v3019 = vunpack.c.l.b16 %v1677
        %v3020 = vunpack.c.h.b16 %v1677
        %v3021 = vunpack.c.l.b16 %v1678
        %v3022 = vunpack.c.h.b16 %v1678
        %v3023 = vunpack.c.l.b16 %v1679
        %v3024 = vunpack.c.l.b16 %v1680
        %v3025 = vunpack.c.h.b16 %v1680
        %v3026 = vunpack.c.l.b16 %v1681
        %v3027 = vunpack.c.h.b16 %v1681
        %v3028 = vunpack.c.l.b16 %v1682
        %v3029 = vunpack.c.h.b16 %v1682
        %v3030 = vunpack.c.l.b16 %v1683
        %v3031 = vunpack.c.l.b16 %v1684
        %v3032 = vunpack.c.h.b16 %v1684
        %v3033 = vunpack.c.l.b16 %v1685
        %v3034 = vunpack.c.h.b16 %v1685
        %v3035 = vunpack.c.l.b16 %v1686
        %v3036 = vunpack.c.h.b16 %v1686
        %v3037 = vunpack.c.l.b16 %v1687
        %v3038 = vunpack.c.l.b16 %v1688
        %v3039 = vunpack.c.h.b16 %v1688
        %v3040 = vunpack.c.l.b16 %v1689
        %v3041 = vunpack.c.h.b16 %v1689
        %v3042 = vunpack.c.l.b16 %v1690
        %v3043 = vunpack.c.h.b16 %v1690
        %v3044 = vunpack.c.l.b16 %v1691
        %v3045 = vunpack.c.l.b16 %v1692
        %v3046 = vunpack.c.h.b16 %v1692
        %v3047 = vunpack.c.l.b16 %v1693
        %v3048 = vunpack.c.h.b16 %v1693
        %v3049 = vunpack.c.l.b16 %v1694
        %v3050 = vunpack.c.h.b16 %v1694
        %v3051 = vunpack.c.l.b16 %v1695
        %v3052 = vunpack.c.l.b16 %v1696
        %v3053 = vunpack.c.h.b16 %v1696
        %v3054 = vunpack.c.l.b16 %v1697
        %v3055 = vunpack.c.h.b16 %v1697
        %v3056 = vunpack.c.l.b16 %v1698
        %v3057 = vunpack.c.h.b16 %v1698
        %v3058 = vunpack.c.l.b16 %v1699
        %v3059 = vunpack.c.l.b16 %v1700
        %v3060 = vunpack.c.h.b16 %v1700
        %v3061 = vunpack.c.l.b16 %v1701
        %v3062 = vunpack.c.h.b16 %v1701
        %v3063 = vunpack.c.l.b16 %v1702
        %v3064 = vunpack.c.h.b16 %v1702
        %v3065 = vunpack.c.l.b16 %v1703
        %v3066 = vunpack.c.l.b16 %v1704
        %v3067 = vunpack.c.h.b16 %v1704
        %v3068 = vunpack.c.l.b16 %v1705
        %v3069 = vunpack.c.h.b16 %v1705
        %v3070 = vunpack.c.l.b16 %v1706
        %v3071 = vunpack.c.h.b16 %v1706
        %v3072 = vunpack.c.l.b16 %v1707
        %v3073 = vunpack.c.l.b16 %v1708
        %v3074 = vunpack.c.h.b16 %v1708
        %v3075 = vunpack.c.l.b16 %v1709
        %v3076 = vunpack.c.h.b16 %v1709
        %v3077 = vunpack.c.l.b16 %v1710
        %v3078 = vunpack.c.h.b16 %v1710
        %v3079 = vunpack.c.l.b16 %v1711
        %v3080 = vunpack.c.l.b16 %v1712
        %v3081 = vunpack.c.h.b16 %v1712
        %v3082 = vunpack.c.l.b16 %v1713
        %v3083 = vunpack.c.h.b16 %v1713
        %v3084 = vunpack.c.l.b16 %v1714
        %v3085 = vunpack.c.h.b16 %v1714
        %v3086 = vunpack.c.l.b16 %v1715
        %v3087 = vunpack.c.l.b16 %v1716
        %v3088 = vunpack.c.h.b16 %v1716
        %v3089 = vunpack.c.l.b16 %v1717
        %v3090 = vunpack.c.h.b16 %v1717
        %v3091 = vunpack.c.l.b16 %v1718
        %v3092 = vunpack.c.h.b16 %v1718
        %v3093 = vunpack.c.l.b16 %v1719
        %v3094 = vunpack.c.l.b16 %v1720
        %v3095 = vunpack.c.h.b16 %v1720
        %v3096 = vunpack.c.l.b16 %v1721
        %v3097 = vunpack.c.h.b16 %v1721
        %v3098 = vunpack.c.l.b16 %v1722
        %v3099 = vunpack.c.h.b16 %v1722
        %v3100 = vunpack.c.l.b16 %v1723
        %v3101 = vunpack.c.l.b16 %v1724
        %v3102 = vunpack.c.h.b16 %v1724
        %v3103 = vunpack.c.l.b16 %v1725
        %v3104 = vunpack.c.h.b16 %v1725
        %v3105 = vunpack.c.l.b16 %v1726
        %v3106 = vunpack.c.h.b16 %v1726
        %v3107 = vunpack.c.l.b16 %v1727
        %v3108 = vunpack.c.l.b16 %v1728
        %v3109 = vunpack.c.h.b16 %v1728
        %v3110 = vunpack.c.l.b16 %v1729
        %v3111 = vunpack.c.h.b16 %v1729
        %v3112 = vunpack.c.l.b16 %v1730
        %v3113 = vunpack.c.h.b16 %v1730
        %v3114 = vunpack.c.l.b16 %v1731
        %v3115 = vunpack.c.l.b16 %v1732
        %v3116 = vunpack.c.h.b16 %v1732
        %v3117 = vunpack.c.l.b16 %v1733
        %v3118 = vunpack.c.h.b16 %v1733
        %v3119 = vunpack.c.l.b16 %v1734
        %v3120 = vunpack.c.h.b16 %v1734
        %v3121 = vunpack.c.l.b16 %v1735
        %v3122 = vunpack.c.l.b16 %v1736
        %v3123 = vunpack.c.h.b16 %v1736
        %v3124 = vunpack.c.l.b16 %v1737
        %v3125 = vunpack.c.h.b16 %v1737
        %v3126 = vunpack.c.l.b16 %v1738
        %v3127 = vunpack.c.h.b16 %v1738
        %v3128 = vunpack.c.l.b16 %v1739
        %v3129 = vunpack.c.l.b16 %v1740
        %v3130 = vunpack.c.h.b16 %v1740
        %v3131 = vunpack.c.l.b16 %v1741
        %v3132 = vunpack.c.h.b16 %v1741
        %v3133 = vunpack.c.l.b16 %v1742
        %v3134 = vunpack.c.h.b16 %v1742
        %v3135 = vunpack.c.l.b16 %v1743
        %v3136 = vunpack.c.l.b16 %v1744
        %v3137 = vunpack.c.h.b16 %v1744
        %v3138 = vunpack.c.l.b16 %v1745
        %v3139 = vunpack.c.h.b16 %v1745
        %v3140 = vunpack.c.l.b16 %v1746
        %v3141 = vunpack.c.h.b16 %v1746
        %v3142 = vunpack.c.l.b16 %v1747
        %v3143 = vunpack.c.l.b16 %v1748
        %v3144 = vunpack.c.h.b16 %v1748
        %v3145 = vunpack.c.l.b16 %v1749
        %v3146 = vunpack.c.h.b16 %v1749
        %v3147 = vunpack.c.l.b16 %v1750
        %v3148 = vunpack.c.h.b16 %v1750
        %v3149 = vunpack.c.l.b16 %v1751
        %v3150 = vunpack.c.l.b16 %v1752
        %v3151 = vunpack.c.h.b16 %v1752
        %v3152 = vunpack.c.l.b16 %v1753
        %v3153 = vunpack.c.h.b16 %v1753
        %v3154 = vunpack.c.l.b16 %v1754
        %v3155 = vunpack.c.h.b16 %v1754
        %v3156 = vunpack.c.l.b16 %v1755
        %v3157 = vunpack.c.l.b16 %v1756
        %v3158 = vunpack.c.h.b16 %v1756
        %v3159 = vunpack.c.l.b16 %v1757
        %v3160 = vunpack.c.h.b16 %v1757
        %v3161 = vunpack.c.l.b16 %v1758
        %v3162 = vunpack.c.h.b16 %v1758
        %v3163 = vunpack.c.l.b16 %v1759
        %v3164 = vunpack.c.l.b16 %v1760
        %v3165 = vunpack.c.h.b16 %v1760
        %v3166 = vunpack.c.l.b16 %v1761
        %v3167 = vunpack.c.h.b16 %v1761
        %v3168 = vunpack.c.l.b16 %v1762
        %v3169 = vunpack.c.h.b16 %v1762
        %v3170 = vunpack.c.l.b16 %v1763
        %v3171 = vunpack.c.l.b16 %v1764
        %v3172 = vunpack.c.h.b16 %v1764
        %v3173 = vunpack.c.l.b16 %v1765
        %v3174 = vunpack.c.h.b16 %v1765
        %v3175 = vunpack.c.l.b16 %v1766
        %v3176 = vunpack.c.h.b16 %v1766
        %v3177 = vunpack.c.l.b16 %v1767
        %v3178 = vunpack.c.l.b16 %v1768
        %v3179 = vunpack.c.h.b16 %v1768
        %v3180 = vunpack.c.l.b16 %v1769
        %v3181 = vunpack.c.h.b16 %v1769
        %v3182 = vunpack.c.l.b16 %v1770
        %v3183 = vunpack.c.h.b16 %v1770
        %v3184 = vunpack.c.l.b16 %v1771
        %v3185 = vunpack.c.l.b16 %v1772
        %v3186 = vunpack.c.h.b16 %v1772
        %v3187 = vunpack.c.l.b16 %v1773
        %v3188 = vunpack.c.h.b16 %v1773
        %v3189 = vunpack.c.l.b16 %v1774
        %v3190 = vunpack.c.h.b16 %v1774
        %v3191 = vunpack.c.l.b16 %v1775
        %v3192 = vunpack.c.l.b16 %v1776
        %v3193 = vunpack.c.h.b16 %v1776
        %v3194 = vunpack.c.l.b16 %v1777
        %v3195 = vunpack.c.h.b16 %v1777
        %v3196 = vunpack.c.l.b16 %v1778
        %v3197 = vunpack.c.h.b16 %v1778
        %v3198 = vunpack.c.l.b16 %v1779
        %v3199 = vunpack.c.l.b16 %v1780
        %v3200 = vunpack.c.h.b16 %v1780
        %v3201 = vunpack.c.l.b16 %v1781
        %v3202 = vunpack.c.h.b16 %v1781
        %v3203 = vunpack.c.l.b16 %v1782
        %v3204 = vunpack.c.h.b16 %v1782
        %v3205 = vunpack.c.l.b16 %v1783
        %v3206 = vunpack.c.l.b16 %v1784
        %v3207 = vunpack.c.h.b16 %v1784
        %v3208 = vunpack.c.l.b16 %v1785
        %v3209 = vunpack.c.h.b16 %v1785
        %v3210 = vunpack.c.l.b16 %v1786
        %v3211 = vunpack.c.h.b16 %v1786
        %v3212 = vunpack.c.l.b16 %v1787
        %v3213 = vunpack.c.l.b16 %v1788
        %v3214 = vunpack.c.h.b16 %v1788
        %v3215 = vunpack.c.l.b16 %v1789
        %v3216 = vunpack.c.h.b16 %v1789
        %v3217 = vunpack.c.l.b16 %v1790
        %v3218 = vunpack.c.h.b16 %v1790
        %v3219 = vunpack.c.l.b16 %v1791
        %v3220 = vunpack.c.l.b16 %v1792
        %v3221 = vunpack.c.h.b16 %v1792
        %v3222 = vunpack.c.l.b16 %v1793
        %v3223 = vunpack.c.h.b16 %v1793
        %v3224 = vunpack.c.l.b16 %v1794
        %v3225 = vunpack.c.h.b16 %v1794
        %v3226 = vunpack.c.l.b16 %v1795
        %v3227 = vunpack.c.l.b16 %v1796
        %v3228 = vunpack.c.h.b16 %v1796
        %v3229 = vunpack.c.l.b16 %v1797
        %v3230 = vunpack.c.h.b16 %v1797
        %v3231 = vunpack.c.l.b16 %v1798
        %v3232 = vunpack.c.h.b16 %v1798
        %v3233 = vunpack.c.l.b16 %v1799
        %v3234 = vunpack.c.l.b16 %v1800
        %v3235 = vunpack.c.h.b16 %v1800
        %v3236 = vunpack.c.l.b16 %v1801
        %v3237 = vunpack.c.h.b16 %v1801
        %v3238 = vunpack.c.l.b16 %v1802
        %v3239 = vunpack.c.h.b16 %v1802
        %v3240 = vunpack.c.l.b16 %v1803
        %v3241 = vunpack.c.l.b16 %v1804
        %v3242 = vunpack.c.h.b16 %v1804
        %v3243 = vunpack.c.l.b16 %v1805
        %v3244 = vunpack.c.h.b16 %v1805
        %v3245 = vunpack.c.l.b16 %v1806
        %v3246 = vunpack.c.h.b16 %v1806
        %v3247 = vunpack.c.l.b16 %v1807
        %v3248 = vunpack.c.l.b16 %v1808
        %v3249 = vunpack.c.h.b16 %v1808
        %v3250 = vunpack.c.l.b16 %v1809
        %v3251 = vunpack.c.h.b16 %v1809
        %v3252 = vunpack.c.l.b16 %v1810
        %v3253 = vunpack.c.h.b16 %v1810
        %v3254 = vunpack.c.l.b16 %v1811
        %v3255 = vunpack.c.l.b16 %v1812
        %v3256 = vunpack.c.h.b16 %v1812
        %v3257 = vunpack.c.l.b16 %v1813
        %v3258 = vunpack.c.h.b16 %v1813
        %v3259 = vunpack.c.l.b16 %v1814
        %v3260 = vunpack.c.h.b16 %v1814
        %v3261 = vunpack.c.l.b16 %v1815
        %v3262 = vunpack.c.l.b16 %v1816
        %v3263 = vunpack.c.h.b16 %v1816
        %v3264 = vunpack.c.l.b16 %v1817
        %v3265 = vunpack.c.h.b16 %v1817
        %v3266 = vunpack.c.l.b16 %v1818
        %v3267 = vunpack.c.h.b16 %v1818
        %v3268 = vunpack.c.l.b16 %v1819
        %v3269 = vunpack.c.l.b16 %v1820
        %v3270 = vunpack.c.h.b16 %v1820
        %v3271 = vunpack.c.l.b16 %v1821
        %v3272 = vunpack.c.h.b16 %v1821
        %v3273 = vunpack.c.l.b16 %v1822
        %v3274 = vunpack.c.h.b16 %v1822
        %v3275 = vunpack.c.l.b16 %v1823
        %v3276 = vunpack.c.l.b16 %v1824
        %v3277 = vunpack.c.h.b16 %v1824
        %v3278 = vunpack.c.l.b16 %v1825
        %v3279 = vunpack.c.h.b16 %v1825
        %v3280 = vunpack.c.l.b16 %v1826
        %v3281 = vunpack.c.h.b16 %v1826
        %v3282 = vunpack.c.l.b16 %v1827
        %v3283 = vunpack.c.l.b16 %v1828
        %v3284 = vunpack.c.h.b16 %v1828
        %v3285 = vunpack.c.l.b16 %v1829
        %v3286 = vunpack.c.h.b16 %v1829
        %v3287 = vunpack.c.l.b16 %v1830
        %v3288 = vunpack.c.h.b16 %v1830
        %v3289 = vunpack.c.l.b16 %v1831
        %v3290 = vunpack.c.l.b16 %v1832
        %v3291 = vunpack.c.h.b16 %v1832
        %v3292 = vunpack.c.l.b16 %v1833
        %v3293 = vunpack.c.h.b16 %v1833
        %v3294 = vunpack.c.l.b16 %v1834
        %v3295 = vunpack.c.h.b16 %v1834
        %v3296 = vunpack.c.l.b16 %v1835
        %v3297 = vunpack.c.l.b16 %v1836
        %v3298 = vunpack.c.h.b16 %v1836
        %v3299 = vunpack.c.l.b16 %v1837
        %v3300 = vunpack.c.h.b16 %v1837
        %v3301 = vunpack.c.l.b16 %v1838
        %v3302 = vunpack.c.h.b16 %v1838
        %v3303 = vunpack.c.l.b16 %v1839
        %v3304 = vunpack.c.l.b16 %v1840
        %v3305 = vunpack.c.h.b16 %v1840
        %v3306 = vunpack.c.l.b16 %v1841
        %v3307 = vunpack.c.h.b16 %v1841
        %v3308 = vunpack.c.l.b16 %v1842
        %v3309 = vunpack.c.h.b16 %v1842
        %v3310 = vunpack.c.l.b16 %v1843
        %v3311 = vunpack.c.l.b16 %v1844
        %v3312 = vunpack.c.h.b16 %v1844
        %v3313 = vunpack.c.l.b16 %v1845
        %v3314 = vunpack.c.h.b16 %v1845
        %v3315 = vunpack.c.l.b16 %v1846
        %v3316 = vunpack.c.h.b16 %v1846
        %v3317 = vunpack.c.l.b16 %v1847
        %v3318 = vunpack.c.l.b16 %v1848
        %v3319 = vunpack.c.h.b16 %v1848
        %v3320 = vunpack.c.l.b16 %v1849
        %v3321 = vunpack.c.h.b16 %v1849
        %v3322 = vunpack.c.l.b16 %v1850
        %v3323 = vunpack.c.h.b16 %v1850
        %v3324 = vunpack.c.l.b16 %v1851
        %v3325 = vpack.c.b16 %v2436, %v2429
        %v3326 = vpack.c.b16 %v2437, %v2430
        %v3327 = vpack.c.b16 %v2438, %v2431
        %v3328 = vpack.c.b16 %v2439, %v2432
        %v3329 = vpack.c.b16 %v2440, %v2433
        %v3330 = vpack.c.b16 %v2441, %v2434
        %v3331 = vpack.c.b16 %v2442, %v2435
        %v3332 = vpack.c.b16 %v2450, %v2443
        %v3333 = vpack.c.b16 %v2451, %v2444
        %v3334 = vpack.c.b16 %v2452, %v2445
        %v3335 = vpack.c.b16 %v2453, %v2446
        %v3336 = vpack.c.b16 %v2454, %v2447
        %v3337 = vpack.c.b16 %v2455, %v2448
        %v3338 = vpack.c.b16 %v2456, %v2449
        %v3339 = vpack.c.b16 %v2464, %v2457
        %v3340 = vpack.c.b16 %v2465, %v2458
        %v3341 = vpack.c.b16 %v2466, %v2459
        %v3342 = vpack.c.b16 %v2467, %v2460
        %v3343 = vpack.c.b16 %v2468, %v2461
        %v3344 = vpack.c.b16 %v2469, %v2462
        %v3345 = vpack.c.b16 %v2470, %v2463
        %v3346 = vpack.c.b16 %v2478, %v2471
        %v3347 = vpack.c.b16 %v2479, %v2472
        %v3348 = vpack.c.b16 %v2480, %v2473
        %v3349 = vpack.c.b16 %v2481, %v2474
        %v3350 = vpack.c.b16 %v2482, %v2475
        %v3351 = vpack.c.b16 %v2483, %v2476
        %v3352 = vpack.c.b16 %v2484, %v2477
        %v3353 = vpack.c.b16 %v2492, %v2485
        %v3354 = vpack.c.b16 %v2493, %v2486
        %v3355 = vpack.c.b16 %v2494, %v2487
        %v3356 = vpack.c.b16 %v2495, %v2488
        %v3357 = vpack.c.b16 %v2496, %v2489
        %v3358 = vpack.c.b16 %v2497, %v2490
        %v3359 = vpack.c.b16 %v2498, %v2491
        %v3360 = vpack.c.b16 %v2506, %v2499
        %v3361 = vpack.c.b16 %v2507, %v2500
        %v3362 = vpack.c.b16 %v2508, %v2501
        %v3363 = vpack.c.b16 %v2509, %v2502
        %v3364 = vpack.c.b16 %v2510, %v2503
        %v3365 = vpack.c.b16 %v2511, %v2504
        %v3366 = vpack.c.b16 %v2512, %v2505
        %v3367 = vpack.c.b16 %v2520, %v2513
        %v3368 = vpack.c.b16 %v2521, %v2514
        %v3369 = vpack.c.b16 %v2522, %v2515
        %v3370 = vpack.c.b16 %v2523, %v2516
        %v3371 = vpack.c.b16 %v2524, %v2517
        %v3372 = vpack.c.b16 %v2525, %v2518
        %v3373 = vpack.c.b16 %v2526, %v2519
        %v3374 = vpack.c.b16 %v2534, %v2527
        %v3375 = vpack.c.b16 %v2535, %v2528
        %v3376 = vpack.c.b16 %v2536, %v2529
        %v3377 = vpack.c.b16 %v2537, %v2530
        %v3378 = vpack.c.b16 %v2538, %v2531
        %v3379 = vpack.c.b16 %v2539, %v2532
        %v3380 = vpack.c.b16 %v2540, %v2533
        %v3381 = vpack.c.b16 %v2548, %v2541
        %v3382 = vpack.c.b16 %v2549, %v2542
        %v3383 = vpack.c.b16 %v2550, %v2543
        %v3384 = vpack.c.b16 %v2551, %v2544
        %v3385 = vpack.c.b16 %v2552, %v2545
        %v3386 = vpack.c.b16 %v2553, %v2546
        %v3387 = vpack.c.b16 %v2554, %v2547
        %v3388 = vpack.c.b16 %v2562, %v2555
        %v3389 = vpack.c.b16 %v2563, %v2556
        %v3390 = vpack.c.b16 %v2564, %v2557
        %v3391 = vpack.c.b16 %v2565, %v2558
        %v3392 = vpack.c.b16 %v2566, %v2559
        %v3393 = vpack.c.b16 %v2567, %v2560
        %v3394 = vpack.c.b16 %v2568, %v2561
        %v3395 = vpack.c.b16 %v2576, %v2569
        %v3396 = vpack.c.b16 %v2577, %v2570
        %v3397 = vpack.c.b16 %v2578, %v2571
        %v3398 = vpack.c.b16 %v2579, %v2572
        %v3399 = vpack.c.b16 %v2580, %v2573
        %v3400 = vpack.c.b16 %v2581, %v2574
        %v3401 = vpack.c.b16 %v2582, %v2575
        %v3402 = vpack.c.b16 %v2590, %v2583
        %v3403 = vpack.c.b16 %v2591, %v2584
        %v3404 = vpack.c.b16 %v2592, %v2585
        %v3405 = vpack.c.b16 %v2593, %v2586
        %v3406 = vpack.c.b16 %v2594, %v2587
        %v3407 = vpack.c.b16 %v2595, %v2588
        %v3408 = vpack.c.b16 %v2596, %v2589
        %v3409 = vpack.c.b16 %v2604, %v2597
        %v3410 = vpack.c.b16 %v2605, %v2598
        %v3411 = vpack.c.b16 %v2606, %v2599
        %v3412 = vpack.c.b16 %v2607, %v2600
        %v3413 = vpack.c.b16 %v2608, %v2601
        %v3414 = vpack.c.b16 %v2609, %v2602
        %v3415 = vpack.c.b16 %v2610, %v2603
        %v3416 = vpack.c.b16 %v2618, %v2611
        %v3417 = vpack.c.b16 %v2619, %v2612
        %v3418 = vpack.c.b16 %v2620, %v2613
        %v3419 = vpack.c.b16 %v2621, %v2614
        %v3420 = vpack.c.b16 %v2622, %v2615
        %v3421 = vpack.c.b16 %v2623, %v2616
        %v3422 = vpack.c.b16 %v2624, %v2617
        %v3423 = vpack.c.b16 %v2632, %v2625
        %v3424 = vpack.c.b16 %v2633, %v2626
        %v3425 = vpack.c.b16 %v2634, %v2627
        %v3426 = vpack.c.b16 %v2635, %v2628
        %v3427 = vpack.c.b16 %v2636, %v2629
        %v3428 = vpack.c.b16 %v2637, %v2630
        %v3429 = vpack.c.b16 %v2638, %v2631
        %v3430 = vpack.c.b16 %v2646, %v2639
        %v3431 = vpack.c.b16 %v2647, %v2640
        %v3432 = vpack.c.b16 %v2648, %v2641
        %v3433 = vpack.c.b16 %v2649, %v2642
        %v3434 = vpack.c.b16 %v2650, %v2643
        %v3435 = vpack.c.b16 %v2651, %v2644
        %v3436 = vpack.c.b16 %v2652, %v2645
        %v3437 = vpack.c.b16 %v2660, %v2653
        %v3438 = vpack.c.b16 %v2661, %v2654
        %v3439 = vpack.c.b16 %v2662, %v2655
        %v3440 = vpack.c.b16 %v2663, %v2656
        %v3441 = vpack.c.b16 %v2664, %v2657
        %v3442 = vpack.c.b16 %v2665, %v2658
        %v3443 = vpack.c.b16 %v2666, %v2659
        %v3444 = vpack.c.b16 %v2674, %v2667
        %v3445 = vpack.c.b16 %v2675, %v2668
        %v3446 = vpack.c.b16 %v2676, %v2669
        %v3447 = vpack.c.b16 %v2677, %v2670
        %v3448 = vpack.c.b16 %v2678, %v2671
        %v3449 = vpack.c.b16 %v2679, %v2672
        %v3450 = vpack.c.b16 %v2680, %v2673
        %v3451 = vpack.c.b16 %v2688, %v2681
        %v3452 = vpack.c.b16 %v2689, %v2682
        %v3453 = vpack.c.b16 %v2690, %v2683
        %v3454 = vpack.c.b16 %v2691, %v2684
        %v3455 = vpack.c.b16 %v2692, %v2685
        %v3456 = vpack.c.b16 %v2693, %v2686
        %v3457 = vpack.c.b16 %v2694, %v2687
        %v3458 = vpack.c.b16 %v2702, %v2695
        %v3459 = vpack.c.b16 %v2703, %v2696
        %v3460 = vpack.c.b16 %v2704, %v2697
        %v3461 = vpack.c.b16 %v2705, %v2698
        %v3462 = vpack.c.b16 %v2706, %v2699
        %v3463 = vpack.c.b16 %v2707, %v2700
        %v3464 = vpack.c.b16 %v2708, %v2701
        %v3465 = vpack.c.b16 %v2716, %v2709
        %v3466 = vpack.c.b16 %v2717, %v2710
        %v3467 = vpack.c.b16 %v2718, %v2711
        %v3468 = vpack.c.b16 %v2719, %v2712
        %v3469 = vpack.c.b16 %v2720, %v2713
        %v3470 = vpack.c.b16 %v2721, %v2714
        %v3471 = vpack.c.b16 %v2722, %v2715
        %v3472 = vpack.c.b16 %v2730, %v2723
        %v3473 = vpack.c.b16 %v2731, %v2724
        %v3474 = vpack.c.b16 %v2732, %v2725
        %v3475 = vpack.c.b16 %v2733, %v2726
        %v3476 = vpack.c.b16 %v2734, %v2727
        %v3477 = vpack.c.b16 %v2735, %v2728
        %v3478 = vpack.c.b16 %v2736, %v2729
        %v3479 = vpack.c.b16 %v2744, %v2737
        %v3480 = vpack.c.b16 %v2745, %v2738
        %v3481 = vpack.c.b16 %v2746, %v2739
        %v3482 = vpack.c.b16 %v2747, %v2740
        %v3483 = vpack.c.b16 %v2748, %v2741
        %v3484 = vpack.c.b16 %v2749, %v2742
        %v3485 = vpack.c.b16 %v2750, %v2743
        %v3486 = vpack.c.b16 %v2758, %v2751
        %v3487 = vpack.c.b16 %v2759, %v2752
        %v3488 = vpack.c.b16 %v2760, %v2753
        %v3489 = vpack.c.b16 %v2761, %v2754
        %v3490 = vpack.c.b16 %v2762, %v2755
        %v3491 = vpack.c.b16 %v2763, %v2756
        %v3492 = vpack.c.b16 %v2764, %v2757
        %v3493 = vpack.c.b16 %v2772, %v2765
        %v3494 = vpack.c.b16 %v2773, %v2766
        %v3495 = vpack.c.b16 %v2774, %v2767
        %v3496 = vpack.c.b16 %v2775, %v2768
        %v3497 = vpack.c.b16 %v2776, %v2769
        %v3498 = vpack.c.b16 %v2777, %v2770
        %v3499 = vpack.c.b16 %v2778, %v2771
        %v3500 = vpack.c.b16 %v2786, %v2779
        %v3501 = vpack.c.b16 %v2787, %v2780
        %v3502 = vpack.c.b16 %v2788, %v2781
        %v3503 = vpack.c.b16 %v2789, %v2782
        %v3504 = vpack.c.b16 %v2790, %v2783
        %v3505 = vpack.c.b16 %v2791, %v2784
        %v3506 = vpack.c.b16 %v2792, %v2785
        %v3507 = vpack.c.b16 %v2800, %v2793
        %v3508 = vpack.c.b16 %v2801, %v2794
        %v3509 = vpack.c.b16 %v2802, %v2795
        %v3510 = vpack.c.b16 %v2803, %v2796
        %v3511 = vpack.c.b16 %v2804, %v2797
        %v3512 = vpack.c.b16 %v2805, %v2798
        %v3513 = vpack.c.b16 %v2806, %v2799
        %v3514 = vpack.c.b16 %v2814, %v2807
        %v3515 = vpack.c.b16 %v2815, %v2808
        %v3516 = vpack.c.b16 %v2816, %v2809
        %v3517 = vpack.c.b16 %v2817, %v2810
        %v3518 = vpack.c.b16 %v2818, %v2811
        %v3519 = vpack.c.b16 %v2819, %v2812
        %v3520 = vpack.c.b16 %v2820, %v2813
        %v3521 = vpack.c.b16 %v2828, %v2821
        %v3522 = vpack.c.b16 %v2829, %v2822
        %v3523 = vpack.c.b16 %v2830, %v2823
        %v3524 = vpack.c.b16 %v2831, %v2824
        %v3525 = vpack.c.b16 %v2832, %v2825
        %v3526 = vpack.c.b16 %v2833, %v2826
        %v3527 = vpack.c.b16 %v2834, %v2827
        %v3528 = vpack.c.b16 %v2842, %v2835
        %v3529 = vpack.c.b16 %v2843, %v2836
        %v3530 = vpack.c.b16 %v2844, %v2837
        %v3531 = vpack.c.b16 %v2845, %v2838
        %v3532 = vpack.c.b16 %v2846, %v2839
        %v3533 = vpack.c.b16 %v2847, %v2840
        %v3534 = vpack.c.b16 %v2848, %v2841
        %v3535 = vpack.c.b16 %v2856, %v2849
        %v3536 = vpack.c.b16 %v2857, %v2850
        %v3537 = vpack.c.b16 %v2858, %v2851
        %v3538 = vpack.c.b16 %v2859, %v2852
        %v3539 = vpack.c.b16 %v2860, %v2853
        %v3540 = vpack.c.b16 %v2861, %v2854
        %v3541 = vpack.c.b16 %v2862, %v2855
        %v3542 = vpack.c.b16 %v2870, %v2863
        %v3543 = vpack.c.b16 %v2871, %v2864
        %v3544 = vpack.c.b16 %v2872, %v2865
        %v3545 = vpack.c.b16 %v2873, %v2866
        %v3546 = vpack.c.b16 %v2874, %v2867
        %v3547 = vpack.c.b16 %v2875, %v2868
        %v3548 = vpack.c.b16 %v2876, %v2869
        %v3549 = vpack.c.b16 %v2884, %v2877
        %v3550 = vpack.c.b16 %v2885, %v2878
        %v3551 = vpack.c.b16 %v2886, %v2879
        %v3552 = vpack.c.b16 %v2887, %v2880
        %v3553 = vpack.c.b16 %v2888, %v2881
        %v3554 = vpack.c.b16 %v2889, %v2882
        %v3555 = vpack.c.b16 %v2890, %v2883
        %v3556 = vpack.c.b16 %v2898, %v2891
        %v3557 = vpack.c.b16 %v2899, %v2892
        %v3558 = vpack.c.b16 %v2900, %v2893
        %v3559 = vpack.c.b16 %v2901, %v2894
        %v3560 = vpack.c.b16 %v2902, %v2895
        %v3561 = vpack.c.b16 %v2903, %v2896
        %v3562 = vpack.c.b16 %v2904, %v2897
        %v3563 = vpack.c.b16 %v2912, %v2905
        %v3564 = vpack.c.b16 %v2913, %v2906
        %v3565 = vpack.c.b16 %v2914, %v2907
        %v3566 = vpack.c.b16 %v2915, %v2908
        %v3567 = vpack.c.b16 %v2916, %v2909
        %v3568 = vpack.c.b16 %v2917, %v2910
        %v3569 = vpack.c.b16 %v2918, %v2911
        %v3570 = vpack.c.b16 %v2926, %v2919
        %v3571 = vpack.c.b16 %v2927, %v2920
        %v3572 = vpack.c.b16 %v2928, %v2921
        %v3573 = vpack.c.b16 %v2929, %v2922
        %v3574 = vpack.c.b16 %v2930, %v2923
        %v3575 = vpack.c.b16 %v2931, %v2924
        %v3576 = vpack.c.b16 %v2932, %v2925
        %v3577 = vpack.c.b16 %v2940, %v2933
        %v3578 = vpack.c.b16 %v2941, %v2934
        %v3579 = vpack.c.b16 %v2942, %v2935
        %v3580 = vpack.c.b16 %v2943, %v2936
        %v3581 = vpack.c.b16 %v2944, %v2937
        %v3582 = vpack.c.b16 %v2945, %v2938
        %v3583 = vpack.c.b16 %v2946, %v2939
        %v3584 = vpack.c.b16 %v2954, %v2947
        %v3585 = vpack.c.b16 %v2955, %v2948
        %v3586 = vpack.c.b16 %v2956, %v2949
        %v3587 = vpack.c.b16 %v2957, %v2950
        %v3588 = vpack.c.b16 %v2958, %v2951
        %v3589 = vpack.c.b16 %v2959, %v2952
        %v3590 = vpack.c.b16 %v2960, %v2953
        %v3591 = vpack.c.b16 %v2968, %v2961
        %v3592 = vpack.c.b16 %v2969, %v2962
        %v3593 = vpack.c.b16 %v2970, %v2963
        %v3594 = vpack.c.b16 %v2971, %v2964
        %v3595 = vpack.c.b16 %v2972, %v2965
        %v3596 = vpack.c.b16 %v2973, %v2966
        %v3597 = vpack.c.b16 %v2974, %v2967
        %v3598 = vpack.c.b16 %v2982, %v2975
        %v3599 = vpack.c.b16 %v2983, %v2976
        %v3600 = vpack.c.b16 %v2984, %v2977
        %v3601 = vpack.c.b16 %v2985, %v2978
        %v3602 = vpack.c.b16 %v2986, %v2979
        %v3603 = vpack.c.b16 %v2987, %v2980
        %v3604 = vpack.c.b16 %v2988, %v2981
        %v3605 = vpack.c.b16 %v2996, %v2989
        %v3606 = vpack.c.b16 %v2997, %v2990
        %v3607 = vpack.c.b16 %v2998, %v2991
        %v3608 = vpack.c.b16 %v2999, %v2992
        %v3609 = vpack.c.b16 %v3000, %v2993
        %v3610 = vpack.c.b16 %v3001, %v2994
        %v3611 = vpack.c.b16 %v3002, %v2995
        %v3612 = vpack.c.b16 %v3010, %v3003
        %v3613 = vpack.c.b16 %v3011, %v3004
        %v3614 = vpack.c.b16 %v3012, %v3005
        %v3615 = vpack.c.b16 %v3013, %v3006
        %v3616 = vpack.c.b16 %v3014, %v3007
        %v3617 = vpack.c.b16 %v3015, %v3008
        %v3618 = vpack.c.b16 %v3016, %v3009
        %v3619 = vpack.c.b16 %v3024, %v3017
        %v3620 = vpack.c.b16 %v3025, %v3018
        %v3621 = vpack.c.b16 %v3026, %v3019
        %v3622 = vpack.c.b16 %v3027, %v3020
        %v3623 = vpack.c.b16 %v3028, %v3021
        %v3624 = vpack.c.b16 %v3029, %v3022
        %v3625 = vpack.c.b16 %v3030, %v3023
        %v3626 = vpack.c.b16 %v3038, %v3031
        %v3627 = vpack.c.b16 %v3039, %v3032
        %v3628 = vpack.c.b16 %v3040, %v3033
        %v3629 = vpack.c.b16 %v3041, %v3034
        %v3630 = vpack.c.b16 %v3042, %v3035
        %v3631 = vpack.c.b16 %v3043, %v3036
        %v3632 = vpack.c.b16 %v3044, %v3037
        %v3633 = vpack.c.b16 %v3052, %v3045
        %v3634 = vpack.c.b16 %v3053, %v3046
        %v3635 = vpack.c.b16 %v3054, %v3047
        %v3636 = vpack.c.b16 %v3055, %v3048
        %v3637 = vpack.c.b16 %v3056, %v3049
        %v3638 = vpack.c.b16 %v3057, %v3050
        %v3639 = vpack.c.b16 %v3058, %v3051
        %v3640 = vpack.c.b16 %v3066, %v3059
        %v3641 = vpack.c.b16 %v3067, %v3060
        %v3642 = vpack.c.b16 %v3068, %v3061
        %v3643 = vpack.c.b16 %v3069, %v3062
        %v3644 = vpack.c.b16 %v3070, %v3063
        %v3645 = vpack.c.b16 %v3071, %v3064
        %v3646 = vpack.c.b16 %v3072, %v3065
        %v3647 = vpack.c.b16 %v3080, %v3073
        %v3648 = vpack.c.b16 %v3081, %v3074
        %v3649 = vpack.c.b16 %v3082, %v3075
        %v3650 = vpack.c.b16 %v3083, %v3076
        %v3651 = vpack.c.b16 %v3084, %v3077
        %v3652 = vpack.c.b16 %v3085, %v3078
        %v3653 = vpack.c.b16 %v3086, %v3079
        %v3654 = vpack.c.b16 %v3094, %v3087
        %v3655 = vpack.c.b16 %v3095, %v3088
        %v3656 = vpack.c.b16 %v3096, %v3089
        %v3657 = vpack.c.b16 %v3097, %v3090
        %v3658 = vpack.c.b16 %v3098, %v3091
        %v3659 = vpack.c.b16 %v3099, %v3092
        %v3660 = vpack.c.b16 %v3100, %v3093
        %v3661 = vpack.c.b16 %v3108, %v3101
        %v3662 = vpack.c.b16 %v3109, %v3102
        %v3663 = vpack.c.b16 %v3110, %v3103
        %v3664 = vpack.c.b16 %v3111, %v3104
        %v3665 = vpack.c.b16 %v3112, %v3105
        %v3666 = vpack.c.b16 %v3113, %v3106
        %v3667 = vpack.c.b16 %v3114, %v3107
        %v3668 = vpack.c.b16 %v3122, %v3115
        %v3669 = vpack.c.b16 %v3123, %v3116
        %v3670 = vpack.c.b16 %v3124, %v3117
        %v3671 = vpack.c.b16 %v3125, %v3118
        %v3672 = vpack.c.b16 %v3126, %v3119
        %v3673 = vpack.c.b16 %v3127, %v3120
        %v3674 = vpack.c.b16 %v3128, %v3121
        %v3675 = vpack.c.b16 %v3136, %v3129
        %v3676 = vpack.c.b16 %v3137, %v3130
        %v3677 = vpack.c.b16 %v3138, %v3131
        %v3678 = vpack.c.b16 %v3139, %v3132
        %v3679 = vpack.c.b16 %v3140, %v3133
        %v3680 = vpack.c.b16 %v3141, %v3134
        %v3681 = vpack.c.b16 %v3142, %v3135
        %v3682 = vpack.c.b16 %v3150, %v3143
        %v3683 = vpack.c.b16 %v3151, %v3144
        %v3684 = vpack.c.b16 %v3152, %v3145
        %v3685 = vpack.c.b16 %v3153, %v3146
        %v3686 = vpack.c.b16 %v3154, %v3147
        %v3687 = vpack.c.b16 %v3155, %v3148
        %v3688 = vpack.c.b16 %v3156, %v3149
        %v3689 = vpack.c.b16 %v3164, %v3157
        %v3690 = vpack.c.b16 %v3165, %v3158
        %v3691 = vpack.c.b16 %v3166, %v3159
        %v3692 = vpack.c.b16 %v3167, %v3160
        %v3693 = vpack.c.b16 %v3168, %v3161
        %v3694 = vpack.c.b16 %v3169, %v3162
        %v3695 = vpack.c.b16 %v3170, %v3163
        %v3696 = vpack.c.b16 %v3178, %v3171
        %v3697 = vpack.c.b16 %v3179, %v3172
        %v3698 = vpack.c.b16 %v3180, %v3173
        %v3699 = vpack.c.b16 %v3181, %v3174
        %v3700 = vpack.c.b16 %v3182, %v3175
        %v3701 = vpack.c.b16 %v3183, %v3176
        %v3702 = vpack.c.b16 %v3184, %v3177
        %v3703 = vpack.c.b16 %v3192, %v3185
        %v3704 = vpack.c.b16 %v3193, %v3186
        %v3705 = vpack.c.b16 %v3194, %v3187
        %v3706 = vpack.c.b16 %v3195, %v3188
        %v3707 = vpack.c.b16 %v3196, %v3189
        %v3708 = vpack.c.b16 %v3197, %v3190
        %v3709 = vpack.c.b16 %v3198, %v3191
        %v3710 = vpack.c.b16 %v3206, %v3199
        %v3711 = vpack.c.b16 %v3207, %v3200
        %v3712 = vpack.c.b16 %v3208, %v3201
        %v3713 = vpack.c.b16 %v3209, %v3202
        %v3714 = vpack.c.b16 %v3210, %v3203
        %v3715 = vpack.c.b16 %v3211, %v3204
        %v3716 = vpack.c.b16 %v3212, %v3205
        %v3717 = vpack.c.b16 %v3220, %v3213
        %v3718 = vpack.c.b16 %v3221, %v3214
        %v3719 = vpack.c.b16 %v3222, %v3215
        %v3720 = vpack.c.b16 %v3223, %v3216
        %v3721 = vpack.c.b16 %v3224, %v3217
        %v3722 = vpack.c.b16 %v3225, %v3218
        %v3723 = vpack.c.b16 %v3226, %v3219
        %v3724 = vpack.c.b16 %v3234, %v3227
        %v3725 = vpack.c.b16 %v3235, %v3228
        %v3726 = vpack.c.b16 %v3236, %v3229
        %v3727 = vpack.c.b16 %v3237, %v3230
        %v3728 = vpack.c.b16 %v3238, %v3231
        %v3729 = vpack.c.b16 %v3239, %v3232
        %v3730 = vpack.c.b16 %v3240, %v3233
        %v3731 = vpack.c.b16 %v3248, %v3241
        %v3732 = vpack.c.b16 %v3249, %v3242
        %v3733 = vpack.c.b16 %v3250, %v3243
        %v3734 = vpack.c.b16 %v3251, %v3244
        %v3735 = vpack.c.b16 %v3252, %v3245
        %v3736 = vpack.c.b16 %v3253, %v3246
        %v3737 = vpack.c.b16 %v3254, %v3247
        %v3738 = vpack.c.b16 %v3262, %v3255
        %v3739 = vpack.c.b16 %v3263, %v3256
        %v3740 = vpack.c.b16 %v3264, %v3257
        %v3741 = vpack.c.b16 %v3265, %v3258
        %v3742 = vpack.c.b16 %v3266, %v3259
        %v3743 = vpack.c.b16 %v3267, %v3260
        %v3744 = vpack.c.b16 %v3268, %v3261
        %v3745 = vpack.c.b16 %v3276, %v3269
        %v3746 = vpack.c.b16 %v3277, %v3270
        %v3747 = vpack.c.b16 %v3278, %v3271
        %v3748 = vpack.c.b16 %v3279, %v3272
        %v3749 = vpack.c.b16 %v3280, %v3273
        %v3750 = vpack.c.b16 %v3281, %v3274
        %v3751 = vpack.c.b16 %v3282, %v3275
        %v3752 = vpack.c.b16 %v3290, %v3283
        %v3753 = vpack.c.b16 %v3291, %v3284
        %v3754 = vpack.c.b16 %v3292, %v3285
        %v3755 = vpack.c.b16 %v3293, %v3286
        %v3756 = vpack.c.b16 %v3294, %v3287
        %v3757 = vpack.c.b16 %v3295, %v3288
        %v3758 = vpack.c.b16 %v3296, %v3289
        %v3759 = vpack.c.b16 %v3304, %v3297
        %v3760 = vpack.c.b16 %v3305, %v3298
        %v3761 = vpack.c.b16 %v3306, %v3299
        %v3762 = vpack.c.b16 %v3307, %v3300
        %v3763 = vpack.c.b16 %v3308, %v3301
        %v3764 = vpack.c.b16 %v3309, %v3302
        %v3765 = vpack.c.b16 %v3310, %v3303
        %v3766 = vpack.c.b16 %v3318, %v3311
        %v3767 = vpack.c.b16 %v3319, %v3312
        %v3768 = vpack.c.b16 %v3320, %v3313
        %v3769 = vpack.c.b16 %v3321, %v3314
        %v3770 = vpack.c.b16 %v3322, %v3315
        %v3771 = vpack.c.b16 %v3323, %v3316
        %v3772 = vpack.c.b16 %v3324, %v3317
        %4221 = vmatprep.subr.bf16.mxu0 %v3326
        %4222 = vmatpush1.bf16.msra.mxu0 %v3325
        %4223 = vmatprep.subr.bf16.mxu0 %v3333
        %4224 = vmatpush1.bf16.msra.mxu0 %v3332
        %4225 = vmatprep.subr.bf16.mxu0 %v3340
        %4226 = vmatpush1.bf16.msra.mxu0 %v3339
        %4227 = vmatprep.subr.bf16.mxu0 %v3347
        %4228 = vmatpush1.bf16.msra.mxu0 %v3346
        %4229 = vmatprep.subr.bf16.mxu0 %v3354
        %4230 = vmatpush1.bf16.msra.mxu0 %v3353
        %4231 = vmatprep.subr.bf16.mxu0 %v3361
        %4232 = vmatpush1.bf16.msra.mxu0 %v3360
        %4233 = vmatprep.subr.bf16.mxu0 %v3368
        %4234 = vmatpush1.bf16.msra.mxu0 %v3367
        %4235 = vmatprep.subr.bf16.mxu0 %v3375
        %4236 = vmatpush1.bf16.msra.mxu0 %v3374
        %4237 = vmatprep.subr.bf16.mxu0 %v3382
        %4238 = vmatpush1.bf16.msra.mxu0 %v3381
        %4239 = vmatprep.subr.bf16.mxu0 %v3389
        %4240 = vmatpush1.bf16.msra.mxu0 %v3388
        %4241 = vmatprep.subr.bf16.mxu0 %v3396
        %4242 = vmatpush1.bf16.msra.mxu0 %v3395
        %4243 = vmatprep.subr.bf16.mxu0 %v3403
        %4244 = vmatpush1.bf16.msra.mxu0 %v3402
        %4245 = vmatprep.subr.bf16.mxu0 %v3410
        %4246 = vmatpush1.bf16.msra.mxu0 %v3409
        %4247 = vmatprep.subr.bf16.mxu0 %v3417
        %4248 = vmatpush1.bf16.msra.mxu0 %v3416
        %4249 = vmatprep.subr.bf16.mxu0 %v3424
        %4250 = vmatpush1.bf16.msra.mxu0 %v3423
        %4251 = vmatprep.subr.bf16.mxu0 %v3431
        %4252 = vmatpush1.bf16.msra.mxu0 %v3430
        %4253 = vmatprep.mubr.bf16.mxu0 %v1902
        %4254 = vmatmul.mubr.bf16.gmra.mrb[0].mxu0 %v1901
        %v4255 = vpop.f32.mrb[0].mxu0
        %v4256 = vadd.f32 %v1857, %v4255
        %v4257 = vpop.f32.mrb[0].mxu0
        %v4258 = vadd.f32 %v1861, %v4257
        %v4259 = vpop.f32.mrb[0].mxu0
        %v4260 = vpop.f32.mrb[0].mxu0
        %4261 = vdwg.mxu0
        %4262 = vmatprep.subr.bf16.mxu0 %v3438
        %4263 = vmatpush1.bf16.msra.mxu0 %v3437
        %4264 = vmatprep.subr.bf16.mxu0 %v3445
        %4265 = vmatpush1.bf16.msra.mxu0 %v3444
        %4266 = vmatprep.subr.bf16.mxu0 %v3452
        %4267 = vmatpush1.bf16.msra.mxu0 %v3451
        %4268 = vmatprep.subr.bf16.mxu0 %v3459
        %4269 = vmatpush1.bf16.msra.mxu0 %v3458
        %4270 = vmatprep.subr.bf16.mxu0 %v3466
        %4271 = vmatpush1.bf16.msra.mxu0 %v3465
        %4272 = vmatprep.subr.bf16.mxu0 %v3473
        %4273 = vmatpush1.bf16.msra.mxu0 %v3472
        %4274 = vmatprep.subr.bf16.mxu0 %v3480
        %4275 = vmatpush1.bf16.msra.mxu0 %v3479
        %4276 = vmatprep.subr.bf16.mxu0 %v3487
        %4277 = vmatpush1.bf16.msra.mxu0 %v3486
        %4278 = vmatprep.subr.bf16.mxu0 %v3494
        %4279 = vmatpush1.bf16.msra.mxu0 %v3493
        %4280 = vmatprep.subr.bf16.mxu0 %v3501
        %4281 = vmatpush1.bf16.msra.mxu0 %v3500
        %4282 = vmatprep.subr.bf16.mxu0 %v3508
        %4283 = vmatpush1.bf16.msra.mxu0 %v3507
        %4284 = vmatprep.subr.bf16.mxu0 %v3515
        %4285 = vmatpush1.bf16.msra.mxu0 %v3514
        %4286 = vmatprep.subr.bf16.mxu0 %v3522
        %4287 = vmatpush1.bf16.msra.mxu0 %v3521
        %4288 = vmatprep.subr.bf16.mxu0 %v3529
        %4289 = vmatpush1.bf16.msra.mxu0 %v3528
        %4290 = vmatprep.subr.bf16.mxu0 %v3536
        %4291 = vmatpush1.bf16.msra.mxu0 %v3535
        %4292 = vmatprep.subr.bf16.mxu0 %v3543
        %4293 = vmatpush1.bf16.msra.mxu0 %v3542
        %4294 = vmatprep.mubr.bf16.mxu0 %v1904
        %4295 = vmatmul.mubr.bf16.gmra.mrb[0].mxu0 %v1903
        %v4296 = vpop.f32.mrb[0].mxu0
        %v4297 = vadd.f32 %v4256, %v4296
        %v4298 = vpop.f32.mrb[0].mxu0
        %v4299 = vadd.f32 %v4258, %v4298
        %v4300 = vpop.f32.mrb[0].mxu0
        %v4301 = vpop.f32.mrb[0].mxu0
        %4302 = vdwg.mxu0
        %4303 = vmatprep.subr.bf16.mxu0 %v3550
        %4304 = vmatpush1.bf16.msra.mxu0 %v3549
        %4305 = vmatprep.subr.bf16.mxu0 %v3557
        %4306 = vmatpush1.bf16.msra.mxu0 %v3556
        %4307 = vmatprep.subr.bf16.mxu0 %v3564
        %4308 = vmatpush1.bf16.msra.mxu0 %v3563
        %4309 = vmatprep.subr.bf16.mxu0 %v3571
        %4310 = vmatpush1.bf16.msra.mxu0 %v3570
        %4311 = vmatprep.subr.bf16.mxu0 %v3578
        %4312 = vmatpush1.bf16.msra.mxu0 %v3577
        %4313 = vmatprep.subr.bf16.mxu0 %v3585
        %4314 = vmatpush1.bf16.msra.mxu0 %v3584
        %4315 = vmatprep.subr.bf16.mxu0 %v3592
        %4316 = vmatpush1.bf16.msra.mxu0 %v3591
        %4317 = vmatprep.subr.bf16.mxu0 %v3599
        %4318 = vmatpush1.bf16.msra.mxu0 %v3598
        %4319 = vmatprep.subr.bf16.mxu0 %v3606
        %4320 = vmatpush1.bf16.msra.mxu0 %v3605
        %4321 = vmatprep.subr.bf16.mxu0 %v3613
        %4322 = vmatpush1.bf16.msra.mxu0 %v3612
        %4323 = vmatprep.subr.bf16.mxu0 %v3620
        %4324 = vmatpush1.bf16.msra.mxu0 %v3619
        %4325 = vmatprep.subr.bf16.mxu0 %v3627
        %4326 = vmatpush1.bf16.msra.mxu0 %v3626
        %4327 = vmatprep.subr.bf16.mxu0 %v3634
        %4328 = vmatpush1.bf16.msra.mxu0 %v3633
        %4329 = vmatprep.subr.bf16.mxu0 %v3641
        %4330 = vmatpush1.bf16.msra.mxu0 %v3640
        %4331 = vmatprep.subr.bf16.mxu0 %v3648
        %4332 = vmatpush1.bf16.msra.mxu0 %v3647
        %4333 = vmatprep.subr.bf16.mxu0 %v3655
        %4334 = vmatpush1.bf16.msra.mxu0 %v3654
        %4335 = vmatprep.mubr.bf16.mxu0 %v1906
        %4336 = vmatmul.mubr.bf16.gmra.mrb[0].mxu0 %v1905
        %v4337 = vpop.f32.mrb[0].mxu0
        %v4338 = vadd.f32 %v4297, %v4337
        %v4339 = vpop.f32.mrb[0].mxu0
        %v4340 = vadd.f32 %v4299, %v4339
        %v4341 = vpop.f32.mrb[0].mxu0
        %v4342 = vpop.f32.mrb[0].mxu0
        %4343 = vdwg.mxu0
        %4344 = vmatprep.subr.bf16.mxu0 %v3662
        %4345 = vmatpush1.bf16.msra.mxu0 %v3661
        %4346 = vmatprep.subr.bf16.mxu0 %v3669
        %4347 = vmatpush1.bf16.msra.mxu0 %v3668
        %4348 = vmatprep.subr.bf16.mxu0 %v3676
        %4349 = vmatpush1.bf16.msra.mxu0 %v3675
        %4350 = vmatprep.subr.bf16.mxu0 %v3683
        %4351 = vmatpush1.bf16.msra.mxu0 %v3682
        %4352 = vmatprep.subr.bf16.mxu0 %v3690
        %4353 = vmatpush1.bf16.msra.mxu0 %v3689
        %4354 = vmatprep.subr.bf16.mxu0 %v3697
        %4355 = vmatpush1.bf16.msra.mxu0 %v3696
        %4356 = vmatprep.subr.bf16.mxu0 %v3704
        %4357 = vmatpush1.bf16.msra.mxu0 %v3703
        %4358 = vmatprep.subr.bf16.mxu0 %v3711
        %4359 = vmatpush1.bf16.msra.mxu0 %v3710
        %4360 = vmatprep.subr.bf16.mxu0 %v3718
        %4361 = vmatpush1.bf16.msra.mxu0 %v3717
        %4362 = vmatprep.subr.bf16.mxu0 %v3725
        %4363 = vmatpush1.bf16.msra.mxu0 %v3724
        %4364 = vmatprep.subr.bf16.mxu0 %v3732
        %4365 = vmatpush1.bf16.msra.mxu0 %v3731
        %4366 = vmatprep.subr.bf16.mxu0 %v3739
        %4367 = vmatpush1.bf16.msra.mxu0 %v3738
        %4368 = vmatprep.subr.bf16.mxu0 %v3746
        %4369 = vmatpush1.bf16.msra.mxu0 %v3745
        %4370 = vmatprep.subr.bf16.mxu0 %v3753
        %4371 = vmatpush1.bf16.msra.mxu0 %v3752
        %4372 = vmatprep.subr.bf16.mxu0 %v3760
        %4373 = vmatpush1.bf16.msra.mxu0 %v3759
        %4374 = vmatprep.subr.bf16.mxu0 %v3767
        %4375 = vmatpush1.bf16.msra.mxu0 %v3766
        %4376 = vmatprep.mubr.bf16.mxu0 %v1908
        %4377 = vmatmul.mubr.bf16.gmra.mrb[0].mxu0 %v1907
        %v4378 = vpop.f32.mrb[0].mxu0
        %v4379 = vadd.f32 %v4338, %v4378
        %v4380 = vpop.f32.mrb[0].mxu0
        %v4381 = vadd.f32 %v4340, %v4380
        %v4382 = vpop.f32.mrb[0].mxu0
        %v4383 = vpop.f32.mrb[0].mxu0
        %4384 = vdwg.mxu0
        %4385 = vmatprep.subr.bf16.mxu0 %v3328
        %4386 = vmatpush1.bf16.msra.mxu0 %v3327
        %4387 = vmatprep.subr.bf16.mxu0 %v3335
        %4388 = vmatpush1.bf16.msra.mxu0 %v3334
        %4389 = vmatprep.subr.bf16.mxu0 %v3342
        %4390 = vmatpush1.bf16.msra.mxu0 %v3341
        %4391 = vmatprep.subr.bf16.mxu0 %v3349
        %4392 = vmatpush1.bf16.msra.mxu0 %v3348
        %4393 = vmatprep.subr.bf16.mxu0 %v3356
        %4394 = vmatpush1.bf16.msra.mxu0 %v3355
        %4395 = vmatprep.subr.bf16.mxu0 %v3363
        %4396 = vmatpush1.bf16.msra.mxu0 %v3362
        %4397 = vmatprep.subr.bf16.mxu0 %v3370
        %4398 = vmatpush1.bf16.msra.mxu0 %v3369
        %4399 = vmatprep.subr.bf16.mxu0 %v3377
        %4400 = vmatpush1.bf16.msra.mxu0 %v3376
        %4401 = vmatprep.subr.bf16.mxu0 %v3384
        %4402 = vmatpush1.bf16.msra.mxu0 %v3383
        %4403 = vmatprep.subr.bf16.mxu0 %v3391
        %4404 = vmatpush1.bf16.msra.mxu0 %v3390
        %4405 = vmatprep.subr.bf16.mxu0 %v3398
        %4406 = vmatpush1.bf16.msra.mxu0 %v3397
        %4407 = vmatprep.subr.bf16.mxu0 %v3405
        %4408 = vmatpush1.bf16.msra.mxu0 %v3404
        %4409 = vmatprep.subr.bf16.mxu0 %v3412
        %4410 = vmatpush1.bf16.msra.mxu0 %v3411
        %4411 = vmatprep.subr.bf16.mxu0 %v3419
        %4412 = vmatpush1.bf16.msra.mxu0 %v3418
        %4413 = vmatprep.subr.bf16.mxu0 %v3426
        %4414 = vmatpush1.bf16.msra.mxu0 %v3425
        %4415 = vmatprep.subr.bf16.mxu0 %v3433
        %4416 = vmatpush1.bf16.msra.mxu0 %v3432
        %4417 = vmatprep.mubr.bf16.mxu0 %v1902
        %4418 = vmatmul.mubr.bf16.gmra.mrb[0].mxu0 %v1901
        %v4419 = vpop.f32.mrb[0].mxu0
        %v4420 = vadd.f32 %v1865, %v4419
        %v4421 = vpop.f32.mrb[0].mxu0
        %v4422 = vadd.f32 %v1869, %v4421
        %v4423 = vpop.f32.mrb[0].mxu0
        %v4424 = vpop.f32.mrb[0].mxu0
        %4425 = vdwg.mxu0
        %4426 = vmatprep.subr.bf16.mxu0 %v3440
        %4427 = vmatpush1.bf16.msra.mxu0 %v3439
        %4428 = vmatprep.subr.bf16.mxu0 %v3447
        %4429 = vmatpush1.bf16.msra.mxu0 %v3446
        %4430 = vmatprep.subr.bf16.mxu0 %v3454
        %4431 = vmatpush1.bf16.msra.mxu0 %v3453
        %4432 = vmatprep.subr.bf16.mxu0 %v3461
        %4433 = vmatpush1.bf16.msra.mxu0 %v3460
        %4434 = vmatprep.subr.bf16.mxu0 %v3468
        %4435 = vmatpush1.bf16.msra.mxu0 %v3467
        %4436 = vmatprep.subr.bf16.mxu0 %v3475
        %4437 = vmatpush1.bf16.msra.mxu0 %v3474
        %4438 = vmatprep.subr.bf16.mxu0 %v3482
        %4439 = vmatpush1.bf16.msra.mxu0 %v3481
        %4440 = vmatprep.subr.bf16.mxu0 %v3489
        %4441 = vmatpush1.bf16.msra.mxu0 %v3488
        %4442 = vmatprep.subr.bf16.mxu0 %v3496
        %4443 = vmatpush1.bf16.msra.mxu0 %v3495
        %4444 = vmatprep.subr.bf16.mxu0 %v3503
        %4445 = vmatpush1.bf16.msra.mxu0 %v3502
        %4446 = vmatprep.subr.bf16.mxu0 %v3510
        %4447 = vmatpush1.bf16.msra.mxu0 %v3509
        %4448 = vmatprep.subr.bf16.mxu0 %v3517
        %4449 = vmatpush1.bf16.msra.mxu0 %v3516
        %4450 = vmatprep.subr.bf16.mxu0 %v3524
        %4451 = vmatpush1.bf16.msra.mxu0 %v3523
        %4452 = vmatprep.subr.bf16.mxu0 %v3531
        %4453 = vmatpush1.bf16.msra.mxu0 %v3530
        %4454 = vmatprep.subr.bf16.mxu0 %v3538
        %4455 = vmatpush1.bf16.msra.mxu0 %v3537
        %4456 = vmatprep.subr.bf16.mxu0 %v3545
        %4457 = vmatpush1.bf16.msra.mxu0 %v3544
        %4458 = vmatprep.mubr.bf16.mxu0 %v1904
        %4459 = vmatmul.mubr.bf16.gmra.mrb[0].mxu0 %v1903
        %v4460 = vpop.f32.mrb[0].mxu0
        %v4461 = vadd.f32 %v4420, %v4460
        %v4462 = vpop.f32.mrb[0].mxu0
        %v4463 = vadd.f32 %v4422, %v4462
        %v4464 = vpop.f32.mrb[0].mxu0
        %v4465 = vpop.f32.mrb[0].mxu0
        %4466 = vdwg.mxu0
        %4467 = vmatprep.subr.bf16.mxu0 %v3552
        %4468 = vmatpush1.bf16.msra.mxu0 %v3551
        %4469 = vmatprep.subr.bf16.mxu0 %v3559
        %4470 = vmatpush1.bf16.msra.mxu0 %v3558
        %4471 = vmatprep.subr.bf16.mxu0 %v3566
        %4472 = vmatpush1.bf16.msra.mxu0 %v3565
        %4473 = vmatprep.subr.bf16.mxu0 %v3573
        %4474 = vmatpush1.bf16.msra.mxu0 %v3572
        %4475 = vmatprep.subr.bf16.mxu0 %v3580
        %4476 = vmatpush1.bf16.msra.mxu0 %v3579
        %4477 = vmatprep.subr.bf16.mxu0 %v3587
        %4478 = vmatpush1.bf16.msra.mxu0 %v3586
        %4479 = vmatprep.subr.bf16.mxu0 %v3594
        %4480 = vmatpush1.bf16.msra.mxu0 %v3593
        %4481 = vmatprep.subr.bf16.mxu0 %v3601
        %4482 = vmatpush1.bf16.msra.mxu0 %v3600
        %4483 = vmatprep.subr.bf16.mxu0 %v3608
        %4484 = vmatpush1.bf16.msra.mxu0 %v3607
        %4485 = vmatprep.subr.bf16.mxu0 %v3615
        %4486 = vmatpush1.bf16.msra.mxu0 %v3614
        %4487 = vmatprep.subr.bf16.mxu0 %v3622
        %4488 = vmatpush1.bf16.msra.mxu0 %v3621
        %4489 = vmatprep.subr.bf16.mxu0 %v3629
        %4490 = vmatpush1.bf16.msra.mxu0 %v3628
        %4491 = vmatprep.subr.bf16.mxu0 %v3636
        %4492 = vmatpush1.bf16.msra.mxu0 %v3635
        %4493 = vmatprep.subr.bf16.mxu0 %v3643
        %4494 = vmatpush1.bf16.msra.mxu0 %v3642
        %4495 = vmatprep.subr.bf16.mxu0 %v3650
        %4496 = vmatpush1.bf16.msra.mxu0 %v3649
        %4497 = vmatprep.subr.bf16.mxu0 %v3657
        %4498 = vmatpush1.bf16.msra.mxu0 %v3656
        %4499 = vmatprep.mubr.bf16.mxu0 %v1906
        %4500 = vmatmul.mubr.bf16.gmra.mrb[0].mxu0 %v1905
        %v4501 = vpop.f32.mrb[0].mxu0
        %v4502 = vadd.f32 %v4461, %v4501
        %v4503 = vpop.f32.mrb[0].mxu0
        %v4504 = vadd.f32 %v4463, %v4503
        %v4505 = vpop.f32.mrb[0].mxu0
        %v4506 = vpop.f32.mrb[0].mxu0
        %4507 = vdwg.mxu0
        %4508 = vmatprep.subr.bf16.mxu0 %v3664
        %4509 = vmatpush1.bf16.msra.mxu0 %v3663
        %4510 = vmatprep.subr.bf16.mxu0 %v3671
        %4511 = vmatpush1.bf16.msra.mxu0 %v3670
        %4512 = vmatprep.subr.bf16.mxu0 %v3678
        %4513 = vmatpush1.bf16.msra.mxu0 %v3677
        %4514 = vmatprep.subr.bf16.mxu0 %v3685
        %4515 = vmatpush1.bf16.msra.mxu0 %v3684
        %4516 = vmatprep.subr.bf16.mxu0 %v3692
        %4517 = vmatpush1.bf16.msra.mxu0 %v3691
        %4518 = vmatprep.subr.bf16.mxu0 %v3699
        %4519 = vmatpush1.bf16.msra.mxu0 %v3698
        %4520 = vmatprep.subr.bf16.mxu0 %v3706
        %4521 = vmatpush1.bf16.msra.mxu0 %v3705
        %4522 = vmatprep.subr.bf16.mxu0 %v3713
        %4523 = vmatpush1.bf16.msra.mxu0 %v3712
        %4524 = vmatprep.subr.bf16.mxu0 %v3720
        %4525 = vmatpush1.bf16.msra.mxu0 %v3719
        %4526 = vmatprep.subr.bf16.mxu0 %v3727
        %4527 = vmatpush1.bf16.msra.mxu0 %v3726
        %4528 = vmatprep.subr.bf16.mxu0 %v3734
        %4529 = vmatpush1.bf16.msra.mxu0 %v3733
        %4530 = vmatprep.subr.bf16.mxu0 %v3741
        %4531 = vmatpush1.bf16.msra.mxu0 %v3740
        %4532 = vmatprep.subr.bf16.mxu0 %v3748
        %4533 = vmatpush1.bf16.msra.mxu0 %v3747
        %4534 = vmatprep.subr.bf16.mxu0 %v3755
        %4535 = vmatpush1.bf16.msra.mxu0 %v3754
        %4536 = vmatprep.subr.bf16.mxu0 %v3762
        %4537 = vmatpush1.bf16.msra.mxu0 %v3761
        %4538 = vmatprep.subr.bf16.mxu0 %v3769
        %4539 = vmatpush1.bf16.msra.mxu0 %v3768
        %4540 = vmatprep.mubr.bf16.mxu0 %v1908
        %4541 = vmatmul.mubr.bf16.gmra.mrb[0].mxu0 %v1907
        %v4542 = vpop.f32.mrb[0].mxu0
        %v4543 = vadd.f32 %v4502, %v4542
        %v4544 = vpop.f32.mrb[0].mxu0
        %v4545 = vadd.f32 %v4504, %v4544
        %v4546 = vpop.f32.mrb[0].mxu0
        %v4547 = vpop.f32.mrb[0].mxu0
        %4548 = vdwg.mxu0
        %4549 = vmatprep.subr.bf16.mxu0 %v3330
        %4550 = vmatpush1.bf16.msra.mxu0 %v3329
        %4551 = vmatprep.subr.bf16.mxu0 %v3337
        %4552 = vmatpush1.bf16.msra.mxu0 %v3336
        %4553 = vmatprep.subr.bf16.mxu0 %v3344
        %4554 = vmatpush1.bf16.msra.mxu0 %v3343
        %4555 = vmatprep.subr.bf16.mxu0 %v3351
        %4556 = vmatpush1.bf16.msra.mxu0 %v3350
        %4557 = vmatprep.subr.bf16.mxu0 %v3358
        %4558 = vmatpush1.bf16.msra.mxu0 %v3357
        %4559 = vmatprep.subr.bf16.mxu0 %v3365
        %4560 = vmatpush1.bf16.msra.mxu0 %v3364
        %4561 = vmatprep.subr.bf16.mxu0 %v3372
        %4562 = vmatpush1.bf16.msra.mxu0 %v3371
        %4563 = vmatprep.subr.bf16.mxu0 %v3379
        %4564 = vmatpush1.bf16.msra.mxu0 %v3378
        %4565 = vmatprep.subr.bf16.mxu0 %v3386
        %4566 = vmatpush1.bf16.msra.mxu0 %v3385
        %4567 = vmatprep.subr.bf16.mxu0 %v3393
        %4568 = vmatpush1.bf16.msra.mxu0 %v3392
        %4569 = vmatprep.subr.bf16.mxu0 %v3400
        %4570 = vmatpush1.bf16.msra.mxu0 %v3399
        %4571 = vmatprep.subr.bf16.mxu0 %v3407
        %4572 = vmatpush1.bf16.msra.mxu0 %v3406
        %4573 = vmatprep.subr.bf16.mxu0 %v3414
        %4574 = vmatpush1.bf16.msra.mxu0 %v3413
        %4575 = vmatprep.subr.bf16.mxu0 %v3421
        %4576 = vmatpush1.bf16.msra.mxu0 %v3420
        %4577 = vmatprep.subr.bf16.mxu0 %v3428
        %4578 = vmatpush1.bf16.msra.mxu0 %v3427
        %4579 = vmatprep.subr.bf16.mxu0 %v3435
        %4580 = vmatpush1.bf16.msra.mxu0 %v3434
        %4581 = vmatprep.mubr.bf16.mxu0 %v1902
        %4582 = vmatmul.mubr.bf16.gmra.mrb[0].mxu0 %v1901
        %v4583 = vpop.f32.mrb[0].mxu0
        %v4584 = vadd.f32 %v1873, %v4583
        %v4585 = vpop.f32.mrb[0].mxu0
        %v4586 = vadd.f32 %v1877, %v4585
        %v4587 = vpop.f32.mrb[0].mxu0
        %v4588 = vpop.f32.mrb[0].mxu0
        %4589 = vdwg.mxu0
        %4590 = vmatprep.subr.bf16.mxu0 %v3442
        %4591 = vmatpush1.bf16.msra.mxu0 %v3441
        %4592 = vmatprep.subr.bf16.mxu0 %v3449
        %4593 = vmatpush1.bf16.msra.mxu0 %v3448
        %4594 = vmatprep.subr.bf16.mxu0 %v3456
        %4595 = vmatpush1.bf16.msra.mxu0 %v3455
        %4596 = vmatprep.subr.bf16.mxu0 %v3463
        %4597 = vmatpush1.bf16.msra.mxu0 %v3462
        %4598 = vmatprep.subr.bf16.mxu0 %v3470
        %4599 = vmatpush1.bf16.msra.mxu0 %v3469
        %4600 = vmatprep.subr.bf16.mxu0 %v3477
        %4601 = vmatpush1.bf16.msra.mxu0 %v3476
        %4602 = vmatprep.subr.bf16.mxu0 %v3484
        %4603 = vmatpush1.bf16.msra.mxu0 %v3483
        %4604 = vmatprep.subr.bf16.mxu0 %v3491
        %4605 = vmatpush1.bf16.msra.mxu0 %v3490
        %4606 = vmatprep.subr.bf16.mxu0 %v3498
        %4607 = vmatpush1.bf16.msra.mxu0 %v3497
        %4608 = vmatprep.subr.bf16.mxu0 %v3505
        %4609 = vmatpush1.bf16.msra.mxu0 %v3504
        %4610 = vmatprep.subr.bf16.mxu0 %v3512
        %4611 = vmatpush1.bf16.msra.mxu0 %v3511
        %4612 = vmatprep.subr.bf16.mxu0 %v3519
        %4613 = vmatpush1.bf16.msra.mxu0 %v3518
        %4614 = vmatprep.subr.bf16.mxu0 %v3526
        %4615 = vmatpush1.bf16.msra.mxu0 %v3525
        %4616 = vmatprep.subr.bf16.mxu0 %v3533
        %4617 = vmatpush1.bf16.msra.mxu0 %v3532
        %4618 = vmatprep.subr.bf16.mxu0 %v3540
        %4619 = vmatpush1.bf16.msra.mxu0 %v3539
        %4620 = vmatprep.subr.bf16.mxu0 %v3547
        %4621 = vmatpush1.bf16.msra.mxu0 %v3546
        %4622 = vmatprep.mubr.bf16.mxu0 %v1904
        %4623 = vmatmul.mubr.bf16.gmra.mrb[0].mxu0 %v1903
        %v4624 = vpop.f32.mrb[0].mxu0
        %v4625 = vadd.f32 %v4584, %v4624
        %v4626 = vpop.f32.mrb[0].mxu0
        %v4627 = vadd.f32 %v4586, %v4626
        %v4628 = vpop.f32.mrb[0].mxu0
        %v4629 = vpop.f32.mrb[0].mxu0
        %4630 = vdwg.mxu0
        %4631 = vmatprep.subr.bf16.mxu0 %v3554
        %4632 = vmatpush1.bf16.msra.mxu0 %v3553
        %4633 = vmatprep.subr.bf16.mxu0 %v3561
        %4634 = vmatpush1.bf16.msra.mxu0 %v3560
        %4635 = vmatprep.subr.bf16.mxu0 %v3568
        %4636 = vmatpush1.bf16.msra.mxu0 %v3567
        %4637 = vmatprep.subr.bf16.mxu0 %v3575
        %4638 = vmatpush1.bf16.msra.mxu0 %v3574
        %4639 = vmatprep.subr.bf16.mxu0 %v3582
        %4640 = vmatpush1.bf16.msra.mxu0 %v3581
        %4641 = vmatprep.subr.bf16.mxu0 %v3589
        %4642 = vmatpush1.bf16.msra.mxu0 %v3588
        %4643 = vmatprep.subr.bf16.mxu0 %v3596
        %4644 = vmatpush1.bf16.msra.mxu0 %v3595
        %4645 = vmatprep.subr.bf16.mxu0 %v3603
        %4646 = vmatpush1.bf16.msra.mxu0 %v3602
        %4647 = vmatprep.subr.bf16.mxu0 %v3610
        %4648 = vmatpush1.bf16.msra.mxu0 %v3609
        %4649 = vmatprep.subr.bf16.mxu0 %v3617
        %4650 = vmatpush1.bf16.msra.mxu0 %v3616
        %4651 = vmatprep.subr.bf16.mxu0 %v3624
        %4652 = vmatpush1.bf16.msra.mxu0 %v3623
        %4653 = vmatprep.subr.bf16.mxu0 %v3631
        %4654 = vmatpush1.bf16.msra.mxu0 %v3630
        %4655 = vmatprep.subr.bf16.mxu0 %v3638
        %4656 = vmatpush1.bf16.msra.mxu0 %v3637
        %4657 = vmatprep.subr.bf16.mxu0 %v3645
        %4658 = vmatpush1.bf16.msra.mxu0 %v3644
        %4659 = vmatprep.subr.bf16.mxu0 %v3652
        %4660 = vmatpush1.bf16.msra.mxu0 %v3651
        %4661 = vmatprep.subr.bf16.mxu0 %v3659
        %4662 = vmatpush1.bf16.msra.mxu0 %v3658
        %4663 = vmatprep.mubr.bf16.mxu0 %v1906
        %4664 = vmatmul.mubr.bf16.gmra.mrb[0].mxu0 %v1905
        %v4665 = vpop.f32.mrb[0].mxu0
        %v4666 = vadd.f32 %v4625, %v4665
        %v4667 = vpop.f32.mrb[0].mxu0
        %v4668 = vadd.f32 %v4627, %v4667
        %v4669 = vpop.f32.mrb[0].mxu0
        %v4670 = vpop.f32.mrb[0].mxu0
        %4671 = vdwg.mxu0
        %4672 = vmatprep.subr.bf16.mxu0 %v3666
        %4673 = vmatpush1.bf16.msra.mxu0 %v3665
        %4674 = vmatprep.subr.bf16.mxu0 %v3673
        %4675 = vmatpush1.bf16.msra.mxu0 %v3672
        %4676 = vmatprep.subr.bf16.mxu0 %v3680
        %4677 = vmatpush1.bf16.msra.mxu0 %v3679
        %4678 = vmatprep.subr.bf16.mxu0 %v3687
        %4679 = vmatpush1.bf16.msra.mxu0 %v3686
        %4680 = vmatprep.subr.bf16.mxu0 %v3694
        %4681 = vmatpush1.bf16.msra.mxu0 %v3693
        %4682 = vmatprep.subr.bf16.mxu0 %v3701
        %4683 = vmatpush1.bf16.msra.mxu0 %v3700
        %4684 = vmatprep.subr.bf16.mxu0 %v3708
        %4685 = vmatpush1.bf16.msra.mxu0 %v3707
        %4686 = vmatprep.subr.bf16.mxu0 %v3715
        %4687 = vmatpush1.bf16.msra.mxu0 %v3714
        %4688 = vmatprep.subr.bf16.mxu0 %v3722
        %4689 = vmatpush1.bf16.msra.mxu0 %v3721
        %4690 = vmatprep.subr.bf16.mxu0 %v3729
        %4691 = vmatpush1.bf16.msra.mxu0 %v3728
        %4692 = vmatprep.subr.bf16.mxu0 %v3736
        %4693 = vmatpush1.bf16.msra.mxu0 %v3735
        %4694 = vmatprep.subr.bf16.mxu0 %v3743
        %4695 = vmatpush1.bf16.msra.mxu0 %v3742
        %4696 = vmatprep.subr.bf16.mxu0 %v3750
        %4697 = vmatpush1.bf16.msra.mxu0 %v3749
        %4698 = vmatprep.subr.bf16.mxu0 %v3757
        %4699 = vmatpush1.bf16.msra.mxu0 %v3756
        %4700 = vmatprep.subr.bf16.mxu0 %v3764
        %4701 = vmatpush1.bf16.msra.mxu0 %v3763
        %4702 = vmatprep.subr.bf16.mxu0 %v3771
        %4703 = vmatpush1.bf16.msra.mxu0 %v3770
        %4704 = vmatprep.mubr.bf16.mxu0 %v1908
        %4705 = vmatmul.mubr.bf16.gmra.mrb[0].mxu0 %v1907
        %v4706 = vpop.f32.mrb[0].mxu0
        %v4707 = vadd.f32 %v4666, %v4706
        %v4708 = vpop.f32.mrb[0].mxu0
        %v4709 = vadd.f32 %v4668, %v4708
        %v4710 = vpop.f32.mrb[0].mxu0
        %v4711 = vpop.f32.mrb[0].mxu0
        %4712 = vdwg.mxu0
        %4713 = vmatprep.subr.bf16.mxu0 0
        %4714 = vmatpush1.bf16.msra.mxu0 %v3331
        %4715 = vmatprep.subr.bf16.mxu0 0
        %4716 = vmatpush1.bf16.msra.mxu0 %v3338
        %4717 = vmatprep.subr.bf16.mxu0 0
        %4718 = vmatpush1.bf16.msra.mxu0 %v3345
        %4719 = vmatprep.subr.bf16.mxu0 0
        %4720 = vmatpush1.bf16.msra.mxu0 %v3352
        %4721 = vmatprep.subr.bf16.mxu0 0
        %4722 = vmatpush1.bf16.msra.mxu0 %v3359
        %4723 = vmatprep.subr.bf16.mxu0 0
        %4724 = vmatpush1.bf16.msra.mxu0 %v3366
        %4725 = vmatprep.subr.bf16.mxu0 0
        %4726 = vmatpush1.bf16.msra.mxu0 %v3373
        %4727 = vmatprep.subr.bf16.mxu0 0
        %4728 = vmatpush1.bf16.msra.mxu0 %v3380
        %4729 = vmatprep.subr.bf16.mxu0 0
        %4730 = vmatpush1.bf16.msra.mxu0 %v3387
        %4731 = vmatprep.subr.bf16.mxu0 0
        %4732 = vmatpush1.bf16.msra.mxu0 %v3394
        %4733 = vmatprep.subr.bf16.mxu0 0
        %4734 = vmatpush1.bf16.msra.mxu0 %v3401
        %4735 = vmatprep.subr.bf16.mxu0 0
        %4736 = vmatpush1.bf16.msra.mxu0 %v3408
        %4737 = vmatprep.subr.bf16.mxu0 0
        %4738 = vmatpush1.bf16.msra.mxu0 %v3415
        %4739 = vmatprep.subr.bf16.mxu0 0
        %4740 = vmatpush1.bf16.msra.mxu0 %v3422
        %4741 = vmatprep.subr.bf16.mxu0 0
        %4742 = vmatpush1.bf16.msra.mxu0 %v3429
        %4743 = vmatprep.subr.bf16.mxu0 0
        %4744 = vmatpush1.bf16.msra.mxu0 %v3436
        %4745 = vmatprep.mubr.bf16.mxu0 %v1902
        %4746 = vmatmul.mubr.bf16.gmra.mrb[0].mxu0 %v1901
        %v4747 = vpop.f32.mrb[0].mxu0
        %v4748 = vadd.f32 %v1881, %v4747
        %v4749 = vpop.f32.mrb[0].mxu0
        %v4750 = vpop.f32.mrb[0].mxu0
        %v4751 = vpop.f32.mrb[0].mxu0
        %4752 = vdwg.mxu0
        %4753 = vmatprep.subr.bf16.mxu0 0
        %4754 = vmatpush1.bf16.msra.mxu0 %v3443
        %4755 = vmatprep.subr.bf16.mxu0 0
        %4756 = vmatpush1.bf16.msra.mxu0 %v3450
        %4757 = vmatprep.subr.bf16.mxu0 0
        %4758 = vmatpush1.bf16.msra.mxu0 %v3457
        %4759 = vmatprep.subr.bf16.mxu0 0
        %4760 = vmatpush1.bf16.msra.mxu0 %v3464
        %4761 = vmatprep.subr.bf16.mxu0 0
        %4762 = vmatpush1.bf16.msra.mxu0 %v3471
        %4763 = vmatprep.subr.bf16.mxu0 0
        %4764 = vmatpush1.bf16.msra.mxu0 %v3478
        %4765 = vmatprep.subr.bf16.mxu0 0
        %4766 = vmatpush1.bf16.msra.mxu0 %v3485
        %4767 = vmatprep.subr.bf16.mxu0 0
        %4768 = vmatpush1.bf16.msra.mxu0 %v3492
        %4769 = vmatprep.subr.bf16.mxu0 0
        %4770 = vmatpush1.bf16.msra.mxu0 %v3499
        %4771 = vmatprep.subr.bf16.mxu0 0
        %4772 = vmatpush1.bf16.msra.mxu0 %v3506
        %4773 = vmatprep.subr.bf16.mxu0 0
        %4774 = vmatpush1.bf16.msra.mxu0 %v3513
        %4775 = vmatprep.subr.bf16.mxu0 0
        %4776 = vmatpush1.bf16.msra.mxu0 %v3520
        %4777 = vmatprep.subr.bf16.mxu0 0
        %4778 = vmatpush1.bf16.msra.mxu0 %v3527
        %4779 = vmatprep.subr.bf16.mxu0 0
        %4780 = vmatpush1.bf16.msra.mxu0 %v3534
        %4781 = vmatprep.subr.bf16.mxu0 0
        %4782 = vmatpush1.bf16.msra.mxu0 %v3541
        %4783 = vmatprep.subr.bf16.mxu0 0
        %4784 = vmatpush1.bf16.msra.mxu0 %v3548
        %4785 = vmatprep.mubr.bf16.mxu0 %v1904
        %4786 = vmatmul.mubr.bf16.gmra.mrb[0].mxu0 %v1903
        %v4787 = vpop.f32.mrb[0].mxu0
        %v4788 = vadd.f32 %v4748, %v4787
        %v4789 = vpop.f32.mrb[0].mxu0
        %v4790 = vpop.f32.mrb[0].mxu0
        %v4791 = vpop.f32.mrb[0].mxu0
        %4792 = vdwg.mxu0
        %4793 = vmatprep.subr.bf16.mxu0 0
        %4794 = vmatpush1.bf16.msra.mxu0 %v3555
        %4795 = vmatprep.subr.bf16.mxu0 0
        %4796 = vmatpush1.bf16.msra.mxu0 %v3562
        %4797 = vmatprep.subr.bf16.mxu0 0
        %4798 = vmatpush1.bf16.msra.mxu0 %v3569
        %4799 = vmatprep.subr.bf16.mxu0 0
        %4800 = vmatpush1.bf16.msra.mxu0 %v3576
        %4801 = vmatprep.subr.bf16.mxu0 0
        %4802 = vmatpush1.bf16.msra.mxu0 %v3583
        %4803 = vmatprep.subr.bf16.mxu0 0
        %4804 = vmatpush1.bf16.msra.mxu0 %v3590
        %4805 = vmatprep.subr.bf16.mxu0 0
        %4806 = vmatpush1.bf16.msra.mxu0 %v3597
        %4807 = vmatprep.subr.bf16.mxu0 0
        %4808 = vmatpush1.bf16.msra.mxu0 %v3604
        %4809 = vmatprep.subr.bf16.mxu0 0
        %4810 = vmatpush1.bf16.msra.mxu0 %v3611
        %4811 = vmatprep.subr.bf16.mxu0 0
        %4812 = vmatpush1.bf16.msra.mxu0 %v3618
        %4813 = vmatprep.subr.bf16.mxu0 0
        %4814 = vmatpush1.bf16.msra.mxu0 %v3625
        %4815 = vmatprep.subr.bf16.mxu0 0
        %4816 = vmatpush1.bf16.msra.mxu0 %v3632
        %4817 = vmatprep.subr.bf16.mxu0 0
        %4818 = vmatpush1.bf16.msra.mxu0 %v3639
        %4819 = vmatprep.subr.bf16.mxu0 0
        %4820 = vmatpush1.bf16.msra.mxu0 %v3646
        %4821 = vmatprep.subr.bf16.mxu0 0
        %4822 = vmatpush1.bf16.msra.mxu0 %v3653
        %4823 = vmatprep.subr.bf16.mxu0 0
        %4824 = vmatpush1.bf16.msra.mxu0 %v3660
        %4825 = vmatprep.mubr.bf16.mxu0 %v1906
        %4826 = vmatmul.mubr.bf16.gmra.mrb[0].mxu0 %v1905
        %v4827 = vpop.f32.mrb[0].mxu0
        %v4828 = vadd.f32 %v4788, %v4827
        %v4829 = vpop.f32.mrb[0].mxu0
        %v4830 = vpop.f32.mrb[0].mxu0
        %v4831 = vpop.f32.mrb[0].mxu0
        %4832 = vdwg.mxu0
        %4833 = vmatprep.subr.bf16.mxu0 0
        %4834 = vmatpush1.bf16.msra.mxu0 %v3667
        %4835 = vmatprep.subr.bf16.mxu0 0
        %4836 = vmatpush1.bf16.msra.mxu0 %v3674
        %4837 = vmatprep.subr.bf16.mxu0 0
        %4838 = vmatpush1.bf16.msra.mxu0 %v3681
        %4839 = vmatprep.subr.bf16.mxu0 0
        %4840 = vmatpush1.bf16.msra.mxu0 %v3688
        %4841 = vmatprep.subr.bf16.mxu0 0
        %4842 = vmatpush1.bf16.msra.mxu0 %v3695
        %4843 = vmatprep.subr.bf16.mxu0 0
        %4844 = vmatpush1.bf16.msra.mxu0 %v3702
        %4845 = vmatprep.subr.bf16.mxu0 0
        %4846 = vmatpush1.bf16.msra.mxu0 %v3709
        %4847 = vmatprep.subr.bf16.mxu0 0
        %4848 = vmatpush1.bf16.msra.mxu0 %v3716
        %4849 = vmatprep.subr.bf16.mxu0 0
        %4850 = vmatpush1.bf16.msra.mxu0 %v3723
        %4851 = vmatprep.subr.bf16.mxu0 0
        %4852 = vmatpush1.bf16.msra.mxu0 %v3730
        %4853 = vmatprep.subr.bf16.mxu0 0
        %4854 = vmatpush1.bf16.msra.mxu0 %v3737
        %4855 = vmatprep.subr.bf16.mxu0 0
        %4856 = vmatpush1.bf16.msra.mxu0 %v3744
        %4857 = vmatprep.subr.bf16.mxu0 0
        %4858 = vmatpush1.bf16.msra.mxu0 %v3751
        %4859 = vmatprep.subr.bf16.mxu0 0
        %4860 = vmatpush1.bf16.msra.mxu0 %v3758
        %4861 = vmatprep.subr.bf16.mxu0 0
        %4862 = vmatpush1.bf16.msra.mxu0 %v3765
        %4863 = vmatprep.subr.bf16.mxu0 0
        %4864 = vmatpush1.bf16.msra.mxu0 %v3772
        %4865 = vmatprep.mubr.bf16.mxu0 %v1908
        %4866 = vmatmul.mubr.bf16.gmra.mrb[0].mxu0 %v1907
        %v4867 = vpop.f32.mrb[0].mxu0
        %v4868 = vadd.f32 %v4828, %v4867
        %v4869 = vpop.f32.mrb[0].mxu0
        %v4870 = vpop.f32.mrb[0].mxu0
        %v4871 = vpop.f32.mrb[0].mxu0
        %4872 = vdwg.mxu0
        %v4873 = vlaneseq
        %v4874 = vshrl.u32 %v4873, 7
        %vm4875 = vcmp.lt.s32.totalorder %v4874, 4
        %v4876 = vsel %vm4875, %v4379, 0.0
        %v4877 = vsel %vm4875, %v4381, 0.0
        %v4878 = vsel %vm4875, %v4543, 0.0
        %v4879 = vsel %vm4875, %v4545, 0.0
        %v4880 = vsel %vm4875, %v4707, 0.0
        %v4881 = vsel %vm4875, %v4709, 0.0
        %v4882 = vsel %vm4875, %v4868, 0.0
        %v4883 = vrot.slane %v4876, 4
        %v4884 = vadd.f32 %v4876, %v4883
        %v4885 = vrot.slane %v4884, 2
        %v4886 = vadd.f32 %v4884, %v4885
        %v4887 = vrot.slane %v4886, 1
        %v4888 = vadd.f32 %v4886, %v4887
        %v4889 = vrot.slane %v4877, 4
        %v4890 = vadd.f32 %v4877, %v4889
        %v4891 = vrot.slane %v4890, 2
        %v4892 = vadd.f32 %v4890, %v4891
        %v4893 = vrot.slane %v4892, 1
        %v4894 = vadd.f32 %v4892, %v4893
        %v4895 = vrot.slane %v4878, 4
        %v4896 = vadd.f32 %v4878, %v4895
        %v4897 = vrot.slane %v4896, 2
        %v4898 = vadd.f32 %v4896, %v4897
        %v4899 = vrot.slane %v4898, 1
        %v4900 = vadd.f32 %v4898, %v4899
        %v4901 = vrot.slane %v4879, 4
        %v4902 = vadd.f32 %v4879, %v4901
        %v4903 = vrot.slane %v4902, 2
        %v4904 = vadd.f32 %v4902, %v4903
        %v4905 = vrot.slane %v4904, 1
        %v4906 = vadd.f32 %v4904, %v4905
        %v4907 = vrot.slane %v4880, 4
        %v4908 = vadd.f32 %v4880, %v4907
        %v4909 = vrot.slane %v4908, 2
        %v4910 = vadd.f32 %v4908, %v4909
        %v4911 = vrot.slane %v4910, 1
        %v4912 = vadd.f32 %v4910, %v4911
        %v4913 = vrot.slane %v4881, 4
        %v4914 = vadd.f32 %v4881, %v4913
        %v4915 = vrot.slane %v4914, 2
        %v4916 = vadd.f32 %v4914, %v4915
        %v4917 = vrot.slane %v4916, 1
        %v4918 = vadd.f32 %v4916, %v4917
        %v4919 = vrot.slane %v4882, 4
        %v4920 = vadd.f32 %v4882, %v4919
        %v4921 = vrot.slane %v4920, 2
        %v4922 = vadd.f32 %v4920, %v4921
        %v4923 = vrot.slane %v4922, 1
        %v4924 = vadd.f32 %v4922, %v4923
        %v4925 = vmul.f32 %v4888, 0.25
        %v4926 = vmul.f32 %v4894, 0.25
        %v4927 = vmul.f32 %v4900, 0.25
        %v4928 = vmul.f32 %v4906, 0.25
        %v4929 = vmul.f32 %v4912, 0.25
        %v4930 = vmul.f32 %v4918, 0.25
        %v4931 = vmul.f32 %v4924, 0.25
        %v4932 = vsub.f32 %v4379, %v4925
        %v4933 = vsub.f32 %v4381, %v4926
        %v4934 = vsub.f32 %v4543, %v4927
        %v4935 = vsub.f32 %v4545, %v4928
        %v4936 = vsub.f32 %v4707, %v4929
        %v4937 = vsub.f32 %v4709, %v4930
        %v4938 = vsub.f32 %v4868, %v4931
        %v4939 = vsel %vm4875, %v4932, 0.0
        %v4940 = vsel %vm4875, %v4933, 0.0
        %v4941 = vsel %vm4875, %v4934, 0.0
        %v4942 = vsel %vm4875, %v4935, 0.0
        %v4943 = vsel %vm4875, %v4936, 0.0
        %v4944 = vsel %vm4875, %v4937, 0.0
        %v4945 = vsel %vm4875, %v4938, 0.0
        %v4946 = vmul.f32 %v4939, %v4939
        %v4947 = vmul.f32 %v4940, %v4940
        %v4948 = vmul.f32 %v4941, %v4941
        %v4949 = vmul.f32 %v4942, %v4942
        %v4950 = vmul.f32 %v4943, %v4943
        %v4951 = vmul.f32 %v4944, %v4944
        %v4952 = vmul.f32 %v4945, %v4945
        %v4953 = vrot.slane %v4946, 4
        %v4954 = vadd.f32 %v4946, %v4953
        %v4955 = vrot.slane %v4954, 2
        %v4956 = vadd.f32 %v4954, %v4955
        %v4957 = vrot.slane %v4956, 1
        %v4958 = vadd.f32 %v4956, %v4957
        %v4959 = vrot.slane %v4947, 4
        %v4960 = vadd.f32 %v4947, %v4959
        %v4961 = vrot.slane %v4960, 2
        %v4962 = vadd.f32 %v4960, %v4961
        %v4963 = vrot.slane %v4962, 1
        %v4964 = vadd.f32 %v4962, %v4963
        %v4965 = vrot.slane %v4948, 4
        %v4966 = vadd.f32 %v4948, %v4965
        %v4967 = vrot.slane %v4966, 2
        %v4968 = vadd.f32 %v4966, %v4967
        %v4969 = vrot.slane %v4968, 1
        %v4970 = vadd.f32 %v4968, %v4969
        %v4971 = vrot.slane %v4949, 4
        %v4972 = vadd.f32 %v4949, %v4971
        %v4973 = vrot.slane %v4972, 2
        %v4974 = vadd.f32 %v4972, %v4973
        %v4975 = vrot.slane %v4974, 1
        %v4976 = vadd.f32 %v4974, %v4975
        %v4977 = vrot.slane %v4950, 4
        %v4978 = vadd.f32 %v4950, %v4977
        %v4979 = vrot.slane %v4978, 2
        %v4980 = vadd.f32 %v4978, %v4979
        %v4981 = vrot.slane %v4980, 1
        %v4982 = vadd.f32 %v4980, %v4981
        %v4983 = vrot.slane %v4951, 4
        %v4984 = vadd.f32 %v4951, %v4983
        %v4985 = vrot.slane %v4984, 2
        %v4986 = vadd.f32 %v4984, %v4985
        %v4987 = vrot.slane %v4986, 1
        %v4988 = vadd.f32 %v4986, %v4987
        %v4989 = vrot.slane %v4952, 4
        %v4990 = vadd.f32 %v4952, %v4989
        %v4991 = vrot.slane %v4990, 2
        %v4992 = vadd.f32 %v4990, %v4991
        %v4993 = vrot.slane %v4992, 1
        %v4994 = vadd.f32 %v4992, %v4993
        %v4995 = vmul.f32 %v4958, 0.25
        %v4996 = vmul.f32 %v4964, 0.25
        %v4997 = vmul.f32 %v4970, 0.25
        %v4998 = vmul.f32 %v4976, 0.25
        %v4999 = vmul.f32 %v4982, 0.25
        %v5000 = vmul.f32 %v4988, 0.25
        %v5001 = vmul.f32 %v4994, 0.25
        %v5002 = vadd.f32 %v4995, 1e-05
        %v5003 = vadd.f32 %v4996, 1e-05
        %v5004 = vadd.f32 %v4997, 1e-05
        %v5005 = vadd.f32 %v4998, 1e-05
        %v5006 = vadd.f32 %v4999, 1e-05
        %v5007 = vadd.f32 %v5000, 1e-05
        %v5008 = vadd.f32 %v5001, 1e-05
        %v5009 = vrsqrt.pop %v5002
        %v5010 = vrsqrt.pop %v5003
        %v5011 = vrsqrt.pop %v5004
        %v5012 = vrsqrt.pop %v5005
        %v5013 = vrsqrt.pop %v5006
        %v5014 = vrsqrt.pop %v5007
        %v5015 = vrsqrt.pop %v5008
        %v5016 = vmul.f32 %v4932, %v5009
        %v5017 = vmul.f32 %v4933, %v5010
        %v5018 = vmul.f32 %v4934, %v5011
        %v5019 = vmul.f32 %v4935, %v5012
        %v5020 = vmul.f32 %v4936, %v5013
        %v5021 = vmul.f32 %v4937, %v5014
        %v5022 = vmul.f32 %v4938, %v5015
        %v5023 = vld [vmem:[%s1322] sm:$0xff]
        %v5025 = vlaneseq
        %v5026 = vshrl.u32 %v5025, 7
        %v5027 = vsub.s32 0, %v5026
        %v5028 = vrot.slane %v5023, %v5027
        %v5029 = vlaneseq
        %v5030 = vshrl.u32 %v5029, 7
        %v5031 = vsub.s32 1, %v5030
        %v5032 = vrot.slane %v5023, %v5031
        %v5033 = vlaneseq
        %v5034 = vshrl.u32 %v5033, 7
        %v5035 = vsub.s32 2, %v5034
        %v5036 = vrot.slane %v5023, %v5035
        %v5037 = vlaneseq
        %v5038 = vshrl.u32 %v5037, 7
        %v5039 = vsub.s32 3, %v5038
        %v5040 = vrot.slane %v5023, %v5039
        %v5041 = vlaneseq
        %v5042 = vshrl.u32 %v5041, 7
        %v5043 = vsub.s32 4, %v5042
        %v5044 = vrot.slane %v5023, %v5043
        %v5045 = vlaneseq
        %v5046 = vshrl.u32 %v5045, 7
        %v5047 = vsub.s32 5, %v5046
        %v5048 = vrot.slane %v5023, %v5047
        %v5049 = vlaneseq
        %v5050 = vshrl.u32 %v5049, 7
        %v5051 = vsub.s32 6, %v5050
        %v5052 = vrot.slane %v5023, %v5051
        %v5060 = vmul.f32 %v5016, %v5028
        %v5061 = vmul.f32 %v5017, %v5032
        %v5062 = vmul.f32 %v5018, %v5036
        %v5063 = vmul.f32 %v5019, %v5040
        %v5064 = vmul.f32 %v5020, %v5044
        %v5065 = vmul.f32 %v5021, %v5048
        %v5066 = vmul.f32 %v5022, %v5052
        %v5067 = vld [vmem:[%s1327] sm:$0xff]
        %v5069 = vlaneseq
        %v5070 = vshrl.u32 %v5069, 7
        %v5071 = vsub.s32 0, %v5070
        %v5072 = vrot.slane %v5067, %v5071
        %v5073 = vlaneseq
        %v5074 = vshrl.u32 %v5073, 7
        %v5075 = vsub.s32 1, %v5074
        %v5076 = vrot.slane %v5067, %v5075
        %v5077 = vlaneseq
        %v5078 = vshrl.u32 %v5077, 7
        %v5079 = vsub.s32 2, %v5078
        %v5080 = vrot.slane %v5067, %v5079
        %v5081 = vlaneseq
        %v5082 = vshrl.u32 %v5081, 7
        %v5083 = vsub.s32 3, %v5082
        %v5084 = vrot.slane %v5067, %v5083
        %v5085 = vlaneseq
        %v5086 = vshrl.u32 %v5085, 7
        %v5087 = vsub.s32 4, %v5086
        %v5088 = vrot.slane %v5067, %v5087
        %v5089 = vlaneseq
        %v5090 = vshrl.u32 %v5089, 7
        %v5091 = vsub.s32 5, %v5090
        %v5092 = vrot.slane %v5067, %v5091
        %v5093 = vlaneseq
        %v5094 = vshrl.u32 %v5093, 7
        %v5095 = vsub.s32 6, %v5094
        %v5096 = vrot.slane %v5067, %v5095
        %v5104 = vadd.f32 %v5060, %v5072
        %v5105 = vadd.f32 %v5061, %v5076
        %v5106 = vadd.f32 %v5062, %v5080
        %v5107 = vadd.f32 %v5063, %v5084
        %v5108 = vadd.f32 %v5064, %v5088
        %v5109 = vadd.f32 %v5065, %v5092
        %v5110 = vadd.f32 %v5066, %v5096
        %v5111 = vmax.f32 %v5104, 0.0
        %v5112 = vmax.f32 %v5105, 0.0
        %v5113 = vmax.f32 %v5106, 0.0
        %v5114 = vmax.f32 %v5107, 0.0
        %v5115 = vmax.f32 %v5108, 0.0
        %v5116 = vmax.f32 %v5109, 0.0
        %v5117 = vmax.f32 %v5110, 0.0
        %5118 = vst [vmem:[%s1333] sm:$0xff] %v5111
        %5119 = vst [vmem:[%s1333 + $0x8] sm:$0xff] %v5112
        %5120 = vst [vmem:[%s1333 + $0x10] sm:$0xff] %v5113
        %5121 = vst [vmem:[%s1333 + $0x18] sm:$0xff] %v5114
        %5122 = vst [vmem:[%s1333 + $0x20] sm:$0xff] %v5115
        %5123 = vst [vmem:[%s1333 + $0x28] sm:$0xff] %v5116
        %5124 = vst [vmem:[%s1333 + $0x30] sm:$0xff] %v5117
        %s5125 = smul.u32 7, %s16
        %p5126 = scmp.lt.s32.totalorder %s5125, 48
        %s5127 = scalar_select %p5126, %s5125, 48
        %s5128 = smul.addr %s5127, 8
        %s5129 = scalar_lea.vmem %s5, %s5128
        // Predicated region
        $region67: #{bernoulli_decoder_forward.6} parent=61 // pred_check
          %p5130 = pneg %p159
        $region68: #{bernoulli_decoder_forward.6} parent=61 // pred_check_branch
          %5132 = sbr.rel (%p5130) target = $region70
        $region69: #{bernoulli_decoder_forward.6} parent=61 // pred_region
          %s5133 = smul.u32 7, %s16
        $region70: #{bernoulli_decoder_forward.6} parent=61 // pred_fallthru
          _
      $region62: #{bernoulli_decoder_forward.6} parent=5 // pred_fallthru
        _
      %p5134 = scmp.le.s32.totalorder 2, %s11
      // Predicated region
      $region71: #{bernoulli_decoder_forward.6} parent=5 // pred_check
        %p5135 = pneg %p5134
      $region72: #{bernoulli_decoder_forward.6} parent=5 // pred_check_branch
        %5137 = sbr.rel (%p5135) target = $region74
      $region73: #{bernoulli_decoder_forward.6} parent=5 // pred_region
        %s5138 = ssub.s32 %s11, 2
        // Predicated region
        $region75: #{bernoulli_decoder_forward.6} parent=73 // pred_check
          %p5139 = pneg %p165
        $region76: #{bernoulli_decoder_forward.6} parent=73 // pred_check_branch
          %5141 = sbr.rel (%p5139) target = $region78
        $region77: #{bernoulli_decoder_forward.6} parent=73 // pred_region
          %s5142 = smul.u32 7, %s17
          %p5143 = scmp.lt.s32.totalorder %s5142, 48
          %s5144 = scalar_select %p5143, %s5142, 48
          %s5145 = smul.addr %s5144, 8
          %s5146 = scalar_lea.vmem %s5, %s5145
        $region78: #{bernoulli_decoder_forward.6} parent=73 // pred_fallthru
          _
      $region74: #{bernoulli_decoder_forward.6} parent=5 // pred_fallthru
        _
    $region6: #{bernoulli_decoder_forward.6} parent=1 // loop_footer
      %s15 = sadd.s32 1, %s11
    $region7: #{bernoulli_decoder_forward.6} parent=1 // loop_footer_branch
      %10 = sbr.rel target = $region3
    $region8: #{bernoulli_decoder_forward.6} parent=1 // loop_exit
      _

// kernel: bernoulli_decoder_forward.7
$region0: #{bernoulli_decoder_forward.7}
  #allocation0 [shape = 'u32[]', space=smem, size = 0x4, offset = 0x4, fixed_abs, tag = 'smem constant byte address 0x4 - core index']
  #allocation1 [shape = 'u32[144,128]{1,0:T(1,128)}', space=vmem, size = 0x12000, scoped, tag = 'internal scratch']
  %s0 = inlined_call_operand.vmem [shape: f32[4,200,512], index: 0, kind: input, shape index: {}]
  %s1 = inlined_call_operand.vmem [shape: f32[4,512,64], index: 1, kind: input, shape index: {}]
  %s2 = inlined_call_operand.vmem [shape: f32[1,64], index: 2, kind: input, shape index: {}]
  %s3 = inlined_call_operand.vmem [shape: f32[4,200,64], index: 3, kind: output, shape index: {}]
  %s4 = sld [smem:[#allocation0]]
  $region45: #{bernoulli_decoder_forward.7} parent=0
    _
  %s6 = ssub.s32 1, %s4
  %s7 = scalar_select 0, %s6, %s4
  loop: start=0, step=1, limit=6
  $region2: #{bernoulli_decoder_forward.7} parent=0 // loop_pre_header
    _
  $region3: #{bernoulli_decoder_forward.7} parent=0 // loop_header
    %s9 = sphi 0, %s13
    %p10 = scmp.ge.s32.totalorder %s9, 6
    %s19 = sphi 0, %s21
    %s22 = sphi 0, %s19
    %s23 = sphi 0, %s22
    %s39 = sphi 0, %s23
    %s45 = sphi 0, %s47
    %s48 = sphi 0, %s45
    %s49 = sphi 0, %s48
    %s65 = sphi 0, %s49
    %s69 = sphi 0, %s69
    %s71 = sphi 0, %s69
    %s72 = sphi 0, %s71
    %s86 = sphi 0, %s72
    %s92 = sphi 0, %s94
    %s95 = sphi 0, %s92
    %s96 = sphi 0, %s95
    %s112 = sphi 0, %s96
  $region4: #{bernoulli_decoder_forward.7} parent=0 // loop_header_branch
    %12 = sbr.rel (%p10) target = $region8
  $region5: #{bernoulli_decoder_forward.7} parent=0 // loop_body
    %s14 = ssub.s32 %s9, 1
    %s15 = ssub.s32 %s9, 2
    %s16 = sadd.s32 %s9, 1
    %s17 = ssub.s32 %s9, %s16
    %p18 = scmp.eq.s32.totalorder %s17, 0
    %s20 = sadd.s32 %s19, 1
    %s21 = scalar_select %p18, %s19, %s20
    %p24 = pneg %p18
    %p25 = scmp.eq.s32.totalorder %s9, 3
    %p26 = por %p24, %p25
    %p27 = scmp.ne.s32.totalorder %s19, %s22
    %p28 = scmp.eq.s32.totalorder %s9, 0
    %p29 = por %p27, %p28
    %p30 = scmp.ne.s32.totalorder %s19, %s22
    %p31 = scmp.eq.s32.totalorder %s14, 3
    %p32 = por %p30, %p31
    %p33 = scmp.ne.s32.totalorder %s22, %s23
    %p34 = scmp.eq.s32.totalorder %s14, 0
    %p35 = por %p33, %p34
    %p36 = scmp.ne.s32.totalorder %s22, %s23
    %p37 = scmp.eq.s32.totalorder %s15, 3
    %p38 = por %p36, %p37
    %p40 = scmp.ne.s32.totalorder %s23, %s39
    %p41 = scmp.eq.s32.totalorder %s15, 0
    %p42 = por %p40, %p41
    %s43 = ssub.s32 %s9, %s16
    %p44 = scmp.eq.s32.totalorder %s43, 0
    %s46 = sadd.s32 %s45, 1
    %s47 = scalar_select %p44, %s45, %s46
    %p50 = pneg %p44
    %p51 = scmp.eq.s32.totalorder %s9, 3
    %p52 = por %p50, %p51
    %p53 = scmp.ne.s32.totalorder %s45, %s48
    %p54 = scmp.eq.s32.totalorder %s9, 0
    %p55 = por %p53, %p54
    %p56 = scmp.ne.s32.totalorder %s45, %s48
    %p57 = scmp.eq.s32.totalorder %s14, 3
    %p58 = por %p56, %p57
    %p59 = scmp.ne.s32.totalorder %s48, %s49
    %p60 = scmp.eq.s32.totalorder %s14, 0
    %p61 = por %p59, %p60
    %p62 = scmp.ne.s32.totalorder %s48, %s49
    %p63 = scmp.eq.s32.totalorder %s15, 3
    %p64 = por %p62, %p63
    %p66 = scmp.ne.s32.totalorder %s49, %s65
    %p67 = scmp.eq.s32.totalorder %s15, 0
    %p68 = por %p66, %p67
    %s70 = sadd.s32 %s69, 1
    %p73 = scmp.eq.s32.totalorder %s9, 3
    %p74 = scmp.ne.s32.totalorder %s69, %s71
    %p75 = scmp.eq.s32.totalorder %s9, 0
    %p76 = por %p74, %p75
    %p77 = scmp.ne.s32.totalorder %s69, %s71
    %p78 = scmp.eq.s32.totalorder %s14, 3
    %p79 = por %p77, %p78
    %p80 = scmp.ne.s32.totalorder %s71, %s72
    %p81 = scmp.eq.s32.totalorder %s14, 0
    %p82 = por %p80, %p81
    %p83 = scmp.ne.s32.totalorder %s71, %s72
    %p84 = scmp.eq.s32.totalorder %s15, 3
    %p85 = por %p83, %p84
    %p87 = scmp.ne.s32.totalorder %s72, %s86
    %p88 = scmp.eq.s32.totalorder %s15, 0
    %p89 = por %p87, %p88
    %s90 = ssub.s32 %s9, %s16
    %p91 = scmp.eq.s32.totalorder %s90, 0
    %s93 = sadd.s32 %s92, 1
    %s94 = scalar_select %p91, %s92, %s93
    %p97 = pneg %p91
    %p98 = scmp.eq.s32.totalorder %s9, 3
    %p99 = por %p97, %p98
    %p100 = scmp.ne.s32.totalorder %s92, %s95
    %p101 = scmp.eq.s32.totalorder %s9, 0
    %p102 = por %p100, %p101
    %p103 = scmp.ne.s32.totalorder %s92, %s95
    %p104 = scmp.eq.s32.totalorder %s14, 3
    %p105 = por %p103, %p104
    %p106 = scmp.ne.s32.totalorder %s95, %s96
    %p107 = scmp.eq.s32.totalorder %s14, 0
    %p108 = por %p106, %p107
    %p109 = scmp.ne.s32.totalorder %s95, %s96
    %p110 = scmp.eq.s32.totalorder %s15, 3
    %p111 = por %p109, %p110
    %p113 = scmp.ne.s32.totalorder %s96, %s112
    %p114 = scmp.eq.s32.totalorder %s15, 0
    %p115 = por %p113, %p114
    %p116 = scmp.le.s32.totalorder 1, %s9
    %p117 = scmp.lt.s32.totalorder %s9, 5
    %p118 = pnand %p116, %p117
    %p119 = pneg %p118
    // Predicated region
    $region9: #{bernoulli_decoder_forward.7} parent=5 // pred_check
      _
    $region10: #{bernoulli_decoder_forward.7} parent=5 // pred_check_branch
      %121 = sbr.rel (%p118) target = $region12
    $region11: #{bernoulli_decoder_forward.7} parent=5 // pred_region
      %s122 = ssub.s32 %s9, 1
      // Predicated region
      $region13: #{bernoulli_decoder_forward.7} parent=11 // pred_check
        %p123 = pneg %p82
      $region14: #{bernoulli_decoder_forward.7} parent=11 // pred_check_branch
        %125 = sbr.rel (%p123) target = $region16
      $region15: #{bernoulli_decoder_forward.7} parent=11 // pred_region
        _
      $region16: #{bernoulli_decoder_forward.7} parent=11 // pred_fallthru
        _
    $region12: #{bernoulli_decoder_forward.7} parent=5 // pred_fallthru
      _
    %p126 = scmp.lt.s32.totalorder %s9, 4
    // Predicated region
    $region17: #{bernoulli_decoder_forward.7} parent=5 // pred_check
      %p127 = pneg %p126
    $region18: #{bernoulli_decoder_forward.7} parent=5 // pred_check_branch
      %129 = sbr.rel (%p127) target = $region20
    $region19: #{bernoulli_decoder_forward.7} parent=5 // pred_region
      // Predicated region
      $region21: #{bernoulli_decoder_forward.7} parent=19 // pred_check
        %p130 = pneg %p29
      $region22: #{bernoulli_decoder_forward.7} parent=19 // pred_check_branch
        %132 = sbr.rel (%p130) target = $region24
      $region23: #{bernoulli_decoder_forward.7} parent=19 // pred_region
        %p133 = scmp.lt.s32.totalorder %s9, 3
        %s134 = scalar_select %p133, %s9, 3
        %s135 = smul.addr %s134, 100
        %s136 = smul.addr %s135, 8
        %s137 = scalar_lea.vmem %s0, %s136
      $region24: #{bernoulli_decoder_forward.7} parent=19 // pred_fallthru
        _
      // Predicated region
      $region25: #{bernoulli_decoder_forward.7} parent=19 // pred_check
        %p138 = pneg %p55
      $region26: #{bernoulli_decoder_forward.7} parent=19 // pred_check_branch
        %140 = sbr.rel (%p138) target = $region28
      $region27: #{bernoulli_decoder_forward.7} parent=19 // pred_region
        %p141 = scmp.lt.s32.totalorder %s9, 3
        %s142 = scalar_select %p141, %s9, 3
        %s143 = smul.addr %s142, 64
        %s144 = smul.addr %s143, 8
        %s145 = scalar_lea.vmem %s1, %s144
      $region28: #{bernoulli_decoder_forward.7} parent=19 // pred_fallthru
        _
    $region20: #{bernoulli_decoder_forward.7} parent=5 // pred_fallthru
      _
    %p146 = scmp.le.s32.totalorder 1, %s9
    %p147 = scmp.lt.s32.totalorder %s9, 5
    %p148 = pnand %p146, %p147
    %p149 = pneg %p148
    // Predicated region
    $region29: #{bernoulli_decoder_forward.7} parent=5 // pred_check
      _
    $region30: #{bernoulli_decoder_forward.7} parent=5 // pred_check_branch
      %151 = sbr.rel (%p148) target = $region32
    $region31: #{bernoulli_decoder_forward.7} parent=5 // pred_region
      %s152 = ssub.s32 %s9, 1
      %p153 = scmp.lt.s32.totalorder %s14, 3
      %s154 = scalar_select %p153, %s14, 3
      %s155 = smul.addr %s154, 100
      %s156 = smul.addr %s155, 8
      %s157 = scalar_lea.vmem %s0, %s156
      %p158 = pneg %p35
      %p159 = pneg %p32
      %p160 = scmp.lt.s32.totalorder %s14, 3
      %s161 = scalar_select %p160, %s14, 3
      %s162 = smul.addr %s161, 64
      %s163 = smul.addr %s162, 8
      %s164 = scalar_lea.vmem %s1, %s163
      %p165 = pneg %p61
      %p166 = pneg %p58
      %p167 = pneg %p82
      %p168 = pneg %p79
      %p169 = pneg %p108
      %p170 = pneg %p105
      %p171 = scmp.lt.s32.totalorder %s14, 3
      %s172 = scalar_select %p171, %s14, 3
      %s173 = smul.addr %s172, 25
      %s174 = smul.addr %s173, 8
      %s175 = scalar_lea.vmem %s3, %s174
      %p176 = scmp.lt.s32.totalorder %s14, 3
      %s177 = scalar_select %p176, %s14, 3
      %s178 = smul.addr %s177, 100
      %s179 = smul.addr %s178, 8
      %s180 = scalar_lea.vmem %s0, %s179
      %p181 = scmp.lt.s32.totalorder %s14, 3
      %s182 = scalar_select %p181, %s14, 3
      %s183 = smul.addr %s182, 64
      %s184 = smul.addr %s183, 8
      %s185 = scalar_lea.vmem %s1, %s184
      %p186 = scmp.lt.s32.totalorder %s14, 3
      %s187 = scalar_select %p186, %s14, 3
      %s188 = smul.addr %s187, 25
      %s189 = smul.addr %s188, 8
      %s190 = scalar_lea.vmem %s3, %s189
      %v191 = vld [vmem:[%s180] sm:$0xff]
      %v192 = vld [vmem:[%s180 + $0x8] sm:$0xff]
      %v193 = vld [vmem:[%s180 + $0x10] sm:$0xff]
      %v194 = vld [vmem:[%s180 + $0x18] sm:$0xff]
      %v195 = vld [vmem:[%s180 + $0x20] sm:$0xff]
      %v196 = vld [vmem:[%s180 + $0x28] sm:$0xff]
      %v197 = vld [vmem:[%s180 + $0x30] sm:$0xff]
      %v198 = vld [vmem:[%s180 + $0x38] sm:$0xff]
      %v199 = vld [vmem:[%s180 + $0x40] sm:$0xff]
      %v200 = vld [vmem:[%s180 + $0x48] sm:$0xff]
      %v201 = vld [vmem:[%s180 + $0x50] sm:$0xff]
      %v202 = vld [vmem:[%s180 + $0x58] sm:$0xff]
      %v203 = vld [vmem:[%s180 + $0x60] sm:$0xff]
      %v204 = vld [vmem:[%s180 + $0x68] sm:$0xff]
      %v205 = vld [vmem:[%s180 + $0x70] sm:$0xff]
      %v206 = vld [vmem:[%s180 + $0x78] sm:$0xff]
      %v207 = vld [vmem:[%s180 + $0x80] sm:$0xff]
      %v208 = vld [vmem:[%s180 + $0x88] sm:$0xff]
      %v209 = vld [vmem:[%s180 + $0x90] sm:$0xff]
      %v210 = vld [vmem:[%s180 + $0x98] sm:$0xff]
      %v211 = vld [vmem:[%s180 + $0xa0] sm:$0xff]
      %v212 = vld [vmem:[%s180 + $0xa8] sm:$0xff]
      %v213 = vld [vmem:[%s180 + $0xb0] sm:$0xff]
      %v214 = vld [vmem:[%s180 + $0xb8] sm:$0xff]
      %v215 = vld [vmem:[%s180 + $0xc0] sm:$0xff]
      %v216 = vld [vmem:[%s180 + $0xc8] sm:$0xff]
      %v217 = vld [vmem:[%s180 + $0xd0] sm:$0xff]
      %v218 = vld [vmem:[%s180 + $0xd8] sm:$0xff]
      %v219 = vld [vmem:[%s180 + $0xe0] sm:$0xff]
      %v220 = vld [vmem:[%s180 + $0xe8] sm:$0xff]
      %v221 = vld [vmem:[%s180 + $0xf0] sm:$0xff]
      %v222 = vld [vmem:[%s180 + $0xf8] sm:$0xff]
      %v223 = vld [vmem:[%s180 + $0x100] sm:$0xff]
      %v224 = vld [vmem:[%s180 + $0x108] sm:$0xff]
      %v225 = vld [vmem:[%s180 + $0x110] sm:$0xff]
      %v226 = vld [vmem:[%s180 + $0x118] sm:$0xff]
      %v227 = vld [vmem:[%s180 + $0x120] sm:$0xff]
      %v228 = vld [vmem:[%s180 + $0x128] sm:$0xff]
      %v229 = vld [vmem:[%s180 + $0x130] sm:$0xff]
      %v230 = vld [vmem:[%s180 + $0x138] sm:$0xff]
      %v231 = vld [vmem:[%s180 + $0x140] sm:$0xff]
      %v232 = vld [vmem:[%s180 + $0x148] sm:$0xff]
      %v233 = vld [vmem:[%s180 + $0x150] sm:$0xff]
      %v234 = vld [vmem:[%s180 + $0x158] sm:$0xff]
      %v235 = vld [vmem:[%s180 + $0x160] sm:$0xff]
      %v236 = vld [vmem:[%s180 + $0x168] sm:$0xff]
      %v237 = vld [vmem:[%s180 + $0x170] sm:$0xff]
      %v238 = vld [vmem:[%s180 + $0x178] sm:$0xff]
      %v239 = vld [vmem:[%s180 + $0x180] sm:$0xff]
      %v240 = vld [vmem:[%s180 + $0x188] sm:$0xff]
      %v241 = vld [vmem:[%s180 + $0x190] sm:$0xff]
      %v242 = vld [vmem:[%s180 + $0x198] sm:$0xff]
      %v243 = vld [vmem:[%s180 + $0x1a0] sm:$0xff]
      %v244 = vld [vmem:[%s180 + $0x1a8] sm:$0xff]
      %v245 = vld [vmem:[%s180 + $0x1b0] sm:$0xff]
      %v246 = vld [vmem:[%s180 + $0x1b8] sm:$0xff]
      %v247 = vld [vmem:[%s180 + $0x1c0] sm:$0xff]
      %v248 = vld [vmem:[%s180 + $0x1c8] sm:$0xff]
      %v249 = vld [vmem:[%s180 + $0x1d0] sm:$0xff]
      %v250 = vld [vmem:[%s180 + $0x1d8] sm:$0xff]
      %v251 = vld [vmem:[%s180 + $0x1e0] sm:$0xff]
      %v252 = vld [vmem:[%s180 + $0x1e8] sm:$0xff]
      %v253 = vld [vmem:[%s180 + $0x1f0] sm:$0xff]
      %v254 = vld [vmem:[%s180 + $0x1f8] sm:$0xff]
      %v255 = vld [vmem:[%s180 + $0x200] sm:$0xff]
      %v256 = vld [vmem:[%s180 + $0x208] sm:$0xff]
      %v257 = vld [vmem:[%s180 + $0x210] sm:$0xff]
      %v258 = vld [vmem:[%s180 + $0x218] sm:$0xff]
      %v259 = vld [vmem:[%s180 + $0x220] sm:$0xff]
      %v260 = vld [vmem:[%s180 + $0x228] sm:$0xff]
      %v261 = vld [vmem:[%s180 + $0x230] sm:$0xff]
      %v262 = vld [vmem:[%s180 + $0x238] sm:$0xff]
      %v263 = vld [vmem:[%s180 + $0x240] sm:$0xff]
      %v264 = vld [vmem:[%s180 + $0x248] sm:$0xff]
      %v265 = vld [vmem:[%s180 + $0x250] sm:$0xff]
      %v266 = vld [vmem:[%s180 + $0x258] sm:$0xff]
      %v267 = vld [vmem:[%s180 + $0x260] sm:$0xff]
      %v268 = vld [vmem:[%s180 + $0x268] sm:$0xff]
      %v269 = vld [vmem:[%s180 + $0x270] sm:$0xff]
      %v270 = vld [vmem:[%s180 + $0x278] sm:$0xff]
      %v271 = vld [vmem:[%s180 + $0x280] sm:$0xff]
      %v272 = vld [vmem:[%s180 + $0x288] sm:$0xff]
      %v273 = vld [vmem:[%s180 + $0x290] sm:$0xff]
      %v274 = vld [vmem:[%s180 + $0x298] sm:$0xff]
      %v275 = vld [vmem:[%s180 + $0x2a0] sm:$0xff]
      %v276 = vld [vmem:[%s180 + $0x2a8] sm:$0xff]
      %v277 = vld [vmem:[%s180 + $0x2b0] sm:$0xff]
      %v278 = vld [vmem:[%s180 + $0x2b8] sm:$0xff]
      %v279 = vld [vmem:[%s180 + $0x2c0] sm:$0xff]
      %v280 = vld [vmem:[%s180 + $0x2c8] sm:$0xff]
      %v281 = vld [vmem:[%s180 + $0x2d0] sm:$0xff]
      %v282 = vld [vmem:[%s180 + $0x2d8] sm:$0xff]
      %v283 = vld [vmem:[%s180 + $0x2e0] sm:$0xff]
      %v284 = vld [vmem:[%s180 + $0x2e8] sm:$0xff]
      %v285 = vld [vmem:[%s180 + $0x2f0] sm:$0xff]
      %v286 = vld [vmem:[%s180 + $0x2f8] sm:$0xff]
      %v287 = vld [vmem:[%s180 + $0x300] sm:$0xff]
      %v288 = vld [vmem:[%s180 + $0x308] sm:$0xff]
      %v289 = vld [vmem:[%s180 + $0x310] sm:$0xff]
      %v290 = vld [vmem:[%s180 + $0x318] sm:$0xff]
      %v291 = vld [vmem:[%s185] sm:$0xff]
      %v292 = vld [vmem:[%s185 + $0x8] sm:$0xff]
      %v293 = vld [vmem:[%s185 + $0x10] sm:$0xff]
      %v294 = vld [vmem:[%s185 + $0x18] sm:$0xff]
      %v295 = vld [vmem:[%s185 + $0x20] sm:$0xff]
      %v296 = vld [vmem:[%s185 + $0x28] sm:$0xff]
      %v297 = vld [vmem:[%s185 + $0x30] sm:$0xff]
      %v298 = vld [vmem:[%s185 + $0x38] sm:$0xff]
      %v299 = vld [vmem:[%s185 + $0x40] sm:$0xff]
      %v300 = vld [vmem:[%s185 + $0x48] sm:$0xff]
      %v301 = vld [vmem:[%s185 + $0x50] sm:$0xff]
      %v302 = vld [vmem:[%s185 + $0x58] sm:$0xff]
      %v303 = vld [vmem:[%s185 + $0x60] sm:$0xff]
      %v304 = vld [vmem:[%s185 + $0x68] sm:$0xff]
      %v305 = vld [vmem:[%s185 + $0x70] sm:$0xff]
      %v306 = vld [vmem:[%s185 + $0x78] sm:$0xff]
      %v307 = vld [vmem:[%s185 + $0x80] sm:$0xff]
      %v308 = vld [vmem:[%s185 + $0x88] sm:$0xff]
      %v309 = vld [vmem:[%s185 + $0x90] sm:$0xff]
      %v310 = vld [vmem:[%s185 + $0x98] sm:$0xff]
      %v311 = vld [vmem:[%s185 + $0xa0] sm:$0xff]
      %v312 = vld [vmem:[%s185 + $0xa8] sm:$0xff]
      %v313 = vld [vmem:[%s185 + $0xb0] sm:$0xff]
      %v314 = vld [vmem:[%s185 + $0xb8] sm:$0xff]
      %v315 = vld [vmem:[%s185 + $0xc0] sm:$0xff]
      %v316 = vld [vmem:[%s185 + $0xc8] sm:$0xff]
      %v317 = vld [vmem:[%s185 + $0xd0] sm:$0xff]
      %v318 = vld [vmem:[%s185 + $0xd8] sm:$0xff]
      %v319 = vld [vmem:[%s185 + $0xe0] sm:$0xff]
      %v320 = vld [vmem:[%s185 + $0xe8] sm:$0xff]
      %v321 = vld [vmem:[%s185 + $0xf0] sm:$0xff]
      %v322 = vld [vmem:[%s185 + $0xf8] sm:$0xff]
      %v323 = vld [vmem:[%s185 + $0x100] sm:$0xff]
      %v324 = vld [vmem:[%s185 + $0x108] sm:$0xff]
      %v325 = vld [vmem:[%s185 + $0x110] sm:$0xff]
      %v326 = vld [vmem:[%s185 + $0x118] sm:$0xff]
      %v327 = vld [vmem:[%s185 + $0x120] sm:$0xff]
      %v328 = vld [vmem:[%s185 + $0x128] sm:$0xff]
      %v329 = vld [vmem:[%s185 + $0x130] sm:$0xff]
      %v330 = vld [vmem:[%s185 + $0x138] sm:$0xff]
      %v331 = vld [vmem:[%s185 + $0x140] sm:$0xff]
      %v332 = vld [vmem:[%s185 + $0x148] sm:$0xff]
      %v333 = vld [vmem:[%s185 + $0x150] sm:$0xff]
      %v334 = vld [vmem:[%s185 + $0x158] sm:$0xff]
      %v335 = vld [vmem:[%s185 + $0x160] sm:$0xff]
      %v336 = vld [vmem:[%s185 + $0x168] sm:$0xff]
      %v337 = vld [vmem:[%s185 + $0x170] sm:$0xff]
      %v338 = vld [vmem:[%s185 + $0x178] sm:$0xff]
      %v339 = vld [vmem:[%s185 + $0x180] sm:$0xff]
      %v340 = vld [vmem:[%s185 + $0x188] sm:$0xff]
      %v341 = vld [vmem:[%s185 + $0x190] sm:$0xff]
      %v342 = vld [vmem:[%s185 + $0x198] sm:$0xff]
      %v343 = vld [vmem:[%s185 + $0x1a0] sm:$0xff]
      %v344 = vld [vmem:[%s185 + $0x1a8] sm:$0xff]
      %v345 = vld [vmem:[%s185 + $0x1b0] sm:$0xff]
      %v346 = vld [vmem:[%s185 + $0x1b8] sm:$0xff]
      %v347 = vld [vmem:[%s185 + $0x1c0] sm:$0xff]
      %v348 = vld [vmem:[%s185 + $0x1c8] sm:$0xff]
      %v349 = vld [vmem:[%s185 + $0x1d0] sm:$0xff]
      %v350 = vld [vmem:[%s185 + $0x1d8] sm:$0xff]
      %v351 = vld [vmem:[%s185 + $0x1e0] sm:$0xff]
      %v352 = vld [vmem:[%s185 + $0x1e8] sm:$0xff]
      %v353 = vld [vmem:[%s185 + $0x1f0] sm:$0xff]
      %v354 = vld [vmem:[%s185 + $0x1f8] sm:$0xff]
      %v355 = vld [vmem:[%s2] sm:$0x1]
      %v357 = vlaneseq
      %v358 = vshrl.u32 %v357, 7
      %v359 = vsub.s32 0, %v358
      %v360 = vrot.slane %v355, %v359
      %362 = vmatprep.subr.mxu0 0.0
      %363 = vmatpush1.msra.mxu0 %v291
      %364 = vmatprep.subr.mxu0 0.0
      %365 = vmatpush1.msra.mxu0 %v292
      %366 = vmatprep.subr.mxu0 0.0
      %367 = vmatpush1.msra.mxu0 %v293
      %368 = vmatprep.subr.mxu0 0.0
      %369 = vmatpush1.msra.mxu0 %v294
      %370 = vmatprep.subr.mxu0 0.0
      %371 = vmatpush1.msra.mxu0 %v295
      %372 = vmatprep.subr.mxu0 0.0
      %373 = vmatpush1.msra.mxu0 %v296
      %374 = vmatprep.subr.mxu0 0.0
      %375 = vmatpush1.msra.mxu0 %v297
      %376 = vmatprep.subr.mxu0 0.0
      %377 = vmatpush1.msra.mxu0 %v298
      %378 = vmatprep.subr.mxu0 0.0
      %379 = vmatpush1.msra.mxu0 %v299
      %380 = vmatprep.subr.mxu0 0.0
      %381 = vmatpush1.msra.mxu0 %v300
      %382 = vmatprep.subr.mxu0 0.0
      %383 = vmatpush1.msra.mxu0 %v301
      %384 = vmatprep.subr.mxu0 0.0
      %385 = vmatpush1.msra.mxu0 %v302
      %386 = vmatprep.subr.mxu0 0.0
      %387 = vmatpush1.msra.mxu0 %v303
      %388 = vmatprep.subr.mxu0 0.0
      %389 = vmatpush1.msra.mxu0 %v304
      %390 = vmatprep.subr.mxu0 0.0
      %391 = vmatpush1.msra.mxu0 %v305
      %392 = vmatprep.subr.mxu0 0.0
      %393 = vmatpush1.msra.mxu0 %v306
      %394 = vmatprep.subr.mxu0 0.0
      %395 = vmatpush1.msra.mxu0 %v307
      %396 = vmatprep.subr.mxu0 0.0
      %397 = vmatpush1.msra.mxu0 %v308
      %398 = vmatprep.subr.mxu0 0.0
      %399 = vmatpush1.msra.mxu0 %v309
      %400 = vmatprep.subr.mxu0 0.0
      %401 = vmatpush1.msra.mxu0 %v310
      %402 = vmatprep.subr.mxu0 0.0
      %403 = vmatpush1.msra.mxu0 %v311
      %404 = vmatprep.subr.mxu0 0.0
      %405 = vmatpush1.msra.mxu0 %v312
      %406 = vmatprep.subr.mxu0 0.0
      %407 = vmatpush1.msra.mxu0 %v313
      %408 = vmatprep.subr.mxu0 0.0
      %409 = vmatpush1.msra.mxu0 %v314
      %410 = vmatprep.subr.mxu0 0.0
      %411 = vmatpush1.msra.mxu0 %v315
      %412 = vmatprep.subr.mxu0 0.0
      %413 = vmatpush1.msra.mxu0 %v316
      %414 = vmatprep.subr.mxu0 0.0
      %415 = vmatpush1.msra.mxu0 %v317
      %416 = vmatprep.subr.mxu0 0.0
      %417 = vmatpush1.msra.mxu0 %v318
      %418 = vmatprep.subr.mxu0 0.0
      %419 = vmatpush1.msra.mxu0 %v319
      %420 = vmatprep.subr.mxu0 0.0
      %421 = vmatpush1.msra.mxu0 %v320
      %422 = vmatprep.subr.mxu0 0.0
      %423 = vmatpush1.msra.mxu0 %v321
      %424 = vmatprep.subr.mxu0 0.0
      %425 = vmatpush1.msra.mxu0 %v322
      %426 = vmatprep.mubr.f32.mxu0 %v192
      %427 = vmatmul.mubr.f32.gmra.mrb[0].mxu0 %v191
      %v428 = vpop.f32.mrb[0].mxu0
      %v429 = vadd.f32 %v360, %v428
      %v430 = vpop.f32.mrb[0].mxu0
      %431 = vmatprep.mubr.f32.mxu0 %v196
      %432 = vmatmul.mubr.f32.gmra.mrb[0].mxu0 %v195
      %v433 = vpop.f32.mrb[0].mxu0
      %v434 = vadd.f32 %v360, %v433
      %v435 = vpop.f32.mrb[0].mxu0
      %436 = vmatprep.mubr.f32.mxu0 %v200
      %437 = vmatmul.mubr.f32.gmra.mrb[0].mxu0 %v199
      %v438 = vpop.f32.mrb[0].mxu0
      %v439 = vadd.f32 %v360, %v438
      %v440 = vpop.f32.mrb[0].mxu0
      %441 = vmatprep.mubr.f32.mxu0 %v204
      %442 = vmatmul.mubr.f32.gmra.mrb[0].mxu0 %v203
      %v443 = vpop.f32.mrb[0].mxu0
      %v444 = vadd.f32 %v360, %v443
      %v445 = vpop.f32.mrb[0].mxu0
      %446 = vmatprep.mubr.f32.mxu0 %v208
      %447 = vmatmul.mubr.f32.gmra.mrb[0].mxu0 %v207
      %v448 = vpop.f32.mrb[0].mxu0
      %v449 = vadd.f32 %v360, %v448
      %v450 = vpop.f32.mrb[0].mxu0
      %451 = vmatprep.mubr.f32.mxu0 %v212
      %452 = vmatmul.mubr.f32.gmra.mrb[0].mxu0 %v211
      %v453 = vpop.f32.mrb[0].mxu0
      %v454 = vadd.f32 %v360, %v453
      %v455 = vpop.f32.mrb[0].mxu0
      %456 = vmatprep.mubr.f32.mxu0 %v216
      %457 = vmatmul.mubr.f32.gmra.mrb[0].mxu0 %v215
      %v458 = vpop.f32.mrb[0].mxu0
      %v459 = vadd.f32 %v360, %v458
      %v460 = vpop.f32.mrb[0].mxu0
      %461 = vmatprep.mubr.f32.mxu0 %v220
      %462 = vmatmul.mubr.f32.gmra.mrb[0].mxu0 %v219
      %v463 = vpop.f32.mrb[0].mxu0
      %v464 = vadd.f32 %v360, %v463
      %v465 = vpop.f32.mrb[0].mxu0
      %466 = vmatprep.mubr.f32.mxu0 %v224
      %467 = vmatmul.mubr.f32.gmra.mrb[0].mxu0 %v223
      %v468 = vpop.f32.mrb[0].mxu0
      %v469 = vadd.f32 %v360, %v468
      %v470 = vpop.f32.mrb[0].mxu0
      %471 = vmatprep.mubr.f32.mxu0 %v228
      %472 = vmatmul.mubr.f32.gmra.mrb[0].mxu0 %v227
      %v473 = vpop.f32.mrb[0].mxu0
      %v474 = vadd.f32 %v360, %v473
      %v475 = vpop.f32.mrb[0].mxu0
      %476 = vmatprep.mubr.f32.mxu0 %v232
      %477 = vmatmul.mubr.f32.gmra.mrb[0].mxu0 %v231
      %v478 = vpop.f32.mrb[0].mxu0
      %v479 = vadd.f32 %v360, %v478
      %v480 = vpop.f32.mrb[0].mxu0
      %481 = vmatprep.mubr.f32.mxu0 %v236
      %482 = vmatmul.mubr.f32.gmra.mrb[0].mxu0 %v235
      %v483 = vpop.f32.mrb[0].mxu0
      %v484 = vadd.f32 %v360, %v483
      %v485 = vpop.f32.mrb[0].mxu0
      %486 = vmatprep.mubr.f32.mxu0 %v240
      %487 = vmatmul.mubr.f32.gmra.mrb[0].mxu0 %v239
      %v488 = vpop.f32.mrb[0].mxu0
      %v489 = vadd.f32 %v360, %v488
      %v490 = vpop.f32.mrb[0].mxu0
      %491 = vmatprep.mubr.f32.mxu0 %v244
      %492 = vmatmul.mubr.f32.gmra.mrb[0].mxu0 %v243
      %v493 = vpop.f32.mrb[0].mxu0
      %v494 = vadd.f32 %v360, %v493
      %v495 = vpop.f32.mrb[0].mxu0
      %496 = vmatprep.mubr.f32.mxu0 %v248
      %497 = vmatmul.mubr.f32.gmra.mrb[0].mxu0 %v247
      %v498 = vpop.f32.mrb[0].mxu0
      %v499 = vadd.f32 %v360, %v498
      %v500 = vpop.f32.mrb[0].mxu0
      %501 = vmatprep.mubr.f32.mxu0 %v252
      %502 = vmatmul.mubr.f32.gmra.mrb[0].mxu0 %v251
      %v503 = vpop.f32.mrb[0].mxu0
      %v504 = vadd.f32 %v360, %v503
      %v505 = vpop.f32.mrb[0].mxu0
      %506 = vmatprep.mubr.f32.mxu0 %v256
      %507 = vmatmul.mubr.f32.gmra.mrb[0].mxu0 %v255
      %v508 = vpop.f32.mrb[0].mxu0
      %v509 = vadd.f32 %v360, %v508
      %v510 = vpop.f32.mrb[0].mxu0
      %511 = vmatprep.mubr.f32.mxu0 %v260
      %512 = vmatmul.mubr.f32.gmra.mrb[0].mxu0 %v259
      %v513 = vpop.f32.mrb[0].mxu0
      %v514 = vadd.f32 %v360, %v513
      %v515 = vpop.f32.mrb[0].mxu0
      %516 = vmatprep.mubr.f32.mxu0 %v264
      %517 = vmatmul.mubr.f32.gmra.mrb[0].mxu0 %v263
      %v518 = vpop.f32.mrb[0].mxu0
      %v519 = vadd.f32 %v360, %v518
      %v520 = vpop.f32.mrb[0].mxu0
      %521 = vmatprep.mubr.f32.mxu0 %v268
      %522 = vmatmul.mubr.f32.gmra.mrb[0].mxu0 %v267
      %v523 = vpop.f32.mrb[0].mxu0
      %v524 = vadd.f32 %v360, %v523
      %v525 = vpop.f32.mrb[0].mxu0
      %526 = vmatprep.mubr.f32.mxu0 %v272
      %527 = vmatmul.mubr.f32.gmra.mrb[0].mxu0 %v271
      %v528 = vpop.f32.mrb[0].mxu0
      %v529 = vadd.f32 %v360, %v528
      %v530 = vpop.f32.mrb[0].mxu0
      %531 = vmatprep.mubr.f32.mxu0 %v276
      %532 = vmatmul.mubr.f32.gmra.mrb[0].mxu0 %v275
      %v533 = vpop.f32.mrb[0].mxu0
      %v534 = vadd.f32 %v360, %v533
      %v535 = vpop.f32.mrb[0].mxu0
      %536 = vmatprep.mubr.f32.mxu0 %v280
      %537 = vmatmul.mubr.f32.gmra.mrb[0].mxu0 %v279
      %v538 = vpop.f32.mrb[0].mxu0
      %v539 = vadd.f32 %v360, %v538
      %v540 = vpop.f32.mrb[0].mxu0
      %541 = vmatprep.mubr.f32.mxu0 %v284
      %542 = vmatmul.mubr.f32.gmra.mrb[0].mxu0 %v283
      %v543 = vpop.f32.mrb[0].mxu0
      %v544 = vadd.f32 %v360, %v543
      %v545 = vpop.f32.mrb[0].mxu0
      %546 = vmatprep.mubr.f32.mxu0 %v288
      %547 = vmatmul.mubr.f32.gmra.mrb[0].mxu0 %v287
      %v548 = vpop.f32.mrb[0].mxu0
      %v549 = vadd.f32 %v360, %v548
      %v550 = vpop.f32.mrb[0].mxu0
      %551 = vdwg.mxu0
      %552 = vmatprep.subr.mxu0 0.0
      %553 = vmatpush1.msra.mxu0 %v323
      %554 = vmatprep.subr.mxu0 0.0
      %555 = vmatpush1.msra.mxu0 %v324
      %556 = vmatprep.subr.mxu0 0.0
      %557 = vmatpush1.msra.mxu0 %v325
      %558 = vmatprep.subr.mxu0 0.0
      %559 = vmatpush1.msra.mxu0 %v326
      %560 = vmatprep.subr.mxu0 0.0
      %561 = vmatpush1.msra.mxu0 %v327
      %562 = vmatprep.subr.mxu0 0.0
      %563 = vmatpush1.msra.mxu0 %v328
      %564 = vmatprep.subr.mxu0 0.0
      %565 = vmatpush1.msra.mxu0 %v329
      %566 = vmatprep.subr.mxu0 0.0
      %567 = vmatpush1.msra.mxu0 %v330
      %568 = vmatprep.subr.mxu0 0.0
      %569 = vmatpush1.msra.mxu0 %v331
      %570 = vmatprep.subr.mxu0 0.0
      %571 = vmatpush1.msra.mxu0 %v332
      %572 = vmatprep.subr.mxu0 0.0
      %573 = vmatpush1.msra.mxu0 %v333
      %574 = vmatprep.subr.mxu0 0.0
      %575 = vmatpush1.msra.mxu0 %v334
      %576 = vmatprep.subr.mxu0 0.0
      %577 = vmatpush1.msra.mxu0 %v335
      %578 = vmatprep.subr.mxu0 0.0
      %579 = vmatpush1.msra.mxu0 %v336
      %580 = vmatprep.subr.mxu0 0.0
      %581 = vmatpush1.msra.mxu0 %v337
      %582 = vmatprep.subr.mxu0 0.0
      %583 = vmatpush1.msra.mxu0 %v338
      %584 = vmatprep.subr.mxu0 0.0
      %585 = vmatpush1.msra.mxu0 %v339
      %586 = vmatprep.subr.mxu0 0.0
      %587 = vmatpush1.msra.mxu0 %v340
      %588 = vmatprep.subr.mxu0 0.0
      %589 = vmatpush1.msra.mxu0 %v341
      %590 = vmatprep.subr.mxu0 0.0
      %591 = vmatpush1.msra.mxu0 %v342
      %592 = vmatprep.subr.mxu0 0.0
      %593 = vmatpush1.msra.mxu0 %v343
      %594 = vmatprep.subr.mxu0 0.0
      %595 = vmatpush1.msra.mxu0 %v344
      %596 = vmatprep.subr.mxu0 0.0
      %597 = vmatpush1.msra.mxu0 %v345
      %598 = vmatprep.subr.mxu0 0.0
      %599 = vmatpush1.msra.mxu0 %v346
      %600 = vmatprep.subr.mxu0 0.0
      %601 = vmatpush1.msra.mxu0 %v347
      %602 = vmatprep.subr.mxu0 0.0
      %603 = vmatpush1.msra.mxu0 %v348
      %604 = vmatprep.subr.mxu0 0.0
      %605 = vmatpush1.msra.mxu0 %v349
      %606 = vmatprep.subr.mxu0 0.0
      %607 = vmatpush1.msra.mxu0 %v350
      %608 = vmatprep.subr.mxu0 0.0
      %609 = vmatpush1.msra.mxu0 %v351
      %610 = vmatprep.subr.mxu0 0.0
      %611 = vmatpush1.msra.mxu0 %v352
      %612 = vmatprep.subr.mxu0 0.0
      %613 = vmatpush1.msra.mxu0 %v353
      %614 = vmatprep.subr.mxu0 0.0
      %615 = vmatpush1.msra.mxu0 %v354
      %616 = vmatprep.mubr.f32.mxu0 %v194
      %617 = vmatmul.mubr.f32.gmra.mrb[0].mxu0 %v193
      %v618 = vpop.f32.mrb[0].mxu0
      %v619 = vadd.f32 %v429, %v618
      %v620 = vpop.f32.mrb[0].mxu0
      %621 = vmatprep.mubr.f32.mxu0 %v198
      %622 = vmatmul.mubr.f32.gmra.mrb[0].mxu0 %v197
      %v623 = vpop.f32.mrb[0].mxu0
      %v624 = vadd.f32 %v434, %v623
      %v625 = vpop.f32.mrb[0].mxu0
      %626 = vmatprep.mubr.f32.mxu0 %v202
      %627 = vmatmul.mubr.f32.gmra.mrb[0].mxu0 %v201
      %v628 = vpop.f32.mrb[0].mxu0
      %v629 = vadd.f32 %v439, %v628
      %v630 = vpop.f32.mrb[0].mxu0
      %631 = vmatprep.mubr.f32.mxu0 %v206
      %632 = vmatmul.mubr.f32.gmra.mrb[0].mxu0 %v205
      %v633 = vpop.f32.mrb[0].mxu0
      %v634 = vadd.f32 %v444, %v633
      %v635 = vpop.f32.mrb[0].mxu0
      %636 = vmatprep.mubr.f32.mxu0 %v210
      %637 = vmatmul.mubr.f32.gmra.mrb[0].mxu0 %v209
      %v638 = vpop.f32.mrb[0].mxu0
      %v639 = vadd.f32 %v449, %v638
      %v640 = vpop.f32.mrb[0].mxu0
      %641 = vmatprep.mubr.f32.mxu0 %v214
      %642 = vmatmul.mubr.f32.gmra.mrb[0].mxu0 %v213
      %v643 = vpop.f32.mrb[0].mxu0
      %v644 = vadd.f32 %v454, %v643
      %v645 = vpop.f32.mrb[0].mxu0
      %646 = vmatprep.mubr.f32.mxu0 %v218
      %647 = vmatmul.mubr.f32.gmra.mrb[0].mxu0 %v217
      %v648 = vpop.f32.mrb[0].mxu0
      %v649 = vadd.f32 %v459, %v648
      %v650 = vpop.f32.mrb[0].mxu0
      %651 = vmatprep.mubr.f32.mxu0 %v222
      %652 = vmatmul.mubr.f32.gmra.mrb[0].mxu0 %v221
      %v653 = vpop.f32.mrb[0].mxu0
      %v654 = vadd.f32 %v464, %v653
      %v655 = vpop.f32.mrb[0].mxu0
      %656 = vmatprep.mubr.f32.mxu0 %v226
      %657 = vmatmul.mubr.f32.gmra.mrb[0].mxu0 %v225
      %v658 = vpop.f32.mrb[0].mxu0
      %v659 = vadd.f32 %v469, %v658
      %v660 = vpop.f32.mrb[0].mxu0
      %661 = vmatprep.mubr.f32.mxu0 %v230
      %662 = vmatmul.mubr.f32.gmra.mrb[0].mxu0 %v229
      %v663 = vpop.f32.mrb[0].mxu0
      %v664 = vadd.f32 %v474, %v663
      %v665 = vpop.f32.mrb[0].mxu0
      %666 = vmatprep.mubr.f32.mxu0 %v234
      %667 = vmatmul.mubr.f32.gmra.mrb[0].mxu0 %v233
      %v668 = vpop.f32.mrb[0].mxu0
      %v669 = vadd.f32 %v479, %v668
      %v670 = vpop.f32.mrb[0].mxu0
      %671 = vmatprep.mubr.f32.mxu0 %v238
      %672 = vmatmul.mubr.f32.gmra.mrb[0].mxu0 %v237
      %v673 = vpop.f32.mrb[0].mxu0
      %v674 = vadd.f32 %v484, %v673
      %v675 = vpop.f32.mrb[0].mxu0
      %676 = vmatprep.mubr.f32.mxu0 %v242
      %677 = vmatmul.mubr.f32.gmra.mrb[0].mxu0 %v241
      %v678 = vpop.f32.mrb[0].mxu0
      %v679 = vadd.f32 %v489, %v678
      %v680 = vpop.f32.mrb[0].mxu0
      %681 = vmatprep.mubr.f32.mxu0 %v246
      %682 = vmatmul.mubr.f32.gmra.mrb[0].mxu0 %v245
      %v683 = vpop.f32.mrb[0].mxu0
      %v684 = vadd.f32 %v494, %v683
      %v685 = vpop.f32.mrb[0].mxu0
      %686 = vmatprep.mubr.f32.mxu0 %v250
      %687 = vmatmul.mubr.f32.gmra.mrb[0].mxu0 %v249
      %v688 = vpop.f32.mrb[0].mxu0
      %v689 = vadd.f32 %v499, %v688
      %v690 = vpop.f32.mrb[0].mxu0
      %691 = vmatprep.mubr.f32.mxu0 %v254
      %692 = vmatmul.mubr.f32.gmra.mrb[0].mxu0 %v253
      %v693 = vpop.f32.mrb[0].mxu0
      %v694 = vadd.f32 %v504, %v693
      %v695 = vpop.f32.mrb[0].mxu0
      %696 = vmatprep.mubr.f32.mxu0 %v258
      %697 = vmatmul.mubr.f32.gmra.mrb[0].mxu0 %v257
      %v698 = vpop.f32.mrb[0].mxu0
      %v699 = vadd.f32 %v509, %v698
      %v700 = vpop.f32.mrb[0].mxu0
      %701 = vmatprep.mubr.f32.mxu0 %v262
      %702 = vmatmul.mubr.f32.gmra.mrb[0].mxu0 %v261
      %v703 = vpop.f32.mrb[0].mxu0
      %v704 = vadd.f32 %v514, %v703
      %v705 = vpop.f32.mrb[0].mxu0
      %706 = vmatprep.mubr.f32.mxu0 %v266
      %707 = vmatmul.mubr.f32.gmra.mrb[0].mxu0 %v265
      %v708 = vpop.f32.mrb[0].mxu0
      %v709 = vadd.f32 %v519, %v708
      %v710 = vpop.f32.mrb[0].mxu0
      %711 = vmatprep.mubr.f32.mxu0 %v270
      %712 = vmatmul.mubr.f32.gmra.mrb[0].mxu0 %v269
      %v713 = vpop.f32.mrb[0].mxu0
      %v714 = vadd.f32 %v524, %v713
      %v715 = vpop.f32.mrb[0].mxu0
      %716 = vmatprep.mubr.f32.mxu0 %v274
      %717 = vmatmul.mubr.f32.gmra.mrb[0].mxu0 %v273
      %v718 = vpop.f32.mrb[0].mxu0
      %v719 = vadd.f32 %v529, %v718
      %v720 = vpop.f32.mrb[0].mxu0
      %721 = vmatprep.mubr.f32.mxu0 %v278
      %722 = vmatmul.mubr.f32.gmra.mrb[0].mxu0 %v277
      %v723 = vpop.f32.mrb[0].mxu0
      %v724 = vadd.f32 %v534, %v723
      %v725 = vpop.f32.mrb[0].mxu0
      %726 = vmatprep.mubr.f32.mxu0 %v282
      %727 = vmatmul.mubr.f32.gmra.mrb[0].mxu0 %v281
      %v728 = vpop.f32.mrb[0].mxu0
      %v729 = vadd.f32 %v539, %v728
      %v730 = vpop.f32.mrb[0].mxu0
      %731 = vmatprep.mubr.f32.mxu0 %v286
      %732 = vmatmul.mubr.f32.gmra.mrb[0].mxu0 %v285
      %v733 = vpop.f32.mrb[0].mxu0
      %v734 = vadd.f32 %v544, %v733
      %v735 = vpop.f32.mrb[0].mxu0
      %736 = vmatprep.mubr.f32.mxu0 %v290
      %737 = vmatmul.mubr.f32.gmra.mrb[0].mxu0 %v289
      %v738 = vpop.f32.mrb[0].mxu0
      %v739 = vadd.f32 %v549, %v738
      %v740 = vpop.f32.mrb[0].mxu0
      %741 = vdwg.mxu0
      %vm742 = vcmask 523264
      %743 = vst.msk [vmem:[%s190] sm:$0xff] %vm742, %v619
      %744 = vst.msk [vmem:[%s190 + $0x8] sm:$0xff] %vm742, %v624
      %745 = vst.msk [vmem:[%s190 + $0x10] sm:$0xff] %vm742, %v629
      %746 = vst.msk [vmem:[%s190 + $0x18] sm:$0xff] %vm742, %v634
      %747 = vst.msk [vmem:[%s190 + $0x20] sm:$0xff] %vm742, %v639
      %748 = vst.msk [vmem:[%s190 + $0x28] sm:$0xff] %vm742, %v644
      %749 = vst.msk [vmem:[%s190 + $0x30] sm:$0xff] %vm742, %v649
      %750 = vst.msk [vmem:[%s190 + $0x38] sm:$0xff] %vm742, %v654
      %751 = vst.msk [vmem:[%s190 + $0x40] sm:$0xff] %vm742, %v659
      %752 = vst.msk [vmem:[%s190 + $0x48] sm:$0xff] %vm742, %v664
      %753 = vst.msk [vmem:[%s190 + $0x50] sm:$0xff] %vm742, %v669
      %754 = vst.msk [vmem:[%s190 + $0x58] sm:$0xff] %vm742, %v674
      %755 = vst.msk [vmem:[%s190 + $0x60] sm:$0xff] %vm742, %v679
      %756 = vst.msk [vmem:[%s190 + $0x68] sm:$0xff] %vm742, %v684
      %757 = vst.msk [vmem:[%s190 + $0x70] sm:$0xff] %vm742, %v689
      %758 = vst.msk [vmem:[%s190 + $0x78] sm:$0xff] %vm742, %v694
      %759 = vst.msk [vmem:[%s190 + $0x80] sm:$0xff] %vm742, %v699
      %760 = vst.msk [vmem:[%s190 + $0x88] sm:$0xff] %vm742, %v704
      %761 = vst.msk [vmem:[%s190 + $0x90] sm:$0xff] %vm742, %v709
      %762 = vst.msk [vmem:[%s190 + $0x98] sm:$0xff] %vm742, %v714
      %763 = vst.msk [vmem:[%s190 + $0xa0] sm:$0xff] %vm742, %v719
      %764 = vst.msk [vmem:[%s190 + $0xa8] sm:$0xff] %vm742, %v724
      %765 = vst.msk [vmem:[%s190 + $0xb0] sm:$0xff] %vm742, %v729
      %766 = vst.msk [vmem:[%s190 + $0xb8] sm:$0xff] %vm742, %v734
      %767 = vst.msk [vmem:[%s190 + $0xc0] sm:$0xff] %vm742, %v739
      %p768 = scmp.lt.s32.totalorder %s14, 3
      %s769 = scalar_select %p768, %s14, 3
      %s770 = smul.addr %s769, 25
      %s771 = smul.addr %s770, 8
      %s772 = scalar_lea.vmem %s3, %s771
      // Predicated region
      $region33: #{bernoulli_decoder_forward.7} parent=31 // pred_check
        %p773 = pneg %p105
      $region34: #{bernoulli_decoder_forward.7} parent=31 // pred_check_branch
        %775 = sbr.rel (%p773) target = $region36
      $region35: #{bernoulli_decoder_forward.7} parent=31 // pred_region
        _
      $region36: #{bernoulli_decoder_forward.7} parent=31 // pred_fallthru
        _
    $region32: #{bernoulli_decoder_forward.7} parent=5 // pred_fallthru
      _
    %p776 = scmp.le.s32.totalorder 2, %s9
    // Predicated region
    $region37: #{bernoulli_decoder_forward.7} parent=5 // pred_check
      %p777 = pneg %p776
    $region38: #{bernoulli_decoder_forward.7} parent=5 // pred_check_branch
      %779 = sbr.rel (%p777) target = $region40
    $region39: #{bernoulli_decoder_forward.7} parent=5 // pred_region
      %s780 = ssub.s32 %s9, 2
      // Predicated region
      $region41: #{bernoulli_decoder_forward.7} parent=39 // pred_check
        %p781 = pneg %p111
      $region42: #{bernoulli_decoder_forward.7} parent=39 // pred_check_branch
        %783 = sbr.rel (%p781) target = $region44
      $region43: #{bernoulli_decoder_forward.7} parent=39 // pred_region
        %p784 = scmp.lt.s32.totalorder %s15, 3
        %s785 = scalar_select %p784, %s15, 3
        %s786 = smul.addr %s785, 25
        %s787 = smul.addr %s786, 8
        %s788 = scalar_lea.vmem %s3, %s787
      $region44: #{bernoulli_decoder_forward.7} parent=39 // pred_fallthru
        _
    $region40: #{bernoulli_decoder_forward.7} parent=5 // pred_fallthru
      _
  $region6: #{bernoulli_decoder_forward.7} parent=0 // loop_footer
    %s13 = sadd.s32 1, %s9
  $region7: #{bernoulli_decoder_forward.7} parent=0 // loop_footer_branch
    %8 = sbr.rel target = $region3
  $region8: #{bernoulli_decoder_forward.7} parent=0 // loop_exit
    _

// kernel: bernoulli_decoder_forward.8
$region0: #{bernoulli_decoder_forward.8}
  #allocation0 [shape = 'u32[]', space=smem, size = 0x4, offset = 0x4, fixed_abs, tag = 'smem constant byte address 0x4 - core index']
  #allocation1 [shape = 'u32[144,128]{1,0:T(1,128)}', space=vmem, size = 0x12000, scoped, tag = 'internal scratch']
  %s0 = inlined_call_operand.vmem [shape: f32[784,64], index: 0, kind: input, shape index: {}]
  %s1 = inlined_call_operand.vmem [shape: f32[1,64], index: 1, kind: input, shape index: {}]
  %s2 = inlined_call_operand.vmem [shape: f32[1,64], index: 2, kind: input, shape index: {}]
  %s3 = inlined_call_operand.vmem [shape: f32[784,64], index: 3, kind: output, shape index: {}]
  %s4 = sld [smem:[#allocation0]]
  $region22: #{bernoulli_decoder_forward.8} parent=0
    _
  %s6 = ssub.s32 1, %s4
  %s7 = scalar_select 0, %s6, %s4
  // Predicated region
  $region2: #{bernoulli_decoder_forward.8} parent=0 // pred_check
    _
  $region3: #{bernoulli_decoder_forward.8} parent=0 // pred_check_branch
    %9 = sbr.rel (0) target = $region5
  $region4: #{bernoulli_decoder_forward.8} parent=0 // pred_region
    _
  $region5: #{bernoulli_decoder_forward.8} parent=0 // pred_fallthru
    _
  // Predicated region
  $region6: #{bernoulli_decoder_forward.8} parent=0 // pred_check
    _
  $region7: #{bernoulli_decoder_forward.8} parent=0 // pred_check_branch
    %11 = sbr.rel (0) target = $region9
  $region8: #{bernoulli_decoder_forward.8} parent=0 // pred_region
    _
  $region9: #{bernoulli_decoder_forward.8} parent=0 // pred_fallthru
    _
  // Predicated region
  $region10: #{bernoulli_decoder_forward.8} parent=0 // pred_check
    _
  $region11: #{bernoulli_decoder_forward.8} parent=0 // pred_check_branch
    %13 = sbr.rel (0) target = $region13
  $region12: #{bernoulli_decoder_forward.8} parent=0 // pred_region
    _
  $region13: #{bernoulli_decoder_forward.8} parent=0 // pred_fallthru
    _
  %v14 = vld [vmem:[%s0] sm:$0xff]
  %v15 = vld [vmem:[%s0 + $0x8] sm:$0xff]
  %v16 = vld [vmem:[%s0 + $0x10] sm:$0xff]
  %v17 = vld [vmem:[%s0 + $0x18] sm:$0xff]
  %v18 = vld [vmem:[%s0 + $0x20] sm:$0xff]
  %v19 = vld [vmem:[%s0 + $0x28] sm:$0xff]
  %v20 = vld [vmem:[%s0 + $0x30] sm:$0xff]
  %v21 = vld [vmem:[%s0 + $0x38] sm:$0xff]
  %v22 = vld [vmem:[%s0 + $0x40] sm:$0xff]
  %v23 = vld [vmem:[%s0 + $0x48] sm:$0xff]
  %v24 = vld [vmem:[%s0 + $0x50] sm:$0xff]
  %v25 = vld [vmem:[%s0 + $0x58] sm:$0xff]
  %v26 = vld [vmem:[%s0 + $0x60] sm:$0xff]
  %v27 = vld [vmem:[%s0 + $0x68] sm:$0xff]
  %v28 = vld [vmem:[%s0 + $0x70] sm:$0xff]
  %v29 = vld [vmem:[%s0 + $0x78] sm:$0xff]
  %v30 = vld [vmem:[%s0 + $0x80] sm:$0xff]
  %v31 = vld [vmem:[%s0 + $0x88] sm:$0xff]
  %v32 = vld [vmem:[%s0 + $0x90] sm:$0xff]
  %v33 = vld [vmem:[%s0 + $0x98] sm:$0xff]
  %v34 = vld [vmem:[%s0 + $0xa0] sm:$0xff]
  %v35 = vld [vmem:[%s0 + $0xa8] sm:$0xff]
  %v36 = vld [vmem:[%s0 + $0xb0] sm:$0xff]
  %v37 = vld [vmem:[%s0 + $0xb8] sm:$0xff]
  %v38 = vld [vmem:[%s0 + $0xc0] sm:$0xff]
  %v39 = vld [vmem:[%s0 + $0xc8] sm:$0xff]
  %v40 = vld [vmem:[%s0 + $0xd0] sm:$0xff]
  %v41 = vld [vmem:[%s0 + $0xd8] sm:$0xff]
  %v42 = vld [vmem:[%s0 + $0xe0] sm:$0xff]
  %v43 = vld [vmem:[%s0 + $0xe8] sm:$0xff]
  %v44 = vld [vmem:[%s0 + $0xf0] sm:$0xff]
  %v45 = vld [vmem:[%s0 + $0xf8] sm:$0xff]
  %v46 = vld [vmem:[%s0 + $0x100] sm:$0xff]
  %v47 = vld [vmem:[%s0 + $0x108] sm:$0xff]
  %v48 = vld [vmem:[%s0 + $0x110] sm:$0xff]
  %v49 = vld [vmem:[%s0 + $0x118] sm:$0xff]
  %v50 = vld [vmem:[%s0 + $0x120] sm:$0xff]
  %v51 = vld [vmem:[%s0 + $0x128] sm:$0xff]
  %v52 = vld [vmem:[%s0 + $0x130] sm:$0xff]
  %v53 = vld [vmem:[%s0 + $0x138] sm:$0xff]
  %v54 = vld [vmem:[%s0 + $0x140] sm:$0xff]
  %v55 = vld [vmem:[%s0 + $0x148] sm:$0xff]
  %v56 = vld [vmem:[%s0 + $0x150] sm:$0xff]
  %v57 = vld [vmem:[%s0 + $0x158] sm:$0xff]
  %v58 = vld [vmem:[%s0 + $0x160] sm:$0xff]
  %v59 = vld [vmem:[%s0 + $0x168] sm:$0xff]
  %v60 = vld [vmem:[%s0 + $0x170] sm:$0xff]
  %v61 = vld [vmem:[%s0 + $0x178] sm:$0xff]
  %v62 = vld [vmem:[%s0 + $0x180] sm:$0xff]
  %v63 = vld [vmem:[%s0 + $0x188] sm:$0xff]
  %v64 = vld [vmem:[%s0 + $0x190] sm:$0xff]
  %v65 = vld [vmem:[%s0 + $0x198] sm:$0xff]
  %v66 = vld [vmem:[%s0 + $0x1a0] sm:$0xff]
  %v67 = vld [vmem:[%s0 + $0x1a8] sm:$0xff]
  %v68 = vld [vmem:[%s0 + $0x1b0] sm:$0xff]
  %v69 = vld [vmem:[%s0 + $0x1b8] sm:$0xff]
  %v70 = vld [vmem:[%s0 + $0x1c0] sm:$0xff]
  %v71 = vld [vmem:[%s0 + $0x1c8] sm:$0xff]
  %v72 = vld [vmem:[%s0 + $0x1d0] sm:$0xff]
  %v73 = vld [vmem:[%s0 + $0x1d8] sm:$0xff]
  %v74 = vld [vmem:[%s0 + $0x1e0] sm:$0xff]
  %v75 = vld [vmem:[%s0 + $0x1e8] sm:$0xff]
  %v76 = vld [vmem:[%s0 + $0x1f0] sm:$0xff]
  %v77 = vld [vmem:[%s0 + $0x1f8] sm:$0xff]
  %v78 = vld [vmem:[%s0 + $0x200] sm:$0xff]
  %v79 = vld [vmem:[%s0 + $0x208] sm:$0xff]
  %v80 = vld [vmem:[%s0 + $0x210] sm:$0xff]
  %v81 = vld [vmem:[%s0 + $0x218] sm:$0xff]
  %v82 = vld [vmem:[%s0 + $0x220] sm:$0xff]
  %v83 = vld [vmem:[%s0 + $0x228] sm:$0xff]
  %v84 = vld [vmem:[%s0 + $0x230] sm:$0xff]
  %v85 = vld [vmem:[%s0 + $0x238] sm:$0xff]
  %v86 = vld [vmem:[%s0 + $0x240] sm:$0xff]
  %v87 = vld [vmem:[%s0 + $0x248] sm:$0xff]
  %v88 = vld [vmem:[%s0 + $0x250] sm:$0xff]
  %v89 = vld [vmem:[%s0 + $0x258] sm:$0xff]
  %v90 = vld [vmem:[%s0 + $0x260] sm:$0xff]
  %v91 = vld [vmem:[%s0 + $0x268] sm:$0xff]
  %v92 = vld [vmem:[%s0 + $0x270] sm:$0xff]
  %v93 = vld [vmem:[%s0 + $0x278] sm:$0xff]
  %v94 = vld [vmem:[%s0 + $0x280] sm:$0xff]
  %v95 = vld [vmem:[%s0 + $0x288] sm:$0xff]
  %v96 = vld [vmem:[%s0 + $0x290] sm:$0xff]
  %v97 = vld [vmem:[%s0 + $0x298] sm:$0xff]
  %v98 = vld [vmem:[%s0 + $0x2a0] sm:$0xff]
  %v99 = vld [vmem:[%s0 + $0x2a8] sm:$0xff]
  %v100 = vld [vmem:[%s0 + $0x2b0] sm:$0xff]
  %v101 = vld [vmem:[%s0 + $0x2b8] sm:$0xff]
  %v102 = vld [vmem:[%s0 + $0x2c0] sm:$0xff]
  %v103 = vld [vmem:[%s0 + $0x2c8] sm:$0xff]
  %v104 = vld [vmem:[%s0 + $0x2d0] sm:$0xff]
  %v105 = vld [vmem:[%s0 + $0x2d8] sm:$0xff]
  %v106 = vld [vmem:[%s0 + $0x2e0] sm:$0xff]
  %v107 = vld [vmem:[%s0 + $0x2e8] sm:$0xff]
  %v108 = vld [vmem:[%s0 + $0x2f0] sm:$0xff]
  %v109 = vld [vmem:[%s0 + $0x2f8] sm:$0xff]
  %v110 = vld [vmem:[%s0 + $0x300] sm:$0xff]
  %v111 = vld [vmem:[%s0 + $0x308] sm:$0xff]
  %vm112 = vcmask 523264
  %v113 = vsel %vm112, %v14, 0.0
  %v114 = vsel %vm112, %v15, 0.0
  %v115 = vadd.f32 %v113, %v114
  %v116 = vsel %vm112, %v16, 0.0
  %v117 = vadd.f32 %v115, %v116
  %v118 = vsel %vm112, %v17, 0.0
  %v119 = vadd.f32 %v117, %v118
  %v120 = vsel %vm112, %v18, 0.0
  %v121 = vadd.f32 %v119, %v120
  %v122 = vsel %vm112, %v19, 0.0
  %v123 = vadd.f32 %v121, %v122
  %v124 = vsel %vm112, %v20, 0.0
  %v125 = vadd.f32 %v123, %v124
  %v126 = vsel %vm112, %v21, 0.0
  %v127 = vadd.f32 %v125, %v126
  %v128 = vsel %vm112, %v22, 0.0
  %v129 = vadd.f32 %v127, %v128
  %v130 = vsel %vm112, %v23, 0.0
  %v131 = vadd.f32 %v129, %v130
  %v132 = vsel %vm112, %v24, 0.0
  %v133 = vadd.f32 %v131, %v132
  %v134 = vsel %vm112, %v25, 0.0
  %v135 = vadd.f32 %v133, %v134
  %v136 = vsel %vm112, %v26, 0.0
  %v137 = vadd.f32 %v135, %v136
  %v138 = vsel %vm112, %v27, 0.0
  %v139 = vadd.f32 %v137, %v138
  %v140 = vsel %vm112, %v28, 0.0
  %v141 = vadd.f32 %v139, %v140
  %v142 = vsel %vm112, %v29, 0.0
  %v143 = vadd.f32 %v141, %v142
  %v144 = vsel %vm112, %v30, 0.0
  %v145 = vadd.f32 %v143, %v144
  %v146 = vsel %vm112, %v31, 0.0
  %v147 = vadd.f32 %v145, %v146
  %v148 = vsel %vm112, %v32, 0.0
  %v149 = vadd.f32 %v147, %v148
  %v150 = vsel %vm112, %v33, 0.0
  %v151 = vadd.f32 %v149, %v150
  %v152 = vsel %vm112, %v34, 0.0
  %v153 = vadd.f32 %v151, %v152
  %v154 = vsel %vm112, %v35, 0.0
  %v155 = vadd.f32 %v153, %v154
  %v156 = vsel %vm112, %v36, 0.0
  %v157 = vadd.f32 %v155, %v156
  %v158 = vsel %vm112, %v37, 0.0
  %v159 = vadd.f32 %v157, %v158
  %v160 = vsel %vm112, %v38, 0.0
  %v161 = vadd.f32 %v159, %v160
  %v162 = vsel %vm112, %v39, 0.0
  %v163 = vadd.f32 %v161, %v162
  %v164 = vsel %vm112, %v40, 0.0
  %v165 = vadd.f32 %v163, %v164
  %v166 = vsel %vm112, %v41, 0.0
  %v167 = vadd.f32 %v165, %v166
  %v168 = vsel %vm112, %v42, 0.0
  %v169 = vadd.f32 %v167, %v168
  %v170 = vsel %vm112, %v43, 0.0
  %v171 = vadd.f32 %v169, %v170
  %v172 = vsel %vm112, %v44, 0.0
  %v173 = vadd.f32 %v171, %v172
  %v174 = vsel %vm112, %v45, 0.0
  %v175 = vadd.f32 %v173, %v174
  %v176 = vsel %vm112, %v46, 0.0
  %v177 = vadd.f32 %v175, %v176
  %v178 = vsel %vm112, %v47, 0.0
  %v179 = vadd.f32 %v177, %v178
  %v180 = vsel %vm112, %v48, 0.0
  %v181 = vadd.f32 %v179, %v180
  %v182 = vsel %vm112, %v49, 0.0
  %v183 = vadd.f32 %v181, %v182
  %v184 = vsel %vm112, %v50, 0.0
  %v185 = vadd.f32 %v183, %v184
  %v186 = vsel %vm112, %v51, 0.0
  %v187 = vadd.f32 %v185, %v186
  %v188 = vsel %vm112, %v52, 0.0
  %v189 = vadd.f32 %v187, %v188
  %v190 = vsel %vm112, %v53, 0.0
  %v191 = vadd.f32 %v189, %v190
  %v192 = vsel %vm112, %v54, 0.0
  %v193 = vadd.f32 %v191, %v192
  %v194 = vsel %vm112, %v55, 0.0
  %v195 = vadd.f32 %v193, %v194
  %v196 = vsel %vm112, %v56, 0.0
  %v197 = vadd.f32 %v195, %v196
  %v198 = vsel %vm112, %v57, 0.0
  %v199 = vadd.f32 %v197, %v198
  %v200 = vsel %vm112, %v58, 0.0
  %v201 = vadd.f32 %v199, %v200
  %v202 = vsel %vm112, %v59, 0.0
  %v203 = vadd.f32 %v201, %v202
  %v204 = vsel %vm112, %v60, 0.0
  %v205 = vadd.f32 %v203, %v204
  %v206 = vsel %vm112, %v61, 0.0
  %v207 = vadd.f32 %v205, %v206
  %v208 = vsel %vm112, %v62, 0.0
  %v209 = vadd.f32 %v207, %v208
  %v210 = vsel %vm112, %v63, 0.0
  %v211 = vadd.f32 %v209, %v210
  %v212 = vsel %vm112, %v64, 0.0
  %v213 = vadd.f32 %v211, %v212
  %v214 = vsel %vm112, %v65, 0.0
  %v215 = vadd.f32 %v213, %v214
  %v216 = vsel %vm112, %v66, 0.0
  %v217 = vadd.f32 %v215, %v216
  %v218 = vsel %vm112, %v67, 0.0
  %v219 = vadd.f32 %v217, %v218
  %v220 = vsel %vm112, %v68, 0.0
  %v221 = vadd.f32 %v219, %v220
  %v222 = vsel %vm112, %v69, 0.0
  %v223 = vadd.f32 %v221, %v222
  %v224 = vsel %vm112, %v70, 0.0
  %v225 = vadd.f32 %v223, %v224
  %v226 = vsel %vm112, %v71, 0.0
  %v227 = vadd.f32 %v225, %v226
  %v228 = vsel %vm112, %v72, 0.0
  %v229 = vadd.f32 %v227, %v228
  %v230 = vsel %vm112, %v73, 0.0
  %v231 = vadd.f32 %v229, %v230
  %v232 = vsel %vm112, %v74, 0.0
  %v233 = vadd.f32 %v231, %v232
  %v234 = vsel %vm112, %v75, 0.0
  %v235 = vadd.f32 %v233, %v234
  %v236 = vsel %vm112, %v76, 0.0
  %v237 = vadd.f32 %v235, %v236
  %v238 = vsel %vm112, %v77, 0.0
  %v239 = vadd.f32 %v237, %v238
  %v240 = vsel %vm112, %v78, 0.0
  %v241 = vadd.f32 %v239, %v240
  %v242 = vsel %vm112, %v79, 0.0
  %v243 = vadd.f32 %v241, %v242
  %v244 = vsel %vm112, %v80, 0.0
  %v245 = vadd.f32 %v243, %v244
  %v246 = vsel %vm112, %v81, 0.0
  %v247 = vadd.f32 %v245, %v246
  %v248 = vsel %vm112, %v82, 0.0
  %v249 = vadd.f32 %v247, %v248
  %v250 = vsel %vm112, %v83, 0.0
  %v251 = vadd.f32 %v249, %v250
  %v252 = vsel %vm112, %v84, 0.0
  %v253 = vadd.f32 %v251, %v252
  %v254 = vsel %vm112, %v85, 0.0
  %v255 = vadd.f32 %v253, %v254
  %v256 = vsel %vm112, %v86, 0.0
  %v257 = vadd.f32 %v255, %v256
  %v258 = vsel %vm112, %v87, 0.0
  %v259 = vadd.f32 %v257, %v258
  %v260 = vsel %vm112, %v88, 0.0
  %v261 = vadd.f32 %v259, %v260
  %v262 = vsel %vm112, %v89, 0.0
  %v263 = vadd.f32 %v261, %v262
  %v264 = vsel %vm112, %v90, 0.0
  %v265 = vadd.f32 %v263, %v264
  %v266 = vsel %vm112, %v91, 0.0
  %v267 = vadd.f32 %v265, %v266
  %v268 = vsel %vm112, %v92, 0.0
  %v269 = vadd.f32 %v267, %v268
  %v270 = vsel %vm112, %v93, 0.0
  %v271 = vadd.f32 %v269, %v270
  %v272 = vsel %vm112, %v94, 0.0
  %v273 = vadd.f32 %v271, %v272
  %v274 = vsel %vm112, %v95, 0.0
  %v275 = vadd.f32 %v273, %v274
  %v276 = vsel %vm112, %v96, 0.0
  %v277 = vadd.f32 %v275, %v276
  %v278 = vsel %vm112, %v97, 0.0
  %v279 = vadd.f32 %v277, %v278
  %v280 = vsel %vm112, %v98, 0.0
  %v281 = vadd.f32 %v279, %v280
  %v282 = vsel %vm112, %v99, 0.0
  %v283 = vadd.f32 %v281, %v282
  %v284 = vsel %vm112, %v100, 0.0
  %v285 = vadd.f32 %v283, %v284
  %v286 = vsel %vm112, %v101, 0.0
  %v287 = vadd.f32 %v285, %v286
  %v288 = vsel %vm112, %v102, 0.0
  %v289 = vadd.f32 %v287, %v288
  %v290 = vsel %vm112, %v103, 0.0
  %v291 = vadd.f32 %v289, %v290
  %v292 = vsel %vm112, %v104, 0.0
  %v293 = vadd.f32 %v291, %v292
  %v294 = vsel %vm112, %v105, 0.0
  %v295 = vadd.f32 %v293, %v294
  %v296 = vsel %vm112, %v106, 0.0
  %v297 = vadd.f32 %v295, %v296
  %v298 = vsel %vm112, %v107, 0.0
  %v299 = vadd.f32 %v297, %v298
  %v300 = vsel %vm112, %v108, 0.0
  %v301 = vadd.f32 %v299, %v300
  %v302 = vsel %vm112, %v109, 0.0
  %v303 = vadd.f32 %v301, %v302
  %v304 = vsel %vm112, %v110, 0.0
  %v305 = vadd.f32 %v303, %v304
  %v306 = vsel %vm112, %v111, 0.0
  %v307 = vadd.f32 %v305, %v306
  %v308 = vrot.slane %v307, 4
  %v309 = vadd.f32 %v307, %v308
  %v310 = vrot.slane %v309, 2
  %v311 = vadd.f32 %v309, %v310
  %v312 = vrot.slane %v311, 1
  %v313 = vadd.f32 %v311, %v312
  %v314 = vrcp.pop 784.0
  %v315 = vmul.f32 %v313, %v314
  %v316 = vsub.f32 %v14, %v315
  %v317 = vsub.f32 %v15, %v315
  %v318 = vsub.f32 %v16, %v315
  %v319 = vsub.f32 %v17, %v315
  %v320 = vsub.f32 %v18, %v315
  %v321 = vsub.f32 %v19, %v315
  %v322 = vsub.f32 %v20, %v315
  %v323 = vsub.f32 %v21, %v315
  %v324 = vsub.f32 %v22, %v315
  %v325 = vsub.f32 %v23, %v315
  %v326 = vsub.f32 %v24, %v315
  %v327 = vsub.f32 %v25, %v315
  %v328 = vsub.f32 %v26, %v315
  %v329 = vsub.f32 %v27, %v315
  %v330 = vsub.f32 %v28, %v315
  %v331 = vsub.f32 %v29, %v315
  %v332 = vsub.f32 %v30, %v315
  %v333 = vsub.f32 %v31, %v315
  %v334 = vsub.f32 %v32, %v315
  %v335 = vsub.f32 %v33, %v315
  %v336 = vsub.f32 %v34, %v315
  %v337 = vsub.f32 %v35, %v315
  %v338 = vsub.f32 %v36, %v315
  %v339 = vsub.f32 %v37, %v315
  %v340 = vsub.f32 %v38, %v315
  %v341 = vsub.f32 %v39, %v315
  %v342 = vsub.f32 %v40, %v315
  %v343 = vsub.f32 %v41, %v315
  %v344 = vsub.f32 %v42, %v315
  %v345 = vsub.f32 %v43, %v315
  %v346 = vsub.f32 %v44, %v315
  %v347 = vsub.f32 %v45, %v315
  %v348 = vsub.f32 %v46, %v315
  %v349 = vsub.f32 %v47, %v315
  %v350 = vsub.f32 %v48, %v315
  %v351 = vsub.f32 %v49, %v315
  %v352 = vsub.f32 %v50, %v315
  %v353 = vsub.f32 %v51, %v315
  %v354 = vsub.f32 %v52, %v315
  %v355 = vsub.f32 %v53, %v315
  %v356 = vsub.f32 %v54, %v315
  %v357 = vsub.f32 %v55, %v315
  %v358 = vsub.f32 %v56, %v315
  %v359 = vsub.f32 %v57, %v315
  %v360 = vsub.f32 %v58, %v315
  %v361 = vsub.f32 %v59, %v315
  %v362 = vsub.f32 %v60, %v315
  %v363 = vsub.f32 %v61, %v315
  %v364 = vsub.f32 %v62, %v315
  %v365 = vsub.f32 %v63, %v315
  %v366 = vsub.f32 %v64, %v315
  %v367 = vsub.f32 %v65, %v315
  %v368 = vsub.f32 %v66, %v315
  %v369 = vsub.f32 %v67, %v315
  %v370 = vsub.f32 %v68, %v315
  %v371 = vsub.f32 %v69, %v315
  %v372 = vsub.f32 %v70, %v315
  %v373 = vsub.f32 %v71, %v315
  %v374 = vsub.f32 %v72, %v315
  %v375 = vsub.f32 %v73, %v315
  %v376 = vsub.f32 %v74, %v315
  %v377 = vsub.f32 %v75, %v315
  %v378 = vsub.f32 %v76, %v315
  %v379 = vsub.f32 %v77, %v315
  %v380 = vsub.f32 %v78, %v315
  %v381 = vsub.f32 %v79, %v315
  %v382 = vsub.f32 %v80, %v315
  %v383 = vsub.f32 %v81, %v315
  %v384 = vsub.f32 %v82, %v315
  %v385 = vsub.f32 %v83, %v315
  %v386 = vsub.f32 %v84, %v315
  %v387 = vsub.f32 %v85, %v315
  %v388 = vsub.f32 %v86, %v315
  %v389 = vsub.f32 %v87, %v315
  %v390 = vsub.f32 %v88, %v315
  %v391 = vsub.f32 %v89, %v315
  %v392 = vsub.f32 %v90, %v315
  %v393 = vsub.f32 %v91, %v315
  %v394 = vsub.f32 %v92, %v315
  %v395 = vsub.f32 %v93, %v315
  %v396 = vsub.f32 %v94, %v315
  %v397 = vsub.f32 %v95, %v315
  %v398 = vsub.f32 %v96, %v315
  %v399 = vsub.f32 %v97, %v315
  %v400 = vsub.f32 %v98, %v315
  %v401 = vsub.f32 %v99, %v315
  %v402 = vsub.f32 %v100, %v315
  %v403 = vsub.f32 %v101, %v315
  %v404 = vsub.f32 %v102, %v315
  %v405 = vsub.f32 %v103, %v315
  %v406 = vsub.f32 %v104, %v315
  %v407 = vsub.f32 %v105, %v315
  %v408 = vsub.f32 %v106, %v315
  %v409 = vsub.f32 %v107, %v315
  %v410 = vsub.f32 %v108, %v315
  %v411 = vsub.f32 %v109, %v315
  %v412 = vsub.f32 %v110, %v315
  %v413 = vsub.f32 %v111, %v315
  %v414 = vmul.f32 %v316, %v316
  %v415 = vmul.f32 %v317, %v317
  %v416 = vmul.f32 %v318, %v318
  %v417 = vmul.f32 %v319, %v319
  %v418 = vmul.f32 %v320, %v320
  %v419 = vmul.f32 %v321, %v321
  %v420 = vmul.f32 %v322, %v322
  %v421 = vmul.f32 %v323, %v323
  %v422 = vmul.f32 %v324, %v324
  %v423 = vmul.f32 %v325, %v325
  %v424 = vmul.f32 %v326, %v326
  %v425 = vmul.f32 %v327, %v327
  %v426 = vmul.f32 %v328, %v328
  %v427 = vmul.f32 %v329, %v329
  %v428 = vmul.f32 %v330, %v330
  %v429 = vmul.f32 %v331, %v331
  %v430 = vmul.f32 %v332, %v332
  %v431 = vmul.f32 %v333, %v333
  %v432 = vmul.f32 %v334, %v334
  %v433 = vmul.f32 %v335, %v335
  %v434 = vmul.f32 %v336, %v336
  %v435 = vmul.f32 %v337, %v337
  %v436 = vmul.f32 %v338, %v338
  %v437 = vmul.f32 %v339, %v339
  %v438 = vmul.f32 %v340, %v340
  %v439 = vmul.f32 %v341, %v341
  %v440 = vmul.f32 %v342, %v342
  %v441 = vmul.f32 %v343, %v343
  %v442 = vmul.f32 %v344, %v344
  %v443 = vmul.f32 %v345, %v345
  %v444 = vmul.f32 %v346, %v346
  %v445 = vmul.f32 %v347, %v347
  %v446 = vmul.f32 %v348, %v348
  %v447 = vmul.f32 %v349, %v349
  %v448 = vmul.f32 %v350, %v350
  %v449 = vmul.f32 %v351, %v351
  %v450 = vmul.f32 %v352, %v352
  %v451 = vmul.f32 %v353, %v353
  %v452 = vmul.f32 %v354, %v354
  %v453 = vmul.f32 %v355, %v355
  %v454 = vmul.f32 %v356, %v356
  %v455 = vmul.f32 %v357, %v357
  %v456 = vmul.f32 %v358, %v358
  %v457 = vmul.f32 %v359, %v359
  %v458 = vmul.f32 %v360, %v360
  %v459 = vmul.f32 %v361, %v361
  %v460 = vmul.f32 %v362, %v362
  %v461 = vmul.f32 %v363, %v363
  %v462 = vmul.f32 %v364, %v364
  %v463 = vmul.f32 %v365, %v365
  %v464 = vmul.f32 %v366, %v366
  %v465 = vmul.f32 %v367, %v367
  %v466 = vmul.f32 %v368, %v368
  %v467 = vmul.f32 %v369, %v369
  %v468 = vmul.f32 %v370, %v370
  %v469 = vmul.f32 %v371, %v371
  %v470 = vmul.f32 %v372, %v372
  %v471 = vmul.f32 %v373, %v373
  %v472 = vmul.f32 %v374, %v374
  %v473 = vmul.f32 %v375, %v375
  %v474 = vmul.f32 %v376, %v376
  %v475 = vmul.f32 %v377, %v377
  %v476 = vmul.f32 %v378, %v378
  %v477 = vmul.f32 %v379, %v379
  %v478 = vmul.f32 %v380, %v380
  %v479 = vmul.f32 %v381, %v381
  %v480 = vmul.f32 %v382, %v382
  %v481 = vmul.f32 %v383, %v383
  %v482 = vmul.f32 %v384, %v384
  %v483 = vmul.f32 %v385, %v385
  %v484 = vmul.f32 %v386, %v386
  %v485 = vmul.f32 %v387, %v387
  %v486 = vmul.f32 %v388, %v388
  %v487 = vmul.f32 %v389, %v389
  %v488 = vmul.f32 %v390, %v390
  %v489 = vmul.f32 %v391, %v391
  %v490 = vmul.f32 %v392, %v392
  %v491 = vmul.f32 %v393, %v393
  %v492 = vmul.f32 %v394, %v394
  %v493 = vmul.f32 %v395, %v395
  %v494 = vmul.f32 %v396, %v396
  %v495 = vmul.f32 %v397, %v397
  %v496 = vmul.f32 %v398, %v398
  %v497 = vmul.f32 %v399, %v399
  %v498 = vmul.f32 %v400, %v400
  %v499 = vmul.f32 %v401, %v401
  %v500 = vmul.f32 %v402, %v402
  %v501 = vmul.f32 %v403, %v403
  %v502 = vmul.f32 %v404, %v404
  %v503 = vmul.f32 %v405, %v405
  %v504 = vmul.f32 %v406, %v406
  %v505 = vmul.f32 %v407, %v407
  %v506 = vmul.f32 %v408, %v408
  %v507 = vmul.f32 %v409, %v409
  %v508 = vmul.f32 %v410, %v410
  %v509 = vmul.f32 %v411, %v411
  %v510 = vmul.f32 %v412, %v412
  %v511 = vmul.f32 %v413, %v413
  %v512 = vsel %vm112, %v414, 0.0
  %v513 = vsel %vm112, %v415, 0.0
  %v514 = vadd.f32 %v512, %v513
  %v515 = vsel %vm112, %v416, 0.0
  %v516 = vadd.f32 %v514, %v515
  %v517 = vsel %vm112, %v417, 0.0
  %v518 = vadd.f32 %v516, %v517
  %v519 = vsel %vm112, %v418, 0.0
  %v520 = vadd.f32 %v518, %v519
  %v521 = vsel %vm112, %v419, 0.0
  %v522 = vadd.f32 %v520, %v521
  %v523 = vsel %vm112, %v420, 0.0
  %v524 = vadd.f32 %v522, %v523
  %v525 = vsel %vm112, %v421, 0.0
  %v526 = vadd.f32 %v524, %v525
  %v527 = vsel %vm112, %v422, 0.0
  %v528 = vadd.f32 %v526, %v527
  %v529 = vsel %vm112, %v423, 0.0
  %v530 = vadd.f32 %v528, %v529
  %v531 = vsel %vm112, %v424, 0.0
  %v532 = vadd.f32 %v530, %v531
  %v533 = vsel %vm112, %v425, 0.0
  %v534 = vadd.f32 %v532, %v533
  %v535 = vsel %vm112, %v426, 0.0
  %v536 = vadd.f32 %v534, %v535
  %v537 = vsel %vm112, %v427, 0.0
  %v538 = vadd.f32 %v536, %v537
  %v539 = vsel %vm112, %v428, 0.0
  %v540 = vadd.f32 %v538, %v539
  %v541 = vsel %vm112, %v429, 0.0
  %v542 = vadd.f32 %v540, %v541
  %v543 = vsel %vm112, %v430, 0.0
  %v544 = vadd.f32 %v542, %v543
  %v545 = vsel %vm112, %v431, 0.0
  %v546 = vadd.f32 %v544, %v545
  %v547 = vsel %vm112, %v432, 0.0
  %v548 = vadd.f32 %v546, %v547
  %v549 = vsel %vm112, %v433, 0.0
  %v550 = vadd.f32 %v548, %v549
  %v551 = vsel %vm112, %v434, 0.0
  %v552 = vadd.f32 %v550, %v551
  %v553 = vsel %vm112, %v435, 0.0
  %v554 = vadd.f32 %v552, %v553
  %v555 = vsel %vm112, %v436, 0.0
  %v556 = vadd.f32 %v554, %v555
  %v557 = vsel %vm112, %v437, 0.0
  %v558 = vadd.f32 %v556, %v557
  %v559 = vsel %vm112, %v438, 0.0
  %v560 = vadd.f32 %v558, %v559
  %v561 = vsel %vm112, %v439, 0.0
  %v562 = vadd.f32 %v560, %v561
  %v563 = vsel %vm112, %v440, 0.0
  %v564 = vadd.f32 %v562, %v563
  %v565 = vsel %vm112, %v441, 0.0
  %v566 = vadd.f32 %v564, %v565
  %v567 = vsel %vm112, %v442, 0.0
  %v568 = vadd.f32 %v566, %v567
  %v569 = vsel %vm112, %v443, 0.0
  %v570 = vadd.f32 %v568, %v569
  %v571 = vsel %vm112, %v444, 0.0
  %v572 = vadd.f32 %v570, %v571
  %v573 = vsel %vm112, %v445, 0.0
  %v574 = vadd.f32 %v572, %v573
  %v575 = vsel %vm112, %v446, 0.0
  %v576 = vadd.f32 %v574, %v575
  %v577 = vsel %vm112, %v447, 0.0
  %v578 = vadd.f32 %v576, %v577
  %v579 = vsel %vm112, %v448, 0.0
  %v580 = vadd.f32 %v578, %v579
  %v581 = vsel %vm112, %v449, 0.0
  %v582 = vadd.f32 %v580, %v581
  %v583 = vsel %vm112, %v450, 0.0
  %v584 = vadd.f32 %v582, %v583
  %v585 = vsel %vm112, %v451, 0.0
  %v586 = vadd.f32 %v584, %v585
  %v587 = vsel %vm112, %v452, 0.0
  %v588 = vadd.f32 %v586, %v587
  %v589 = vsel %vm112, %v453, 0.0
  %v590 = vadd.f32 %v588, %v589
  %v591 = vsel %vm112, %v454, 0.0
  %v592 = vadd.f32 %v590, %v591
  %v593 = vsel %vm112, %v455, 0.0
  %v594 = vadd.f32 %v592, %v593
  %v595 = vsel %vm112, %v456, 0.0
  %v596 = vadd.f32 %v594, %v595
  %v597 = vsel %vm112, %v457, 0.0
  %v598 = vadd.f32 %v596, %v597
  %v599 = vsel %vm112, %v458, 0.0
  %v600 = vadd.f32 %v598, %v599
  %v601 = vsel %vm112, %v459, 0.0
  %v602 = vadd.f32 %v600, %v601
  %v603 = vsel %vm112, %v460, 0.0
  %v604 = vadd.f32 %v602, %v603
  %v605 = vsel %vm112, %v461, 0.0
  %v606 = vadd.f32 %v604, %v605
  %v607 = vsel %vm112, %v462, 0.0
  %v608 = vadd.f32 %v606, %v607
  %v609 = vsel %vm112, %v463, 0.0
  %v610 = vadd.f32 %v608, %v609
  %v611 = vsel %vm112, %v464, 0.0
  %v612 = vadd.f32 %v610, %v611
  %v613 = vsel %vm112, %v465, 0.0
  %v614 = vadd.f32 %v612, %v613
  %v615 = vsel %vm112, %v466, 0.0
  %v616 = vadd.f32 %v614, %v615
  %v617 = vsel %vm112, %v467, 0.0
  %v618 = vadd.f32 %v616, %v617
  %v619 = vsel %vm112, %v468, 0.0
  %v620 = vadd.f32 %v618, %v619
  %v621 = vsel %vm112, %v469, 0.0
  %v622 = vadd.f32 %v620, %v621
  %v623 = vsel %vm112, %v470, 0.0
  %v624 = vadd.f32 %v622, %v623
  %v625 = vsel %vm112, %v471, 0.0
  %v626 = vadd.f32 %v624, %v625
  %v627 = vsel %vm112, %v472, 0.0
  %v628 = vadd.f32 %v626, %v627
  %v629 = vsel %vm112, %v473, 0.0
  %v630 = vadd.f32 %v628, %v629
  %v631 = vsel %vm112, %v474, 0.0
  %v632 = vadd.f32 %v630, %v631
  %v633 = vsel %vm112, %v475, 0.0
  %v634 = vadd.f32 %v632, %v633
  %v635 = vsel %vm112, %v476, 0.0
  %v636 = vadd.f32 %v634, %v635
  %v637 = vsel %vm112, %v477, 0.0
  %v638 = vadd.f32 %v636, %v637
  %v639 = vsel %vm112, %v478, 0.0
  %v640 = vadd.f32 %v638, %v639
  %v641 = vsel %vm112, %v479, 0.0
  %v642 = vadd.f32 %v640, %v641
  %v643 = vsel %vm112, %v480, 0.0
  %v644 = vadd.f32 %v642, %v643
  %v645 = vsel %vm112, %v481, 0.0
  %v646 = vadd.f32 %v644, %v645
  %v647 = vsel %vm112, %v482, 0.0
  %v648 = vadd.f32 %v646, %v647
  %v649 = vsel %vm112, %v483, 0.0
  %v650 = vadd.f32 %v648, %v649
  %v651 = vsel %vm112, %v484, 0.0
  %v652 = vadd.f32 %v650, %v651
  %v653 = vsel %vm112, %v485, 0.0
  %v654 = vadd.f32 %v652, %v653
  %v655 = vsel %vm112, %v486, 0.0
  %v656 = vadd.f32 %v654, %v655
  %v657 = vsel %vm112, %v487, 0.0
  %v658 = vadd.f32 %v656, %v657
  %v659 = vsel %vm112, %v488, 0.0
  %v660 = vadd.f32 %v658, %v659
  %v661 = vsel %vm112, %v489, 0.0
  %v662 = vadd.f32 %v660, %v661
  %v663 = vsel %vm112, %v490, 0.0
  %v664 = vadd.f32 %v662, %v663
  %v665 = vsel %vm112, %v491, 0.0
  %v666 = vadd.f32 %v664, %v665
  %v667 = vsel %vm112, %v492, 0.0
  %v668 = vadd.f32 %v666, %v667
  %v669 = vsel %vm112, %v493, 0.0
  %v670 = vadd.f32 %v668, %v669
  %v671 = vsel %vm112, %v494, 0.0
  %v672 = vadd.f32 %v670, %v671
  %v673 = vsel %vm112, %v495, 0.0
  %v674 = vadd.f32 %v672, %v673
  %v675 = vsel %vm112, %v496, 0.0
  %v676 = vadd.f32 %v674, %v675
  %v677 = vsel %vm112, %v497, 0.0
  %v678 = vadd.f32 %v676, %v677
  %v679 = vsel %vm112, %v498, 0.0
  %v680 = vadd.f32 %v678, %v679
  %v681 = vsel %vm112, %v499, 0.0
  %v682 = vadd.f32 %v680, %v681
  %v683 = vsel %vm112, %v500, 0.0
  %v684 = vadd.f32 %v682, %v683
  %v685 = vsel %vm112, %v501, 0.0
  %v686 = vadd.f32 %v684, %v685
  %v687 = vsel %vm112, %v502, 0.0
  %v688 = vadd.f32 %v686, %v687
  %v689 = vsel %vm112, %v503, 0.0
  %v690 = vadd.f32 %v688, %v689
  %v691 = vsel %vm112, %v504, 0.0
  %v692 = vadd.f32 %v690, %v691
  %v693 = vsel %vm112, %v505, 0.0
  %v694 = vadd.f32 %v692, %v693
  %v695 = vsel %vm112, %v506, 0.0
  %v696 = vadd.f32 %v694, %v695
  %v697 = vsel %vm112, %v507, 0.0
  %v698 = vadd.f32 %v696, %v697
  %v699 = vsel %vm112, %v508, 0.0
  %v700 = vadd.f32 %v698, %v699
  %v701 = vsel %vm112, %v509, 0.0
  %v702 = vadd.f32 %v700, %v701
  %v703 = vsel %vm112, %v510, 0.0
  %v704 = vadd.f32 %v702, %v703
  %v705 = vsel %vm112, %v511, 0.0
  %v706 = vadd.f32 %v704, %v705
  %v707 = vrot.slane %v706, 4
  %v708 = vadd.f32 %v706, %v707
  %v709 = vrot.slane %v708, 2
  %v710 = vadd.f32 %v708, %v709
  %v711 = vrot.slane %v710, 1
  %v712 = vadd.f32 %v710, %v711
  %v713 = vmul.f32 %v712, %v314
  %v714 = vadd.f32 %v713, 1e-05
  %v715 = vrsqrt.pop %v714
  %v716 = vmul.f32 %v316, %v715
  %v717 = vmul.f32 %v317, %v715
  %v718 = vmul.f32 %v318, %v715
  %v719 = vmul.f32 %v319, %v715
  %v720 = vmul.f32 %v320, %v715
  %v721 = vmul.f32 %v321, %v715
  %v722 = vmul.f32 %v322, %v715
  %v723 = vmul.f32 %v323, %v715
  %v724 = vmul.f32 %v324, %v715
  %v725 = vmul.f32 %v325, %v715
  %v726 = vmul.f32 %v326, %v715
  %v727 = vmul.f32 %v327, %v715
  %v728 = vmul.f32 %v328, %v715
  %v729 = vmul.f32 %v329, %v715
  %v730 = vmul.f32 %v330, %v715
  %v731 = vmul.f32 %v331, %v715
  %v732 = vmul.f32 %v332, %v715
  %v733 = vmul.f32 %v333, %v715
  %v734 = vmul.f32 %v334, %v715
  %v735 = vmul.f32 %v335, %v715
  %v736 = vmul.f32 %v336, %v715
  %v737 = vmul.f32 %v337, %v715
  %v738 = vmul.f32 %v338, %v715
  %v739 = vmul.f32 %v339, %v715
  %v740 = vmul.f32 %v340, %v715
  %v741 = vmul.f32 %v341, %v715
  %v742 = vmul.f32 %v342, %v715
  %v743 = vmul.f32 %v343, %v715
  %v744 = vmul.f32 %v344, %v715
  %v745 = vmul.f32 %v345, %v715
  %v746 = vmul.f32 %v346, %v715
  %v747 = vmul.f32 %v347, %v715
  %v748 = vmul.f32 %v348, %v715
  %v749 = vmul.f32 %v349, %v715
  %v750 = vmul.f32 %v350, %v715
  %v751 = vmul.f32 %v351, %v715
  %v752 = vmul.f32 %v352, %v715
  %v753 = vmul.f32 %v353, %v715
  %v754 = vmul.f32 %v354, %v715
  %v755 = vmul.f32 %v355, %v715
  %v756 = vmul.f32 %v356, %v715
  %v757 = vmul.f32 %v357, %v715
  %v758 = vmul.f32 %v358, %v715
  %v759 = vmul.f32 %v359, %v715
  %v760 = vmul.f32 %v360, %v715
  %v761 = vmul.f32 %v361, %v715
  %v762 = vmul.f32 %v362, %v715
  %v763 = vmul.f32 %v363, %v715
  %v764 = vmul.f32 %v364, %v715
  %v765 = vmul.f32 %v365, %v715
  %v766 = vmul.f32 %v366, %v715
  %v767 = vmul.f32 %v367, %v715
  %v768 = vmul.f32 %v368, %v715
  %v769 = vmul.f32 %v369, %v715
  %v770 = vmul.f32 %v370, %v715
  %v771 = vmul.f32 %v371, %v715
  %v772 = vmul.f32 %v372, %v715
  %v773 = vmul.f32 %v373, %v715
  %v774 = vmul.f32 %v374, %v715
  %v775 = vmul.f32 %v375, %v715
  %v776 = vmul.f32 %v376, %v715
  %v777 = vmul.f32 %v377, %v715
  %v778 = vmul.f32 %v378, %v715
  %v779 = vmul.f32 %v379, %v715
  %v780 = vmul.f32 %v380, %v715
  %v781 = vmul.f32 %v381, %v715
  %v782 = vmul.f32 %v382, %v715
  %v783 = vmul.f32 %v383, %v715
  %v784 = vmul.f32 %v384, %v715
  %v785 = vmul.f32 %v385, %v715
  %v786 = vmul.f32 %v386, %v715
  %v787 = vmul.f32 %v387, %v715
  %v788 = vmul.f32 %v388, %v715
  %v789 = vmul.f32 %v389, %v715
  %v790 = vmul.f32 %v390, %v715
  %v791 = vmul.f32 %v391, %v715
  %v792 = vmul.f32 %v392, %v715
  %v793 = vmul.f32 %v393, %v715
  %v794 = vmul.f32 %v394, %v715
  %v795 = vmul.f32 %v395, %v715
  %v796 = vmul.f32 %v396, %v715
  %v797 = vmul.f32 %v397, %v715
  %v798 = vmul.f32 %v398, %v715
  %v799 = vmul.f32 %v399, %v715
  %v800 = vmul.f32 %v400, %v715
  %v801 = vmul.f32 %v401, %v715
  %v802 = vmul.f32 %v402, %v715
  %v803 = vmul.f32 %v403, %v715
  %v804 = vmul.f32 %v404, %v715
  %v805 = vmul.f32 %v405, %v715
  %v806 = vmul.f32 %v406, %v715
  %v807 = vmul.f32 %v407, %v715
  %v808 = vmul.f32 %v408, %v715
  %v809 = vmul.f32 %v409, %v715
  %v810 = vmul.f32 %v410, %v715
  %v811 = vmul.f32 %v411, %v715
  %v812 = vmul.f32 %v412, %v715
  %v813 = vmul.f32 %v413, %v715
  %v814 = vld [vmem:[%s1] sm:$0x1]
  %v816 = vlaneseq
  %v817 = vshrl.u32 %v816, 7
  %v818 = vsub.s32 0, %v817
  %v819 = vrot.slane %v814, %v818
  %v821 = vmul.f32 %v716, %v819
  %v822 = vmul.f32 %v717, %v819
  %v823 = vmul.f32 %v718, %v819
  %v824 = vmul.f32 %v719, %v819
  %v825 = vmul.f32 %v720, %v819
  %v826 = vmul.f32 %v721, %v819
  %v827 = vmul.f32 %v722, %v819
  %v828 = vmul.f32 %v723, %v819
  %v829 = vmul.f32 %v724, %v819
  %v830 = vmul.f32 %v725, %v819
  %v831 = vmul.f32 %v726, %v819
  %v832 = vmul.f32 %v727, %v819
  %v833 = vmul.f32 %v728, %v819
  %v834 = vmul.f32 %v729, %v819
  %v835 = vmul.f32 %v730, %v819
  %v836 = vmul.f32 %v731, %v819
  %v837 = vmul.f32 %v732, %v819
  %v838 = vmul.f32 %v733, %v819
  %v839 = vmul.f32 %v734, %v819
  %v840 = vmul.f32 %v735, %v819
  %v841 = vmul.f32 %v736, %v819
  %v842 = vmul.f32 %v737, %v819
  %v843 = vmul.f32 %v738, %v819
  %v844 = vmul.f32 %v739, %v819
  %v845 = vmul.f32 %v740, %v819
  %v846 = vmul.f32 %v741, %v819
  %v847 = vmul.f32 %v742, %v819
  %v848 = vmul.f32 %v743, %v819
  %v849 = vmul.f32 %v744, %v819
  %v850 = vmul.f32 %v745, %v819
  %v851 = vmul.f32 %v746, %v819
  %v852 = vmul.f32 %v747, %v819
  %v853 = vmul.f32 %v748, %v819
  %v854 = vmul.f32 %v749, %v819
  %v855 = vmul.f32 %v750, %v819
  %v856 = vmul.f32 %v751, %v819
  %v857 = vmul.f32 %v752, %v819
  %v858 = vmul.f32 %v753, %v819
  %v859 = vmul.f32 %v754, %v819
  %v860 = vmul.f32 %v755, %v819
  %v861 = vmul.f32 %v756, %v819
  %v862 = vmul.f32 %v757, %v819
  %v863 = vmul.f32 %v758, %v819
  %v864 = vmul.f32 %v759, %v819
  %v865 = vmul.f32 %v760, %v819
  %v866 = vmul.f32 %v761, %v819
  %v867 = vmul.f32 %v762, %v819
  %v868 = vmul.f32 %v763, %v819
  %v869 = vmul.f32 %v764, %v819
  %v870 = vmul.f32 %v765, %v819
  %v871 = vmul.f32 %v766, %v819
  %v872 = vmul.f32 %v767, %v819
  %v873 = vmul.f32 %v768, %v819
  %v874 = vmul.f32 %v769, %v819
  %v875 = vmul.f32 %v770, %v819
  %v876 = vmul.f32 %v771, %v819
  %v877 = vmul.f32 %v772, %v819
  %v878 = vmul.f32 %v773, %v819
  %v879 = vmul.f32 %v774, %v819
  %v880 = vmul.f32 %v775, %v819
  %v881 = vmul.f32 %v776, %v819
  %v882 = vmul.f32 %v777, %v819
  %v883 = vmul.f32 %v778, %v819
  %v884 = vmul.f32 %v779, %v819
  %v885 = vmul.f32 %v780, %v819
  %v886 = vmul.f32 %v781, %v819
  %v887 = vmul.f32 %v782, %v819
  %v888 = vmul.f32 %v783, %v819
  %v889 = vmul.f32 %v784, %v819
  %v890 = vmul.f32 %v785, %v819
  %v891 = vmul.f32 %v786, %v819
  %v892 = vmul.f32 %v787, %v819
  %v893 = vmul.f32 %v788, %v819
  %v894 = vmul.f32 %v789, %v819
  %v895 = vmul.f32 %v790, %v819
  %v896 = vmul.f32 %v791, %v819
  %v897 = vmul.f32 %v792, %v819
  %v898 = vmul.f32 %v793, %v819
  %v899 = vmul.f32 %v794, %v819
  %v900 = vmul.f32 %v795, %v819
  %v901 = vmul.f32 %v796, %v819
  %v902 = vmul.f32 %v797, %v819
  %v903 = vmul.f32 %v798, %v819
  %v904 = vmul.f32 %v799, %v819
  %v905 = vmul.f32 %v800, %v819
  %v906 = vmul.f32 %v801, %v819
  %v907 = vmul.f32 %v802, %v819
  %v908 = vmul.f32 %v803, %v819
  %v909 = vmul.f32 %v804, %v819
  %v910 = vmul.f32 %v805, %v819
  %v911 = vmul.f32 %v806, %v819
  %v912 = vmul.f32 %v807, %v819
  %v913 = vmul.f32 %v808, %v819
  %v914 = vmul.f32 %v809, %v819
  %v915 = vmul.f32 %v810, %v819
  %v916 = vmul.f32 %v811, %v819
  %v917 = vmul.f32 %v812, %v819
  %v918 = vmul.f32 %v813, %v819
  %v919 = vld [vmem:[%s2] sm:$0x1]
  %v921 = vlaneseq
  %v922 = vshrl.u32 %v921, 7
  %v923 = vsub.s32 0, %v922
  %v924 = vrot.slane %v919, %v923
  %v926 = vadd.f32 %v821, %v924
  %v927 = vadd.f32 %v822, %v924
  %v928 = vadd.f32 %v823, %v924
  %v929 = vadd.f32 %v824, %v924
  %v930 = vadd.f32 %v825, %v924
  %v931 = vadd.f32 %v826, %v924
  %v932 = vadd.f32 %v827, %v924
  %v933 = vadd.f32 %v828, %v924
  %v934 = vadd.f32 %v829, %v924
  %v935 = vadd.f32 %v830, %v924
  %v936 = vadd.f32 %v831, %v924
  %v937 = vadd.f32 %v832, %v924
  %v938 = vadd.f32 %v833, %v924
  %v939 = vadd.f32 %v834, %v924
  %v940 = vadd.f32 %v835, %v924
  %v941 = vadd.f32 %v836, %v924
  %v942 = vadd.f32 %v837, %v924
  %v943 = vadd.f32 %v838, %v924
  %v944 = vadd.f32 %v839, %v924
  %v945 = vadd.f32 %v840, %v924
  %v946 = vadd.f32 %v841, %v924
  %v947 = vadd.f32 %v842, %v924
  %v948 = vadd.f32 %v843, %v924
  %v949 = vadd.f32 %v844, %v924
  %v950 = vadd.f32 %v845, %v924
  %v951 = vadd.f32 %v846, %v924
  %v952 = vadd.f32 %v847, %v924
  %v953 = vadd.f32 %v848, %v924
  %v954 = vadd.f32 %v849, %v924
  %v955 = vadd.f32 %v850, %v924
  %v956 = vadd.f32 %v851, %v924
  %v957 = vadd.f32 %v852, %v924
  %v958 = vadd.f32 %v853, %v924
  %v959 = vadd.f32 %v854, %v924
  %v960 = vadd.f32 %v855, %v924
  %v961 = vadd.f32 %v856, %v924
  %v962 = vadd.f32 %v857, %v924
  %v963 = vadd.f32 %v858, %v924
  %v964 = vadd.f32 %v859, %v924
  %v965 = vadd.f32 %v860, %v924
  %v966 = vadd.f32 %v861, %v924
  %v967 = vadd.f32 %v862, %v924
  %v968 = vadd.f32 %v863, %v924
  %v969 = vadd.f32 %v864, %v924
  %v970 = vadd.f32 %v865, %v924
  %v971 = vadd.f32 %v866, %v924
  %v972 = vadd.f32 %v867, %v924
  %v973 = vadd.f32 %v868, %v924
  %v974 = vadd.f32 %v869, %v924
  %v975 = vadd.f32 %v870, %v924
  %v976 = vadd.f32 %v871, %v924
  %v977 = vadd.f32 %v872, %v924
  %v978 = vadd.f32 %v873, %v924
  %v979 = vadd.f32 %v874, %v924
  %v980 = vadd.f32 %v875, %v924
  %v981 = vadd.f32 %v876, %v924
  %v982 = vadd.f32 %v877, %v924
  %v983 = vadd.f32 %v878, %v924
  %v984 = vadd.f32 %v879, %v924
  %v985 = vadd.f32 %v880, %v924
  %v986 = vadd.f32 %v881, %v924
  %v987 = vadd.f32 %v882, %v924
  %v988 = vadd.f32 %v883, %v924
  %v989 = vadd.f32 %v884, %v924
  %v990 = vadd.f32 %v885, %v924
  %v991 = vadd.f32 %v886, %v924
  %v992 = vadd.f32 %v887, %v924
  %v993 = vadd.f32 %v888, %v924
  %v994 = vadd.f32 %v889, %v924
  %v995 = vadd.f32 %v890, %v924
  %v996 = vadd.f32 %v891, %v924
  %v997 = vadd.f32 %v892, %v924
  %v998 = vadd.f32 %v893, %v924
  %v999 = vadd.f32 %v894, %v924
  %v1000 = vadd.f32 %v895, %v924
  %v1001 = vadd.f32 %v896, %v924
  %v1002 = vadd.f32 %v897, %v924
  %v1003 = vadd.f32 %v898, %v924
  %v1004 = vadd.f32 %v899, %v924
  %v1005 = vadd.f32 %v900, %v924
  %v1006 = vadd.f32 %v901, %v924
  %v1007 = vadd.f32 %v902, %v924
  %v1008 = vadd.f32 %v903, %v924
  %v1009 = vadd.f32 %v904, %v924
  %v1010 = vadd.f32 %v905, %v924
  %v1011 = vadd.f32 %v906, %v924
  %v1012 = vadd.f32 %v907, %v924
  %v1013 = vadd.f32 %v908, %v924
  %v1014 = vadd.f32 %v909, %v924
  %v1015 = vadd.f32 %v910, %v924
  %v1016 = vadd.f32 %v911, %v924
  %v1017 = vadd.f32 %v912, %v924
  %v1018 = vadd.f32 %v913, %v924
  %v1019 = vadd.f32 %v914, %v924
  %v1020 = vadd.f32 %v915, %v924
  %v1021 = vadd.f32 %v916, %v924
  %v1022 = vadd.f32 %v917, %v924
  %v1023 = vadd.f32 %v918, %v924
  %v1024 = vmax.f32 %v926, 0.0
  %v1025 = vmax.f32 %v927, 0.0
  %v1026 = vmax.f32 %v928, 0.0
  %v1027 = vmax.f32 %v929, 0.0
  %v1028 = vmax.f32 %v930, 0.0
  %v1029 = vmax.f32 %v931, 0.0
  %v1030 = vmax.f32 %v932, 0.0
  %v1031 = vmax.f32 %v933, 0.0
  %v1032 = vmax.f32 %v934, 0.0
  %v1033 = vmax.f32 %v935, 0.0
  %v1034 = vmax.f32 %v936, 0.0
  %v1035 = vmax.f32 %v937, 0.0
  %v1036 = vmax.f32 %v938, 0.0
  %v1037 = vmax.f32 %v939, 0.0
  %v1038 = vmax.f32 %v940, 0.0
  %v1039 = vmax.f32 %v941, 0.0
  %v1040 = vmax.f32 %v942, 0.0
  %v1041 = vmax.f32 %v943, 0.0
  %v1042 = vmax.f32 %v944, 0.0
  %v1043 = vmax.f32 %v945, 0.0
  %v1044 = vmax.f32 %v946, 0.0
  %v1045 = vmax.f32 %v947, 0.0
  %v1046 = vmax.f32 %v948, 0.0
  %v1047 = vmax.f32 %v949, 0.0
  %v1048 = vmax.f32 %v950, 0.0
  %v1049 = vmax.f32 %v951, 0.0
  %v1050 = vmax.f32 %v952, 0.0
  %v1051 = vmax.f32 %v953, 0.0
  %v1052 = vmax.f32 %v954, 0.0
  %v1053 = vmax.f32 %v955, 0.0
  %v1054 = vmax.f32 %v956, 0.0
  %v1055 = vmax.f32 %v957, 0.0
  %v1056 = vmax.f32 %v958, 0.0
  %v1057 = vmax.f32 %v959, 0.0
  %v1058 = vmax.f32 %v960, 0.0
  %v1059 = vmax.f32 %v961, 0.0
  %v1060 = vmax.f32 %v962, 0.0
  %v1061 = vmax.f32 %v963, 0.0
  %v1062 = vmax.f32 %v964, 0.0
  %v1063 = vmax.f32 %v965, 0.0
  %v1064 = vmax.f32 %v966, 0.0
  %v1065 = vmax.f32 %v967, 0.0
  %v1066 = vmax.f32 %v968, 0.0
  %v1067 = vmax.f32 %v969, 0.0
  %v1068 = vmax.f32 %v970, 0.0
  %v1069 = vmax.f32 %v971, 0.0
  %v1070 = vmax.f32 %v972, 0.0
  %v1071 = vmax.f32 %v973, 0.0
  %v1072 = vmax.f32 %v974, 0.0
  %v1073 = vmax.f32 %v975, 0.0
  %v1074 = vmax.f32 %v976, 0.0
  %v1075 = vmax.f32 %v977, 0.0
  %v1076 = vmax.f32 %v978, 0.0
  %v1077 = vmax.f32 %v979, 0.0
  %v1078 = vmax.f32 %v980, 0.0
  %v1079 = vmax.f32 %v981, 0.0
  %v1080 = vmax.f32 %v982, 0.0
  %v1081 = vmax.f32 %v983, 0.0
  %v1082 = vmax.f32 %v984, 0.0
  %v1083 = vmax.f32 %v985, 0.0
  %v1084 = vmax.f32 %v986, 0.0
  %v1085 = vmax.f32 %v987, 0.0
  %v1086 = vmax.f32 %v988, 0.0
  %v1087 = vmax.f32 %v989, 0.0
  %v1088 = vmax.f32 %v990, 0.0
  %v1089 = vmax.f32 %v991, 0.0
  %v1090 = vmax.f32 %v992, 0.0
  %v1091 = vmax.f32 %v993, 0.0
  %v1092 = vmax.f32 %v994, 0.0
  %v1093 = vmax.f32 %v995, 0.0
  %v1094 = vmax.f32 %v996, 0.0
  %v1095 = vmax.f32 %v997, 0.0
  %v1096 = vmax.f32 %v998, 0.0
  %v1097 = vmax.f32 %v999, 0.0
  %v1098 = vmax.f32 %v1000, 0.0
  %v1099 = vmax.f32 %v1001, 0.0
  %v1100 = vmax.f32 %v1002, 0.0
  %v1101 = vmax.f32 %v1003, 0.0
  %v1102 = vmax.f32 %v1004, 0.0
  %v1103 = vmax.f32 %v1005, 0.0
  %v1104 = vmax.f32 %v1006, 0.0
  %v1105 = vmax.f32 %v1007, 0.0
  %v1106 = vmax.f32 %v1008, 0.0
  %v1107 = vmax.f32 %v1009, 0.0
  %v1108 = vmax.f32 %v1010, 0.0
  %v1109 = vmax.f32 %v1011, 0.0
  %v1110 = vmax.f32 %v1012, 0.0
  %v1111 = vmax.f32 %v1013, 0.0
  %v1112 = vmax.f32 %v1014, 0.0
  %v1113 = vmax.f32 %v1015, 0.0
  %v1114 = vmax.f32 %v1016, 0.0
  %v1115 = vmax.f32 %v1017, 0.0
  %v1116 = vmax.f32 %v1018, 0.0
  %v1117 = vmax.f32 %v1019, 0.0
  %v1118 = vmax.f32 %v1020, 0.0
  %v1119 = vmax.f32 %v1021, 0.0
  %v1120 = vmax.f32 %v1022, 0.0
  %v1121 = vmax.f32 %v1023, 0.0
  %1122 = vst.msk [vmem:[%s3] sm:$0xff] %vm112, %v1024
  %1123 = vst.msk [vmem:[%s3 + $0x8] sm:$0xff] %vm112, %v1025
  %1124 = vst.msk [vmem:[%s3 + $0x10] sm:$0xff] %vm112, %v1026
  %1125 = vst.msk [vmem:[%s3 + $0x18] sm:$0xff] %vm112, %v1027
  %1126 = vst.msk [vmem:[%s3 + $0x20] sm:$0xff] %vm112, %v1028
  %1127 = vst.msk [vmem:[%s3 + $0x28] sm:$0xff] %vm112, %v1029
  %1128 = vst.msk [vmem:[%s3 + $0x30] sm:$0xff] %vm112, %v1030
  %1129 = vst.msk [vmem:[%s3 + $0x38] sm:$0xff] %vm112, %v1031
  %1130 = vst.msk [vmem:[%s3 + $0x40] sm:$0xff] %vm112, %v1032
  %1131 = vst.msk [vmem:[%s3 + $0x48] sm:$0xff] %vm112, %v1033
  %1132 = vst.msk [vmem:[%s3 + $0x50] sm:$0xff] %vm112, %v1034
  %1133 = vst.msk [vmem:[%s3 + $0x58] sm:$0xff] %vm112, %v1035
  %1134 = vst.msk [vmem:[%s3 + $0x60] sm:$0xff] %vm112, %v1036
  %1135 = vst.msk [vmem:[%s3 + $0x68] sm:$0xff] %vm112, %v1037
  %1136 = vst.msk [vmem:[%s3 + $0x70] sm:$0xff] %vm112, %v1038
  %1137 = vst.msk [vmem:[%s3 + $0x78] sm:$0xff] %vm112, %v1039
  %1138 = vst.msk [vmem:[%s3 + $0x80] sm:$0xff] %vm112, %v1040
  %1139 = vst.msk [vmem:[%s3 + $0x88] sm:$0xff] %vm112, %v1041
  %1140 = vst.msk [vmem:[%s3 + $0x90] sm:$0xff] %vm112, %v1042
  %1141 = vst.msk [vmem:[%s3 + $0x98] sm:$0xff] %vm112, %v1043
  %1142 = vst.msk [vmem:[%s3 + $0xa0] sm:$0xff] %vm112, %v1044
  %1143 = vst.msk [vmem:[%s3 + $0xa8] sm:$0xff] %vm112, %v1045
  %1144 = vst.msk [vmem:[%s3 + $0xb0] sm:$0xff] %vm112, %v1046
  %1145 = vst.msk [vmem:[%s3 + $0xb8] sm:$0xff] %vm112, %v1047
  %1146 = vst.msk [vmem:[%s3 + $0xc0] sm:$0xff] %vm112, %v1048
  %1147 = vst.msk [vmem:[%s3 + $0xc8] sm:$0xff] %vm112, %v1049
  %1148 = vst.msk [vmem:[%s3 + $0xd0] sm:$0xff] %vm112, %v1050
  %1149 = vst.msk [vmem:[%s3 + $0xd8] sm:$0xff] %vm112, %v1051
  %1150 = vst.msk [vmem:[%s3 + $0xe0] sm:$0xff] %vm112, %v1052
  %1151 = vst.msk [vmem:[%s3 + $0xe8] sm:$0xff] %vm112, %v1053
  %1152 = vst.msk [vmem:[%s3 + $0xf0] sm:$0xff] %vm112, %v1054
  %1153 = vst.msk [vmem:[%s3 + $0xf8] sm:$0xff] %vm112, %v1055
  %1154 = vst.msk [vmem:[%s3 + $0x100] sm:$0xff] %vm112, %v1056
  %1155 = vst.msk [vmem:[%s3 + $0x108] sm:$0xff] %vm112, %v1057
  %1156 = vst.msk [vmem:[%s3 + $0x110] sm:$0xff] %vm112, %v1058
  %1157 = vst.msk [vmem:[%s3 + $0x118] sm:$0xff] %vm112, %v1059
  %1158 = vst.msk [vmem:[%s3 + $0x120] sm:$0xff] %vm112, %v1060
  %1159 = vst.msk [vmem:[%s3 + $0x128] sm:$0xff] %vm112, %v1061
  %1160 = vst.msk [vmem:[%s3 + $0x130] sm:$0xff] %vm112, %v1062
  %1161 = vst.msk [vmem:[%s3 + $0x138] sm:$0xff] %vm112, %v1063
  %1162 = vst.msk [vmem:[%s3 + $0x140] sm:$0xff] %vm112, %v1064
  %1163 = vst.msk [vmem:[%s3 + $0x148] sm:$0xff] %vm112, %v1065
  %1164 = vst.msk [vmem:[%s3 + $0x150] sm:$0xff] %vm112, %v1066
  %1165 = vst.msk [vmem:[%s3 + $0x158] sm:$0xff] %vm112, %v1067
  %1166 = vst.msk [vmem:[%s3 + $0x160] sm:$0xff] %vm112, %v1068
  %1167 = vst.msk [vmem:[%s3 + $0x168] sm:$0xff] %vm112, %v1069
  %1168 = vst.msk [vmem:[%s3 + $0x170] sm:$0xff] %vm112, %v1070
  %1169 = vst.msk [vmem:[%s3 + $0x178] sm:$0xff] %vm112, %v1071
  %1170 = vst.msk [vmem:[%s3 + $0x180] sm:$0xff] %vm112, %v1072
  %1171 = vst.msk [vmem:[%s3 + $0x188] sm:$0xff] %vm112, %v1073
  %1172 = vst.msk [vmem:[%s3 + $0x190] sm:$0xff] %vm112, %v1074
  %1173 = vst.msk [vmem:[%s3 + $0x198] sm:$0xff] %vm112, %v1075
  %1174 = vst.msk [vmem:[%s3 + $0x1a0] sm:$0xff] %vm112, %v1076
  %1175 = vst.msk [vmem:[%s3 + $0x1a8] sm:$0xff] %vm112, %v1077
  %1176 = vst.msk [vmem:[%s3 + $0x1b0] sm:$0xff] %vm112, %v1078
  %1177 = vst.msk [vmem:[%s3 + $0x1b8] sm:$0xff] %vm112, %v1079
  %1178 = vst.msk [vmem:[%s3 + $0x1c0] sm:$0xff] %vm112, %v1080
  %1179 = vst.msk [vmem:[%s3 + $0x1c8] sm:$0xff] %vm112, %v1081
  %1180 = vst.msk [vmem:[%s3 + $0x1d0] sm:$0xff] %vm112, %v1082
  %1181 = vst.msk [vmem:[%s3 + $0x1d8] sm:$0xff] %vm112, %v1083
  %1182 = vst.msk [vmem:[%s3 + $0x1e0] sm:$0xff] %vm112, %v1084
  %1183 = vst.msk [vmem:[%s3 + $0x1e8] sm:$0xff] %vm112, %v1085
  %1184 = vst.msk [vmem:[%s3 + $0x1f0] sm:$0xff] %vm112, %v1086
  %1185 = vst.msk [vmem:[%s3 + $0x1f8] sm:$0xff] %vm112, %v1087
  %1186 = vst.msk [vmem:[%s3 + $0x200] sm:$0xff] %vm112, %v1088
  %1187 = vst.msk [vmem:[%s3 + $0x208] sm:$0xff] %vm112, %v1089
  %1188 = vst.msk [vmem:[%s3 + $0x210] sm:$0xff] %vm112, %v1090
  %1189 = vst.msk [vmem:[%s3 + $0x218] sm:$0xff] %vm112, %v1091
  %1190 = vst.msk [vmem:[%s3 + $0x220] sm:$0xff] %vm112, %v1092
  %1191 = vst.msk [vmem:[%s3 + $0x228] sm:$0xff] %vm112, %v1093
  %1192 = vst.msk [vmem:[%s3 + $0x230] sm:$0xff] %vm112, %v1094
  %1193 = vst.msk [vmem:[%s3 + $0x238] sm:$0xff] %vm112, %v1095
  %1194 = vst.msk [vmem:[%s3 + $0x240] sm:$0xff] %vm112, %v1096
  %1195 = vst.msk [vmem:[%s3 + $0x248] sm:$0xff] %vm112, %v1097
  %1196 = vst.msk [vmem:[%s3 + $0x250] sm:$0xff] %vm112, %v1098
  %1197 = vst.msk [vmem:[%s3 + $0x258] sm:$0xff] %vm112, %v1099
  %1198 = vst.msk [vmem:[%s3 + $0x260] sm:$0xff] %vm112, %v1100
  %1199 = vst.msk [vmem:[%s3 + $0x268] sm:$0xff] %vm112, %v1101
  %1200 = vst.msk [vmem:[%s3 + $0x270] sm:$0xff] %vm112, %v1102
  %1201 = vst.msk [vmem:[%s3 + $0x278] sm:$0xff] %vm112, %v1103
  %1202 = vst.msk [vmem:[%s3 + $0x280] sm:$0xff] %vm112, %v1104
  %1203 = vst.msk [vmem:[%s3 + $0x288] sm:$0xff] %vm112, %v1105
  %1204 = vst.msk [vmem:[%s3 + $0x290] sm:$0xff] %vm112, %v1106
  %1205 = vst.msk [vmem:[%s3 + $0x298] sm:$0xff] %vm112, %v1107
  %1206 = vst.msk [vmem:[%s3 + $0x2a0] sm:$0xff] %vm112, %v1108
  %1207 = vst.msk [vmem:[%s3 + $0x2a8] sm:$0xff] %vm112, %v1109
  %1208 = vst.msk [vmem:[%s3 + $0x2b0] sm:$0xff] %vm112, %v1110
  %1209 = vst.msk [vmem:[%s3 + $0x2b8] sm:$0xff] %vm112, %v1111
  %1210 = vst.msk [vmem:[%s3 + $0x2c0] sm:$0xff] %vm112, %v1112
  %1211 = vst.msk [vmem:[%s3 + $0x2c8] sm:$0xff] %vm112, %v1113
  %1212 = vst.msk [vmem:[%s3 + $0x2d0] sm:$0xff] %vm112, %v1114
  %1213 = vst.msk [vmem:[%s3 + $0x2d8] sm:$0xff] %vm112, %v1115
  %1214 = vst.msk [vmem:[%s3 + $0x2e0] sm:$0xff] %vm112, %v1116
  %1215 = vst.msk [vmem:[%s3 + $0x2e8] sm:$0xff] %vm112, %v1117
  %1216 = vst.msk [vmem:[%s3 + $0x2f0] sm:$0xff] %vm112, %v1118
  %1217 = vst.msk [vmem:[%s3 + $0x2f8] sm:$0xff] %vm112, %v1119
  %1218 = vst.msk [vmem:[%s3 + $0x300] sm:$0xff] %vm112, %v1120
  %1219 = vst.msk [vmem:[%s3 + $0x308] sm:$0xff] %vm112, %v1121
  // Predicated region
  $region14: #{bernoulli_decoder_forward.8} parent=0 // pred_check
    _
  $region15: #{bernoulli_decoder_forward.8} parent=0 // pred_check_branch
    %1221 = sbr.rel (0) target = $region17
  $region16: #{bernoulli_decoder_forward.8} parent=0 // pred_region
    _
  $region17: #{bernoulli_decoder_forward.8} parent=0 // pred_fallthru
    _
  // Predicated region
  $region18: #{bernoulli_decoder_forward.8} parent=0 // pred_check
    _
  $region19: #{bernoulli_decoder_forward.8} parent=0 // pred_check_branch
    %1223 = sbr.rel (0) target = $region21
  $region20: #{bernoulli_decoder_forward.8} parent=0 // pred_region
    _
  $region21: #{bernoulli_decoder_forward.8} parent=0 // pred_fallthru
    _

// kernel: bernoulli_decoder_forward.9
$region0: #{bernoulli_decoder_forward.9}
  #allocation0 [shape = 'u32[]', space=smem, size = 0x4, offset = 0x4, fixed_abs, tag = 'smem constant byte address 0x4 - core index']
  #allocation1 [shape = 'u32[144,128]{1,0:T(1,128)}', space=vmem, size = 0x12000, scoped, tag = 'internal scratch']
  #allocation2 [shape = 'f32[1,1]{1,0:T(1,128)S(1)}', space=vmem, size = 0x200, scoped, tag = 'scoped memory for bernoulli_decoder_forward.9']
  %s0 = inlined_call_operand.vmem [shape: f32[4,784,256], index: 0, kind: input, shape index: {}]
  %s1 = inlined_call_operand.vmem [shape: f32[4,1,256], index: 1, kind: input, shape index: {}]
  %s2 = inlined_call_operand.<no memory space> [shape: f32[1,1], index: 2, kind: input, shape index: {}]
  %s3 = inlined_call_operand.vmem [shape: f32[4,784,1], index: 3, kind: output, shape index: {}]
  %s4 = sld [smem:[#allocation0]]
  $region45: #{bernoulli_decoder_forward.9} parent=0
    _
  %s6 = ssub.s32 1, %s4
  %s7 = scalar_select 0, %s6, %s4
  %v8 = vstv %s2
  %9 = vst [vmem:[#allocation2] sm:$0x1] %v8
  loop: start=0, step=1, limit=6
  $region2: #{bernoulli_decoder_forward.9} parent=0 // loop_pre_header
    _
  $region3: #{bernoulli_decoder_forward.9} parent=0 // loop_header
    %s11 = sphi 0, %s15
    %p12 = scmp.ge.s32.totalorder %s11, 6
    %s21 = sphi 0, %s23
    %s24 = sphi 0, %s21
    %s25 = sphi 0, %s24
    %s41 = sphi 0, %s25
    %s47 = sphi 0, %s49
    %s50 = sphi 0, %s47
    %s51 = sphi 0, %s50
    %s67 = sphi 0, %s51
    %s71 = sphi 0, %s71
    %s73 = sphi 0, %s71
    %s74 = sphi 0, %s73
    %s88 = sphi 0, %s74
    %s94 = sphi 0, %s96
    %s97 = sphi 0, %s94
    %s98 = sphi 0, %s97
    %s114 = sphi 0, %s98
  $region4: #{bernoulli_decoder_forward.9} parent=0 // loop_header_branch
    %14 = sbr.rel (%p12) target = $region8
  $region5: #{bernoulli_decoder_forward.9} parent=0 // loop_body
    %s16 = ssub.s32 %s11, 1
    %s17 = ssub.s32 %s11, 2
    %s18 = sadd.s32 %s11, 1
    %s19 = ssub.s32 %s11, %s18
    %p20 = scmp.eq.s32.totalorder %s19, 0
    %s22 = sadd.s32 %s21, 1
    %s23 = scalar_select %p20, %s21, %s22
    %p26 = pneg %p20
    %p27 = scmp.eq.s32.totalorder %s11, 3
    %p28 = por %p26, %p27
    %p29 = scmp.ne.s32.totalorder %s21, %s24
    %p30 = scmp.eq.s32.totalorder %s11, 0
    %p31 = por %p29, %p30
    %p32 = scmp.ne.s32.totalorder %s21, %s24
    %p33 = scmp.eq.s32.totalorder %s16, 3
    %p34 = por %p32, %p33
    %p35 = scmp.ne.s32.totalorder %s24, %s25
    %p36 = scmp.eq.s32.totalorder %s16, 0
    %p37 = por %p35, %p36
    %p38 = scmp.ne.s32.totalorder %s24, %s25
    %p39 = scmp.eq.s32.totalorder %s17, 3
    %p40 = por %p38, %p39
    %p42 = scmp.ne.s32.totalorder %s25, %s41
    %p43 = scmp.eq.s32.totalorder %s17, 0
    %p44 = por %p42, %p43
    %s45 = ssub.s32 %s11, %s18
    %p46 = scmp.eq.s32.totalorder %s45, 0
    %s48 = sadd.s32 %s47, 1
    %s49 = scalar_select %p46, %s47, %s48
    %p52 = pneg %p46
    %p53 = scmp.eq.s32.totalorder %s11, 3
    %p54 = por %p52, %p53
    %p55 = scmp.ne.s32.totalorder %s47, %s50
    %p56 = scmp.eq.s32.totalorder %s11, 0
    %p57 = por %p55, %p56
    %p58 = scmp.ne.s32.totalorder %s47, %s50
    %p59 = scmp.eq.s32.totalorder %s16, 3
    %p60 = por %p58, %p59
    %p61 = scmp.ne.s32.totalorder %s50, %s51
    %p62 = scmp.eq.s32.totalorder %s16, 0
    %p63 = por %p61, %p62
    %p64 = scmp.ne.s32.totalorder %s50, %s51
    %p65 = scmp.eq.s32.totalorder %s17, 3
    %p66 = por %p64, %p65
    %p68 = scmp.ne.s32.totalorder %s51, %s67
    %p69 = scmp.eq.s32.totalorder %s17, 0
    %p70 = por %p68, %p69
    %s72 = sadd.s32 %s71, 1
    %p75 = scmp.eq.s32.totalorder %s11, 3
    %p76 = scmp.ne.s32.totalorder %s71, %s73
    %p77 = scmp.eq.s32.totalorder %s11, 0
    %p78 = por %p76, %p77
    %p79 = scmp.ne.s32.totalorder %s71, %s73
    %p80 = scmp.eq.s32.totalorder %s16, 3
    %p81 = por %p79, %p80
    %p82 = scmp.ne.s32.totalorder %s73, %s74
    %p83 = scmp.eq.s32.totalorder %s16, 0
    %p84 = por %p82, %p83
    %p85 = scmp.ne.s32.totalorder %s73, %s74
    %p86 = scmp.eq.s32.totalorder %s17, 3
    %p87 = por %p85, %p86
    %p89 = scmp.ne.s32.totalorder %s74, %s88
    %p90 = scmp.eq.s32.totalorder %s17, 0
    %p91 = por %p89, %p90
    %s92 = ssub.s32 %s11, %s18
    %p93 = scmp.eq.s32.totalorder %s92, 0
    %s95 = sadd.s32 %s94, 1
    %s96 = scalar_select %p93, %s94, %s95
    %p99 = pneg %p93
    %p100 = scmp.eq.s32.totalorder %s11, 3
    %p101 = por %p99, %p100
    %p102 = scmp.ne.s32.totalorder %s94, %s97
    %p103 = scmp.eq.s32.totalorder %s11, 0
    %p104 = por %p102, %p103
    %p105 = scmp.ne.s32.totalorder %s94, %s97
    %p106 = scmp.eq.s32.totalorder %s16, 3
    %p107 = por %p105, %p106
    %p108 = scmp.ne.s32.totalorder %s97, %s98
    %p109 = scmp.eq.s32.totalorder %s16, 0
    %p110 = por %p108, %p109
    %p111 = scmp.ne.s32.totalorder %s97, %s98
    %p112 = scmp.eq.s32.totalorder %s17, 3
    %p113 = por %p111, %p112
    %p115 = scmp.ne.s32.totalorder %s98, %s114
    %p116 = scmp.eq.s32.totalorder %s17, 0
    %p117 = por %p115, %p116
    %p118 = scmp.le.s32.totalorder 1, %s11
    %p119 = scmp.lt.s32.totalorder %s11, 5
    %p120 = pnand %p118, %p119
    %p121 = pneg %p120
    // Predicated region
    $region9: #{bernoulli_decoder_forward.9} parent=5 // pred_check
      _
    $region10: #{bernoulli_decoder_forward.9} parent=5 // pred_check_branch
      %123 = sbr.rel (%p120) target = $region12
    $region11: #{bernoulli_decoder_forward.9} parent=5 // pred_region
      %s124 = ssub.s32 %s11, 1
      // Predicated region
      $region13: #{bernoulli_decoder_forward.9} parent=11 // pred_check
        %p125 = pneg %p84
      $region14: #{bernoulli_decoder_forward.9} parent=11 // pred_check_branch
        %127 = sbr.rel (%p125) target = $region16
      $region15: #{bernoulli_decoder_forward.9} parent=11 // pred_region
        _
      $region16: #{bernoulli_decoder_forward.9} parent=11 // pred_fallthru
        _
    $region12: #{bernoulli_decoder_forward.9} parent=5 // pred_fallthru
      _
    %p128 = scmp.lt.s32.totalorder %s11, 4
    // Predicated region
    $region17: #{bernoulli_decoder_forward.9} parent=5 // pred_check
      %p129 = pneg %p128
    $region18: #{bernoulli_decoder_forward.9} parent=5 // pred_check_branch
      %131 = sbr.rel (%p129) target = $region20
    $region19: #{bernoulli_decoder_forward.9} parent=5 // pred_region
      // Predicated region
      $region21: #{bernoulli_decoder_forward.9} parent=19 // pred_check
        %p132 = pneg %p31
      $region22: #{bernoulli_decoder_forward.9} parent=19 // pred_check_branch
        %134 = sbr.rel (%p132) target = $region24
      $region23: #{bernoulli_decoder_forward.9} parent=19 // pred_region
        %p135 = scmp.lt.s32.totalorder %s11, 3
        %s136 = scalar_select %p135, %s11, 3
        %s137 = smul.addr %s136, 196
        %s138 = smul.addr %s137, 8
        %s139 = scalar_lea.vmem %s0, %s138
      $region24: #{bernoulli_decoder_forward.9} parent=19 // pred_fallthru
        _
      // Predicated region
      $region25: #{bernoulli_decoder_forward.9} parent=19 // pred_check
        %p140 = pneg %p57
      $region26: #{bernoulli_decoder_forward.9} parent=19 // pred_check_branch
        %142 = sbr.rel (%p140) target = $region28
      $region27: #{bernoulli_decoder_forward.9} parent=19 // pred_region
        %p143 = scmp.lt.s32.totalorder %s11, 3
        %s144 = scalar_select %p143, %s11, 3
        %s145 = smul.addr %s144, 2
        %s146 = scalar_lea.vmem %s1, %s145
      $region28: #{bernoulli_decoder_forward.9} parent=19 // pred_fallthru
        _
    $region20: #{bernoulli_decoder_forward.9} parent=5 // pred_fallthru
      _
    %p147 = scmp.le.s32.totalorder 1, %s11
    %p148 = scmp.lt.s32.totalorder %s11, 5
    %p149 = pnand %p147, %p148
    %p150 = pneg %p149
    // Predicated region
    $region29: #{bernoulli_decoder_forward.9} parent=5 // pred_check
      _
    $region30: #{bernoulli_decoder_forward.9} parent=5 // pred_check_branch
      %152 = sbr.rel (%p149) target = $region32
    $region31: #{bernoulli_decoder_forward.9} parent=5 // pred_region
      %s153 = ssub.s32 %s11, 1
      %p154 = scmp.lt.s32.totalorder %s16, 3
      %s155 = scalar_select %p154, %s16, 3
      %s156 = smul.addr %s155, 196
      %s157 = smul.addr %s156, 8
      %s158 = scalar_lea.vmem %s0, %s157
      %p159 = pneg %p37
      %p160 = pneg %p34
      %p161 = scmp.lt.s32.totalorder %s16, 3
      %s162 = scalar_select %p161, %s16, 3
      %s163 = smul.addr %s162, 2
      %s164 = scalar_lea.vmem %s1, %s163
      %p165 = pneg %p63
      %p166 = pneg %p60
      %p167 = pneg %p84
      %p168 = pneg %p81
      %p169 = pneg %p110
      %p170 = pneg %p107
      %p171 = scmp.lt.s32.totalorder %s16, 3
      %s172 = scalar_select %p171, %s16, 3
      %s173 = smul.addr %s172, 98
      %s174 = smul.addr %s173, 8
      %s175 = scalar_lea.vmem %s3, %s174
      %p176 = scmp.lt.s32.totalorder %s16, 3
      %s177 = scalar_select %p176, %s16, 3
      %s178 = smul.addr %s177, 196
      %s179 = smul.addr %s178, 8
      %s180 = scalar_lea.vmem %s0, %s179
      %p181 = scmp.lt.s32.totalorder %s16, 3
      %s182 = scalar_select %p181, %s16, 3
      %s183 = smul.addr %s182, 2
      %s184 = scalar_lea.vmem %s1, %s183
      %p185 = scmp.lt.s32.totalorder %s16, 3
      %s186 = scalar_select %p185, %s16, 3
      %s187 = smul.addr %s186, 98
      %s188 = smul.addr %s187, 8
      %s189 = scalar_lea.vmem %s3, %s188
      %v190 = vld [vmem:[%s180] sm:$0xff]
      %v191 = vld [vmem:[%s180 + $0x8] sm:$0xff]
      %v192 = vld [vmem:[%s180 + $0x10] sm:$0xff]
      %v193 = vld [vmem:[%s180 + $0x18] sm:$0xff]
      %v194 = vld [vmem:[%s180 + $0x20] sm:$0xff]
      %v195 = vld [vmem:[%s180 + $0x28] sm:$0xff]
      %v196 = vld [vmem:[%s180 + $0x30] sm:$0xff]
      %v197 = vld [vmem:[%s180 + $0x38] sm:$0xff]
      %v198 = vld [vmem:[%s180 + $0x40] sm:$0xff]
      %v199 = vld [vmem:[%s180 + $0x48] sm:$0xff]
      %v200 = vld [vmem:[%s180 + $0x50] sm:$0xff]
      %v201 = vld [vmem:[%s180 + $0x58] sm:$0xff]
      %v202 = vld [vmem:[%s180 + $0x60] sm:$0xff]
      %v203 = vld [vmem:[%s180 + $0x68] sm:$0xff]
      %v204 = vld [vmem:[%s180 + $0x70] sm:$0xff]
      %v205 = vld [vmem:[%s180 + $0x78] sm:$0xff]
      %v206 = vld [vmem:[%s180 + $0x80] sm:$0xff]
      %v207 = vld [vmem:[%s180 + $0x88] sm:$0xff]
      %v208 = vld [vmem:[%s180 + $0x90] sm:$0xff]
      %v209 = vld [vmem:[%s180 + $0x98] sm:$0xff]
      %v210 = vld [vmem:[%s180 + $0xa0] sm:$0xff]
      %v211 = vld [vmem:[%s180 + $0xa8] sm:$0xff]
      %v212 = vld [vmem:[%s180 + $0xb0] sm:$0xff]
      %v213 = vld [vmem:[%s180 + $0xb8] sm:$0xff]
      %v214 = vld [vmem:[%s180 + $0xc0] sm:$0xff]
      %v215 = vld [vmem:[%s180 + $0xc8] sm:$0xff]
      %v216 = vld [vmem:[%s180 + $0xd0] sm:$0xff]
      %v217 = vld [vmem:[%s180 + $0xd8] sm:$0xff]
      %v218 = vld [vmem:[%s180 + $0xe0] sm:$0xff]
      %v219 = vld [vmem:[%s180 + $0xe8] sm:$0xff]
      %v220 = vld [vmem:[%s180 + $0xf0] sm:$0xff]
      %v221 = vld [vmem:[%s180 + $0xf8] sm:$0xff]
      %v222 = vld [vmem:[%s180 + $0x100] sm:$0xff]
      %v223 = vld [vmem:[%s180 + $0x108] sm:$0xff]
      %v224 = vld [vmem:[%s180 + $0x110] sm:$0xff]
      %v225 = vld [vmem:[%s180 + $0x118] sm:$0xff]
      %v226 = vld [vmem:[%s180 + $0x120] sm:$0xff]
      %v227 = vld [vmem:[%s180 + $0x128] sm:$0xff]
      %v228 = vld [vmem:[%s180 + $0x130] sm:$0xff]
      %v229 = vld [vmem:[%s180 + $0x138] sm:$0xff]
      %v230 = vld [vmem:[%s180 + $0x140] sm:$0xff]
      %v231 = vld [vmem:[%s180 + $0x148] sm:$0xff]
      %v232 = vld [vmem:[%s180 + $0x150] sm:$0xff]
      %v233 = vld [vmem:[%s180 + $0x158] sm:$0xff]
      %v234 = vld [vmem:[%s180 + $0x160] sm:$0xff]
      %v235 = vld [vmem:[%s180 + $0x168] sm:$0xff]
      %v236 = vld [vmem:[%s180 + $0x170] sm:$0xff]
      %v237 = vld [vmem:[%s180 + $0x178] sm:$0xff]
      %v238 = vld [vmem:[%s180 + $0x180] sm:$0xff]
      %v239 = vld [vmem:[%s180 + $0x188] sm:$0xff]
      %v240 = vld [vmem:[%s180 + $0x190] sm:$0xff]
      %v241 = vld [vmem:[%s180 + $0x198] sm:$0xff]
      %v242 = vld [vmem:[%s180 + $0x1a0] sm:$0xff]
      %v243 = vld [vmem:[%s180 + $0x1a8] sm:$0xff]
      %v244 = vld [vmem:[%s180 + $0x1b0] sm:$0xff]
      %v245 = vld [vmem:[%s180 + $0x1b8] sm:$0xff]
      %v246 = vld [vmem:[%s180 + $0x1c0] sm:$0xff]
      %v247 = vld [vmem:[%s180 + $0x1c8] sm:$0xff]
      %v248 = vld [vmem:[%s180 + $0x1d0] sm:$0xff]
      %v249 = vld [vmem:[%s180 + $0x1d8] sm:$0xff]
      %v250 = vld [vmem:[%s180 + $0x1e0] sm:$0xff]
      %v251 = vld [vmem:[%s180 + $0x1e8] sm:$0xff]
      %v252 = vld [vmem:[%s180 + $0x1f0] sm:$0xff]
      %v253 = vld [vmem:[%s180 + $0x1f8] sm:$0xff]
      %v254 = vld [vmem:[%s180 + $0x200] sm:$0xff]
      %v255 = vld [vmem:[%s180 + $0x208] sm:$0xff]
      %v256 = vld [vmem:[%s180 + $0x210] sm:$0xff]
      %v257 = vld [vmem:[%s180 + $0x218] sm:$0xff]
      %v258 = vld [vmem:[%s180 + $0x220] sm:$0xff]
      %v259 = vld [vmem:[%s180 + $0x228] sm:$0xff]
      %v260 = vld [vmem:[%s180 + $0x230] sm:$0xff]
      %v261 = vld [vmem:[%s180 + $0x238] sm:$0xff]
      %v262 = vld [vmem:[%s180 + $0x240] sm:$0xff]
      %v263 = vld [vmem:[%s180 + $0x248] sm:$0xff]
      %v264 = vld [vmem:[%s180 + $0x250] sm:$0xff]
      %v265 = vld [vmem:[%s180 + $0x258] sm:$0xff]
      %v266 = vld [vmem:[%s180 + $0x260] sm:$0xff]
      %v267 = vld [vmem:[%s180 + $0x268] sm:$0xff]
      %v268 = vld [vmem:[%s180 + $0x270] sm:$0xff]
      %v269 = vld [vmem:[%s180 + $0x278] sm:$0xff]
      %v270 = vld [vmem:[%s180 + $0x280] sm:$0xff]
      %v271 = vld [vmem:[%s180 + $0x288] sm:$0xff]
      %v272 = vld [vmem:[%s180 + $0x290] sm:$0xff]
      %v273 = vld [vmem:[%s180 + $0x298] sm:$0xff]
      %v274 = vld [vmem:[%s180 + $0x2a0] sm:$0xff]
      %v275 = vld [vmem:[%s180 + $0x2a8] sm:$0xff]
      %v276 = vld [vmem:[%s180 + $0x2b0] sm:$0xff]
      %v277 = vld [vmem:[%s180 + $0x2b8] sm:$0xff]
      %v278 = vld [vmem:[%s180 + $0x2c0] sm:$0xff]
      %v279 = vld [vmem:[%s180 + $0x2c8] sm:$0xff]
      %v280 = vld [vmem:[%s180 + $0x2d0] sm:$0xff]
      %v281 = vld [vmem:[%s180 + $0x2d8] sm:$0xff]
      %v282 = vld [vmem:[%s180 + $0x2e0] sm:$0xff]
      %v283 = vld [vmem:[%s180 + $0x2e8] sm:$0xff]
      %v284 = vld [vmem:[%s180 + $0x2f0] sm:$0xff]
      %v285 = vld [vmem:[%s180 + $0x2f8] sm:$0xff]
      %v286 = vld [vmem:[%s180 + $0x300] sm:$0xff]
      %v287 = vld [vmem:[%s180 + $0x308] sm:$0xff]
      %v288 = vld [vmem:[%s180 + $0x310] sm:$0xff]
      %v289 = vld [vmem:[%s180 + $0x318] sm:$0xff]
      %v290 = vld [vmem:[%s180 + $0x320] sm:$0xff]
      %v291 = vld [vmem:[%s180 + $0x328] sm:$0xff]
      %v292 = vld [vmem:[%s180 + $0x330] sm:$0xff]
      %v293 = vld [vmem:[%s180 + $0x338] sm:$0xff]
      %v294 = vld [vmem:[%s180 + $0x340] sm:$0xff]
      %v295 = vld [vmem:[%s180 + $0x348] sm:$0xff]
      %v296 = vld [vmem:[%s180 + $0x350] sm:$0xff]
      %v297 = vld [vmem:[%s180 + $0x358] sm:$0xff]
      %v298 = vld [vmem:[%s180 + $0x360] sm:$0xff]
      %v299 = vld [vmem:[%s180 + $0x368] sm:$0xff]
      %v300 = vld [vmem:[%s180 + $0x370] sm:$0xff]
      %v301 = vld [vmem:[%s180 + $0x378] sm:$0xff]
      %v302 = vld [vmem:[%s180 + $0x380] sm:$0xff]
      %v303 = vld [vmem:[%s180 + $0x388] sm:$0xff]
      %v304 = vld [vmem:[%s180 + $0x390] sm:$0xff]
      %v305 = vld [vmem:[%s180 + $0x398] sm:$0xff]
      %v306 = vld [vmem:[%s180 + $0x3a0] sm:$0xff]
      %v307 = vld [vmem:[%s180 + $0x3a8] sm:$0xff]
      %v308 = vld [vmem:[%s180 + $0x3b0] sm:$0xff]
      %v309 = vld [vmem:[%s180 + $0x3b8] sm:$0xff]
      %v310 = vld [vmem:[%s180 + $0x3c0] sm:$0xff]
      %v311 = vld [vmem:[%s180 + $0x3c8] sm:$0xff]
      %v312 = vld [vmem:[%s180 + $0x3d0] sm:$0xff]
      %v313 = vld [vmem:[%s180 + $0x3d8] sm:$0xff]
      %v314 = vld [vmem:[%s180 + $0x3e0] sm:$0xff]
      %v315 = vld [vmem:[%s180 + $0x3e8] sm:$0xff]
      %v316 = vld [vmem:[%s180 + $0x3f0] sm:$0xff]
      %v317 = vld [vmem:[%s180 + $0x3f8] sm:$0xff]
      %v318 = vld [vmem:[%s180 + $0x400] sm:$0xff]
      %v319 = vld [vmem:[%s180 + $0x408] sm:$0xff]
      %v320 = vld [vmem:[%s180 + $0x410] sm:$0xff]
      %v321 = vld [vmem:[%s180 + $0x418] sm:$0xff]
      %v322 = vld [vmem:[%s180 + $0x420] sm:$0xff]
      %v323 = vld [vmem:[%s180 + $0x428] sm:$0xff]
      %v324 = vld [vmem:[%s180 + $0x430] sm:$0xff]
      %v325 = vld [vmem:[%s180 + $0x438] sm:$0xff]
      %v326 = vld [vmem:[%s180 + $0x440] sm:$0xff]
      %v327 = vld [vmem:[%s180 + $0x448] sm:$0xff]
      %v328 = vld [vmem:[%s180 + $0x450] sm:$0xff]
      %v329 = vld [vmem:[%s180 + $0x458] sm:$0xff]
      %v330 = vld [vmem:[%s180 + $0x460] sm:$0xff]
      %v331 = vld [vmem:[%s180 + $0x468] sm:$0xff]
      %v332 = vld [vmem:[%s180 + $0x470] sm:$0xff]
      %v333 = vld [vmem:[%s180 + $0x478] sm:$0xff]
      %v334 = vld [vmem:[%s180 + $0x480] sm:$0xff]
      %v335 = vld [vmem:[%s180 + $0x488] sm:$0xff]
      %v336 = vld [vmem:[%s180 + $0x490] sm:$0xff]
      %v337 = vld [vmem:[%s180 + $0x498] sm:$0xff]
      %v338 = vld [vmem:[%s180 + $0x4a0] sm:$0xff]
      %v339 = vld [vmem:[%s180 + $0x4a8] sm:$0xff]
      %v340 = vld [vmem:[%s180 + $0x4b0] sm:$0xff]
      %v341 = vld [vmem:[%s180 + $0x4b8] sm:$0xff]
      %v342 = vld [vmem:[%s180 + $0x4c0] sm:$0xff]
      %v343 = vld [vmem:[%s180 + $0x4c8] sm:$0xff]
      %v344 = vld [vmem:[%s180 + $0x4d0] sm:$0xff]
      %v345 = vld [vmem:[%s180 + $0x4d8] sm:$0xff]
      %v346 = vld [vmem:[%s180 + $0x4e0] sm:$0xff]
      %v347 = vld [vmem:[%s180 + $0x4e8] sm:$0xff]
      %v348 = vld [vmem:[%s180 + $0x4f0] sm:$0xff]
      %v349 = vld [vmem:[%s180 + $0x4f8] sm:$0xff]
      %v350 = vld [vmem:[%s180 + $0x500] sm:$0xff]
      %v351 = vld [vmem:[%s180 + $0x508] sm:$0xff]
      %v352 = vld [vmem:[%s180 + $0x510] sm:$0xff]
      %v353 = vld [vmem:[%s180 + $0x518] sm:$0xff]
      %v354 = vld [vmem:[%s180 + $0x520] sm:$0xff]
      %v355 = vld [vmem:[%s180 + $0x528] sm:$0xff]
      %v356 = vld [vmem:[%s180 + $0x530] sm:$0xff]
      %v357 = vld [vmem:[%s180 + $0x538] sm:$0xff]
      %v358 = vld [vmem:[%s180 + $0x540] sm:$0xff]
      %v359 = vld [vmem:[%s180 + $0x548] sm:$0xff]
      %v360 = vld [vmem:[%s180 + $0x550] sm:$0xff]
      %v361 = vld [vmem:[%s180 + $0x558] sm:$0xff]
      %v362 = vld [vmem:[%s180 + $0x560] sm:$0xff]
      %v363 = vld [vmem:[%s180 + $0x568] sm:$0xff]
      %v364 = vld [vmem:[%s180 + $0x570] sm:$0xff]
      %v365 = vld [vmem:[%s180 + $0x578] sm:$0xff]
      %v366 = vld [vmem:[%s180 + $0x580] sm:$0xff]
      %v367 = vld [vmem:[%s180 + $0x588] sm:$0xff]
      %v368 = vld [vmem:[%s180 + $0x590] sm:$0xff]
      %v369 = vld [vmem:[%s180 + $0x598] sm:$0xff]
      %v370 = vld [vmem:[%s180 + $0x5a0] sm:$0xff]
      %v371 = vld [vmem:[%s180 + $0x5a8] sm:$0xff]
      %v372 = vld [vmem:[%s180 + $0x5b0] sm:$0xff]
      %v373 = vld [vmem:[%s180 + $0x5b8] sm:$0xff]
      %v374 = vld [vmem:[%s180 + $0x5c0] sm:$0xff]
      %v375 = vld [vmem:[%s180 + $0x5c8] sm:$0xff]
      %v376 = vld [vmem:[%s180 + $0x5d0] sm:$0xff]
      %v377 = vld [vmem:[%s180 + $0x5d8] sm:$0xff]
      %v378 = vld [vmem:[%s180 + $0x5e0] sm:$0xff]
      %v379 = vld [vmem:[%s180 + $0x5e8] sm:$0xff]
      %v380 = vld [vmem:[%s180 + $0x5f0] sm:$0xff]
      %v381 = vld [vmem:[%s180 + $0x5f8] sm:$0xff]
      %v382 = vld [vmem:[%s180 + $0x600] sm:$0xff]
      %v383 = vld [vmem:[%s180 + $0x608] sm:$0xff]
      %v384 = vld [vmem:[%s180 + $0x610] sm:$0xff]
      %v385 = vld [vmem:[%s180 + $0x618] sm:$0xff]
      %v386 = vld [vmem:[%s184] sm:$0x3]
      %v388 = vlaneseq
      %v389 = vshrl.u32 %v388, 7
      %v390 = vsub.s32 0, %v389
      %v391 = vrot.slane %v386, %v390
      %v392 = vlaneseq
      %v393 = vshrl.u32 %v392, 7
      %v394 = vsub.s32 1, %v393
      %v395 = vrot.slane %v386, %v394
      %v398 = vmul.f32 %v190, %v391
      %v399 = vmul.f32 %v191, %v395
      %v400 = vmul.f32 %v192, %v391
      %v401 = vmul.f32 %v193, %v395
      %v402 = vmul.f32 %v194, %v391
      %v403 = vmul.f32 %v195, %v395
      %v404 = vmul.f32 %v196, %v391
      %v405 = vmul.f32 %v197, %v395
      %v406 = vmul.f32 %v198, %v391
      %v407 = vmul.f32 %v199, %v395
      %v408 = vmul.f32 %v200, %v391
      %v409 = vmul.f32 %v201, %v395
      %v410 = vmul.f32 %v202, %v391
      %v411 = vmul.f32 %v203, %v395
      %v412 = vmul.f32 %v204, %v391
      %v413 = vmul.f32 %v205, %v395
      %v414 = vmul.f32 %v206, %v391
      %v415 = vmul.f32 %v207, %v395
      %v416 = vmul.f32 %v208, %v391
      %v417 = vmul.f32 %v209, %v395
      %v418 = vmul.f32 %v210, %v391
      %v419 = vmul.f32 %v211, %v395
      %v420 = vmul.f32 %v212, %v391
      %v421 = vmul.f32 %v213, %v395
      %v422 = vmul.f32 %v214, %v391
      %v423 = vmul.f32 %v215, %v395
      %v424 = vmul.f32 %v216, %v391
      %v425 = vmul.f32 %v217, %v395
      %v426 = vmul.f32 %v218, %v391
      %v427 = vmul.f32 %v219, %v395
      %v428 = vmul.f32 %v220, %v391
      %v429 = vmul.f32 %v221, %v395
      %v430 = vmul.f32 %v222, %v391
      %v431 = vmul.f32 %v223, %v395
      %v432 = vmul.f32 %v224, %v391
      %v433 = vmul.f32 %v225, %v395
      %v434 = vmul.f32 %v226, %v391
      %v435 = vmul.f32 %v227, %v395
      %v436 = vmul.f32 %v228, %v391
      %v437 = vmul.f32 %v229, %v395
      %v438 = vmul.f32 %v230, %v391
      %v439 = vmul.f32 %v231, %v395
      %v440 = vmul.f32 %v232, %v391
      %v441 = vmul.f32 %v233, %v395
      %v442 = vmul.f32 %v234, %v391
      %v443 = vmul.f32 %v235, %v395
      %v444 = vmul.f32 %v236, %v391
      %v445 = vmul.f32 %v237, %v395
      %v446 = vmul.f32 %v238, %v391
      %v447 = vmul.f32 %v239, %v395
      %v448 = vmul.f32 %v240, %v391
      %v449 = vmul.f32 %v241, %v395
      %v450 = vmul.f32 %v242, %v391
      %v451 = vmul.f32 %v243, %v395
      %v452 = vmul.f32 %v244, %v391
      %v453 = vmul.f32 %v245, %v395
      %v454 = vmul.f32 %v246, %v391
      %v455 = vmul.f32 %v247, %v395
      %v456 = vmul.f32 %v248, %v391
      %v457 = vmul.f32 %v249, %v395
      %v458 = vmul.f32 %v250, %v391
      %v459 = vmul.f32 %v251, %v395
      %v460 = vmul.f32 %v252, %v391
      %v461 = vmul.f32 %v253, %v395
      %v462 = vmul.f32 %v254, %v391
      %v463 = vmul.f32 %v255, %v395
      %v464 = vmul.f32 %v256, %v391
      %v465 = vmul.f32 %v257, %v395
      %v466 = vmul.f32 %v258, %v391
      %v467 = vmul.f32 %v259, %v395
      %v468 = vmul.f32 %v260, %v391
      %v469 = vmul.f32 %v261, %v395
      %v470 = vmul.f32 %v262, %v391
      %v471 = vmul.f32 %v263, %v395
      %v472 = vmul.f32 %v264, %v391
      %v473 = vmul.f32 %v265, %v395
      %v474 = vmul.f32 %v266, %v391
      %v475 = vmul.f32 %v267, %v395
      %v476 = vmul.f32 %v268, %v391
      %v477 = vmul.f32 %v269, %v395
      %v478 = vmul.f32 %v270, %v391
      %v479 = vmul.f32 %v271, %v395
      %v480 = vmul.f32 %v272, %v391
      %v481 = vmul.f32 %v273, %v395
      %v482 = vmul.f32 %v274, %v391
      %v483 = vmul.f32 %v275, %v395
      %v484 = vmul.f32 %v276, %v391
      %v485 = vmul.f32 %v277, %v395
      %v486 = vmul.f32 %v278, %v391
      %v487 = vmul.f32 %v279, %v395
      %v488 = vmul.f32 %v280, %v391
      %v489 = vmul.f32 %v281, %v395
      %v490 = vmul.f32 %v282, %v391
      %v491 = vmul.f32 %v283, %v395
      %v492 = vmul.f32 %v284, %v391
      %v493 = vmul.f32 %v285, %v395
      %v494 = vmul.f32 %v286, %v391
      %v495 = vmul.f32 %v287, %v395
      %v496 = vmul.f32 %v288, %v391
      %v497 = vmul.f32 %v289, %v395
      %v498 = vmul.f32 %v290, %v391
      %v499 = vmul.f32 %v291, %v395
      %v500 = vmul.f32 %v292, %v391
      %v501 = vmul.f32 %v293, %v395
      %v502 = vmul.f32 %v294, %v391
      %v503 = vmul.f32 %v295, %v395
      %v504 = vmul.f32 %v296, %v391
      %v505 = vmul.f32 %v297, %v395
      %v506 = vmul.f32 %v298, %v391
      %v507 = vmul.f32 %v299, %v395
      %v508 = vmul.f32 %v300, %v391
      %v509 = vmul.f32 %v301, %v395
      %v510 = vmul.f32 %v302, %v391
      %v511 = vmul.f32 %v303, %v395
      %v512 = vmul.f32 %v304, %v391
      %v513 = vmul.f32 %v305, %v395
      %v514 = vmul.f32 %v306, %v391
      %v515 = vmul.f32 %v307, %v395
      %v516 = vmul.f32 %v308, %v391
      %v517 = vmul.f32 %v309, %v395
      %v518 = vmul.f32 %v310, %v391
      %v519 = vmul.f32 %v311, %v395
      %v520 = vmul.f32 %v312, %v391
      %v521 = vmul.f32 %v313, %v395
      %v522 = vmul.f32 %v314, %v391
      %v523 = vmul.f32 %v315, %v395
      %v524 = vmul.f32 %v316, %v391
      %v525 = vmul.f32 %v317, %v395
      %v526 = vmul.f32 %v318, %v391
      %v527 = vmul.f32 %v319, %v395
      %v528 = vmul.f32 %v320, %v391
      %v529 = vmul.f32 %v321, %v395
      %v530 = vmul.f32 %v322, %v391
      %v531 = vmul.f32 %v323, %v395
      %v532 = vmul.f32 %v324, %v391
      %v533 = vmul.f32 %v325, %v395
      %v534 = vmul.f32 %v326, %v391
      %v535 = vmul.f32 %v327, %v395
      %v536 = vmul.f32 %v328, %v391
      %v537 = vmul.f32 %v329, %v395
      %v538 = vmul.f32 %v330, %v391
      %v539 = vmul.f32 %v331, %v395
      %v540 = vmul.f32 %v332, %v391
      %v541 = vmul.f32 %v333, %v395
      %v542 = vmul.f32 %v334, %v391
      %v543 = vmul.f32 %v335, %v395
      %v544 = vmul.f32 %v336, %v391
      %v545 = vmul.f32 %v337, %v395
      %v546 = vmul.f32 %v338, %v391
      %v547 = vmul.f32 %v339, %v395
      %v548 = vmul.f32 %v340, %v391
      %v549 = vmul.f32 %v341, %v395
      %v550 = vmul.f32 %v342, %v391
      %v551 = vmul.f32 %v343, %v395
      %v552 = vmul.f32 %v344, %v391
      %v553 = vmul.f32 %v345, %v395
      %v554 = vmul.f32 %v346, %v391
      %v555 = vmul.f32 %v347, %v395
      %v556 = vmul.f32 %v348, %v391
      %v557 = vmul.f32 %v349, %v395
      %v558 = vmul.f32 %v350, %v391
      %v559 = vmul.f32 %v351, %v395
      %v560 = vmul.f32 %v352, %v391
      %v561 = vmul.f32 %v353, %v395
      %v562 = vmul.f32 %v354, %v391
      %v563 = vmul.f32 %v355, %v395
      %v564 = vmul.f32 %v356, %v391
      %v565 = vmul.f32 %v357, %v395
      %v566 = vmul.f32 %v358, %v391
      %v567 = vmul.f32 %v359, %v395
      %v568 = vmul.f32 %v360, %v391
      %v569 = vmul.f32 %v361, %v395
      %v570 = vmul.f32 %v362, %v391
      %v571 = vmul.f32 %v363, %v395
      %v572 = vmul.f32 %v364, %v391
      %v573 = vmul.f32 %v365, %v395
      %v574 = vmul.f32 %v366, %v391
      %v575 = vmul.f32 %v367, %v395
      %v576 = vmul.f32 %v368, %v391
      %v577 = vmul.f32 %v369, %v395
      %v578 = vmul.f32 %v370, %v391
      %v579 = vmul.f32 %v371, %v395
      %v580 = vmul.f32 %v372, %v391
      %v581 = vmul.f32 %v373, %v395
      %v582 = vmul.f32 %v374, %v391
      %v583 = vmul.f32 %v375, %v395
      %v584 = vmul.f32 %v376, %v391
      %v585 = vmul.f32 %v377, %v395
      %v586 = vmul.f32 %v378, %v391
      %v587 = vmul.f32 %v379, %v395
      %v588 = vmul.f32 %v380, %v391
      %v589 = vmul.f32 %v381, %v395
      %v590 = vmul.f32 %v382, %v391
      %v591 = vmul.f32 %v383, %v395
      %v592 = vmul.f32 %v384, %v391
      %v593 = vmul.f32 %v385, %v395
      %v594 = vadd.f32 %v398, %v399
      %595 = vadd.xlane.f32.xlu0 %v594
      %v596 = vpop.xlane.xlu0 %595
      %v597 = vadd.f32 %v400, %v401
      %598 = vadd.xlane.f32.xlu0 %v597
      %v599 = vpop.xlane.xlu0 %598
      %v600 = vadd.f32 %v402, %v403
      %601 = vadd.xlane.f32.xlu0 %v600
      %v602 = vpop.xlane.xlu0 %601
      %v603 = vadd.f32 %v404, %v405
      %604 = vadd.xlane.f32.xlu0 %v603
      %v605 = vpop.xlane.xlu0 %604
      %v606 = vadd.f32 %v406, %v407
      %607 = vadd.xlane.f32.xlu0 %v606
      %v608 = vpop.xlane.xlu0 %607
      %v609 = vadd.f32 %v408, %v409
      %610 = vadd.xlane.f32.xlu0 %v609
      %v611 = vpop.xlane.xlu0 %610
      %v612 = vadd.f32 %v410, %v411
      %613 = vadd.xlane.f32.xlu0 %v612
      %v614 = vpop.xlane.xlu0 %613
      %v615 = vadd.f32 %v412, %v413
      %616 = vadd.xlane.f32.xlu0 %v615
      %v617 = vpop.xlane.xlu0 %616
      %v618 = vadd.f32 %v414, %v415
      %619 = vadd.xlane.f32.xlu0 %v618
      %v620 = vpop.xlane.xlu0 %619
      %v621 = vadd.f32 %v416, %v417
      %622 = vadd.xlane.f32.xlu0 %v621
      %v623 = vpop.xlane.xlu0 %622
      %v624 = vadd.f32 %v418, %v419
      %625 = vadd.xlane.f32.xlu0 %v624
      %v626 = vpop.xlane.xlu0 %625
      %v627 = vadd.f32 %v420, %v421
      %628 = vadd.xlane.f32.xlu0 %v627
      %v629 = vpop.xlane.xlu0 %628
      %v630 = vadd.f32 %v422, %v423
      %631 = vadd.xlane.f32.xlu0 %v630
      %v632 = vpop.xlane.xlu0 %631
      %v633 = vadd.f32 %v424, %v425
      %634 = vadd.xlane.f32.xlu0 %v633
      %v635 = vpop.xlane.xlu0 %634
      %v636 = vadd.f32 %v426, %v427
      %637 = vadd.xlane.f32.xlu0 %v636
      %v638 = vpop.xlane.xlu0 %637
      %v639 = vadd.f32 %v428, %v429
      %640 = vadd.xlane.f32.xlu0 %v639
      %v641 = vpop.xlane.xlu0 %640
      %v642 = vadd.f32 %v430, %v431
      %643 = vadd.xlane.f32.xlu0 %v642
      %v644 = vpop.xlane.xlu0 %643
      %v645 = vadd.f32 %v432, %v433
      %646 = vadd.xlane.f32.xlu0 %v645
      %v647 = vpop.xlane.xlu0 %646
      %v648 = vadd.f32 %v434, %v435
      %649 = vadd.xlane.f32.xlu0 %v648
      %v650 = vpop.xlane.xlu0 %649
      %v651 = vadd.f32 %v436, %v437
      %652 = vadd.xlane.f32.xlu0 %v651
      %v653 = vpop.xlane.xlu0 %652
      %v654 = vadd.f32 %v438, %v439
      %655 = vadd.xlane.f32.xlu0 %v654
      %v656 = vpop.xlane.xlu0 %655
      %v657 = vadd.f32 %v440, %v441
      %658 = vadd.xlane.f32.xlu0 %v657
      %v659 = vpop.xlane.xlu0 %658
      %v660 = vadd.f32 %v442, %v443
      %661 = vadd.xlane.f32.xlu0 %v660
      %v662 = vpop.xlane.xlu0 %661
      %v663 = vadd.f32 %v444, %v445
      %664 = vadd.xlane.f32.xlu0 %v663
      %v665 = vpop.xlane.xlu0 %664
      %v666 = vadd.f32 %v446, %v447
      %667 = vadd.xlane.f32.xlu0 %v666
      %v668 = vpop.xlane.xlu0 %667
      %v669 = vadd.f32 %v448, %v449
      %670 = vadd.xlane.f32.xlu0 %v669
      %v671 = vpop.xlane.xlu0 %670
      %v672 = vadd.f32 %v450, %v451
      %673 = vadd.xlane.f32.xlu0 %v672
      %v674 = vpop.xlane.xlu0 %673
      %v675 = vadd.f32 %v452, %v453
      %676 = vadd.xlane.f32.xlu0 %v675
      %v677 = vpop.xlane.xlu0 %676
      %v678 = vadd.f32 %v454, %v455
      %679 = vadd.xlane.f32.xlu0 %v678
      %v680 = vpop.xlane.xlu0 %679
      %v681 = vadd.f32 %v456, %v457
      %682 = vadd.xlane.f32.xlu0 %v681
      %v683 = vpop.xlane.xlu0 %682
      %v684 = vadd.f32 %v458, %v459
      %685 = vadd.xlane.f32.xlu0 %v684
      %v686 = vpop.xlane.xlu0 %685
      %v687 = vadd.f32 %v460, %v461
      %688 = vadd.xlane.f32.xlu0 %v687
      %v689 = vpop.xlane.xlu0 %688
      %v690 = vadd.f32 %v462, %v463
      %691 = vadd.xlane.f32.xlu0 %v690
      %v692 = vpop.xlane.xlu0 %691
      %v693 = vadd.f32 %v464, %v465
      %694 = vadd.xlane.f32.xlu0 %v693
      %v695 = vpop.xlane.xlu0 %694
      %v696 = vadd.f32 %v466, %v467
      %697 = vadd.xlane.f32.xlu0 %v696
      %v698 = vpop.xlane.xlu0 %697
      %v699 = vadd.f32 %v468, %v469
      %700 = vadd.xlane.f32.xlu0 %v699
      %v701 = vpop.xlane.xlu0 %700
      %v702 = vadd.f32 %v470, %v471
      %703 = vadd.xlane.f32.xlu0 %v702
      %v704 = vpop.xlane.xlu0 %703
      %v705 = vadd.f32 %v472, %v473
      %706 = vadd.xlane.f32.xlu0 %v705
      %v707 = vpop.xlane.xlu0 %706
      %v708 = vadd.f32 %v474, %v475
      %709 = vadd.xlane.f32.xlu0 %v708
      %v710 = vpop.xlane.xlu0 %709
      %v711 = vadd.f32 %v476, %v477
      %712 = vadd.xlane.f32.xlu0 %v711
      %v713 = vpop.xlane.xlu0 %712
      %v714 = vadd.f32 %v478, %v479
      %715 = vadd.xlane.f32.xlu0 %v714
      %v716 = vpop.xlane.xlu0 %715
      %v717 = vadd.f32 %v480, %v481
      %718 = vadd.xlane.f32.xlu0 %v717
      %v719 = vpop.xlane.xlu0 %718
      %v720 = vadd.f32 %v482, %v483
      %721 = vadd.xlane.f32.xlu0 %v720
      %v722 = vpop.xlane.xlu0 %721
      %v723 = vadd.f32 %v484, %v485
      %724 = vadd.xlane.f32.xlu0 %v723
      %v725 = vpop.xlane.xlu0 %724
      %v726 = vadd.f32 %v486, %v487
      %727 = vadd.xlane.f32.xlu0 %v726
      %v728 = vpop.xlane.xlu0 %727
      %v729 = vadd.f32 %v488, %v489
      %730 = vadd.xlane.f32.xlu0 %v729
      %v731 = vpop.xlane.xlu0 %730
      %v732 = vadd.f32 %v490, %v491
      %733 = vadd.xlane.f32.xlu0 %v732
      %v734 = vpop.xlane.xlu0 %733
      %v735 = vadd.f32 %v492, %v493
      %736 = vadd.xlane.f32.xlu0 %v735
      %v737 = vpop.xlane.xlu0 %736
      %v738 = vadd.f32 %v494, %v495
      %739 = vadd.xlane.f32.xlu0 %v738
      %v740 = vpop.xlane.xlu0 %739
      %v741 = vadd.f32 %v496, %v497
      %742 = vadd.xlane.f32.xlu0 %v741
      %v743 = vpop.xlane.xlu0 %742
      %v744 = vadd.f32 %v498, %v499
      %745 = vadd.xlane.f32.xlu0 %v744
      %v746 = vpop.xlane.xlu0 %745
      %v747 = vadd.f32 %v500, %v501
      %748 = vadd.xlane.f32.xlu0 %v747
      %v749 = vpop.xlane.xlu0 %748
      %v750 = vadd.f32 %v502, %v503
      %751 = vadd.xlane.f32.xlu0 %v750
      %v752 = vpop.xlane.xlu0 %751
      %v753 = vadd.f32 %v504, %v505
      %754 = vadd.xlane.f32.xlu0 %v753
      %v755 = vpop.xlane.xlu0 %754
      %v756 = vadd.f32 %v506, %v507
      %757 = vadd.xlane.f32.xlu0 %v756
      %v758 = vpop.xlane.xlu0 %757
      %v759 = vadd.f32 %v508, %v509
      %760 = vadd.xlane.f32.xlu0 %v759
      %v761 = vpop.xlane.xlu0 %760
      %v762 = vadd.f32 %v510, %v511
      %763 = vadd.xlane.f32.xlu0 %v762
      %v764 = vpop.xlane.xlu0 %763
      %v765 = vadd.f32 %v512, %v513
      %766 = vadd.xlane.f32.xlu0 %v765
      %v767 = vpop.xlane.xlu0 %766
      %v768 = vadd.f32 %v514, %v515
      %769 = vadd.xlane.f32.xlu0 %v768
      %v770 = vpop.xlane.xlu0 %769
      %v771 = vadd.f32 %v516, %v517
      %772 = vadd.xlane.f32.xlu0 %v771
      %v773 = vpop.xlane.xlu0 %772
      %v774 = vadd.f32 %v518, %v519
      %775 = vadd.xlane.f32.xlu0 %v774
      %v776 = vpop.xlane.xlu0 %775
      %v777 = vadd.f32 %v520, %v521
      %778 = vadd.xlane.f32.xlu0 %v777
      %v779 = vpop.xlane.xlu0 %778
      %v780 = vadd.f32 %v522, %v523
      %781 = vadd.xlane.f32.xlu0 %v780
      %v782 = vpop.xlane.xlu0 %781
      %v783 = vadd.f32 %v524, %v525
      %784 = vadd.xlane.f32.xlu0 %v783
      %v785 = vpop.xlane.xlu0 %784
      %v786 = vadd.f32 %v526, %v527
      %787 = vadd.xlane.f32.xlu0 %v786
      %v788 = vpop.xlane.xlu0 %787
      %v789 = vadd.f32 %v528, %v529
      %790 = vadd.xlane.f32.xlu0 %v789
      %v791 = vpop.xlane.xlu0 %790
      %v792 = vadd.f32 %v530, %v531
      %793 = vadd.xlane.f32.xlu0 %v792
      %v794 = vpop.xlane.xlu0 %793
      %v795 = vadd.f32 %v532, %v533
      %796 = vadd.xlane.f32.xlu0 %v795
      %v797 = vpop.xlane.xlu0 %796
      %v798 = vadd.f32 %v534, %v535
      %799 = vadd.xlane.f32.xlu0 %v798
      %v800 = vpop.xlane.xlu0 %799
      %v801 = vadd.f32 %v536, %v537
      %802 = vadd.xlane.f32.xlu0 %v801
      %v803 = vpop.xlane.xlu0 %802
      %v804 = vadd.f32 %v538, %v539
      %805 = vadd.xlane.f32.xlu0 %v804
      %v806 = vpop.xlane.xlu0 %805
      %v807 = vadd.f32 %v540, %v541
      %808 = vadd.xlane.f32.xlu0 %v807
      %v809 = vpop.xlane.xlu0 %808
      %v810 = vadd.f32 %v542, %v543
      %811 = vadd.xlane.f32.xlu0 %v810
      %v812 = vpop.xlane.xlu0 %811
      %v813 = vadd.f32 %v544, %v545
      %814 = vadd.xlane.f32.xlu0 %v813
      %v815 = vpop.xlane.xlu0 %814
      %v816 = vadd.f32 %v546, %v547
      %817 = vadd.xlane.f32.xlu0 %v816
      %v818 = vpop.xlane.xlu0 %817
      %v819 = vadd.f32 %v548, %v549
      %820 = vadd.xlane.f32.xlu0 %v819
      %v821 = vpop.xlane.xlu0 %820
      %v822 = vadd.f32 %v550, %v551
      %823 = vadd.xlane.f32.xlu0 %v822
      %v824 = vpop.xlane.xlu0 %823
      %v825 = vadd.f32 %v552, %v553
      %826 = vadd.xlane.f32.xlu0 %v825
      %v827 = vpop.xlane.xlu0 %826
      %v828 = vadd.f32 %v554, %v555
      %829 = vadd.xlane.f32.xlu0 %v828
      %v830 = vpop.xlane.xlu0 %829
      %v831 = vadd.f32 %v556, %v557
      %832 = vadd.xlane.f32.xlu0 %v831
      %v833 = vpop.xlane.xlu0 %832
      %v834 = vadd.f32 %v558, %v559
      %835 = vadd.xlane.f32.xlu0 %v834
      %v836 = vpop.xlane.xlu0 %835
      %v837 = vadd.f32 %v560, %v561
      %838 = vadd.xlane.f32.xlu0 %v837
      %v839 = vpop.xlane.xlu0 %838
      %v840 = vadd.f32 %v562, %v563
      %841 = vadd.xlane.f32.xlu0 %v840
      %v842 = vpop.xlane.xlu0 %841
      %v843 = vadd.f32 %v564, %v565
      %844 = vadd.xlane.f32.xlu0 %v843
      %v845 = vpop.xlane.xlu0 %844
      %v846 = vadd.f32 %v566, %v567
      %847 = vadd.xlane.f32.xlu0 %v846
      %v848 = vpop.xlane.xlu0 %847
      %v849 = vadd.f32 %v568, %v569
      %850 = vadd.xlane.f32.xlu0 %v849
      %v851 = vpop.xlane.xlu0 %850
      %v852 = vadd.f32 %v570, %v571
      %853 = vadd.xlane.f32.xlu0 %v852
      %v854 = vpop.xlane.xlu0 %853
      %v855 = vadd.f32 %v572, %v573
      %856 = vadd.xlane.f32.xlu0 %v855
      %v857 = vpop.xlane.xlu0 %856
      %v858 = vadd.f32 %v574, %v575
      %859 = vadd.xlane.f32.xlu0 %v858
      %v860 = vpop.xlane.xlu0 %859
      %v861 = vadd.f32 %v576, %v577
      %862 = vadd.xlane.f32.xlu0 %v861
      %v863 = vpop.xlane.xlu0 %862
      %v864 = vadd.f32 %v578, %v579
      %865 = vadd.xlane.f32.xlu0 %v864
      %v866 = vpop.xlane.xlu0 %865
      %v867 = vadd.f32 %v580, %v581
      %868 = vadd.xlane.f32.xlu0 %v867
      %v869 = vpop.xlane.xlu0 %868
      %v870 = vadd.f32 %v582, %v583
      %871 = vadd.xlane.f32.xlu0 %v870
      %v872 = vpop.xlane.xlu0 %871
      %v873 = vadd.f32 %v584, %v585
      %874 = vadd.xlane.f32.xlu0 %v873
      %v875 = vpop.xlane.xlu0 %874
      %v876 = vadd.f32 %v586, %v587
      %877 = vadd.xlane.f32.xlu0 %v876
      %v878 = vpop.xlane.xlu0 %877
      %v879 = vadd.f32 %v588, %v589
      %880 = vadd.xlane.f32.xlu0 %v879
      %v881 = vpop.xlane.xlu0 %880
      %v882 = vadd.f32 %v590, %v591
      %883 = vadd.xlane.f32.xlu0 %v882
      %v884 = vpop.xlane.xlu0 %883
      %v885 = vadd.f32 %v592, %v593
      %886 = vadd.xlane.f32.xlu0 %v885
      %v887 = vpop.xlane.xlu0 %886
      %v888 = vld [vmem:[#allocation2] sm:$0x1]
      %v890 = vlaneseq
      %v891 = vshrl.u32 %v890, 7
      %v892 = vsub.s32 0, %v891
      %v893 = vrot.slane %v888, %v892
      %v895 = vadd.f32 %v596, %v893
      %v896 = vadd.f32 %v599, %v893
      %v897 = vadd.f32 %v602, %v893
      %v898 = vadd.f32 %v605, %v893
      %v899 = vadd.f32 %v608, %v893
      %v900 = vadd.f32 %v611, %v893
      %v901 = vadd.f32 %v614, %v893
      %v902 = vadd.f32 %v617, %v893
      %v903 = vadd.f32 %v620, %v893
      %v904 = vadd.f32 %v623, %v893
      %v905 = vadd.f32 %v626, %v893
      %v906 = vadd.f32 %v629, %v893
      %v907 = vadd.f32 %v632, %v893
      %v908 = vadd.f32 %v635, %v893
      %v909 = vadd.f32 %v638, %v893
      %v910 = vadd.f32 %v641, %v893
      %v911 = vadd.f32 %v644, %v893
      %v912 = vadd.f32 %v647, %v893
      %v913 = vadd.f32 %v650, %v893
      %v914 = vadd.f32 %v653, %v893
      %v915 = vadd.f32 %v656, %v893
      %v916 = vadd.f32 %v659, %v893
      %v917 = vadd.f32 %v662, %v893
      %v918 = vadd.f32 %v665, %v893
      %v919 = vadd.f32 %v668, %v893
      %v920 = vadd.f32 %v671, %v893
      %v921 = vadd.f32 %v674, %v893
      %v922 = vadd.f32 %v677, %v893
      %v923 = vadd.f32 %v680, %v893
      %v924 = vadd.f32 %v683, %v893
      %v925 = vadd.f32 %v686, %v893
      %v926 = vadd.f32 %v689, %v893
      %v927 = vadd.f32 %v692, %v893
      %v928 = vadd.f32 %v695, %v893
      %v929 = vadd.f32 %v698, %v893
      %v930 = vadd.f32 %v701, %v893
      %v931 = vadd.f32 %v704, %v893
      %v932 = vadd.f32 %v707, %v893
      %v933 = vadd.f32 %v710, %v893
      %v934 = vadd.f32 %v713, %v893
      %v935 = vadd.f32 %v716, %v893
      %v936 = vadd.f32 %v719, %v893
      %v937 = vadd.f32 %v722, %v893
      %v938 = vadd.f32 %v725, %v893
      %v939 = vadd.f32 %v728, %v893
      %v940 = vadd.f32 %v731, %v893
      %v941 = vadd.f32 %v734, %v893
      %v942 = vadd.f32 %v737, %v893
      %v943 = vadd.f32 %v740, %v893
      %v944 = vadd.f32 %v743, %v893
      %v945 = vadd.f32 %v746, %v893
      %v946 = vadd.f32 %v749, %v893
      %v947 = vadd.f32 %v752, %v893
      %v948 = vadd.f32 %v755, %v893
      %v949 = vadd.f32 %v758, %v893
      %v950 = vadd.f32 %v761, %v893
      %v951 = vadd.f32 %v764, %v893
      %v952 = vadd.f32 %v767, %v893
      %v953 = vadd.f32 %v770, %v893
      %v954 = vadd.f32 %v773, %v893
      %v955 = vadd.f32 %v776, %v893
      %v956 = vadd.f32 %v779, %v893
      %v957 = vadd.f32 %v782, %v893
      %v958 = vadd.f32 %v785, %v893
      %v959 = vadd.f32 %v788, %v893
      %v960 = vadd.f32 %v791, %v893
      %v961 = vadd.f32 %v794, %v893
      %v962 = vadd.f32 %v797, %v893
      %v963 = vadd.f32 %v800, %v893
      %v964 = vadd.f32 %v803, %v893
      %v965 = vadd.f32 %v806, %v893
      %v966 = vadd.f32 %v809, %v893
      %v967 = vadd.f32 %v812, %v893
      %v968 = vadd.f32 %v815, %v893
      %v969 = vadd.f32 %v818, %v893
      %v970 = vadd.f32 %v821, %v893
      %v971 = vadd.f32 %v824, %v893
      %v972 = vadd.f32 %v827, %v893
      %v973 = vadd.f32 %v830, %v893
      %v974 = vadd.f32 %v833, %v893
      %v975 = vadd.f32 %v836, %v893
      %v976 = vadd.f32 %v839, %v893
      %v977 = vadd.f32 %v842, %v893
      %v978 = vadd.f32 %v845, %v893
      %v979 = vadd.f32 %v848, %v893
      %v980 = vadd.f32 %v851, %v893
      %v981 = vadd.f32 %v854, %v893
      %v982 = vadd.f32 %v857, %v893
      %v983 = vadd.f32 %v860, %v893
      %v984 = vadd.f32 %v863, %v893
      %v985 = vadd.f32 %v866, %v893
      %v986 = vadd.f32 %v869, %v893
      %v987 = vadd.f32 %v872, %v893
      %v988 = vadd.f32 %v875, %v893
      %v989 = vadd.f32 %v878, %v893
      %v990 = vadd.f32 %v881, %v893
      %v991 = vadd.f32 %v884, %v893
      %v992 = vadd.f32 %v887, %v893
      %v993 = vxor.u32 %v895, 2147483648
      %v994 = vxor.u32 %v896, 2147483648
      %v995 = vxor.u32 %v897, 2147483648
      %v996 = vxor.u32 %v898, 2147483648
      %v997 = vxor.u32 %v899, 2147483648
      %v998 = vxor.u32 %v900, 2147483648
      %v999 = vxor.u32 %v901, 2147483648
      %v1000 = vxor.u32 %v902, 2147483648
      %v1001 = vxor.u32 %v903, 2147483648
      %v1002 = vxor.u32 %v904, 2147483648
      %v1003 = vxor.u32 %v905, 2147483648
      %v1004 = vxor.u32 %v906, 2147483648
      %v1005 = vxor.u32 %v907, 2147483648
      %v1006 = vxor.u32 %v908, 2147483648
      %v1007 = vxor.u32 %v909, 2147483648
      %v1008 = vxor.u32 %v910, 2147483648
      %v1009 = vxor.u32 %v911, 2147483648
      %v1010 = vxor.u32 %v912, 2147483648
      %v1011 = vxor.u32 %v913, 2147483648
      %v1012 = vxor.u32 %v914, 2147483648
      %v1013 = vxor.u32 %v915, 2147483648
      %v1014 = vxor.u32 %v916, 2147483648
      %v1015 = vxor.u32 %v917, 2147483648
      %v1016 = vxor.u32 %v918, 2147483648
      %v1017 = vxor.u32 %v919, 2147483648
      %v1018 = vxor.u32 %v920, 2147483648
      %v1019 = vxor.u32 %v921, 2147483648
      %v1020 = vxor.u32 %v922, 2147483648
      %v1021 = vxor.u32 %v923, 2147483648
      %v1022 = vxor.u32 %v924, 2147483648
      %v1023 = vxor.u32 %v925, 2147483648
      %v1024 = vxor.u32 %v926, 2147483648
      %v1025 = vxor.u32 %v927, 2147483648
      %v1026 = vxor.u32 %v928, 2147483648
      %v1027 = vxor.u32 %v929, 2147483648
      %v1028 = vxor.u32 %v930, 2147483648
      %v1029 = vxor.u32 %v931, 2147483648
      %v1030 = vxor.u32 %v932, 2147483648
      %v1031 = vxor.u32 %v933, 2147483648
      %v1032 = vxor.u32 %v934, 2147483648
      %v1033 = vxor.u32 %v935, 2147483648
      %v1034 = vxor.u32 %v936, 2147483648
      %v1035 = vxor.u32 %v937, 2147483648
      %v1036 = vxor.u32 %v938, 2147483648
      %v1037 = vxor.u32 %v939, 2147483648
      %v1038 = vxor.u32 %v940, 2147483648
      %v1039 = vxor.u32 %v941, 2147483648
      %v1040 = vxor.u32 %v942, 2147483648
      %v1041 = vxor.u32 %v943, 2147483648
      %v1042 = vxor.u32 %v944, 2147483648
      %v1043 = vxor.u32 %v945, 2147483648
      %v1044 = vxor.u32 %v946, 2147483648
      %v1045 = vxor.u32 %v947, 2147483648
      %v1046 = vxor.u32 %v948, 2147483648
      %v1047 = vxor.u32 %v949, 2147483648
      %v1048 = vxor.u32 %v950, 2147483648
      %v1049 = vxor.u32 %v951, 2147483648
      %v1050 = vxor.u32 %v952, 2147483648
      %v1051 = vxor.u32 %v953, 2147483648
      %v1052 = vxor.u32 %v954, 2147483648
      %v1053 = vxor.u32 %v955, 2147483648
      %v1054 = vxor.u32 %v956, 2147483648
      %v1055 = vxor.u32 %v957, 2147483648
      %v1056 = vxor.u32 %v958, 2147483648
      %v1057 = vxor.u32 %v959, 2147483648
      %v1058 = vxor.u32 %v960, 2147483648
      %v1059 = vxor.u32 %v961, 2147483648
      %v1060 = vxor.u32 %v962, 2147483648
      %v1061 = vxor.u32 %v963, 2147483648
      %v1062 = vxor.u32 %v964, 2147483648
      %v1063 = vxor.u32 %v965, 2147483648
      %v1064 = vxor.u32 %v966, 2147483648
      %v1065 = vxor.u32 %v967, 2147483648
      %v1066 = vxor.u32 %v968, 2147483648
      %v1067 = vxor.u32 %v969, 2147483648
      %v1068 = vxor.u32 %v970, 2147483648
      %v1069 = vxor.u32 %v971, 2147483648
      %v1070 = vxor.u32 %v972, 2147483648
      %v1071 = vxor.u32 %v973, 2147483648
      %v1072 = vxor.u32 %v974, 2147483648
      %v1073 = vxor.u32 %v975, 2147483648
      %v1074 = vxor.u32 %v976, 2147483648
      %v1075 = vxor.u32 %v977, 2147483648
      %v1076 = vxor.u32 %v978, 2147483648
      %v1077 = vxor.u32 %v979, 2147483648
      %v1078 = vxor.u32 %v980, 2147483648
      %v1079 = vxor.u32 %v981, 2147483648
      %v1080 = vxor.u32 %v982, 2147483648
      %v1081 = vxor.u32 %v983, 2147483648
      %v1082 = vxor.u32 %v984, 2147483648
      %v1083 = vxor.u32 %v985, 2147483648
      %v1084 = vxor.u32 %v986, 2147483648
      %v1085 = vxor.u32 %v987, 2147483648
      %v1086 = vxor.u32 %v988, 2147483648
      %v1087 = vxor.u32 %v989, 2147483648
      %v1088 = vxor.u32 %v990, 2147483648
      %v1089 = vxor.u32 %v991, 2147483648
      %v1090 = vxor.u32 %v992, 2147483648
      %v1091 = vmul.f32 %v993, 1.442695
      %v1092 = vpow.pop %v1091
      %v1093 = vmul.f32 %v994, 1.442695
      %v1094 = vpow.pop %v1093
      %v1095 = vmul.f32 %v995, 1.442695
      %v1096 = vpow.pop %v1095
      %v1097 = vmul.f32 %v996, 1.442695
      %v1098 = vpow.pop %v1097
      %v1099 = vmul.f32 %v997, 1.442695
      %v1100 = vpow.pop %v1099
      %v1101 = vmul.f32 %v998, 1.442695
      %v1102 = vpow.pop %v1101
      %v1103 = vmul.f32 %v999, 1.442695
      %v1104 = vpow.pop %v1103
      %v1105 = vmul.f32 %v1000, 1.442695
      %v1106 = vpow.pop %v1105
      %v1107 = vmul.f32 %v1001, 1.442695
      %v1108 = vpow.pop %v1107
      %v1109 = vmul.f32 %v1002, 1.442695
      %v1110 = vpow.pop %v1109
      %v1111 = vmul.f32 %v1003, 1.442695
      %v1112 = vpow.pop %v1111
      %v1113 = vmul.f32 %v1004, 1.442695
      %v1114 = vpow.pop %v1113
      %v1115 = vmul.f32 %v1005, 1.442695
      %v1116 = vpow.pop %v1115
      %v1117 = vmul.f32 %v1006, 1.442695
      %v1118 = vpow.pop %v1117
      %v1119 = vmul.f32 %v1007, 1.442695
      %v1120 = vpow.pop %v1119
      %v1121 = vmul.f32 %v1008, 1.442695
      %v1122 = vpow.pop %v1121
      %v1123 = vmul.f32 %v1009, 1.442695
      %v1124 = vpow.pop %v1123
      %v1125 = vmul.f32 %v1010, 1.442695
      %v1126 = vpow.pop %v1125
      %v1127 = vmul.f32 %v1011, 1.442695
      %v1128 = vpow.pop %v1127
      %v1129 = vmul.f32 %v1012, 1.442695
      %v1130 = vpow.pop %v1129
      %v1131 = vmul.f32 %v1013, 1.442695
      %v1132 = vpow.pop %v1131
      %v1133 = vmul.f32 %v1014, 1.442695
      %v1134 = vpow.pop %v1133
      %v1135 = vmul.f32 %v1015, 1.442695
      %v1136 = vpow.pop %v1135
      %v1137 = vmul.f32 %v1016, 1.442695
      %v1138 = vpow.pop %v1137
      %v1139 = vmul.f32 %v1017, 1.442695
      %v1140 = vpow.pop %v1139
      %v1141 = vmul.f32 %v1018, 1.442695
      %v1142 = vpow.pop %v1141
      %v1143 = vmul.f32 %v1019, 1.442695
      %v1144 = vpow.pop %v1143
      %v1145 = vmul.f32 %v1020, 1.442695
      %v1146 = vpow.pop %v1145
      %v1147 = vmul.f32 %v1021, 1.442695
      %v1148 = vpow.pop %v1147
      %v1149 = vmul.f32 %v1022, 1.442695
      %v1150 = vpow.pop %v1149
      %v1151 = vmul.f32 %v1023, 1.442695
      %v1152 = vpow.pop %v1151
      %v1153 = vmul.f32 %v1024, 1.442695
      %v1154 = vpow.pop %v1153
      %v1155 = vmul.f32 %v1025, 1.442695
      %v1156 = vpow.pop %v1155
      %v1157 = vmul.f32 %v1026, 1.442695
      %v1158 = vpow.pop %v1157
      %v1159 = vmul.f32 %v1027, 1.442695
      %v1160 = vpow.pop %v1159
      %v1161 = vmul.f32 %v1028, 1.442695
      %v1162 = vpow.pop %v1161
      %v1163 = vmul.f32 %v1029, 1.442695
      %v1164 = vpow.pop %v1163
      %v1165 = vmul.f32 %v1030, 1.442695
      %v1166 = vpow.pop %v1165
      %v1167 = vmul.f32 %v1031, 1.442695
      %v1168 = vpow.pop %v1167
      %v1169 = vmul.f32 %v1032, 1.442695
      %v1170 = vpow.pop %v1169
      %v1171 = vmul.f32 %v1033, 1.442695
      %v1172 = vpow.pop %v1171
      %v1173 = vmul.f32 %v1034, 1.442695
      %v1174 = vpow.pop %v1173
      %v1175 = vmul.f32 %v1035, 1.442695
      %v1176 = vpow.pop %v1175
      %v1177 = vmul.f32 %v1036, 1.442695
      %v1178 = vpow.pop %v1177
      %v1179 = vmul.f32 %v1037, 1.442695
      %v1180 = vpow.pop %v1179
      %v1181 = vmul.f32 %v1038, 1.442695
      %v1182 = vpow.pop %v1181
      %v1183 = vmul.f32 %v1039, 1.442695
      %v1184 = vpow.pop %v1183
      %v1185 = vmul.f32 %v1040, 1.442695
      %v1186 = vpow.pop %v1185
      %v1187 = vmul.f32 %v1041, 1.442695
      %v1188 = vpow.pop %v1187
      %v1189 = vmul.f32 %v1042, 1.442695
      %v1190 = vpow.pop %v1189
      %v1191 = vmul.f32 %v1043, 1.442695
      %v1192 = vpow.pop %v1191
      %v1193 = vmul.f32 %v1044, 1.442695
      %v1194 = vpow.pop %v1193
      %v1195 = vmul.f32 %v1045, 1.442695
      %v1196 = vpow.pop %v1195
      %v1197 = vmul.f32 %v1046, 1.442695
      %v1198 = vpow.pop %v1197
      %v1199 = vmul.f32 %v1047, 1.442695
      %v1200 = vpow.pop %v1199
      %v1201 = vmul.f32 %v1048, 1.442695
      %v1202 = vpow.pop %v1201
      %v1203 = vmul.f32 %v1049, 1.442695
      %v1204 = vpow.pop %v1203
      %v1205 = vmul.f32 %v1050, 1.442695
      %v1206 = vpow.pop %v1205
      %v1207 = vmul.f32 %v1051, 1.442695
      %v1208 = vpow.pop %v1207
      %v1209 = vmul.f32 %v1052, 1.442695
      %v1210 = vpow.pop %v1209
      %v1211 = vmul.f32 %v1053, 1.442695
      %v1212 = vpow.pop %v1211
      %v1213 = vmul.f32 %v1054, 1.442695
      %v1214 = vpow.pop %v1213
      %v1215 = vmul.f32 %v1055, 1.442695
      %v1216 = vpow.pop %v1215
      %v1217 = vmul.f32 %v1056, 1.442695
      %v1218 = vpow.pop %v1217
      %v1219 = vmul.f32 %v1057, 1.442695
      %v1220 = vpow.pop %v1219
      %v1221 = vmul.f32 %v1058, 1.442695
      %v1222 = vpow.pop %v1221
      %v1223 = vmul.f32 %v1059, 1.442695
      %v1224 = vpow.pop %v1223
      %v1225 = vmul.f32 %v1060, 1.442695
      %v1226 = vpow.pop %v1225
      %v1227 = vmul.f32 %v1061, 1.442695
      %v1228 = vpow.pop %v1227
      %v1229 = vmul.f32 %v1062, 1.442695
      %v1230 = vpow.pop %v1229
      %v1231 = vmul.f32 %v1063, 1.442695
      %v1232 = vpow.pop %v1231
      %v1233 = vmul.f32 %v1064, 1.442695
      %v1234 = vpow.pop %v1233
      %v1235 = vmul.f32 %v1065, 1.442695
      %v1236 = vpow.pop %v1235
      %v1237 = vmul.f32 %v1066, 1.442695
      %v1238 = vpow.pop %v1237
      %v1239 = vmul.f32 %v1067, 1.442695
      %v1240 = vpow.pop %v1239
      %v1241 = vmul.f32 %v1068, 1.442695
      %v1242 = vpow.pop %v1241
      %v1243 = vmul.f32 %v1069, 1.442695
      %v1244 = vpow.pop %v1243
      %v1245 = vmul.f32 %v1070, 1.442695
      %v1246 = vpow.pop %v1245
      %v1247 = vmul.f32 %v1071, 1.442695
      %v1248 = vpow.pop %v1247
      %v1249 = vmul.f32 %v1072, 1.442695
      %v1250 = vpow.pop %v1249
      %v1251 = vmul.f32 %v1073, 1.442695
      %v1252 = vpow.pop %v1251
      %v1253 = vmul.f32 %v1074, 1.442695
      %v1254 = vpow.pop %v1253
      %v1255 = vmul.f32 %v1075, 1.442695
      %v1256 = vpow.pop %v1255
      %v1257 = vmul.f32 %v1076, 1.442695
      %v1258 = vpow.pop %v1257
      %v1259 = vmul.f32 %v1077, 1.442695
      %v1260 = vpow.pop %v1259
      %v1261 = vmul.f32 %v1078, 1.442695
      %v1262 = vpow.pop %v1261
      %v1263 = vmul.f32 %v1079, 1.442695
      %v1264 = vpow.pop %v1263
      %v1265 = vmul.f32 %v1080, 1.442695
      %v1266 = vpow.pop %v1265
      %v1267 = vmul.f32 %v1081, 1.442695
      %v1268 = vpow.pop %v1267
      %v1269 = vmul.f32 %v1082, 1.442695
      %v1270 = vpow.pop %v1269
      %v1271 = vmul.f32 %v1083, 1.442695
      %v1272 = vpow.pop %v1271
      %v1273 = vmul.f32 %v1084, 1.442695
      %v1274 = vpow.pop %v1273
      %v1275 = vmul.f32 %v1085, 1.442695
      %v1276 = vpow.pop %v1275
      %v1277 = vmul.f32 %v1086, 1.442695
      %v1278 = vpow.pop %v1277
      %v1279 = vmul.f32 %v1087, 1.442695
      %v1280 = vpow.pop %v1279
      %v1281 = vmul.f32 %v1088, 1.442695
      %v1282 = vpow.pop %v1281
      %v1283 = vmul.f32 %v1089, 1.442695
      %v1284 = vpow.pop %v1283
      %v1285 = vmul.f32 %v1090, 1.442695
      %v1286 = vpow.pop %v1285
      %v1287 = vadd.f32 %v1092, 1.0
      %v1288 = vadd.f32 %v1094, 1.0
      %v1289 = vadd.f32 %v1096, 1.0
      %v1290 = vadd.f32 %v1098, 1.0
      %v1291 = vadd.f32 %v1100, 1.0
      %v1292 = vadd.f32 %v1102, 1.0
      %v1293 = vadd.f32 %v1104, 1.0
      %v1294 = vadd.f32 %v1106, 1.0
      %v1295 = vadd.f32 %v1108, 1.0
      %v1296 = vadd.f32 %v1110, 1.0
      %v1297 = vadd.f32 %v1112, 1.0
      %v1298 = vadd.f32 %v1114, 1.0
      %v1299 = vadd.f32 %v1116, 1.0
      %v1300 = vadd.f32 %v1118, 1.0
      %v1301 = vadd.f32 %v1120, 1.0
      %v1302 = vadd.f32 %v1122, 1.0
      %v1303 = vadd.f32 %v1124, 1.0
      %v1304 = vadd.f32 %v1126, 1.0
      %v1305 = vadd.f32 %v1128, 1.0
      %v1306 = vadd.f32 %v1130, 1.0
      %v1307 = vadd.f32 %v1132, 1.0
      %v1308 = vadd.f32 %v1134, 1.0
      %v1309 = vadd.f32 %v1136, 1.0
      %v1310 = vadd.f32 %v1138, 1.0
      %v1311 = vadd.f32 %v1140, 1.0
      %v1312 = vadd.f32 %v1142, 1.0
      %v1313 = vadd.f32 %v1144, 1.0
      %v1314 = vadd.f32 %v1146, 1.0
      %v1315 = vadd.f32 %v1148, 1.0
      %v1316 = vadd.f32 %v1150, 1.0
      %v1317 = vadd.f32 %v1152, 1.0
      %v1318 = vadd.f32 %v1154, 1.0
      %v1319 = vadd.f32 %v1156, 1.0
      %v1320 = vadd.f32 %v1158, 1.0
      %v1321 = vadd.f32 %v1160, 1.0
      %v1322 = vadd.f32 %v1162, 1.0
      %v1323 = vadd.f32 %v1164, 1.0
      %v1324 = vadd.f32 %v1166, 1.0
      %v1325 = vadd.f32 %v1168, 1.0
      %v1326 = vadd.f32 %v1170, 1.0
      %v1327 = vadd.f32 %v1172, 1.0
      %v1328 = vadd.f32 %v1174, 1.0
      %v1329 = vadd.f32 %v1176, 1.0
      %v1330 = vadd.f32 %v1178, 1.0
      %v1331 = vadd.f32 %v1180, 1.0
      %v1332 = vadd.f32 %v1182, 1.0
      %v1333 = vadd.f32 %v1184, 1.0
      %v1334 = vadd.f32 %v1186, 1.0
      %v1335 = vadd.f32 %v1188, 1.0
      %v1336 = vadd.f32 %v1190, 1.0
      %v1337 = vadd.f32 %v1192, 1.0
      %v1338 = vadd.f32 %v1194, 1.0
      %v1339 = vadd.f32 %v1196, 1.0
      %v1340 = vadd.f32 %v1198, 1.0
      %v1341 = vadd.f32 %v1200, 1.0
      %v1342 = vadd.f32 %v1202, 1.0
      %v1343 = vadd.f32 %v1204, 1.0
      %v1344 = vadd.f32 %v1206, 1.0
      %v1345 = vadd.f32 %v1208, 1.0
      %v1346 = vadd.f32 %v1210, 1.0
      %v1347 = vadd.f32 %v1212, 1.0
      %v1348 = vadd.f32 %v1214, 1.0
      %v1349 = vadd.f32 %v1216, 1.0
      %v1350 = vadd.f32 %v1218, 1.0
      %v1351 = vadd.f32 %v1220, 1.0
      %v1352 = vadd.f32 %v1222, 1.0
      %v1353 = vadd.f32 %v1224, 1.0
      %v1354 = vadd.f32 %v1226, 1.0
      %v1355 = vadd.f32 %v1228, 1.0
      %v1356 = vadd.f32 %v1230, 1.0
      %v1357 = vadd.f32 %v1232, 1.0
      %v1358 = vadd.f32 %v1234, 1.0
      %v1359 = vadd.f32 %v1236, 1.0
      %v1360 = vadd.f32 %v1238, 1.0
      %v1361 = vadd.f32 %v1240, 1.0
      %v1362 = vadd.f32 %v1242, 1.0
      %v1363 = vadd.f32 %v1244, 1.0
      %v1364 = vadd.f32 %v1246, 1.0
      %v1365 = vadd.f32 %v1248, 1.0
      %v1366 = vadd.f32 %v1250, 1.0
      %v1367 = vadd.f32 %v1252, 1.0
      %v1368 = vadd.f32 %v1254, 1.0
      %v1369 = vadd.f32 %v1256, 1.0
      %v1370 = vadd.f32 %v1258, 1.0
      %v1371 = vadd.f32 %v1260, 1.0
      %v1372 = vadd.f32 %v1262, 1.0
      %v1373 = vadd.f32 %v1264, 1.0
      %v1374 = vadd.f32 %v1266, 1.0
      %v1375 = vadd.f32 %v1268, 1.0
      %v1376 = vadd.f32 %v1270, 1.0
      %v1377 = vadd.f32 %v1272, 1.0
      %v1378 = vadd.f32 %v1274, 1.0
      %v1379 = vadd.f32 %v1276, 1.0
      %v1380 = vadd.f32 %v1278, 1.0
      %v1381 = vadd.f32 %v1280, 1.0
      %v1382 = vadd.f32 %v1282, 1.0
      %v1383 = vadd.f32 %v1284, 1.0
      %v1384 = vadd.f32 %v1286, 1.0
      %v1385 = vrcp.pop %v1287
      %v1386 = vmul.f32 1.0, %v1385
      %v1387 = vrcp.pop %v1288
      %v1388 = vmul.f32 1.0, %v1387
      %v1389 = vrcp.pop %v1289
      %v1390 = vmul.f32 1.0, %v1389
      %v1391 = vrcp.pop %v1290
      %v1392 = vmul.f32 1.0, %v1391
      %v1393 = vrcp.pop %v1291
      %v1394 = vmul.f32 1.0, %v1393
      %v1395 = vrcp.pop %v1292
      %v1396 = vmul.f32 1.0, %v1395
      %v1397 = vrcp.pop %v1293
      %v1398 = vmul.f32 1.0, %v1397
      %v1399 = vrcp.pop %v1294
      %v1400 = vmul.f32 1.0, %v1399
      %v1401 = vrcp.pop %v1295
      %v1402 = vmul.f32 1.0, %v1401
      %v1403 = vrcp.pop %v1296
      %v1404 = vmul.f32 1.0, %v1403
      %v1405 = vrcp.pop %v1297
      %v1406 = vmul.f32 1.0, %v1405
      %v1407 = vrcp.pop %v1298
      %v1408 = vmul.f32 1.0, %v1407
      %v1409 = vrcp.pop %v1299
      %v1410 = vmul.f32 1.0, %v1409
      %v1411 = vrcp.pop %v1300
      %v1412 = vmul.f32 1.0, %v1411
      %v1413 = vrcp.pop %v1301
      %v1414 = vmul.f32 1.0, %v1413
      %v1415 = vrcp.pop %v1302
      %v1416 = vmul.f32 1.0, %v1415
      %v1417 = vrcp.pop %v1303
      %v1418 = vmul.f32 1.0, %v1417
      %v1419 = vrcp.pop %v1304
      %v1420 = vmul.f32 1.0, %v1419
      %v1421 = vrcp.pop %v1305
      %v1422 = vmul.f32 1.0, %v1421
      %v1423 = vrcp.pop %v1306
      %v1424 = vmul.f32 1.0, %v1423
      %v1425 = vrcp.pop %v1307
      %v1426 = vmul.f32 1.0, %v1425
      %v1427 = vrcp.pop %v1308
      %v1428 = vmul.f32 1.0, %v1427
      %v1429 = vrcp.pop %v1309
      %v1430 = vmul.f32 1.0, %v1429
      %v1431 = vrcp.pop %v1310
      %v1432 = vmul.f32 1.0, %v1431
      %v1433 = vrcp.pop %v1311
      %v1434 = vmul.f32 1.0, %v1433
      %v1435 = vrcp.pop %v1312
      %v1436 = vmul.f32 1.0, %v1435
      %v1437 = vrcp.pop %v1313
      %v1438 = vmul.f32 1.0, %v1437
      %v1439 = vrcp.pop %v1314
      %v1440 = vmul.f32 1.0, %v1439
      %v1441 = vrcp.pop %v1315
      %v1442 = vmul.f32 1.0, %v1441
      %v1443 = vrcp.pop %v1316
      %v1444 = vmul.f32 1.0, %v1443
      %v1445 = vrcp.pop %v1317
      %v1446 = vmul.f32 1.0, %v1445
      %v1447 = vrcp.pop %v1318
      %v1448 = vmul.f32 1.0, %v1447
      %v1449 = vrcp.pop %v1319
      %v1450 = vmul.f32 1.0, %v1449
      %v1451 = vrcp.pop %v1320
      %v1452 = vmul.f32 1.0, %v1451
      %v1453 = vrcp.pop %v1321
      %v1454 = vmul.f32 1.0, %v1453
      %v1455 = vrcp.pop %v1322
      %v1456 = vmul.f32 1.0, %v1455
      %v1457 = vrcp.pop %v1323
      %v1458 = vmul.f32 1.0, %v1457
      %v1459 = vrcp.pop %v1324
      %v1460 = vmul.f32 1.0, %v1459
      %v1461 = vrcp.pop %v1325
      %v1462 = vmul.f32 1.0, %v1461
      %v1463 = vrcp.pop %v1326
      %v1464 = vmul.f32 1.0, %v1463
      %v1465 = vrcp.pop %v1327
      %v1466 = vmul.f32 1.0, %v1465
      %v1467 = vrcp.pop %v1328
      %v1468 = vmul.f32 1.0, %v1467
      %v1469 = vrcp.pop %v1329
      %v1470 = vmul.f32 1.0, %v1469
      %v1471 = vrcp.pop %v1330
      %v1472 = vmul.f32 1.0, %v1471
      %v1473 = vrcp.pop %v1331
      %v1474 = vmul.f32 1.0, %v1473
      %v1475 = vrcp.pop %v1332
      %v1476 = vmul.f32 1.0, %v1475
      %v1477 = vrcp.pop %v1333
      %v1478 = vmul.f32 1.0, %v1477
      %v1479 = vrcp.pop %v1334
      %v1480 = vmul.f32 1.0, %v1479
      %v1481 = vrcp.pop %v1335
      %v1482 = vmul.f32 1.0, %v1481
      %v1483 = vrcp.pop %v1336
      %v1484 = vmul.f32 1.0, %v1483
      %v1485 = vrcp.pop %v1337
      %v1486 = vmul.f32 1.0, %v1485
      %v1487 = vrcp.pop %v1338
      %v1488 = vmul.f32 1.0, %v1487
      %v1489 = vrcp.pop %v1339
      %v1490 = vmul.f32 1.0, %v1489
      %v1491 = vrcp.pop %v1340
      %v1492 = vmul.f32 1.0, %v1491
      %v1493 = vrcp.pop %v1341
      %v1494 = vmul.f32 1.0, %v1493
      %v1495 = vrcp.pop %v1342
      %v1496 = vmul.f32 1.0, %v1495
      %v1497 = vrcp.pop %v1343
      %v1498 = vmul.f32 1.0, %v1497
      %v1499 = vrcp.pop %v1344
      %v1500 = vmul.f32 1.0, %v1499
      %v1501 = vrcp.pop %v1345
      %v1502 = vmul.f32 1.0, %v1501
      %v1503 = vrcp.pop %v1346
      %v1504 = vmul.f32 1.0, %v1503
      %v1505 = vrcp.pop %v1347
      %v1506 = vmul.f32 1.0, %v1505
      %v1507 = vrcp.pop %v1348
      %v1508 = vmul.f32 1.0, %v1507
      %v1509 = vrcp.pop %v1349
      %v1510 = vmul.f32 1.0, %v1509
      %v1511 = vrcp.pop %v1350
      %v1512 = vmul.f32 1.0, %v1511
      %v1513 = vrcp.pop %v1351
      %v1514 = vmul.f32 1.0, %v1513
      %v1515 = vrcp.pop %v1352
      %v1516 = vmul.f32 1.0, %v1515
      %v1517 = vrcp.pop %v1353
      %v1518 = vmul.f32 1.0, %v1517
      %v1519 = vrcp.pop %v1354
      %v1520 = vmul.f32 1.0, %v1519
      %v1521 = vrcp.pop %v1355
      %v1522 = vmul.f32 1.0, %v1521
      %v1523 = vrcp.pop %v1356
      %v1524 = vmul.f32 1.0, %v1523
      %v1525 = vrcp.pop %v1357
      %v1526 = vmul.f32 1.0, %v1525
      %v1527 = vrcp.pop %v1358
      %v1528 = vmul.f32 1.0, %v1527
      %v1529 = vrcp.pop %v1359
      %v1530 = vmul.f32 1.0, %v1529
      %v1531 = vrcp.pop %v1360
      %v1532 = vmul.f32 1.0, %v1531
      %v1533 = vrcp.pop %v1361
      %v1534 = vmul.f32 1.0, %v1533
      %v1535 = vrcp.pop %v1362
      %v1536 = vmul.f32 1.0, %v1535
      %v1537 = vrcp.pop %v1363
      %v1538 = vmul.f32 1.0, %v1537
      %v1539 = vrcp.pop %v1364
      %v1540 = vmul.f32 1.0, %v1539
      %v1541 = vrcp.pop %v1365
      %v1542 = vmul.f32 1.0, %v1541
      %v1543 = vrcp.pop %v1366
      %v1544 = vmul.f32 1.0, %v1543
      %v1545 = vrcp.pop %v1367
      %v1546 = vmul.f32 1.0, %v1545
      %v1547 = vrcp.pop %v1368
      %v1548 = vmul.f32 1.0, %v1547
      %v1549 = vrcp.pop %v1369
      %v1550 = vmul.f32 1.0, %v1549
      %v1551 = vrcp.pop %v1370
      %v1552 = vmul.f32 1.0, %v1551
      %v1553 = vrcp.pop %v1371
      %v1554 = vmul.f32 1.0, %v1553
      %v1555 = vrcp.pop %v1372
      %v1556 = vmul.f32 1.0, %v1555
      %v1557 = vrcp.pop %v1373
      %v1558 = vmul.f32 1.0, %v1557
      %v1559 = vrcp.pop %v1374
      %v1560 = vmul.f32 1.0, %v1559
      %v1561 = vrcp.pop %v1375
      %v1562 = vmul.f32 1.0, %v1561
      %v1563 = vrcp.pop %v1376
      %v1564 = vmul.f32 1.0, %v1563
      %v1565 = vrcp.pop %v1377
      %v1566 = vmul.f32 1.0, %v1565
      %v1567 = vrcp.pop %v1378
      %v1568 = vmul.f32 1.0, %v1567
      %v1569 = vrcp.pop %v1379
      %v1570 = vmul.f32 1.0, %v1569
      %v1571 = vrcp.pop %v1380
      %v1572 = vmul.f32 1.0, %v1571
      %v1573 = vrcp.pop %v1381
      %v1574 = vmul.f32 1.0, %v1573
      %v1575 = vrcp.pop %v1382
      %v1576 = vmul.f32 1.0, %v1575
      %v1577 = vrcp.pop %v1383
      %v1578 = vmul.f32 1.0, %v1577
      %v1579 = vrcp.pop %v1384
      %v1580 = vmul.f32 1.0, %v1579
      %vm1581 = vcmask 7168
      %1582 = vst.msk [vmem:[%s189] sm:$0xff] %vm1581, %v1386
      %1583 = vst.msk [vmem:[%s189 + $0x8] sm:$0xff] %vm1581, %v1388
      %1584 = vst.msk [vmem:[%s189 + $0x10] sm:$0xff] %vm1581, %v1390
      %1585 = vst.msk [vmem:[%s189 + $0x18] sm:$0xff] %vm1581, %v1392
      %1586 = vst.msk [vmem:[%s189 + $0x20] sm:$0xff] %vm1581, %v1394
      %1587 = vst.msk [vmem:[%s189 + $0x28] sm:$0xff] %vm1581, %v1396
      %1588 = vst.msk [vmem:[%s189 + $0x30] sm:$0xff] %vm1581, %v1398
      %1589 = vst.msk [vmem:[%s189 + $0x38] sm:$0xff] %vm1581, %v1400
      %1590 = vst.msk [vmem:[%s189 + $0x40] sm:$0xff] %vm1581, %v1402
      %1591 = vst.msk [vmem:[%s189 + $0x48] sm:$0xff] %vm1581, %v1404
      %1592 = vst.msk [vmem:[%s189 + $0x50] sm:$0xff] %vm1581, %v1406
      %1593 = vst.msk [vmem:[%s189 + $0x58] sm:$0xff] %vm1581, %v1408
      %1594 = vst.msk [vmem:[%s189 + $0x60] sm:$0xff] %vm1581, %v1410
      %1595 = vst.msk [vmem:[%s189 + $0x68] sm:$0xff] %vm1581, %v1412
      %1596 = vst.msk [vmem:[%s189 + $0x70] sm:$0xff] %vm1581, %v1414
      %1597 = vst.msk [vmem:[%s189 + $0x78] sm:$0xff] %vm1581, %v1416
      %1598 = vst.msk [vmem:[%s189 + $0x80] sm:$0xff] %vm1581, %v1418
      %1599 = vst.msk [vmem:[%s189 + $0x88] sm:$0xff] %vm1581, %v1420
      %1600 = vst.msk [vmem:[%s189 + $0x90] sm:$0xff] %vm1581, %v1422
      %1601 = vst.msk [vmem:[%s189 + $0x98] sm:$0xff] %vm1581, %v1424
      %1602 = vst.msk [vmem:[%s189 + $0xa0] sm:$0xff] %vm1581, %v1426
      %1603 = vst.msk [vmem:[%s189 + $0xa8] sm:$0xff] %vm1581, %v1428
      %1604 = vst.msk [vmem:[%s189 + $0xb0] sm:$0xff] %vm1581, %v1430
      %1605 = vst.msk [vmem:[%s189 + $0xb8] sm:$0xff] %vm1581, %v1432
      %1606 = vst.msk [vmem:[%s189 + $0xc0] sm:$0xff] %vm1581, %v1434
      %1607 = vst.msk [vmem:[%s189 + $0xc8] sm:$0xff] %vm1581, %v1436
      %1608 = vst.msk [vmem:[%s189 + $0xd0] sm:$0xff] %vm1581, %v1438
      %1609 = vst.msk [vmem:[%s189 + $0xd8] sm:$0xff] %vm1581, %v1440
      %1610 = vst.msk [vmem:[%s189 + $0xe0] sm:$0xff] %vm1581, %v1442
      %1611 = vst.msk [vmem:[%s189 + $0xe8] sm:$0xff] %vm1581, %v1444
      %1612 = vst.msk [vmem:[%s189 + $0xf0] sm:$0xff] %vm1581, %v1446
      %1613 = vst.msk [vmem:[%s189 + $0xf8] sm:$0xff] %vm1581, %v1448
      %1614 = vst.msk [vmem:[%s189 + $0x100] sm:$0xff] %vm1581, %v1450
      %1615 = vst.msk [vmem:[%s189 + $0x108] sm:$0xff] %vm1581, %v1452
      %1616 = vst.msk [vmem:[%s189 + $0x110] sm:$0xff] %vm1581, %v1454
      %1617 = vst.msk [vmem:[%s189 + $0x118] sm:$0xff] %vm1581, %v1456
      %1618 = vst.msk [vmem:[%s189 + $0x120] sm:$0xff] %vm1581, %v1458
      %1619 = vst.msk [vmem:[%s189 + $0x128] sm:$0xff] %vm1581, %v1460
      %1620 = vst.msk [vmem:[%s189 + $0x130] sm:$0xff] %vm1581, %v1462
      %1621 = vst.msk [vmem:[%s189 + $0x138] sm:$0xff] %vm1581, %v1464
      %1622 = vst.msk [vmem:[%s189 + $0x140] sm:$0xff] %vm1581, %v1466
      %1623 = vst.msk [vmem:[%s189 + $0x148] sm:$0xff] %vm1581, %v1468
      %1624 = vst.msk [vmem:[%s189 + $0x150] sm:$0xff] %vm1581, %v1470
      %1625 = vst.msk [vmem:[%s189 + $0x158] sm:$0xff] %vm1581, %v1472
      %1626 = vst.msk [vmem:[%s189 + $0x160] sm:$0xff] %vm1581, %v1474
      %1627 = vst.msk [vmem:[%s189 + $0x168] sm:$0xff] %vm1581, %v1476
      %1628 = vst.msk [vmem:[%s189 + $0x170] sm:$0xff] %vm1581, %v1478
      %1629 = vst.msk [vmem:[%s189 + $0x178] sm:$0xff] %vm1581, %v1480
      %1630 = vst.msk [vmem:[%s189 + $0x180] sm:$0xff] %vm1581, %v1482
      %1631 = vst.msk [vmem:[%s189 + $0x188] sm:$0xff] %vm1581, %v1484
      %1632 = vst.msk [vmem:[%s189 + $0x190] sm:$0xff] %vm1581, %v1486
      %1633 = vst.msk [vmem:[%s189 + $0x198] sm:$0xff] %vm1581, %v1488
      %1634 = vst.msk [vmem:[%s189 + $0x1a0] sm:$0xff] %vm1581, %v1490
      %1635 = vst.msk [vmem:[%s189 + $0x1a8] sm:$0xff] %vm1581, %v1492
      %1636 = vst.msk [vmem:[%s189 + $0x1b0] sm:$0xff] %vm1581, %v1494
      %1637 = vst.msk [vmem:[%s189 + $0x1b8] sm:$0xff] %vm1581, %v1496
      %1638 = vst.msk [vmem:[%s189 + $0x1c0] sm:$0xff] %vm1581, %v1498
      %1639 = vst.msk [vmem:[%s189 + $0x1c8] sm:$0xff] %vm1581, %v1500
      %1640 = vst.msk [vmem:[%s189 + $0x1d0] sm:$0xff] %vm1581, %v1502
      %1641 = vst.msk [vmem:[%s189 + $0x1d8] sm:$0xff] %vm1581, %v1504
      %1642 = vst.msk [vmem:[%s189 + $0x1e0] sm:$0xff] %vm1581, %v1506
      %1643 = vst.msk [vmem:[%s189 + $0x1e8] sm:$0xff] %vm1581, %v1508
      %1644 = vst.msk [vmem:[%s189 + $0x1f0] sm:$0xff] %vm1581, %v1510
      %1645 = vst.msk [vmem:[%s189 + $0x1f8] sm:$0xff] %vm1581, %v1512
      %1646 = vst.msk [vmem:[%s189 + $0x200] sm:$0xff] %vm1581, %v1514
      %1647 = vst.msk [vmem:[%s189 + $0x208] sm:$0xff] %vm1581, %v1516
      %1648 = vst.msk [vmem:[%s189 + $0x210] sm:$0xff] %vm1581, %v1518
      %1649 = vst.msk [vmem:[%s189 + $0x218] sm:$0xff] %vm1581, %v1520
      %1650 = vst.msk [vmem:[%s189 + $0x220] sm:$0xff] %vm1581, %v1522
      %1651 = vst.msk [vmem:[%s189 + $0x228] sm:$0xff] %vm1581, %v1524
      %1652 = vst.msk [vmem:[%s189 + $0x230] sm:$0xff] %vm1581, %v1526
      %1653 = vst.msk [vmem:[%s189 + $0x238] sm:$0xff] %vm1581, %v1528
      %1654 = vst.msk [vmem:[%s189 + $0x240] sm:$0xff] %vm1581, %v1530
      %1655 = vst.msk [vmem:[%s189 + $0x248] sm:$0xff] %vm1581, %v1532
      %1656 = vst.msk [vmem:[%s189 + $0x250] sm:$0xff] %vm1581, %v1534
      %1657 = vst.msk [vmem:[%s189 + $0x258] sm:$0xff] %vm1581, %v1536
      %1658 = vst.msk [vmem:[%s189 + $0x260] sm:$0xff] %vm1581, %v1538
      %1659 = vst.msk [vmem:[%s189 + $0x268] sm:$0xff] %vm1581, %v1540
      %1660 = vst.msk [vmem:[%s189 + $0x270] sm:$0xff] %vm1581, %v1542
      %1661 = vst.msk [vmem:[%s189 + $0x278] sm:$0xff] %vm1581, %v1544
      %1662 = vst.msk [vmem:[%s189 + $0x280] sm:$0xff] %vm1581, %v1546
      %1663 = vst.msk [vmem:[%s189 + $0x288] sm:$0xff] %vm1581, %v1548
      %1664 = vst.msk [vmem:[%s189 + $0x290] sm:$0xff] %vm1581, %v1550
      %1665 = vst.msk [vmem:[%s189 + $0x298] sm:$0xff] %vm1581, %v1552
      %1666 = vst.msk [vmem:[%s189 + $0x2a0] sm:$0xff] %vm1581, %v1554
      %1667 = vst.msk [vmem:[%s189 + $0x2a8] sm:$0xff] %vm1581, %v1556
      %1668 = vst.msk [vmem:[%s189 + $0x2b0] sm:$0xff] %vm1581, %v1558
      %1669 = vst.msk [vmem:[%s189 + $0x2b8] sm:$0xff] %vm1581, %v1560
      %1670 = vst.msk [vmem:[%s189 + $0x2c0] sm:$0xff] %vm1581, %v1562
      %1671 = vst.msk [vmem:[%s189 + $0x2c8] sm:$0xff] %vm1581, %v1564
      %1672 = vst.msk [vmem:[%s189 + $0x2d0] sm:$0xff] %vm1581, %v1566
      %1673 = vst.msk [vmem:[%s189 + $0x2d8] sm:$0xff] %vm1581, %v1568
      %1674 = vst.msk [vmem:[%s189 + $0x2e0] sm:$0xff] %vm1581, %v1570
      %1675 = vst.msk [vmem:[%s189 + $0x2e8] sm:$0xff] %vm1581, %v1572
      %1676 = vst.msk [vmem:[%s189 + $0x2f0] sm:$0xff] %vm1581, %v1574
      %1677 = vst.msk [vmem:[%s189 + $0x2f8] sm:$0xff] %vm1581, %v1576
      %1678 = vst.msk [vmem:[%s189 + $0x300] sm:$0xff] %vm1581, %v1578
      %1679 = vst.msk [vmem:[%s189 + $0x308] sm:$0xff] %vm1581, %v1580
      %p1680 = scmp.lt.s32.totalorder %s16, 3
      %s1681 = scalar_select %p1680, %s16, 3
      %s1682 = smul.addr %s1681, 98
      %s1683 = smul.addr %s1682, 8
      %s1684 = scalar_lea.vmem %s3, %s1683
      // Predicated region
      $region33: #{bernoulli_decoder_forward.9} parent=31 // pred_check
        %p1685 = pneg %p107
      $region34: #{bernoulli_decoder_forward.9} parent=31 // pred_check_branch
        %1687 = sbr.rel (%p1685) target = $region36
      $region35: #{bernoulli_decoder_forward.9} parent=31 // pred_region
        _
      $region36: #{bernoulli_decoder_forward.9} parent=31 // pred_fallthru
        _
    $region32: #{bernoulli_decoder_forward.9} parent=5 // pred_fallthru
      _
    %p1688 = scmp.le.s32.totalorder 2, %s11
    // Predicated region
    $region37: #{bernoulli_decoder_forward.9} parent=5 // pred_check
      %p1689 = pneg %p1688
    $region38: #{bernoulli_decoder_forward.9} parent=5 // pred_check_branch
      %1691 = sbr.rel (%p1689) target = $region40
    $region39: #{bernoulli_decoder_forward.9} parent=5 // pred_region
      %s1692 = ssub.s32 %s11, 2
      // Predicated region
      $region41: #{bernoulli_decoder_forward.9} parent=39 // pred_check
        %p1693 = pneg %p113
      $region42: #{bernoulli_decoder_forward.9} parent=39 // pred_check_branch
        %1695 = sbr.rel (%p1693) target = $region44
      $region43: #{bernoulli_decoder_forward.9} parent=39 // pred_region
        %p1696 = scmp.lt.s32.totalorder %s17, 3
        %s1697 = scalar_select %p1696, %s17, 3
        %s1698 = smul.addr %s1697, 98
        %s1699 = smul.addr %s1698, 8
        %s1700 = scalar_lea.vmem %s3, %s1699
      $region44: #{bernoulli_decoder_forward.9} parent=39 // pred_fallthru
        _
    $region40: #{bernoulli_decoder_forward.9} parent=5 // pred_fallthru
      _
  $region6: #{bernoulli_decoder_forward.9} parent=0 // loop_footer
    %s15 = sadd.s32 1, %s11
  $region7: #{bernoulli_decoder_forward.9} parent=0 // loop_footer_branch
    %10 = sbr.rel target = $region3
  $region8: #{bernoulli_decoder_forward.9} parent=0 // loop_exit
    _

</llo_original>
